<compile_context>
chip_gen: v5e
topology: v5e:2x2
jax: 0.10.0
libtpu: 0.0.40
codegen_flags: <defaults>
</compile_context>

<pallas_src>
import functools

import numpy as np
import jax
import jax.numpy as jnp
from jax import lax
from jax.experimental import pallas as pl
from jax.experimental.pallas import tpu as pltpu

EPS = 1e-5
INV_LOG2 = np.float32(1.0 / np.log(2.0))

F_IN, H1, H2, H3 = 128, 256, 128, 64

# Offsets inside the packed (1, VEC_LEN) parameter vector (all lane-aligned).
OFF_G1V = 0                       # BatchNorm1d(128) gamma
OFF_B1V = OFF_G1V + F_IN          # BatchNorm1d(128) beta
OFF_BIAS1 = OFF_B1V + F_IN        # Linear(128,256) bias
OFF_G1 = OFF_BIAS1 + H1           # BatchNorm1d(256) gamma
OFF_BE1 = OFF_G1 + H1             # BatchNorm1d(256) beta
OFF_BIAS2 = OFF_BE1 + H1          # Linear(256,128) bias
OFF_BIAS3 = OFF_BIAS2 + H2        # Linear(128,64) bias
VEC_LEN = OFF_BIAS3 + H3          # 1216


def _bn1d(t, gamma, beta):
    # Training-mode BatchNorm1d: per-feature batch stats, biased variance,
    # single pass over the data (E[x], E[x^2]); clamp for f32 cancellation.
    m = jnp.mean(t, axis=0, keepdims=True)
    ms = jnp.mean(t * t, axis=0, keepdims=True)
    v = jnp.maximum(ms - m * m, 0.0)
    return (t - m) * (lax.rsqrt(v + EPS) * gamma) + beta


def bfnn_kernel(scal_ref, x_ref, csi_ref, snr_ref, vec_ref,
                w1_ref, w2_ref, w3_ref, out_ref, *, use_bf16_matmul):
    def mm(a, w_ref):
        w = w_ref[...]
        if use_bf16_matmul:        # v6e/v7x: native-bf16 MXU, f32 accumulate
            a = a.astype(jnp.bfloat16)
            w = w.astype(jnp.bfloat16)
        return jnp.dot(a, w, preferred_element_type=jnp.float32)

    x = x_ref[...]                                  # (B, 128) f32 (flattened NCHW, C=1)

    # ---- BatchNorm2d(1): batch stats over (B, H, W) == all flattened elements
    # (kept for exact forward semantics; scalars come from SMEM).
    g2d = scal_ref[0]
    b2d = scal_ref[1]
    m0 = jnp.mean(x)
    ms0 = jnp.mean(x * x)
    v0 = jnp.maximum(ms0 - m0 * m0, 0.0)
    x = (x - m0) * (lax.rsqrt(v0 + EPS) * g2d) + b2d

    # ---- Flatten is a no-op here; BatchNorm1d(128).
    x = _bn1d(x,
              vec_ref[:, OFF_G1V:OFF_G1V + F_IN],
              vec_ref[:, OFF_B1V:OFF_B1V + F_IN])

    # ---- hidden1 + ReLU, BatchNorm1d(256), hidden2 + ReLU, hidden3.
    h = jnp.maximum(mm(x, w1_ref) + vec_ref[:, OFF_BIAS1:OFF_BIAS1 + H1], 0.0)
    h = _bn1d(h,
              vec_ref[:, OFF_G1:OFF_G1 + H1],
              vec_ref[:, OFF_BE1:OFF_BE1 + H1])
    h = jnp.maximum(mm(h, w2_ref) + vec_ref[:, OFF_BIAS2:OFF_BIAS2 + H2], 0.0)
    h = mm(h, w3_ref) + vec_ref[:, OFF_BIAS3:OFF_BIAS3 + H3]      # (B, 64)

    # ---- bmm(csi.view(-1,1,128), cat(cos,sin).view(-1,128,1)) fused as a
    #      split-CSI per-row dot (no lane-axis concatenate, no VRF temporary).
    csi = csi_ref[...]                                            # (B, 128)
    hv = jnp.sum(csi[:, :H3] * jnp.cos(h) + csi[:, H3:] * jnp.sin(h),
                 axis=1, keepdims=True)                           # (B, 1)

    # ---- rate = log2(1 + SNR/64 * |hv|^2); return -rate.
    # TODO(synk): torch upcasts to float64 here; TPU has no native f64 — this
    # stays in f32 (log1p for better small-argument accuracy).
    snr = snr_ref[...]                                            # (B, 1)
    rate = jnp.log1p(snr * (1.0 / 64.0) * (hv * hv)) * INV_LOG2
    out_ref[...] = -rate


def _vmem_full(shape):
    nd = len(shape)
    return pl.BlockSpec(shape, lambda i, _nd=nd: (0,) * _nd)


def bfnn_forward(x_nchw, perfect_csi, snr_input, packed, *, use_bf16_matmul=False):
    scal, vec, w1, w2, w3 = packed
    B = x_nchw.shape[0]
    x_flat = x_nchw.reshape(B, -1).astype(jnp.float32)   # nn.Flatten on NCHW (C=1)
    csi = perfect_csi.astype(jnp.float32)
    snr = snr_input.astype(jnp.float32)

    kernel = functools.partial(bfnn_kernel, use_bf16_matmul=use_bf16_matmul)

    in_specs = [
        pl.BlockSpec(memory_space=pltpu.MemorySpace.SMEM),   # (2,) BN2d gamma/beta
        _vmem_full(x_flat.shape),
        _vmem_full(csi.shape),
        _vmem_full(snr.shape),
        _vmem_full(vec.shape),
        _vmem_full(w1.shape),
        _vmem_full(w2.shape),
        _vmem_full(w3.shape),
    ]

    # Weights (~0.3 MiB) + activations (B*256*4 B) fit comfortably in VMEM on
    # v5e/v6e/v7x, so one grid step with whole-array blocks is the right tiling.
    # TODO(synk): for B in the tens of thousands, tile the batch over a
    # "parallel" grid axis with a separate BN-stats pass (two-pass design) to
    # keep full-batch BN semantics and use both v7x TensorCores.
    return pl.pallas_call(
        kernel,
        out_shape=jax.ShapeDtypeStruct((B, 1), jnp.float32),
        grid=(1,),
        in_specs=in_specs,
        out_specs=_vmem_full((B, 1)),
        compiler_params=pltpu.CompilerParams(
            dimension_semantics=("arbitrary",)),
    )(scal, x_flat, csi, snr, vec, w1, w2, w3)


def init_params(key):
    ks = jax.random.split(key, 9)

    def lin(k, fan_in, fan_out):
        # weight stored as (in, out) = torch weight transposed
        bound = 1.0 / np.sqrt(fan_in)
        w = jax.random.uniform(k, (fan_in, fan_out), jnp.float32, -bound, bound)
        b = jax.random.uniform(jax.random.fold_in(k, 1), (1, fan_out),
                               jnp.float32, -bound, bound)
        return w, b

    w1, b1 = lin(ks[0], F_IN, H1)
    w2, b2 = lin(ks[1], H1, H2)
    w3, b3 = lin(ks[2], H2, H3)

    return dict(
        # BatchNorm affine params (deterministic, slightly perturbed from default)
        g2d=jnp.ones((1, 1), jnp.float32) + 0.1 * jax.random.normal(ks[3], (1, 1)),
        b2d=0.1 * jax.random.normal(ks[4], (1, 1), jnp.float32),
        g1v=jnp.ones((1, F_IN), jnp.float32) + 0.1 * jax.random.normal(ks[5], (1, F_IN)),
        b1v=0.1 * jax.random.normal(ks[6], (1, F_IN), jnp.float32),
        g1=jnp.ones((1, H1), jnp.float32) + 0.1 * jax.random.normal(ks[7], (1, H1)),
        be1=0.1 * jax.random.normal(ks[8], (1, H1), jnp.float32),
        w1=w1, b1=b1, w2=w2, b2=b2, w3=w3, b3=b3,
    )


def pack_params(p):
    """One-time packing: BN2d scalars -> SMEM (2,); all 1-D params -> (1, 1216)."""
    scal = jnp.concatenate([p["g2d"].reshape(1), p["b2d"].reshape(1)]).astype(jnp.float32)
    vec = jnp.concatenate([
        p["g1v"].reshape(1, F_IN), p["b1v"].reshape(1, F_IN),
        p["b1"].reshape(1, H1),
        p["g1"].reshape(1, H1), p["be1"].reshape(1, H1),
        p["b2"].reshape(1, H2), p["b3"].reshape(1, H3),
    ], axis=1).astype(jnp.float32)
    assert vec.shape == (1, VEC_LEN)
    return (scal, vec,
            p["w1"].astype(jnp.float32),
            p["w2"].astype(jnp.float32),
            p["w3"].astype(jnp.float32))


if __name__ == "__main__":
    key = jax.random.PRNGKey(0)
    k_x, k_csi, k_snr, k_p = jax.random.split(key, 4)

    # C=1, H*W = 128 features (required by Flatten -> BatchNorm1d(128)).
    # Batch raised to 128 per the perf review to fill the MXU sublane dimension
    # (still a small problem: ~64 KiB of activations).
    B, H, W = 128, 8, 16
    x = jax.random.normal(k_x, (B, 1, H, W), jnp.float32)           # NCHW
    perfect_csi = jax.random.normal(k_csi, (B, 128), jnp.float32)   # -> view(-1,1,128)
    snr_input = jax.random.uniform(k_snr, (B, 1), jnp.float32, 1.0, 10.0)

    packed = pack_params(init_params(k_p))

    # use_bf16_matmul=True is the v6e/v7x MXU-throughput option (f32 accumulate);
    # default False keeps f32 parity with the torch module.
    out = bfnn_forward(x, perfect_csi, snr_input, packed)
    out = jax.block_until_ready(out)
    assert out.shape == (B, 1) and out.dtype == jnp.float32
    assert bool(jnp.all(jnp.isfinite(out)))
    print("KERNEL_OK")
</pallas_src>

<mosaic_0001>
module attributes {stable_mosaic.version = 11 : i64} {
  func.func @bfnn_kernel(%arg0: i32, %arg1: memref<2xf32, #tpu.memory_space<smem>>, %arg2: memref<128x128xf32, #tpu.memory_space<vmem>>, %arg3: memref<128x128xf32, #tpu.memory_space<vmem>>, %arg4: memref<128x1xf32, #tpu.memory_space<vmem>>, %arg5: memref<1x1216xf32, #tpu.memory_space<vmem>>, %arg6: memref<128x256xf32, #tpu.memory_space<vmem>>, %arg7: memref<256x128xf32, #tpu.memory_space<vmem>>, %arg8: memref<128x64xf32, #tpu.memory_space<vmem>>, %arg9: memref<128x1xf32, #tpu.memory_space<vmem>>) attributes {dimension_semantics = [#tpu.dimension_semantics<arbitrary>], iteration_bounds = array<i64: 1>, scalar_prefetch = 0 : i64, scratch_operands = 0 : i64, tpu.core_type = #tpu.core_type<tc>, window_params = [{transform_indices = @transform_0, window_bounds = array<i64: 2>}, {pipeline_mode = #tpu.pipeline_mode<synchronous>, transform_indices = @transform_1, window_bounds = array<i64: 128, 128>}, {pipeline_mode = #tpu.pipeline_mode<synchronous>, transform_indices = @transform_2, window_bounds = array<i64: 128, 128>}, {pipeline_mode = #tpu.pipeline_mode<synchronous>, transform_indices = @transform_3, window_bounds = array<i64: 128, 1>}, {pipeline_mode = #tpu.pipeline_mode<synchronous>, transform_indices = @transform_4, window_bounds = array<i64: 1, 1216>}, {pipeline_mode = #tpu.pipeline_mode<synchronous>, transform_indices = @transform_5, window_bounds = array<i64: 128, 256>}, {pipeline_mode = #tpu.pipeline_mode<synchronous>, transform_indices = @transform_6, window_bounds = array<i64: 256, 128>}, {pipeline_mode = #tpu.pipeline_mode<synchronous>, transform_indices = @transform_7, window_bounds = array<i64: 128, 64>}, {pipeline_mode = #tpu.pipeline_mode<synchronous>, transform_indices = @transform_8, window_bounds = array<i64: 128, 1>}]} {
    %c0 = arith.constant 0 : index
    %c0_0 = arith.constant 0 : index
    %0 = vector.load %arg2[%c0, %c0_0] : memref<128x128xf32, #tpu.memory_space<vmem>>, vector<128x128xf32>
    %c0_1 = arith.constant 0 : index
    %1 = memref.load %arg1[%c0_1] : memref<2xf32, #tpu.memory_space<smem>>
    %c1 = arith.constant 1 : index
    %2 = memref.load %arg1[%c1] : memref<2xf32, #tpu.memory_space<smem>>
    %3 = vector.shape_cast %0 : vector<128x128xf32> to vector<1x128x128xf32>
    %cst = arith.constant dense<0.000000e+00> : vector<1xf32>
    %4 = vector.multi_reduction <add>, %3, %cst [1, 2] : vector<1x128x128xf32> to vector<1xf32>
    %5 = vector.shape_cast %4 : vector<1xf32> to vector<1x1x1xf32>
    %6 = vector.extract %5[0, 0, 0] : f32 from vector<1x1x1xf32>
    %cst_2 = arith.constant 1.638400e+04 : f32
    %7 = arith.divf %6, %cst_2 : f32
    %8 = arith.mulf %0, %0 : vector<128x128xf32>
    %9 = vector.shape_cast %8 : vector<128x128xf32> to vector<1x128x128xf32>
    %cst_3 = arith.constant dense<0.000000e+00> : vector<1xf32>
    %10 = vector.multi_reduction <add>, %9, %cst_3 [1, 2] : vector<1x128x128xf32> to vector<1xf32>
    %11 = vector.shape_cast %10 : vector<1xf32> to vector<1x1x1xf32>
    %12 = vector.extract %11[0, 0, 0] : f32 from vector<1x1x1xf32>
    %cst_4 = arith.constant 1.638400e+04 : f32
    %13 = arith.divf %12, %cst_4 : f32
    %14 = arith.mulf %7, %7 : f32
    %15 = arith.subf %13, %14 : f32
    %cst_5 = arith.constant 0.000000e+00 : f32
    %16 = arith.maximumf %15, %cst_5 : f32
    %17 = vector.broadcast %7 : f32 to vector<128x128xf32>
    %18 = arith.subf %0, %17 : vector<128x128xf32>
    %cst_6 = arith.constant 9.99999974E-6 : f32
    %19 = arith.addf %16, %cst_6 : f32
    %20 = math.rsqrt %19 : f32
    %21 = arith.mulf %20, %1 : f32
    %22 = vector.broadcast %21 : f32 to vector<128x128xf32>
    %23 = arith.mulf %18, %22 : vector<128x128xf32>
    %24 = vector.broadcast %2 : f32 to vector<128x128xf32>
    %25 = arith.addf %23, %24 : vector<128x128xf32>
    %c0_7 = arith.constant 0 : index
    %c0_8 = arith.constant 0 : index
    %26 = vector.load %arg5[%c0_7, %c0_8] : memref<1x1216xf32, #tpu.memory_space<vmem>>, vector<1x128xf32>
    %c0_9 = arith.constant 0 : index
    %c128 = arith.constant 128 : index
    %27 = vector.load %arg5[%c0_9, %c128] : memref<1x1216xf32, #tpu.memory_space<vmem>>, vector<1x128xf32>
    %cst_10 = arith.constant dense<0.000000e+00> : vector<128xf32>
    %28 = vector.multi_reduction <add>, %25, %cst_10 [0] : vector<128x128xf32> to vector<128xf32>
    %29 = vector.shape_cast %28 : vector<128xf32> to vector<1x128xf32>
    %cst_11 = arith.constant 1.280000e+02 : f32
    %30 = vector.broadcast %cst_11 : f32 to vector<1x128xf32>
    %31 = arith.divf %29, %30 : vector<1x128xf32>
    %32 = arith.mulf %25, %25 : vector<128x128xf32>
    %cst_12 = arith.constant dense<0.000000e+00> : vector<128xf32>
    %33 = vector.multi_reduction <add>, %32, %cst_12 [0] : vector<128x128xf32> to vector<128xf32>
    %34 = vector.shape_cast %33 : vector<128xf32> to vector<1x128xf32>
    %cst_13 = arith.constant 1.280000e+02 : f32
    %35 = vector.broadcast %cst_13 : f32 to vector<1x128xf32>
    %36 = arith.divf %34, %35 : vector<1x128xf32>
    %37 = arith.mulf %31, %31 : vector<1x128xf32>
    %38 = arith.subf %36, %37 : vector<1x128xf32>
    %cst_14 = arith.constant 0.000000e+00 : f32
    %39 = vector.broadcast %cst_14 : f32 to vector<1x128xf32>
    %40 = arith.maximumf %38, %39 : vector<1x128xf32>
    %41 = vector.broadcast %31 : vector<1x128xf32> to vector<128x128xf32>
    %42 = arith.subf %25, %41 : vector<128x128xf32>
    %cst_15 = arith.constant 9.99999974E-6 : f32
    %43 = vector.broadcast %cst_15 : f32 to vector<1x128xf32>
    %44 = arith.addf %40, %43 : vector<1x128xf32>
    %45 = math.rsqrt %44 : vector<1x128xf32>
    %46 = arith.mulf %45, %26 : vector<1x128xf32>
    %47 = vector.broadcast %46 : vector<1x128xf32> to vector<128x128xf32>
    %48 = arith.mulf %42, %47 : vector<128x128xf32>
    %49 = vector.broadcast %27 : vector<1x128xf32> to vector<128x128xf32>
    %50 = arith.addf %48, %49 : vector<128x128xf32>
    %c0_16 = arith.constant 0 : index
    %c0_17 = arith.constant 0 : index
    %51 = vector.load %arg6[%c0_16, %c0_17] : memref<128x256xf32, #tpu.memory_space<vmem>>, vector<128x256xf32>
    %cst_18 = arith.constant dense<0.000000e+00> : vector<128x256xf32>
    %52 = tpu.matmul %50, %51, %cst_18 {dimension_numbers = #tpu.dot_dimension_numbers<[1], [0], [0], [1], [0, 0, 1, 1], [], []>} : vector<128x128xf32>, vector<128x256xf32>, vector<128x256xf32> -> vector<128x256xf32>
    %c0_19 = arith.constant 0 : index
    %c256 = arith.constant 256 : index
    %53 = vector.load %arg5[%c0_19, %c256] : memref<1x1216xf32, #tpu.memory_space<vmem>>, vector<1x256xf32>
    %54 = vector.broadcast %53 : vector<1x256xf32> to vector<128x256xf32>
    %55 = arith.addf %52, %54 : vector<128x256xf32>
    %cst_20 = arith.constant 0.000000e+00 : f32
    %56 = vector.broadcast %cst_20 : f32 to vector<128x256xf32>
    %57 = arith.maximumf %55, %56 : vector<128x256xf32>
    %c0_21 = arith.constant 0 : index
    %c512 = arith.constant 512 : index
    %58 = vector.load %arg5[%c0_21, %c512] : memref<1x1216xf32, #tpu.memory_space<vmem>>, vector<1x256xf32>
    %c0_22 = arith.constant 0 : index
    %c768 = arith.constant 768 : index
    %59 = vector.load %arg5[%c0_22, %c768] : memref<1x1216xf32, #tpu.memory_space<vmem>>, vector<1x256xf32>
    %cst_23 = arith.constant dense<0.000000e+00> : vector<256xf32>
    %60 = vector.multi_reduction <add>, %57, %cst_23 [0] : vector<128x256xf32> to vector<256xf32>
    %61 = vector.shape_cast %60 : vector<256xf32> to vector<1x256xf32>
    %cst_24 = arith.constant 1.280000e+02 : f32
    %62 = vector.broadcast %cst_24 : f32 to vector<1x256xf32>
    %63 = arith.divf %61, %62 : vector<1x256xf32>
    %64 = arith.mulf %57, %57 : vector<128x256xf32>
    %cst_25 = arith.constant dense<0.000000e+00> : vector<256xf32>
    %65 = vector.multi_reduction <add>, %64, %cst_25 [0] : vector<128x256xf32> to vector<256xf32>
    %66 = vector.shape_cast %65 : vector<256xf32> to vector<1x256xf32>
    %cst_26 = arith.constant 1.280000e+02 : f32
    %67 = vector.broadcast %cst_26 : f32 to vector<1x256xf32>
    %68 = arith.divf %66, %67 : vector<1x256xf32>
    %69 = arith.mulf %63, %63 : vector<1x256xf32>
    %70 = arith.subf %68, %69 : vector<1x256xf32>
    %cst_27 = arith.constant 0.000000e+00 : f32
    %71 = vector.broadcast %cst_27 : f32 to vector<1x256xf32>
    %72 = arith.maximumf %70, %71 : vector<1x256xf32>
    %73 = vector.broadcast %63 : vector<1x256xf32> to vector<128x256xf32>
    %74 = arith.subf %57, %73 : vector<128x256xf32>
    %cst_28 = arith.constant 9.99999974E-6 : f32
    %75 = vector.broadcast %cst_28 : f32 to vector<1x256xf32>
    %76 = arith.addf %72, %75 : vector<1x256xf32>
    %77 = math.rsqrt %76 : vector<1x256xf32>
    %78 = arith.mulf %77, %58 : vector<1x256xf32>
    %79 = vector.broadcast %78 : vector<1x256xf32> to vector<128x256xf32>
    %80 = arith.mulf %74, %79 : vector<128x256xf32>
    %81 = vector.broadcast %59 : vector<1x256xf32> to vector<128x256xf32>
    %82 = arith.addf %80, %81 : vector<128x256xf32>
    %c0_29 = arith.constant 0 : index
    %c0_30 = arith.constant 0 : index
    %83 = vector.load %arg7[%c0_29, %c0_30] : memref<256x128xf32, #tpu.memory_space<vmem>>, vector<256x128xf32>
    %cst_31 = arith.constant dense<0.000000e+00> : vector<128x128xf32>
    %84 = tpu.matmul %82, %83, %cst_31 {dimension_numbers = #tpu.dot_dimension_numbers<[1], [0], [0], [1], [0, 0, 1, 1], [], []>} : vector<128x256xf32>, vector<256x128xf32>, vector<128x128xf32> -> vector<128x128xf32>
    %c0_32 = arith.constant 0 : index
    %c1024 = arith.constant 1024 : index
    %85 = vector.load %arg5[%c0_32, %c1024] : memref<1x1216xf32, #tpu.memory_space<vmem>>, vector<1x128xf32>
    %86 = vector.broadcast %85 : vector<1x128xf32> to vector<128x128xf32>
    %87 = arith.addf %84, %86 : vector<128x128xf32>
    %cst_33 = arith.constant 0.000000e+00 : f32
    %88 = vector.broadcast %cst_33 : f32 to vector<128x128xf32>
    %89 = arith.maximumf %87, %88 : vector<128x128xf32>
    %c0_34 = arith.constant 0 : index
    %c0_35 = arith.constant 0 : index
    %90 = vector.load %arg8[%c0_34, %c0_35] : memref<128x64xf32, #tpu.memory_space<vmem>>, vector<128x64xf32>
    %cst_36 = arith.constant dense<0.000000e+00> : vector<128x64xf32>
    %91 = tpu.matmul %89, %90, %cst_36 {dimension_numbers = #tpu.dot_dimension_numbers<[1], [0], [0], [1], [0, 0, 1, 1], [], []>} : vector<128x128xf32>, vector<128x64xf32>, vector<128x64xf32> -> vector<128x64xf32>
    %c0_37 = arith.constant 0 : index
    %c1152 = arith.constant 1152 : index
    %92 = vector.load %arg5[%c0_37, %c1152] : memref<1x1216xf32, #tpu.memory_space<vmem>>, vector<1x64xf32>
    %93 = vector.broadcast %92 : vector<1x64xf32> to vector<128x64xf32>
    %94 = arith.addf %91, %93 : vector<128x64xf32>
    %c0_38 = arith.constant 0 : index
    %c0_39 = arith.constant 0 : index
    %95 = vector.load %arg3[%c0_38, %c0_39] : memref<128x128xf32, #tpu.memory_space<vmem>>, vector<128x128xf32>
    %96 = vector.extract_strided_slice %95 {offsets = [0, 0], sizes = [128, 64], strides = [1, 1]} : vector<128x128xf32> to vector<128x64xf32>
    %97 = math.cos %94 : vector<128x64xf32>
    %98 = arith.mulf %96, %97 : vector<128x64xf32>
    %99 = vector.extract_strided_slice %95 {offsets = [0, 64], sizes = [128, 64], strides = [1, 1]} : vector<128x128xf32> to vector<128x64xf32>
    %100 = math.sin %94 : vector<128x64xf32>
    %101 = arith.mulf %99, %100 : vector<128x64xf32>
    %102 = arith.addf %98, %101 : vector<128x64xf32>
    %cst_40 = arith.constant dense<0.000000e+00> : vector<128xf32>
    %103 = vector.multi_reduction <add>, %102, %cst_40 [1] : vector<128x64xf32> to vector<128xf32>
    %104 = vector.shape_cast %103 : vector<128xf32> to vector<128x1xf32>
    %c0_41 = arith.constant 0 : index
    %c0_42 = arith.constant 0 : index
    %105 = vector.load %arg4[%c0_41, %c0_42] : memref<128x1xf32, #tpu.memory_space<vmem>>, vector<128x1xf32>
    %cst_43 = arith.constant 1.562500e-02 : f32
    %106 = vector.broadcast %cst_43 : f32 to vector<128x1xf32>
    %107 = arith.mulf %105, %106 : vector<128x1xf32>
    %108 = arith.mulf %104, %104 : vector<128x1xf32>
    %109 = arith.mulf %107, %108 : vector<128x1xf32>
    %110 = math.log1p %109 : vector<128x1xf32>
    %cst_44 = arith.constant 1.44269502 : f32
    %111 = vector.broadcast %cst_44 : f32 to vector<128x1xf32>
    %112 = arith.mulf %110, %111 : vector<128x1xf32>
    %cst_45 = arith.constant 0.000000e+00 : f32
    %113 = vector.broadcast %cst_45 : f32 to vector<128x1xf32>
    %114 = arith.subf %113, %112 : vector<128x1xf32>
    %c0_46 = arith.constant 0 : index
    %c0_47 = arith.constant 0 : index
    %115 = vector.load %arg9[%c0_46, %c0_47] : memref<128x1xf32, #tpu.memory_space<vmem>>, vector<128x1xf32>
    tpu.vector_store %arg9[%c0_46, %c0_47], %114 {strides = array<i32>} : memref<128x1xf32, #tpu.memory_space<vmem>>, vector<128x1xf32>,
    return
  }
  func.func @transform_0(%arg0: i32) -> i32 {
    %c0_i32 = arith.constant 0 : i32
    %c0_i32_0 = arith.constant 0 : i32
    return %c0_i32 : i32
  }
  func.func @transform_1(%arg0: i32) -> (i32, i32) {
    %c0_i32 = arith.constant 0 : i32
    %c0_i32_0 = arith.constant 0 : i32
    %c0_i32_1 = arith.constant 0 : i32
    return %c0_i32, %c0_i32_0 : i32, i32
  }
  func.func @transform_2(%arg0: i32) -> (i32, i32) {
    %c0_i32 = arith.constant 0 : i32
    %c0_i32_0 = arith.constant 0 : i32
    %c0_i32_1 = arith.constant 0 : i32
    return %c0_i32, %c0_i32_0 : i32, i32
  }
  func.func @transform_3(%arg0: i32) -> (i32, i32) {
    %c0_i32 = arith.constant 0 : i32
    %c0_i32_0 = arith.constant 0 : i32
    %c0_i32_1 = arith.constant 0 : i32
    return %c0_i32, %c0_i32_0 : i32, i32
  }
  func.func @transform_4(%arg0: i32) -> (i32, i32) {
    %c0_i32 = arith.constant 0 : i32
    %c0_i32_0 = arith.constant 0 : i32
    %c0_i32_1 = arith.constant 0 : i32
    return %c0_i32, %c0_i32_0 : i32, i32
  }
  func.func @transform_5(%arg0: i32) -> (i32, i32) {
    %c0_i32 = arith.constant 0 : i32
    %c0_i32_0 = arith.constant 0 : i32
    %c0_i32_1 = arith.constant 0 : i32
    return %c0_i32, %c0_i32_0 : i32, i32
  }
  func.func @transform_6(%arg0: i32) -> (i32, i32) {
    %c0_i32 = arith.constant 0 : i32
    %c0_i32_0 = arith.constant 0 : i32
    %c0_i32_1 = arith.constant 0 : i32
    return %c0_i32, %c0_i32_0 : i32, i32
  }
  func.func @transform_7(%arg0: i32) -> (i32, i32) {
    %c0_i32 = arith.constant 0 : i32
    %c0_i32_0 = arith.constant 0 : i32
    %c0_i32_1 = arith.constant 0 : i32
    return %c0_i32, %c0_i32_0 : i32, i32
  }
  func.func @transform_8(%arg0: i32) -> (i32, i32) {
    %c0_i32 = arith.constant 0 : i32
    %c0_i32_0 = arith.constant 0 : i32
    %c0_i32_1 = arith.constant 0 : i32
    return %c0_i32, %c0_i32_0 : i32, i32
  }
}

</mosaic_0001>

<llo_original>
// kernel: tpu_custom_call.1
$region0: #{tpu_custom_call.1}
  #allocation0 [shape = 'u32[]', space=smem, size = 0x4, offset = 0x4, fixed_abs, tag = 'smem constant byte address 0x4 - core index']
  #allocation1 [shape = 'u32[72,128]{1,0:T(1,128)}', space=vmem, size = 0x9000, scoped, tag = 'internal scratch']
  %s0 = inlined_call_operand.vmem [shape: f32[2], index: 0, kind: input, shape index: {}]
  %s1 = inlined_call_operand.hbm [shape: f32[128,128], index: 1, kind: input, shape index: {}]
  %s2 = inlined_call_operand.hbm [shape: f32[128,128], index: 2, kind: input, shape index: {}]
  %s3 = inlined_call_operand.vmem [shape: f32[128,1], index: 3, kind: input, shape index: {}]
  %s4 = inlined_call_operand.hbm [shape: f32[1,1216], index: 4, kind: input, shape index: {}]
  %s5 = inlined_call_operand.vmem [shape: f32[128,256], index: 5, kind: input, shape index: {}]
  %s6 = inlined_call_operand.hbm [shape: f32[256,128], index: 6, kind: input, shape index: {}]
  %s7 = inlined_call_operand.vmem [shape: f32[128,64], index: 7, kind: input, shape index: {}]
  %s8 = inlined_call_operand.vmem [shape: f32[128,1], index: 8, kind: output, shape index: {}]
  %s9 = sld [smem:[#allocation0]]
  $region62: #{tpu_custom_call.1} parent=0
    _
  %s11 = ssub.s32 1, %s9
  %s12 = scalar_select 0, %s11, %s9
  $region1: #{tpu_custom_call.1} parent=0
    #allocation2 [shape = 'u8[512]{0}', space=smem, size = 0x200, scoped, tag = 'input window, operand 0, single buffered']
    #allocation3 [shape = 's32[1]{0}', space=sflag, size = 0x4, scoped, tag = 'scoped memory for tpu_custom_call.1']
    #allocation4 [shape = 's32[1]{0}', space=sflag, size = 0x4, scoped, tag = 'scoped memory for tpu_custom_call.1']
    #allocation5 [shape = 'u8[65536]{0}', space=vmem, size = 0x10000, scoped, tag = 'input window, operand 1, single buffered']
    #allocation6 [shape = 'u8[65536]{0}', space=vmem, size = 0x10000, scoped, tag = 'input window, operand 2, single buffered']
    #allocation7 [shape = 's32[1]{0}', space=sflag, size = 0x4, scoped, tag = 'scoped memory for tpu_custom_call.1']
    #allocation8 [shape = 'u8[5120]{0}', space=vmem, size = 0x1400, scoped, tag = 'input window, operand 4, single buffered']
    #allocation9 [shape = 'u8[131072]{0}', space=vmem, size = 0x20000, scoped, tag = 'input window, operand 6, single buffered']
    #allocation10 [shape = 's32[1]{0}', space=sflag, size = 0x4, scoped, tag = 'scoped memory for tpu_custom_call.1']
    %13 = vsyncpa [#allocation4], 0
    %14 = vsyncpa [#allocation3], 0
    %15 = vsyncpa [#allocation7], 0
    %16 = vsyncpa [#allocation10], 0
    // Predicated region
    $region2: #{tpu_custom_call.1} parent=1 // pred_check
      _
    $region3: #{tpu_custom_call.1} parent=1 // pred_check_branch
      %18 = sbr.rel (0) target = $region5
    $region4: #{tpu_custom_call.1} parent=1 // pred_region
      %20 = vsyncadd [#allocation4], 0
      %s22 = sshll.u32 %s0, 4
      %s23 = int_to_ptr.vmem [resolvable:$true] %s22
      %25 = dma.vmem_to_smem %s23, 16, [#allocation2], [#allocation4]
    $region5: #{tpu_custom_call.1} parent=1 // pred_fallthru
      _
    // Predicated region
    $region6: #{tpu_custom_call.1} parent=1 // pred_check
      _
    $region7: #{tpu_custom_call.1} parent=1 // pred_check_branch
      %27 = sbr.rel (0) target = $region9
    $region8: #{tpu_custom_call.1} parent=1 // pred_region
      %29 = vsyncadd [#allocation3], 0
      %s30 = sshll.u32 %s1, 4
      %s31 = int_to_ptr.hbm [resolvable:$true] %s30
      %s32 = sshll.u32 [#allocation5], 4
      %s33 = int_to_ptr.vmem [resolvable:$true] %s32
      %38 = dma.hbm_to_vmem [thread:$0]  %s31, 2048, %s33, [#allocation3], 128, 128, 8
    $region9: #{tpu_custom_call.1} parent=1 // pred_fallthru
      _
    // Predicated region
    $region10: #{tpu_custom_call.1} parent=1 // pred_check
      _
    $region11: #{tpu_custom_call.1} parent=1 // pred_check_branch
      %40 = sbr.rel (0) target = $region13
    $region12: #{tpu_custom_call.1} parent=1 // pred_region
      %42 = vsyncadd [#allocation7], 0
      %s43 = sshll.u32 %s2, 4
      %s44 = int_to_ptr.hbm [resolvable:$true] %s43
      %s45 = sshll.u32 [#allocation6], 4
      %s46 = int_to_ptr.vmem [resolvable:$true] %s45
      %51 = dma.hbm_to_vmem [thread:$0]  %s44, 2048, %s46, [#allocation7], 128, 128, 8
    $region13: #{tpu_custom_call.1} parent=1 // pred_fallthru
      _
    // Predicated region
    $region14: #{tpu_custom_call.1} parent=1 // pred_check
      _
    $region15: #{tpu_custom_call.1} parent=1 // pred_check_branch
      %53 = sbr.rel (0) target = $region17
    $region16: #{tpu_custom_call.1} parent=1 // pred_region
      _
    $region17: #{tpu_custom_call.1} parent=1 // pred_fallthru
      _
    // Predicated region
    $region18: #{tpu_custom_call.1} parent=1 // pred_check
      _
    $region19: #{tpu_custom_call.1} parent=1 // pred_check_branch
      %55 = sbr.rel (0) target = $region21
    $region20: #{tpu_custom_call.1} parent=1 // pred_region
      %57 = vsyncadd [#allocation7], 0
      %s59 = sshll.u32 %s4, 4
      %s60 = int_to_ptr.hbm [resolvable:$true] %s59
      %s61 = sshll.u32 [#allocation8], 4
      %s62 = int_to_ptr.vmem [resolvable:$true] %s61
      %64 = dma.hbm_to_vmem [thread:$0]  %s60, 160, %s62, [#allocation7]
    $region21: #{tpu_custom_call.1} parent=1 // pred_fallthru
      _
    // Predicated region
    $region22: #{tpu_custom_call.1} parent=1 // pred_check
      _
    $region23: #{tpu_custom_call.1} parent=1 // pred_check_branch
      %66 = sbr.rel (0) target = $region25
    $region24: #{tpu_custom_call.1} parent=1 // pred_region
      _
    $region25: #{tpu_custom_call.1} parent=1 // pred_fallthru
      _
    // Predicated region
    $region26: #{tpu_custom_call.1} parent=1 // pred_check
      _
    $region27: #{tpu_custom_call.1} parent=1 // pred_check_branch
      %68 = sbr.rel (0) target = $region29
    $region28: #{tpu_custom_call.1} parent=1 // pred_region
      %70 = vsyncadd [#allocation10], 0
      %s71 = sshll.u32 %s6, 4
      %s72 = int_to_ptr.hbm [resolvable:$true] %s71
      %s73 = sshll.u32 [#allocation9], 4
      %s74 = int_to_ptr.vmem [resolvable:$true] %s73
      %79 = dma.hbm_to_vmem [thread:$0]  %s72, 4096, %s74, [#allocation10], 128, 128, 8
    $region29: #{tpu_custom_call.1} parent=1 // pred_fallthru
      _
    // Predicated region
    $region30: #{tpu_custom_call.1} parent=1 // pred_check
      _
    $region31: #{tpu_custom_call.1} parent=1 // pred_check_branch
      %81 = sbr.rel (0) target = $region33
    $region32: #{tpu_custom_call.1} parent=1 // pred_region
      _
    $region33: #{tpu_custom_call.1} parent=1 // pred_fallthru
      _
    // Predicated region
    $region34: #{tpu_custom_call.1} parent=1 // pred_check
      _
    $region35: #{tpu_custom_call.1} parent=1 // pred_check_branch
      %83 = sbr.rel (0) target = $region37
    $region36: #{tpu_custom_call.1} parent=1 // pred_region
      %85 = dma.done [#allocation4], 16
    $region37: #{tpu_custom_call.1} parent=1 // pred_fallthru
      _
    // Predicated region
    $region38: #{tpu_custom_call.1} parent=1 // pred_check
      _
    $region39: #{tpu_custom_call.1} parent=1 // pred_check_branch
      %87 = sbr.rel (0) target = $region41
    $region40: #{tpu_custom_call.1} parent=1 // pred_region
      %89 = dma.done [#allocation3], 2048
    $region41: #{tpu_custom_call.1} parent=1 // pred_fallthru
      _
    // Predicated region
    $region42: #{tpu_custom_call.1} parent=1 // pred_check
      _
    $region43: #{tpu_custom_call.1} parent=1 // pred_check_branch
      %91 = sbr.rel (0) target = $region45
    $region44: #{tpu_custom_call.1} parent=1 // pred_region
      %93 = dma.done [#allocation7], 2048
    $region45: #{tpu_custom_call.1} parent=1 // pred_fallthru
      _
    // Predicated region
    $region46: #{tpu_custom_call.1} parent=1 // pred_check
      _
    $region47: #{tpu_custom_call.1} parent=1 // pred_check_branch
      %95 = sbr.rel (0) target = $region49
    $region48: #{tpu_custom_call.1} parent=1 // pred_region
      %97 = dma.done [#allocation7], 160
    $region49: #{tpu_custom_call.1} parent=1 // pred_fallthru
      _
    // Predicated region
    $region50: #{tpu_custom_call.1} parent=1 // pred_check
      _
    $region51: #{tpu_custom_call.1} parent=1 // pred_check_branch
      %99 = sbr.rel (0) target = $region53
    $region52: #{tpu_custom_call.1} parent=1 // pred_region
      %101 = dma.done [#allocation10], 4096
    $region53: #{tpu_custom_call.1} parent=1 // pred_fallthru
      _
    %102 = sfence
    %v103 = vld [vmem:[#allocation5] sm:$0xff]
    %v104 = vld [vmem:[#allocation5 + $0x8] sm:$0xff]
    %v105 = vld [vmem:[#allocation5 + $0x10] sm:$0xff]
    %v106 = vld [vmem:[#allocation5 + $0x18] sm:$0xff]
    %v107 = vld [vmem:[#allocation5 + $0x20] sm:$0xff]
    %v108 = vld [vmem:[#allocation5 + $0x28] sm:$0xff]
    %v109 = vld [vmem:[#allocation5 + $0x30] sm:$0xff]
    %v110 = vld [vmem:[#allocation5 + $0x38] sm:$0xff]
    %v111 = vld [vmem:[#allocation5 + $0x40] sm:$0xff]
    %v112 = vld [vmem:[#allocation5 + $0x48] sm:$0xff]
    %v113 = vld [vmem:[#allocation5 + $0x50] sm:$0xff]
    %v114 = vld [vmem:[#allocation5 + $0x58] sm:$0xff]
    %v115 = vld [vmem:[#allocation5 + $0x60] sm:$0xff]
    %v116 = vld [vmem:[#allocation5 + $0x68] sm:$0xff]
    %v117 = vld [vmem:[#allocation5 + $0x70] sm:$0xff]
    %v118 = vld [vmem:[#allocation5 + $0x78] sm:$0xff]
    %s119 = sld [smem:[#allocation2]]
    %s120 = sld [smem:[#allocation2 + $0x1]]
    %v121 = vadd.f32 %v103, %v104
    %v122 = vadd.f32 %v121, %v105
    %v123 = vadd.f32 %v122, %v106
    %v124 = vadd.f32 %v123, %v107
    %v125 = vadd.f32 %v124, %v108
    %v126 = vadd.f32 %v125, %v109
    %v127 = vadd.f32 %v126, %v110
    %v128 = vadd.f32 %v127, %v111
    %v129 = vadd.f32 %v128, %v112
    %v130 = vadd.f32 %v129, %v113
    %v131 = vadd.f32 %v130, %v114
    %v132 = vadd.f32 %v131, %v115
    %v133 = vadd.f32 %v132, %v116
    %v134 = vadd.f32 %v133, %v117
    %v135 = vadd.f32 %v134, %v118
    %136 = vadd.xlane.f32.xlu0 %v135
    %v137 = vpop.xlane.xlu0 %136
    %v138 = vrot.slane %v137, 4
    %v139 = vadd.f32 %v137, %v138
    %v140 = vrot.slane %v139, 2
    %v141 = vadd.f32 %v139, %v140
    %v142 = vrot.slane %v141, 1
    %v143 = vadd.f32 %v141, %v142
    %s144 = vtos %v143
    %v145 = vrcp.pop 16384.0
    %v146 = vmul.f32 16384.0, %v145
    %v147 = vsub.f32 1.0, %v146
    %v148 = vmul.f32 %v145, %v147
    %v149 = vadd.f32 %v145, %v148
    %vm150 = vweird.f32 %v145
    %v151 = vsel %vm150, %v145, %v149
    %s152 = vtos %v151
    %s153 = smul.f32 %s144, %s152
    %v154 = vmul.f32 %v103, %v103
    %v155 = vmul.f32 %v104, %v104
    %v156 = vmul.f32 %v105, %v105
    %v157 = vmul.f32 %v106, %v106
    %v158 = vmul.f32 %v107, %v107
    %v159 = vmul.f32 %v108, %v108
    %v160 = vmul.f32 %v109, %v109
    %v161 = vmul.f32 %v110, %v110
    %v162 = vmul.f32 %v111, %v111
    %v163 = vmul.f32 %v112, %v112
    %v164 = vmul.f32 %v113, %v113
    %v165 = vmul.f32 %v114, %v114
    %v166 = vmul.f32 %v115, %v115
    %v167 = vmul.f32 %v116, %v116
    %v168 = vmul.f32 %v117, %v117
    %v169 = vmul.f32 %v118, %v118
    %v170 = vadd.f32 %v154, %v155
    %v171 = vadd.f32 %v170, %v156
    %v172 = vadd.f32 %v171, %v157
    %v173 = vadd.f32 %v172, %v158
    %v174 = vadd.f32 %v173, %v159
    %v175 = vadd.f32 %v174, %v160
    %v176 = vadd.f32 %v175, %v161
    %v177 = vadd.f32 %v176, %v162
    %v178 = vadd.f32 %v177, %v163
    %v179 = vadd.f32 %v178, %v164
    %v180 = vadd.f32 %v179, %v165
    %v181 = vadd.f32 %v180, %v166
    %v182 = vadd.f32 %v181, %v167
    %v183 = vadd.f32 %v182, %v168
    %v184 = vadd.f32 %v183, %v169
    %185 = vadd.xlane.f32.xlu0 %v184
    %v186 = vpop.xlane.xlu0 %185
    %v187 = vrot.slane %v186, 4
    %v188 = vadd.f32 %v186, %v187
    %v189 = vrot.slane %v188, 2
    %v190 = vadd.f32 %v188, %v189
    %v191 = vrot.slane %v190, 1
    %v192 = vadd.f32 %v190, %v191
    %s193 = vtos %v192
    %v194 = vrcp.pop 16384.0
    %v195 = vmul.f32 16384.0, %v194
    %v196 = vsub.f32 1.0, %v195
    %v197 = vmul.f32 %v194, %v196
    %v198 = vadd.f32 %v194, %v197
    %vm199 = vweird.f32 %v194
    %v200 = vsel %vm199, %v194, %v198
    %s201 = vtos %v200
    %s202 = smul.f32 %s193, %s201
    %s203 = smul.f32 %s153, %s153
    %s204 = ssub.f32 %s202, %s203
    %s205 = smax.f32 %s204, 0.0
    %v206 = vstv %s153
    %v207 = vsub.f32 %v103, %v206
    %v208 = vsub.f32 %v104, %v206
    %v209 = vsub.f32 %v105, %v206
    %v210 = vsub.f32 %v106, %v206
    %v211 = vsub.f32 %v107, %v206
    %v212 = vsub.f32 %v108, %v206
    %v213 = vsub.f32 %v109, %v206
    %v214 = vsub.f32 %v110, %v206
    %v215 = vsub.f32 %v111, %v206
    %v216 = vsub.f32 %v112, %v206
    %v217 = vsub.f32 %v113, %v206
    %v218 = vsub.f32 %v114, %v206
    %v219 = vsub.f32 %v115, %v206
    %v220 = vsub.f32 %v116, %v206
    %v221 = vsub.f32 %v117, %v206
    %v222 = vsub.f32 %v118, %v206
    %s223 = sadd.f32 %s205, 1e-05
    %v224 = vstv %s223
    %v225 = vrsqrt.pop %v224
    %v226 = vmul.f32 %v225, %v224
    %v227 = vmul.f32 %v226, %v225
    %v228 = vmul.f32 0.5, %v227
    %v229 = vsub.f32 1.5, %v228
    %v230 = vmul.f32 %v225, %v229
    %vm231 = vweird.f32 %v224
    %vm232 = vweird.f32 %v225
    %vm233 = vmor %vm231, %vm232
    %v234 = vsel %vm233, %v225, %v230
    %s235 = vtos %v234
    %s236 = smul.f32 %s235, %s119
    %v237 = vstv %s236
    %v238 = vmul.f32 %v207, %v237
    %v239 = vmul.f32 %v208, %v237
    %v240 = vmul.f32 %v209, %v237
    %v241 = vmul.f32 %v210, %v237
    %v242 = vmul.f32 %v211, %v237
    %v243 = vmul.f32 %v212, %v237
    %v244 = vmul.f32 %v213, %v237
    %v245 = vmul.f32 %v214, %v237
    %v246 = vmul.f32 %v215, %v237
    %v247 = vmul.f32 %v216, %v237
    %v248 = vmul.f32 %v217, %v237
    %v249 = vmul.f32 %v218, %v237
    %v250 = vmul.f32 %v219, %v237
    %v251 = vmul.f32 %v220, %v237
    %v252 = vmul.f32 %v221, %v237
    %v253 = vmul.f32 %v222, %v237
    %v254 = vstv %s120
    %v255 = vadd.f32 %v238, %v254
    %v256 = vadd.f32 %v239, %v254
    %v257 = vadd.f32 %v240, %v254
    %v258 = vadd.f32 %v241, %v254
    %v259 = vadd.f32 %v242, %v254
    %v260 = vadd.f32 %v243, %v254
    %v261 = vadd.f32 %v244, %v254
    %v262 = vadd.f32 %v245, %v254
    %v263 = vadd.f32 %v246, %v254
    %v264 = vadd.f32 %v247, %v254
    %v265 = vadd.f32 %v248, %v254
    %v266 = vadd.f32 %v249, %v254
    %v267 = vadd.f32 %v250, %v254
    %v268 = vadd.f32 %v251, %v254
    %v269 = vadd.f32 %v252, %v254
    %v270 = vadd.f32 %v253, %v254
    %v271 = vld [vmem:[#allocation8] sm:$0x1]
    %v272 = vld [vmem:[#allocation8 + $0x1] sm:$0x1]
    %v273 = vadd.f32 %v255, %v256
    %v274 = vadd.f32 %v273, %v257
    %v275 = vadd.f32 %v274, %v258
    %v276 = vadd.f32 %v275, %v259
    %v277 = vadd.f32 %v276, %v260
    %v278 = vadd.f32 %v277, %v261
    %v279 = vadd.f32 %v278, %v262
    %v280 = vadd.f32 %v279, %v263
    %v281 = vadd.f32 %v280, %v264
    %v282 = vadd.f32 %v281, %v265
    %v283 = vadd.f32 %v282, %v266
    %v284 = vadd.f32 %v283, %v267
    %v285 = vadd.f32 %v284, %v268
    %v286 = vadd.f32 %v285, %v269
    %v287 = vadd.f32 %v286, %v270
    %v288 = vrot.slane %v287, 4
    %v289 = vadd.f32 %v287, %v288
    %v290 = vrot.slane %v289, 2
    %v291 = vadd.f32 %v289, %v290
    %v292 = vrot.slane %v291, 1
    %v293 = vadd.f32 %v291, %v292
    %v294 = vrcp.pop 128.0
    %v295 = vmul.f32 128.0, %v294
    %v296 = vsub.f32 1.0, %v295
    %v297 = vmul.f32 %v294, %v296
    %v298 = vadd.f32 %v294, %v297
    %vm299 = vweird.f32 %v294
    %v300 = vsel %vm299, %v294, %v298
    %v301 = vmul.f32 %v293, %v300
    %v302 = vmul.f32 %v255, %v255
    %v303 = vmul.f32 %v256, %v256
    %v304 = vmul.f32 %v257, %v257
    %v305 = vmul.f32 %v258, %v258
    %v306 = vmul.f32 %v259, %v259
    %v307 = vmul.f32 %v260, %v260
    %v308 = vmul.f32 %v261, %v261
    %v309 = vmul.f32 %v262, %v262
    %v310 = vmul.f32 %v263, %v263
    %v311 = vmul.f32 %v264, %v264
    %v312 = vmul.f32 %v265, %v265
    %v313 = vmul.f32 %v266, %v266
    %v314 = vmul.f32 %v267, %v267
    %v315 = vmul.f32 %v268, %v268
    %v316 = vmul.f32 %v269, %v269
    %v317 = vmul.f32 %v270, %v270
    %v318 = vadd.f32 %v302, %v303
    %v319 = vadd.f32 %v318, %v304
    %v320 = vadd.f32 %v319, %v305
    %v321 = vadd.f32 %v320, %v306
    %v322 = vadd.f32 %v321, %v307
    %v323 = vadd.f32 %v322, %v308
    %v324 = vadd.f32 %v323, %v309
    %v325 = vadd.f32 %v324, %v310
    %v326 = vadd.f32 %v325, %v311
    %v327 = vadd.f32 %v326, %v312
    %v328 = vadd.f32 %v327, %v313
    %v329 = vadd.f32 %v328, %v314
    %v330 = vadd.f32 %v329, %v315
    %v331 = vadd.f32 %v330, %v316
    %v332 = vadd.f32 %v331, %v317
    %v333 = vrot.slane %v332, 4
    %v334 = vadd.f32 %v332, %v333
    %v335 = vrot.slane %v334, 2
    %v336 = vadd.f32 %v334, %v335
    %v337 = vrot.slane %v336, 1
    %v338 = vadd.f32 %v336, %v337
    %v339 = vmul.f32 %v338, %v300
    %v340 = vmul.f32 %v301, %v301
    %v341 = vsub.f32 %v339, %v340
    %v342 = vmax.f32 %v341, 0.0
    %v343 = vsub.f32 %v255, %v301
    %v344 = vsub.f32 %v256, %v301
    %v345 = vsub.f32 %v257, %v301
    %v346 = vsub.f32 %v258, %v301
    %v347 = vsub.f32 %v259, %v301
    %v348 = vsub.f32 %v260, %v301
    %v349 = vsub.f32 %v261, %v301
    %v350 = vsub.f32 %v262, %v301
    %v351 = vsub.f32 %v263, %v301
    %v352 = vsub.f32 %v264, %v301
    %v353 = vsub.f32 %v265, %v301
    %v354 = vsub.f32 %v266, %v301
    %v355 = vsub.f32 %v267, %v301
    %v356 = vsub.f32 %v268, %v301
    %v357 = vsub.f32 %v269, %v301
    %v358 = vsub.f32 %v270, %v301
    %v359 = vadd.f32 %v342, 1e-05
    %v360 = vrsqrt.pop %v359
    %v361 = vmul.f32 %v360, %v359
    %v362 = vmul.f32 %v361, %v360
    %v363 = vmul.f32 0.5, %v362
    %v364 = vsub.f32 1.5, %v363
    %v365 = vmul.f32 %v360, %v364
    %vm366 = vweird.f32 %v359
    %vm367 = vweird.f32 %v360
    %vm368 = vmor %vm366, %vm367
    %v369 = vsel %vm368, %v360, %v365
    %v370 = vmul.f32 %v369, %v271
    %v371 = vperm.slane %v370, 0
    %v372 = vmul.f32 %v343, %v371
    %v373 = vmul.f32 %v344, %v371
    %v374 = vmul.f32 %v345, %v371
    %v375 = vmul.f32 %v346, %v371
    %v376 = vmul.f32 %v347, %v371
    %v377 = vmul.f32 %v348, %v371
    %v378 = vmul.f32 %v349, %v371
    %v379 = vmul.f32 %v350, %v371
    %v380 = vmul.f32 %v351, %v371
    %v381 = vmul.f32 %v352, %v371
    %v382 = vmul.f32 %v353, %v371
    %v383 = vmul.f32 %v354, %v371
    %v384 = vmul.f32 %v355, %v371
    %v385 = vmul.f32 %v356, %v371
    %v386 = vmul.f32 %v357, %v371
    %v387 = vmul.f32 %v358, %v371
    %v389 = vperm.slane %v272, 0
    %v391 = vadd.f32 %v372, %v389
    %v392 = vadd.f32 %v373, %v389
    %v393 = vadd.f32 %v374, %v389
    %v394 = vadd.f32 %v375, %v389
    %v395 = vadd.f32 %v376, %v389
    %v396 = vadd.f32 %v377, %v389
    %v397 = vadd.f32 %v378, %v389
    %v398 = vadd.f32 %v379, %v389
    %v399 = vadd.f32 %v380, %v389
    %v400 = vadd.f32 %v381, %v389
    %v401 = vadd.f32 %v382, %v389
    %v402 = vadd.f32 %v383, %v389
    %v403 = vadd.f32 %v384, %v389
    %v404 = vadd.f32 %v385, %v389
    %v405 = vadd.f32 %v386, %v389
    %v406 = vadd.f32 %v387, %v389
    %v407 = vld [vmem:[%s5] sm:$0xff]
    %v408 = vld [vmem:[%s5 + $0x8] sm:$0xff]
    %v409 = vld [vmem:[%s5 + $0x10] sm:$0xff]
    %v410 = vld [vmem:[%s5 + $0x18] sm:$0xff]
    %v411 = vld [vmem:[%s5 + $0x20] sm:$0xff]
    %v412 = vld [vmem:[%s5 + $0x28] sm:$0xff]
    %v413 = vld [vmem:[%s5 + $0x30] sm:$0xff]
    %v414 = vld [vmem:[%s5 + $0x38] sm:$0xff]
    %v415 = vld [vmem:[%s5 + $0x40] sm:$0xff]
    %v416 = vld [vmem:[%s5 + $0x48] sm:$0xff]
    %v417 = vld [vmem:[%s5 + $0x50] sm:$0xff]
    %v418 = vld [vmem:[%s5 + $0x58] sm:$0xff]
    %v419 = vld [vmem:[%s5 + $0x60] sm:$0xff]
    %v420 = vld [vmem:[%s5 + $0x68] sm:$0xff]
    %v421 = vld [vmem:[%s5 + $0x70] sm:$0xff]
    %v422 = vld [vmem:[%s5 + $0x78] sm:$0xff]
    %v423 = vld [vmem:[%s5 + $0x80] sm:$0xff]
    %v424 = vld [vmem:[%s5 + $0x88] sm:$0xff]
    %v425 = vld [vmem:[%s5 + $0x90] sm:$0xff]
    %v426 = vld [vmem:[%s5 + $0x98] sm:$0xff]
    %v427 = vld [vmem:[%s5 + $0xa0] sm:$0xff]
    %v428 = vld [vmem:[%s5 + $0xa8] sm:$0xff]
    %v429 = vld [vmem:[%s5 + $0xb0] sm:$0xff]
    %v430 = vld [vmem:[%s5 + $0xb8] sm:$0xff]
    %v431 = vld [vmem:[%s5 + $0xc0] sm:$0xff]
    %v432 = vld [vmem:[%s5 + $0xc8] sm:$0xff]
    %v433 = vld [vmem:[%s5 + $0xd0] sm:$0xff]
    %v434 = vld [vmem:[%s5 + $0xd8] sm:$0xff]
    %v435 = vld [vmem:[%s5 + $0xe0] sm:$0xff]
    %v436 = vld [vmem:[%s5 + $0xe8] sm:$0xff]
    %v437 = vld [vmem:[%s5 + $0xf0] sm:$0xff]
    %v438 = vld [vmem:[%s5 + $0xf8] sm:$0xff]
    %v439 = vld [vmem:[#allocation8 + $0x2] sm:$0x3]
    %v441 = vperm.slane %v439, 0
    %v442 = vperm.slane %v439, 1
    %445 = vmatpush.msra.mxu0 %v437
    %446 = vmatpush.msra.mxu0 %v435
    %447 = vmatpush.msra.mxu0 %v433
    %448 = vmatpush.msra.mxu0 %v431
    %449 = vmatpush.msra.mxu0 %v429
    %450 = vmatpush.msra.mxu0 %v427
    %451 = vmatpush.msra.mxu0 %v425
    %452 = vmatpush.msra.mxu0 %v423
    %453 = vmatpush.msra.mxu0 %v421
    %454 = vmatpush.msra.mxu0 %v419
    %455 = vmatpush.msra.mxu0 %v417
    %456 = vmatpush.msra.mxu0 %v415
    %457 = vmatpush.msra.mxu0 %v413
    %458 = vmatpush.msra.mxu0 %v411
    %459 = vmatpush.msra.mxu0 %v409
    %460 = vmatpush.msra.mxu0 %v407
    %461 = vmatmul.f32.gmra.mxu0 %v391
    %v462 = vpop.f32.mrf.mxu0
    %v463 = vadd.f32 %v441, %v462
    %464 = vmatmul.f32.gmra.mxu0 %v392
    %v465 = vpop.f32.mrf.mxu0
    %v466 = vadd.f32 %v441, %v465
    %467 = vmatmul.f32.gmra.mxu0 %v393
    %v468 = vpop.f32.mrf.mxu0
    %v469 = vadd.f32 %v441, %v468
    %470 = vmatmul.f32.gmra.mxu0 %v394
    %v471 = vpop.f32.mrf.mxu0
    %v472 = vadd.f32 %v441, %v471
    %473 = vmatmul.f32.gmra.mxu0 %v395
    %v474 = vpop.f32.mrf.mxu0
    %v475 = vadd.f32 %v441, %v474
    %476 = vmatmul.f32.gmra.mxu0 %v396
    %v477 = vpop.f32.mrf.mxu0
    %v478 = vadd.f32 %v441, %v477
    %479 = vmatmul.f32.gmra.mxu0 %v397
    %v480 = vpop.f32.mrf.mxu0
    %v481 = vadd.f32 %v441, %v480
    %482 = vmatmul.f32.gmra.mxu0 %v398
    %v483 = vpop.f32.mrf.mxu0
    %v484 = vadd.f32 %v441, %v483
    %485 = vmatmul.f32.gmra.mxu0 %v399
    %v486 = vpop.f32.mrf.mxu0
    %v487 = vadd.f32 %v441, %v486
    %488 = vmatmul.f32.gmra.mxu0 %v400
    %v489 = vpop.f32.mrf.mxu0
    %v490 = vadd.f32 %v441, %v489
    %491 = vmatmul.f32.gmra.mxu0 %v401
    %v492 = vpop.f32.mrf.mxu0
    %v493 = vadd.f32 %v441, %v492
    %494 = vmatmul.f32.gmra.mxu0 %v402
    %v495 = vpop.f32.mrf.mxu0
    %v496 = vadd.f32 %v441, %v495
    %497 = vmatmul.f32.gmra.mxu0 %v403
    %v498 = vpop.f32.mrf.mxu0
    %v499 = vadd.f32 %v441, %v498
    %500 = vmatmul.f32.gmra.mxu0 %v404
    %v501 = vpop.f32.mrf.mxu0
    %v502 = vadd.f32 %v441, %v501
    %503 = vmatmul.f32.gmra.mxu0 %v405
    %v504 = vpop.f32.mrf.mxu0
    %v505 = vadd.f32 %v441, %v504
    %506 = vmatmul.f32.gmra.mxu0 %v406
    %v507 = vpop.f32.mrf.mxu0
    %v508 = vadd.f32 %v441, %v507
    %509 = vdwg.mxu0
    %510 = vmatpush.msra.mxu0 %v438
    %511 = vmatpush.msra.mxu0 %v436
    %512 = vmatpush.msra.mxu0 %v434
    %513 = vmatpush.msra.mxu0 %v432
    %514 = vmatpush.msra.mxu0 %v430
    %515 = vmatpush.msra.mxu0 %v428
    %516 = vmatpush.msra.mxu0 %v426
    %517 = vmatpush.msra.mxu0 %v424
    %518 = vmatpush.msra.mxu0 %v422
    %519 = vmatpush.msra.mxu0 %v420
    %520 = vmatpush.msra.mxu0 %v418
    %521 = vmatpush.msra.mxu0 %v416
    %522 = vmatpush.msra.mxu0 %v414
    %523 = vmatpush.msra.mxu0 %v412
    %524 = vmatpush.msra.mxu0 %v410
    %525 = vmatpush.msra.mxu0 %v408
    %526 = vmatmul.f32.gmra.mxu0 %v391
    %v527 = vpop.f32.mrf.mxu0
    %v528 = vadd.f32 %v442, %v527
    %529 = vmatmul.f32.gmra.mxu0 %v392
    %v530 = vpop.f32.mrf.mxu0
    %v531 = vadd.f32 %v442, %v530
    %532 = vmatmul.f32.gmra.mxu0 %v393
    %v533 = vpop.f32.mrf.mxu0
    %v534 = vadd.f32 %v442, %v533
    %535 = vmatmul.f32.gmra.mxu0 %v394
    %v536 = vpop.f32.mrf.mxu0
    %v537 = vadd.f32 %v442, %v536
    %538 = vmatmul.f32.gmra.mxu0 %v395
    %v539 = vpop.f32.mrf.mxu0
    %v540 = vadd.f32 %v442, %v539
    %541 = vmatmul.f32.gmra.mxu0 %v396
    %v542 = vpop.f32.mrf.mxu0
    %v543 = vadd.f32 %v442, %v542
    %544 = vmatmul.f32.gmra.mxu0 %v397
    %v545 = vpop.f32.mrf.mxu0
    %v546 = vadd.f32 %v442, %v545
    %547 = vmatmul.f32.gmra.mxu0 %v398
    %v548 = vpop.f32.mrf.mxu0
    %v549 = vadd.f32 %v442, %v548
    %550 = vmatmul.f32.gmra.mxu0 %v399
    %v551 = vpop.f32.mrf.mxu0
    %v552 = vadd.f32 %v442, %v551
    %553 = vmatmul.f32.gmra.mxu0 %v400
    %v554 = vpop.f32.mrf.mxu0
    %v555 = vadd.f32 %v442, %v554
    %556 = vmatmul.f32.gmra.mxu0 %v401
    %v557 = vpop.f32.mrf.mxu0
    %v558 = vadd.f32 %v442, %v557
    %559 = vmatmul.f32.gmra.mxu0 %v402
    %v560 = vpop.f32.mrf.mxu0
    %v561 = vadd.f32 %v442, %v560
    %562 = vmatmul.f32.gmra.mxu0 %v403
    %v563 = vpop.f32.mrf.mxu0
    %v564 = vadd.f32 %v442, %v563
    %565 = vmatmul.f32.gmra.mxu0 %v404
    %v566 = vpop.f32.mrf.mxu0
    %v567 = vadd.f32 %v442, %v566
    %568 = vmatmul.f32.gmra.mxu0 %v405
    %v569 = vpop.f32.mrf.mxu0
    %v570 = vadd.f32 %v442, %v569
    %571 = vmatmul.f32.gmra.mxu0 %v406
    %v572 = vpop.f32.mrf.mxu0
    %v573 = vadd.f32 %v442, %v572
    %574 = vdwg.mxu0
    %v575 = vmax.f32 %v463, 0.0
    %v576 = vmax.f32 %v528, 0.0
    %v577 = vmax.f32 %v466, 0.0
    %v578 = vmax.f32 %v531, 0.0
    %v579 = vmax.f32 %v469, 0.0
    %v580 = vmax.f32 %v534, 0.0
    %v581 = vmax.f32 %v472, 0.0
    %v582 = vmax.f32 %v537, 0.0
    %v583 = vmax.f32 %v475, 0.0
    %v584 = vmax.f32 %v540, 0.0
    %v585 = vmax.f32 %v478, 0.0
    %v586 = vmax.f32 %v543, 0.0
    %v587 = vmax.f32 %v481, 0.0
    %v588 = vmax.f32 %v546, 0.0
    %v589 = vmax.f32 %v484, 0.0
    %v590 = vmax.f32 %v549, 0.0
    %v591 = vmax.f32 %v487, 0.0
    %v592 = vmax.f32 %v552, 0.0
    %v593 = vmax.f32 %v490, 0.0
    %v594 = vmax.f32 %v555, 0.0
    %v595 = vmax.f32 %v493, 0.0
    %v596 = vmax.f32 %v558, 0.0
    %v597 = vmax.f32 %v496, 0.0
    %v598 = vmax.f32 %v561, 0.0
    %v599 = vmax.f32 %v499, 0.0
    %v600 = vmax.f32 %v564, 0.0
    %v601 = vmax.f32 %v502, 0.0
    %v602 = vmax.f32 %v567, 0.0
    %v603 = vmax.f32 %v505, 0.0
    %v604 = vmax.f32 %v570, 0.0
    %v605 = vmax.f32 %v508, 0.0
    %v606 = vmax.f32 %v573, 0.0
    %v607 = vld [vmem:[#allocation8 + $0x4] sm:$0x3]
    %v608 = vld [vmem:[#allocation8 + $0x6] sm:$0x3]
    %v609 = vadd.f32 %v575, %v577
    %v610 = vadd.f32 %v609, %v579
    %v611 = vadd.f32 %v610, %v581
    %v612 = vadd.f32 %v611, %v583
    %v613 = vadd.f32 %v612, %v585
    %v614 = vadd.f32 %v613, %v587
    %v615 = vadd.f32 %v614, %v589
    %v616 = vadd.f32 %v615, %v591
    %v617 = vadd.f32 %v616, %v593
    %v618 = vadd.f32 %v617, %v595
    %v619 = vadd.f32 %v618, %v597
    %v620 = vadd.f32 %v619, %v599
    %v621 = vadd.f32 %v620, %v601
    %v622 = vadd.f32 %v621, %v603
    %v623 = vadd.f32 %v622, %v605
    %v624 = vrot.slane %v623, 4
    %v625 = vadd.f32 %v623, %v624
    %v626 = vrot.slane %v625, 2
    %v627 = vadd.f32 %v625, %v626
    %v628 = vrot.slane %v627, 1
    %v629 = vadd.f32 %v627, %v628
    %v630 = vadd.f32 %v576, %v578
    %v631 = vadd.f32 %v630, %v580
    %v632 = vadd.f32 %v631, %v582
    %v633 = vadd.f32 %v632, %v584
    %v634 = vadd.f32 %v633, %v586
    %v635 = vadd.f32 %v634, %v588
    %v636 = vadd.f32 %v635, %v590
    %v637 = vadd.f32 %v636, %v592
    %v638 = vadd.f32 %v637, %v594
    %v639 = vadd.f32 %v638, %v596
    %v640 = vadd.f32 %v639, %v598
    %v641 = vadd.f32 %v640, %v600
    %v642 = vadd.f32 %v641, %v602
    %v643 = vadd.f32 %v642, %v604
    %v644 = vadd.f32 %v643, %v606
    %v645 = vrot.slane %v644, 4
    %v646 = vadd.f32 %v644, %v645
    %v647 = vrot.slane %v646, 2
    %v648 = vadd.f32 %v646, %v647
    %v649 = vrot.slane %v648, 1
    %v650 = vadd.f32 %v648, %v649
    %v651 = vmul.f32 %v629, %v300
    %v652 = vmul.f32 %v650, %v300
    %v653 = vmul.f32 %v575, %v575
    %v654 = vmul.f32 %v576, %v576
    %v655 = vmul.f32 %v577, %v577
    %v656 = vmul.f32 %v578, %v578
    %v657 = vmul.f32 %v579, %v579
    %v658 = vmul.f32 %v580, %v580
    %v659 = vmul.f32 %v581, %v581
    %v660 = vmul.f32 %v582, %v582
    %v661 = vmul.f32 %v583, %v583
    %v662 = vmul.f32 %v584, %v584
    %v663 = vmul.f32 %v585, %v585
    %v664 = vmul.f32 %v586, %v586
    %v665 = vmul.f32 %v587, %v587
    %v666 = vmul.f32 %v588, %v588
    %v667 = vmul.f32 %v589, %v589
    %v668 = vmul.f32 %v590, %v590
    %v669 = vmul.f32 %v591, %v591
    %v670 = vmul.f32 %v592, %v592
    %v671 = vmul.f32 %v593, %v593
    %v672 = vmul.f32 %v594, %v594
    %v673 = vmul.f32 %v595, %v595
    %v674 = vmul.f32 %v596, %v596
    %v675 = vmul.f32 %v597, %v597
    %v676 = vmul.f32 %v598, %v598
    %v677 = vmul.f32 %v599, %v599
    %v678 = vmul.f32 %v600, %v600
    %v679 = vmul.f32 %v601, %v601
    %v680 = vmul.f32 %v602, %v602
    %v681 = vmul.f32 %v603, %v603
    %v682 = vmul.f32 %v604, %v604
    %v683 = vmul.f32 %v605, %v605
    %v684 = vmul.f32 %v606, %v606
    %v685 = vadd.f32 %v653, %v655
    %v686 = vadd.f32 %v685, %v657
    %v687 = vadd.f32 %v686, %v659
    %v688 = vadd.f32 %v687, %v661
    %v689 = vadd.f32 %v688, %v663
    %v690 = vadd.f32 %v689, %v665
    %v691 = vadd.f32 %v690, %v667
    %v692 = vadd.f32 %v691, %v669
    %v693 = vadd.f32 %v692, %v671
    %v694 = vadd.f32 %v693, %v673
    %v695 = vadd.f32 %v694, %v675
    %v696 = vadd.f32 %v695, %v677
    %v697 = vadd.f32 %v696, %v679
    %v698 = vadd.f32 %v697, %v681
    %v699 = vadd.f32 %v698, %v683
    %v700 = vrot.slane %v699, 4
    %v701 = vadd.f32 %v699, %v700
    %v702 = vrot.slane %v701, 2
    %v703 = vadd.f32 %v701, %v702
    %v704 = vrot.slane %v703, 1
    %v705 = vadd.f32 %v703, %v704
    %v706 = vadd.f32 %v654, %v656
    %v707 = vadd.f32 %v706, %v658
    %v708 = vadd.f32 %v707, %v660
    %v709 = vadd.f32 %v708, %v662
    %v710 = vadd.f32 %v709, %v664
    %v711 = vadd.f32 %v710, %v666
    %v712 = vadd.f32 %v711, %v668
    %v713 = vadd.f32 %v712, %v670
    %v714 = vadd.f32 %v713, %v672
    %v715 = vadd.f32 %v714, %v674
    %v716 = vadd.f32 %v715, %v676
    %v717 = vadd.f32 %v716, %v678
    %v718 = vadd.f32 %v717, %v680
    %v719 = vadd.f32 %v718, %v682
    %v720 = vadd.f32 %v719, %v684
    %v721 = vrot.slane %v720, 4
    %v722 = vadd.f32 %v720, %v721
    %v723 = vrot.slane %v722, 2
    %v724 = vadd.f32 %v722, %v723
    %v725 = vrot.slane %v724, 1
    %v726 = vadd.f32 %v724, %v725
    %v727 = vmul.f32 %v705, %v300
    %v728 = vmul.f32 %v726, %v300
    %v729 = vmul.f32 %v651, %v651
    %v730 = vmul.f32 %v652, %v652
    %v731 = vsub.f32 %v727, %v729
    %v732 = vsub.f32 %v728, %v730
    %v733 = vmax.f32 %v731, 0.0
    %v734 = vmax.f32 %v732, 0.0
    %v735 = vsub.f32 %v575, %v651
    %v736 = vsub.f32 %v576, %v652
    %v737 = vsub.f32 %v577, %v651
    %v738 = vsub.f32 %v578, %v652
    %v739 = vsub.f32 %v579, %v651
    %v740 = vsub.f32 %v580, %v652
    %v741 = vsub.f32 %v581, %v651
    %v742 = vsub.f32 %v582, %v652
    %v743 = vsub.f32 %v583, %v651
    %v744 = vsub.f32 %v584, %v652
    %v745 = vsub.f32 %v585, %v651
    %v746 = vsub.f32 %v586, %v652
    %v747 = vsub.f32 %v587, %v651
    %v748 = vsub.f32 %v588, %v652
    %v749 = vsub.f32 %v589, %v651
    %v750 = vsub.f32 %v590, %v652
    %v751 = vsub.f32 %v591, %v651
    %v752 = vsub.f32 %v592, %v652
    %v753 = vsub.f32 %v593, %v651
    %v754 = vsub.f32 %v594, %v652
    %v755 = vsub.f32 %v595, %v651
    %v756 = vsub.f32 %v596, %v652
    %v757 = vsub.f32 %v597, %v651
    %v758 = vsub.f32 %v598, %v652
    %v759 = vsub.f32 %v599, %v651
    %v760 = vsub.f32 %v600, %v652
    %v761 = vsub.f32 %v601, %v651
    %v762 = vsub.f32 %v602, %v652
    %v763 = vsub.f32 %v603, %v651
    %v764 = vsub.f32 %v604, %v652
    %v765 = vsub.f32 %v605, %v651
    %v766 = vsub.f32 %v606, %v652
    %v767 = vadd.f32 %v733, 1e-05
    %v768 = vadd.f32 %v734, 1e-05
    %v769 = vrsqrt.pop %v767
    %v770 = vmul.f32 %v769, %v767
    %v771 = vmul.f32 %v770, %v769
    %v772 = vmul.f32 0.5, %v771
    %v773 = vsub.f32 1.5, %v772
    %v774 = vmul.f32 %v769, %v773
    %vm775 = vweird.f32 %v767
    %vm776 = vweird.f32 %v769
    %vm777 = vmor %vm775, %vm776
    %v778 = vsel %vm777, %v769, %v774
    %v779 = vrsqrt.pop %v768
    %v780 = vmul.f32 %v779, %v768
    %v781 = vmul.f32 %v780, %v779
    %v782 = vmul.f32 0.5, %v781
    %v783 = vsub.f32 1.5, %v782
    %v784 = vmul.f32 %v779, %v783
    %vm785 = vweird.f32 %v768
    %vm786 = vweird.f32 %v779
    %vm787 = vmor %vm785, %vm786
    %v788 = vsel %vm787, %v779, %v784
    %v790 = vperm.slane %v607, 0
    %v791 = vperm.slane %v607, 1
    %v794 = vmul.f32 %v778, %v790
    %v795 = vmul.f32 %v788, %v791
    %v796 = vperm.slane %v794, 0
    %v797 = vperm.slane %v795, 0
    %v798 = vmul.f32 %v735, %v796
    %v799 = vmul.f32 %v736, %v797
    %v800 = vmul.f32 %v737, %v796
    %v801 = vmul.f32 %v738, %v797
    %v802 = vmul.f32 %v739, %v796
    %v803 = vmul.f32 %v740, %v797
    %v804 = vmul.f32 %v741, %v796
    %v805 = vmul.f32 %v742, %v797
    %v806 = vmul.f32 %v743, %v796
    %v807 = vmul.f32 %v744, %v797
    %v808 = vmul.f32 %v745, %v796
    %v809 = vmul.f32 %v746, %v797
    %v810 = vmul.f32 %v747, %v796
    %v811 = vmul.f32 %v748, %v797
    %v812 = vmul.f32 %v749, %v796
    %v813 = vmul.f32 %v750, %v797
    %v814 = vmul.f32 %v751, %v796
    %v815 = vmul.f32 %v752, %v797
    %v816 = vmul.f32 %v753, %v796
    %v817 = vmul.f32 %v754, %v797
    %v818 = vmul.f32 %v755, %v796
    %v819 = vmul.f32 %v756, %v797
    %v820 = vmul.f32 %v757, %v796
    %v821 = vmul.f32 %v758, %v797
    %v822 = vmul.f32 %v759, %v796
    %v823 = vmul.f32 %v760, %v797
    %v824 = vmul.f32 %v761, %v796
    %v825 = vmul.f32 %v762, %v797
    %v826 = vmul.f32 %v763, %v796
    %v827 = vmul.f32 %v764, %v797
    %v828 = vmul.f32 %v765, %v796
    %v829 = vmul.f32 %v766, %v797
    %v831 = vperm.slane %v608, 0
    %v832 = vperm.slane %v608, 1
    %v835 = vadd.f32 %v798, %v831
    %v836 = vadd.f32 %v799, %v832
    %v837 = vadd.f32 %v800, %v831
    %v838 = vadd.f32 %v801, %v832
    %v839 = vadd.f32 %v802, %v831
    %v840 = vadd.f32 %v803, %v832
    %v841 = vadd.f32 %v804, %v831
    %v842 = vadd.f32 %v805, %v832
    %v843 = vadd.f32 %v806, %v831
    %v844 = vadd.f32 %v807, %v832
    %v845 = vadd.f32 %v808, %v831
    %v846 = vadd.f32 %v809, %v832
    %v847 = vadd.f32 %v810, %v831
    %v848 = vadd.f32 %v811, %v832
    %v849 = vadd.f32 %v812, %v831
    %v850 = vadd.f32 %v813, %v832
    %v851 = vadd.f32 %v814, %v831
    %v852 = vadd.f32 %v815, %v832
    %v853 = vadd.f32 %v816, %v831
    %v854 = vadd.f32 %v817, %v832
    %v855 = vadd.f32 %v818, %v831
    %v856 = vadd.f32 %v819, %v832
    %v857 = vadd.f32 %v820, %v831
    %v858 = vadd.f32 %v821, %v832
    %v859 = vadd.f32 %v822, %v831
    %v860 = vadd.f32 %v823, %v832
    %v861 = vadd.f32 %v824, %v831
    %v862 = vadd.f32 %v825, %v832
    %v863 = vadd.f32 %v826, %v831
    %v864 = vadd.f32 %v827, %v832
    %v865 = vadd.f32 %v828, %v831
    %v866 = vadd.f32 %v829, %v832
    %v867 = vld [vmem:[#allocation9] sm:$0xff]
    %v868 = vld [vmem:[#allocation9 + $0x8] sm:$0xff]
    %v869 = vld [vmem:[#allocation9 + $0x10] sm:$0xff]
    %v870 = vld [vmem:[#allocation9 + $0x18] sm:$0xff]
    %v871 = vld [vmem:[#allocation9 + $0x20] sm:$0xff]
    %v872 = vld [vmem:[#allocation9 + $0x28] sm:$0xff]
    %v873 = vld [vmem:[#allocation9 + $0x30] sm:$0xff]
    %v874 = vld [vmem:[#allocation9 + $0x38] sm:$0xff]
    %v875 = vld [vmem:[#allocation9 + $0x40] sm:$0xff]
    %v876 = vld [vmem:[#allocation9 + $0x48] sm:$0xff]
    %v877 = vld [vmem:[#allocation9 + $0x50] sm:$0xff]
    %v878 = vld [vmem:[#allocation9 + $0x58] sm:$0xff]
    %v879 = vld [vmem:[#allocation9 + $0x60] sm:$0xff]
    %v880 = vld [vmem:[#allocation9 + $0x68] sm:$0xff]
    %v881 = vld [vmem:[#allocation9 + $0x70] sm:$0xff]
    %v882 = vld [vmem:[#allocation9 + $0x78] sm:$0xff]
    %v883 = vld [vmem:[#allocation9 + $0x80] sm:$0xff]
    %v884 = vld [vmem:[#allocation9 + $0x88] sm:$0xff]
    %v885 = vld [vmem:[#allocation9 + $0x90] sm:$0xff]
    %v886 = vld [vmem:[#allocation9 + $0x98] sm:$0xff]
    %v887 = vld [vmem:[#allocation9 + $0xa0] sm:$0xff]
    %v888 = vld [vmem:[#allocation9 + $0xa8] sm:$0xff]
    %v889 = vld [vmem:[#allocation9 + $0xb0] sm:$0xff]
    %v890 = vld [vmem:[#allocation9 + $0xb8] sm:$0xff]
    %v891 = vld [vmem:[#allocation9 + $0xc0] sm:$0xff]
    %v892 = vld [vmem:[#allocation9 + $0xc8] sm:$0xff]
    %v893 = vld [vmem:[#allocation9 + $0xd0] sm:$0xff]
    %v894 = vld [vmem:[#allocation9 + $0xd8] sm:$0xff]
    %v895 = vld [vmem:[#allocation9 + $0xe0] sm:$0xff]
    %v896 = vld [vmem:[#allocation9 + $0xe8] sm:$0xff]
    %v897 = vld [vmem:[#allocation9 + $0xf0] sm:$0xff]
    %v898 = vld [vmem:[#allocation9 + $0xf8] sm:$0xff]
    %v899 = vld [vmem:[#allocation8 + $0x8] sm:$0x1]
    %v901 = vperm.slane %v899, 0
    %903 = vmatpush.msra.mxu0 %v882
    %904 = vmatpush.msra.mxu0 %v881
    %905 = vmatpush.msra.mxu0 %v880
    %906 = vmatpush.msra.mxu0 %v879
    %907 = vmatpush.msra.mxu0 %v878
    %908 = vmatpush.msra.mxu0 %v877
    %909 = vmatpush.msra.mxu0 %v876
    %910 = vmatpush.msra.mxu0 %v875
    %911 = vmatpush.msra.mxu0 %v874
    %912 = vmatpush.msra.mxu0 %v873
    %913 = vmatpush.msra.mxu0 %v872
    %914 = vmatpush.msra.mxu0 %v871
    %915 = vmatpush.msra.mxu0 %v870
    %916 = vmatpush.msra.mxu0 %v869
    %917 = vmatpush.msra.mxu0 %v868
    %918 = vmatpush.msra.mxu0 %v867
    %919 = vmatmul.f32.gmra.mxu0 %v835
    %v920 = vpop.f32.mrf.mxu0
    %v921 = vadd.f32 %v901, %v920
    %922 = vmatmul.f32.gmra.mxu0 %v837
    %v923 = vpop.f32.mrf.mxu0
    %v924 = vadd.f32 %v901, %v923
    %925 = vmatmul.f32.gmra.mxu0 %v839
    %v926 = vpop.f32.mrf.mxu0
    %v927 = vadd.f32 %v901, %v926
    %928 = vmatmul.f32.gmra.mxu0 %v841
    %v929 = vpop.f32.mrf.mxu0
    %v930 = vadd.f32 %v901, %v929
    %931 = vmatmul.f32.gmra.mxu0 %v843
    %v932 = vpop.f32.mrf.mxu0
    %v933 = vadd.f32 %v901, %v932
    %934 = vmatmul.f32.gmra.mxu0 %v845
    %v935 = vpop.f32.mrf.mxu0
    %v936 = vadd.f32 %v901, %v935
    %937 = vmatmul.f32.gmra.mxu0 %v847
    %v938 = vpop.f32.mrf.mxu0
    %v939 = vadd.f32 %v901, %v938
    %940 = vmatmul.f32.gmra.mxu0 %v849
    %v941 = vpop.f32.mrf.mxu0
    %v942 = vadd.f32 %v901, %v941
    %943 = vmatmul.f32.gmra.mxu0 %v851
    %v944 = vpop.f32.mrf.mxu0
    %v945 = vadd.f32 %v901, %v944
    %946 = vmatmul.f32.gmra.mxu0 %v853
    %v947 = vpop.f32.mrf.mxu0
    %v948 = vadd.f32 %v901, %v947
    %949 = vmatmul.f32.gmra.mxu0 %v855
    %v950 = vpop.f32.mrf.mxu0
    %v951 = vadd.f32 %v901, %v950
    %952 = vmatmul.f32.gmra.mxu0 %v857
    %v953 = vpop.f32.mrf.mxu0
    %v954 = vadd.f32 %v901, %v953
    %955 = vmatmul.f32.gmra.mxu0 %v859
    %v956 = vpop.f32.mrf.mxu0
    %v957 = vadd.f32 %v901, %v956
    %958 = vmatmul.f32.gmra.mxu0 %v861
    %v959 = vpop.f32.mrf.mxu0
    %v960 = vadd.f32 %v901, %v959
    %961 = vmatmul.f32.gmra.mxu0 %v863
    %v962 = vpop.f32.mrf.mxu0
    %v963 = vadd.f32 %v901, %v962
    %964 = vmatmul.f32.gmra.mxu0 %v865
    %v965 = vpop.f32.mrf.mxu0
    %v966 = vadd.f32 %v901, %v965
    %967 = vdwg.mxu0
    %968 = vmatpush.msra.mxu0 %v898
    %969 = vmatpush.msra.mxu0 %v897
    %970 = vmatpush.msra.mxu0 %v896
    %971 = vmatpush.msra.mxu0 %v895
    %972 = vmatpush.msra.mxu0 %v894
    %973 = vmatpush.msra.mxu0 %v893
    %974 = vmatpush.msra.mxu0 %v892
    %975 = vmatpush.msra.mxu0 %v891
    %976 = vmatpush.msra.mxu0 %v890
    %977 = vmatpush.msra.mxu0 %v889
    %978 = vmatpush.msra.mxu0 %v888
    %979 = vmatpush.msra.mxu0 %v887
    %980 = vmatpush.msra.mxu0 %v886
    %981 = vmatpush.msra.mxu0 %v885
    %982 = vmatpush.msra.mxu0 %v884
    %983 = vmatpush.msra.mxu0 %v883
    %984 = vmatmul.f32.gmra.mxu0 %v836
    %v985 = vpop.f32.mrf.mxu0
    %v986 = vadd.f32 %v921, %v985
    %987 = vmatmul.f32.gmra.mxu0 %v838
    %v988 = vpop.f32.mrf.mxu0
    %v989 = vadd.f32 %v924, %v988
    %990 = vmatmul.f32.gmra.mxu0 %v840
    %v991 = vpop.f32.mrf.mxu0
    %v992 = vadd.f32 %v927, %v991
    %993 = vmatmul.f32.gmra.mxu0 %v842
    %v994 = vpop.f32.mrf.mxu0
    %v995 = vadd.f32 %v930, %v994
    %996 = vmatmul.f32.gmra.mxu0 %v844
    %v997 = vpop.f32.mrf.mxu0
    %v998 = vadd.f32 %v933, %v997
    %999 = vmatmul.f32.gmra.mxu0 %v846
    %v1000 = vpop.f32.mrf.mxu0
    %v1001 = vadd.f32 %v936, %v1000
    %1002 = vmatmul.f32.gmra.mxu0 %v848
    %v1003 = vpop.f32.mrf.mxu0
    %v1004 = vadd.f32 %v939, %v1003
    %1005 = vmatmul.f32.gmra.mxu0 %v850
    %v1006 = vpop.f32.mrf.mxu0
    %v1007 = vadd.f32 %v942, %v1006
    %1008 = vmatmul.f32.gmra.mxu0 %v852
    %v1009 = vpop.f32.mrf.mxu0
    %v1010 = vadd.f32 %v945, %v1009
    %1011 = vmatmul.f32.gmra.mxu0 %v854
    %v1012 = vpop.f32.mrf.mxu0
    %v1013 = vadd.f32 %v948, %v1012
    %1014 = vmatmul.f32.gmra.mxu0 %v856
    %v1015 = vpop.f32.mrf.mxu0
    %v1016 = vadd.f32 %v951, %v1015
    %1017 = vmatmul.f32.gmra.mxu0 %v858
    %v1018 = vpop.f32.mrf.mxu0
    %v1019 = vadd.f32 %v954, %v1018
    %1020 = vmatmul.f32.gmra.mxu0 %v860
    %v1021 = vpop.f32.mrf.mxu0
    %v1022 = vadd.f32 %v957, %v1021
    %1023 = vmatmul.f32.gmra.mxu0 %v862
    %v1024 = vpop.f32.mrf.mxu0
    %v1025 = vadd.f32 %v960, %v1024
    %1026 = vmatmul.f32.gmra.mxu0 %v864
    %v1027 = vpop.f32.mrf.mxu0
    %v1028 = vadd.f32 %v963, %v1027
    %1029 = vmatmul.f32.gmra.mxu0 %v866
    %v1030 = vpop.f32.mrf.mxu0
    %v1031 = vadd.f32 %v966, %v1030
    %1032 = vdwg.mxu0
    %v1033 = vmax.f32 %v986, 0.0
    %v1034 = vmax.f32 %v989, 0.0
    %v1035 = vmax.f32 %v992, 0.0
    %v1036 = vmax.f32 %v995, 0.0
    %v1037 = vmax.f32 %v998, 0.0
    %v1038 = vmax.f32 %v1001, 0.0
    %v1039 = vmax.f32 %v1004, 0.0
    %v1040 = vmax.f32 %v1007, 0.0
    %v1041 = vmax.f32 %v1010, 0.0
    %v1042 = vmax.f32 %v1013, 0.0
    %v1043 = vmax.f32 %v1016, 0.0
    %v1044 = vmax.f32 %v1019, 0.0
    %v1045 = vmax.f32 %v1022, 0.0
    %v1046 = vmax.f32 %v1025, 0.0
    %v1047 = vmax.f32 %v1028, 0.0
    %v1048 = vmax.f32 %v1031, 0.0
    %v1049 = vld [vmem:[%s7] sm:$0xff]
    %v1050 = vld [vmem:[%s7 + $0x8] sm:$0xff]
    %v1051 = vld [vmem:[%s7 + $0x10] sm:$0xff]
    %v1052 = vld [vmem:[%s7 + $0x18] sm:$0xff]
    %v1053 = vld [vmem:[%s7 + $0x20] sm:$0xff]
    %v1054 = vld [vmem:[%s7 + $0x28] sm:$0xff]
    %v1055 = vld [vmem:[%s7 + $0x30] sm:$0xff]
    %v1056 = vld [vmem:[%s7 + $0x38] sm:$0xff]
    %v1057 = vld [vmem:[%s7 + $0x40] sm:$0xff]
    %v1058 = vld [vmem:[%s7 + $0x48] sm:$0xff]
    %v1059 = vld [vmem:[%s7 + $0x50] sm:$0xff]
    %v1060 = vld [vmem:[%s7 + $0x58] sm:$0xff]
    %v1061 = vld [vmem:[%s7 + $0x60] sm:$0xff]
    %v1062 = vld [vmem:[%s7 + $0x68] sm:$0xff]
    %v1063 = vld [vmem:[%s7 + $0x70] sm:$0xff]
    %v1064 = vld [vmem:[%s7 + $0x78] sm:$0xff]
    %v1065 = vld [vmem:[#allocation8 + $0x9] sm:$0x1]
    %v1067 = vperm.slane %v1065, 0
    %1069 = vmatpush.msra.mxu0 %v1064
    %1070 = vmatpush.msra.mxu0 %v1063
    %1071 = vmatpush.msra.mxu0 %v1062
    %1072 = vmatpush.msra.mxu0 %v1061
    %1073 = vmatpush.msra.mxu0 %v1060
    %1074 = vmatpush.msra.mxu0 %v1059
    %1075 = vmatpush.msra.mxu0 %v1058
    %1076 = vmatpush.msra.mxu0 %v1057
    %1077 = vmatpush.msra.mxu0 %v1056
    %1078 = vmatpush.msra.mxu0 %v1055
    %1079 = vmatpush.msra.mxu0 %v1054
    %1080 = vmatpush.msra.mxu0 %v1053
    %1081 = vmatpush.msra.mxu0 %v1052
    %1082 = vmatpush.msra.mxu0 %v1051
    %1083 = vmatpush.msra.mxu0 %v1050
    %1084 = vmatpush.msra.mxu0 %v1049
    %1085 = vmatmul.f32.gmra.mxu0 %v1033
    %v1086 = vpop.f32.mrf.mxu0
    %v1087 = vadd.f32 %v1067, %v1086
    %1088 = vmatmul.f32.gmra.mxu0 %v1034
    %v1089 = vpop.f32.mrf.mxu0
    %v1090 = vadd.f32 %v1067, %v1089
    %1091 = vmatmul.f32.gmra.mxu0 %v1035
    %v1092 = vpop.f32.mrf.mxu0
    %v1093 = vadd.f32 %v1067, %v1092
    %1094 = vmatmul.f32.gmra.mxu0 %v1036
    %v1095 = vpop.f32.mrf.mxu0
    %v1096 = vadd.f32 %v1067, %v1095
    %1097 = vmatmul.f32.gmra.mxu0 %v1037
    %v1098 = vpop.f32.mrf.mxu0
    %v1099 = vadd.f32 %v1067, %v1098
    %1100 = vmatmul.f32.gmra.mxu0 %v1038
    %v1101 = vpop.f32.mrf.mxu0
    %v1102 = vadd.f32 %v1067, %v1101
    %1103 = vmatmul.f32.gmra.mxu0 %v1039
    %v1104 = vpop.f32.mrf.mxu0
    %v1105 = vadd.f32 %v1067, %v1104
    %1106 = vmatmul.f32.gmra.mxu0 %v1040
    %v1107 = vpop.f32.mrf.mxu0
    %v1108 = vadd.f32 %v1067, %v1107
    %1109 = vmatmul.f32.gmra.mxu0 %v1041
    %v1110 = vpop.f32.mrf.mxu0
    %v1111 = vadd.f32 %v1067, %v1110
    %1112 = vmatmul.f32.gmra.mxu0 %v1042
    %v1113 = vpop.f32.mrf.mxu0
    %v1114 = vadd.f32 %v1067, %v1113
    %1115 = vmatmul.f32.gmra.mxu0 %v1043
    %v1116 = vpop.f32.mrf.mxu0
    %v1117 = vadd.f32 %v1067, %v1116
    %1118 = vmatmul.f32.gmra.mxu0 %v1044
    %v1119 = vpop.f32.mrf.mxu0
    %v1120 = vadd.f32 %v1067, %v1119
    %1121 = vmatmul.f32.gmra.mxu0 %v1045
    %v1122 = vpop.f32.mrf.mxu0
    %v1123 = vadd.f32 %v1067, %v1122
    %1124 = vmatmul.f32.gmra.mxu0 %v1046
    %v1125 = vpop.f32.mrf.mxu0
    %v1126 = vadd.f32 %v1067, %v1125
    %1127 = vmatmul.f32.gmra.mxu0 %v1047
    %v1128 = vpop.f32.mrf.mxu0
    %v1129 = vadd.f32 %v1067, %v1128
    %1130 = vmatmul.f32.gmra.mxu0 %v1048
    %v1131 = vpop.f32.mrf.mxu0
    %v1132 = vadd.f32 %v1067, %v1131
    %1133 = vdwg.mxu0
    %v1134 = vld [vmem:[#allocation6] sm:$0xff]
    %v1135 = vld [vmem:[#allocation6 + $0x8] sm:$0xff]
    %v1136 = vld [vmem:[#allocation6 + $0x10] sm:$0xff]
    %v1137 = vld [vmem:[#allocation6 + $0x18] sm:$0xff]
    %v1138 = vld [vmem:[#allocation6 + $0x20] sm:$0xff]
    %v1139 = vld [vmem:[#allocation6 + $0x28] sm:$0xff]
    %v1140 = vld [vmem:[#allocation6 + $0x30] sm:$0xff]
    %v1141 = vld [vmem:[#allocation6 + $0x38] sm:$0xff]
    %v1142 = vld [vmem:[#allocation6 + $0x40] sm:$0xff]
    %v1143 = vld [vmem:[#allocation6 + $0x48] sm:$0xff]
    %v1144 = vld [vmem:[#allocation6 + $0x50] sm:$0xff]
    %v1145 = vld [vmem:[#allocation6 + $0x58] sm:$0xff]
    %v1146 = vld [vmem:[#allocation6 + $0x60] sm:$0xff]
    %v1147 = vld [vmem:[#allocation6 + $0x68] sm:$0xff]
    %v1148 = vld [vmem:[#allocation6 + $0x70] sm:$0xff]
    %v1149 = vld [vmem:[#allocation6 + $0x78] sm:$0xff]
    %v1150 = vand.u32 2147483647, %v1087
    %vm1151 = vcmp.le.f32.partialorder %v1150, 0.7853982
    %vm1152 = vcmp.lt.s32.totalorder %v1087, 0
    %v1153 = vand.u32 %v1087, 2139095040
    %v1154 = vshrl.u32 %v1153, 23
    %v1155 = vsub.s32 %v1154, 127
    %v1156 = vand.u32 2147483647, %v1087
    %v1157 = vand.u32 %v1156, 8388607
    %v1158 = vor.u32 %v1157, 8388608
    %v1159 = vsub.s32 0, %v1158
    %v1160 = vadd.s32 %v1155, 1
    %vm1161 = vcmp.gt.s32.totalorder %v1160, 0
    %v1162 = vsel %vm1161, %v1160, 0
    %v1163 = vshrl.u32 %v1162, 5
    %v1164 = vand.u32 %v1162, 31
    %v1165 = vsub.s32 32, %v1164
    %v1166 = vshrl.u32 683565275, %v1165
    %v1167 = vshll.u32 683565275, %v1164
    %v1168 = vshrl.u32 2475754826, %v1165
    %v1169 = vor.u32 %v1167, %v1168
    %v1170 = vshll.u32 2475754826, %v1164
    %v1171 = vshrl.u32 2131351028, %v1165
    %v1172 = vor.u32 %v1170, %v1171
    %v1173 = vshll.u32 2131351028, %v1164
    %v1174 = vshrl.u32 2102212464, %v1165
    %v1175 = vor.u32 %v1173, %v1174
    %v1176 = vshll.u32 2102212464, %v1164
    %v1177 = vshrl.u32 920167782, %v1165
    %v1178 = vor.u32 %v1176, %v1177
    %v1179 = vshll.u32 920167782, %v1164
    %v1180 = vshrl.u32 1326507024, %v1165
    %v1181 = vor.u32 %v1179, %v1180
    %vm1182 = vcmp.lt.s32.totalorder %v1163, 1
    %vm1183 = vcmp.lt.s32.totalorder %v1163, 2
    %vm1184 = vcmp.lt.s32.totalorder %v1163, 3
    %vm1185 = vcmp.lt.s32.totalorder %v1163, 4
    %v1186 = vsel %vm1182, %v1166, %v1169
    %v1187 = vsel %vm1185, %v1175, 2102212464
    %v1188 = vsel %vm1184, %v1172, %v1187
    %v1189 = vsel %vm1183, %v1186, %v1188
    %v1190 = vsel %vm1182, %v1169, %v1172
    %v1191 = vsel %vm1185, %v1178, 920167782
    %v1192 = vsel %vm1184, %v1175, %v1191
    %v1193 = vsel %vm1183, %v1190, %v1192
    %v1194 = vsel %vm1182, %v1172, %v1175
    %v1195 = vsel %vm1185, %v1181, 1326507024
    %v1196 = vsel %vm1184, %v1178, %v1195
    %v1197 = vsel %vm1183, %v1194, %v1196
    %v1198 = vshll.u32 %v1158, 8
    %v1199 = vand.u32 %v1198, 65535
    %v1200 = vshrl.u32 %v1198, 16
    %v1201 = vand.u32 %v1197, 65535
    %v1202 = vshrl.u32 %v1197, 16
    %v1203 = vmul.u32 %v1199, %v1201
    %v1204 = vmul.u32 %v1199, %v1202
    %v1205 = vmul.u32 %v1200, %v1201
    %v1206 = vmul.u32 %v1200, %v1202
    %v1207 = vshll.u32 %v1204, 16
    %v1208 = vshrl.u32 %v1204, 16
    %v1209 = vshll.u32 %v1205, 16
    %v1210 = vshrl.u32 %v1205, 16
    %vm1211 = vc.u32 %v1203, %v1207
    %v1212 = vsel %vm1211, 1, 0
    %v1213 = vadd.s32 %v1203, %v1207
    %v1214 = vadd.s32 %v1206, %v1212
    %vm1215 = vc.u32 %v1213, %v1209
    %v1216 = vsel %vm1215, 1, 0
    %v1217 = vadd.s32 %v1213, %v1209
    %v1218 = vadd.s32 %v1214, %v1216
    %v1219 = vadd.s32 %v1218, %v1208
    %v1220 = vadd.s32 %v1219, %v1210
    %v1221 = vand.u32 %v1198, 65535
    %v1222 = vshrl.u32 %v1198, 16
    %v1223 = vand.u32 %v1193, 65535
    %v1224 = vshrl.u32 %v1193, 16
    %v1225 = vmul.u32 %v1221, %v1223
    %v1226 = vmul.u32 %v1221, %v1224
    %v1227 = vmul.u32 %v1222, %v1223
    %v1228 = vmul.u32 %v1222, %v1224
    %v1229 = vshll.u32 %v1226, 16
    %v1230 = vshrl.u32 %v1226, 16
    %v1231 = vshll.u32 %v1227, 16
    %v1232 = vshrl.u32 %v1227, 16
    %vm1233 = vc.u32 %v1225, %v1229
    %v1234 = vsel %vm1233, 1, 0
    %v1235 = vadd.s32 %v1225, %v1229
    %v1236 = vadd.s32 %v1228, %v1234
    %vm1237 = vc.u32 %v1235, %v1231
    %v1238 = vsel %vm1237, 1, 0
    %v1239 = vadd.s32 %v1235, %v1231
    %v1240 = vadd.s32 %v1236, %v1238
    %v1241 = vadd.s32 %v1240, %v1230
    %v1242 = vadd.s32 %v1241, %v1232
    %v1243 = vmul.u32 %v1198, %v1189
    %v1244 = vadd.s32 %v1220, %v1239
    %vm1245 = vc.u32 %v1220, %v1239
    %v1246 = vadd.s32 %v1242, 1
    %v1247 = vsel %vm1245, %v1246, %v1242
    %v1248 = vadd.s32 %v1243, %v1247
    %v1249 = vadd.s32 %v1248, 536870912
    %v1250 = vshrl.u32 %v1249, 30
    %v1251 = vshll.u32 %v1250, 30
    %v1252 = vsub.s32 %v1248, %v1251
    %vm1253 = vcmp.lt.s32.totalorder %v1252, 0
    %v1254 = vsub.s32 0, %v1252
    %v1255 = vsel %vm1253, %v1254, %v1252
    %v1256 = vclz %v1255
    %v1257 = vsub.s32 %v1256, 2
    %vm1258 = vcmp.gt.s32.totalorder 0, %v1257
    %v1259 = vsel %vm1258, 0, %v1257
    %v1260 = vsub.s32 32, %v1259
    %v1261 = vshll.u32 %v1252, %v1259
    %v1262 = vshrl.u32 %v1244, %v1260
    %v1263 = vor.u32 %v1261, %v1262
    %v1264 = vsub.s32 4294967266, %v1259
    %v1265 = vadd.s32 %v1264, 127
    %v1266 = vshll.u32 %v1265, 23
    %v1267 = vor.u32 4788187, %v1266
    %v1268 = vand.u32 2147483647, %v1267
    %v1270 = vcvt.s32.f32 %v1263
    %v1271 = vmul.f32 %v1270, %v1268
    %v1272 = vxor.u32 %v1271, 2147483648
    %v1273 = vsel %vm1152, %v1272, %v1271
    %v1274 = vsub.s32 4, %v1250
    %v1275 = vsel %vm1152, %v1274, %v1250
    %v1276 = vsel %vm1151, %v1087, %v1273
    %v1277 = vsel %vm1151, 0, %v1275
    %v1278 = vmul.f32 %v1276, %v1276
    %v1279 = vmul.f32 %v1278, -0.001358992
    %v1280 = vadd.f32 %v1279, 0.041655596
    %v1281 = vmul.f32 %v1278, %v1280
    %v1282 = vadd.f32 %v1281, -0.4999988
    %v1283 = vmul.f32 %v1278, %v1282
    %v1284 = vadd.f32 1.0, %v1283
    %v1285 = vmul.f32 %v1276, %v1276
    %v1286 = vmul.f32 %v1285, -0.00019511016
    %v1287 = vadd.f32 %v1286, 0.008332121
    %v1288 = vmul.f32 %v1285, %v1287
    %v1289 = vadd.f32 %v1288, -0.16666654
    %v1290 = vmul.f32 %v1285, %v1289
    %v1291 = vadd.f32 %v1290, 1.0
    %v1292 = vmul.f32 %v1291, %v1276
    %vm1293 = vweird.f32 %v1087
    %v1294 = vand.u32 %v1277, 3
    %vm1295 = vcmp.lt.s32.totalorder %v1294, 2
    %vm1296 = vcmp.eq.s32.totalorder %v1294, 0
    %v1297 = vxor.u32 %v1292, 2147483648
    %v1298 = vsel %vm1296, %v1284, %v1297
    %vm1299 = vcmp.eq.s32.totalorder %v1294, 2
    %v1300 = vxor.u32 %v1284, 2147483648
    %v1301 = vsel %vm1299, %v1300, %v1292
    %v1302 = vsel %vm1295, %v1298, %v1301
    %v1303 = vsel %vm1293, nan, %v1302
    %v1304 = vand.u32 2147483647, %v1090
    %vm1305 = vcmp.le.f32.partialorder %v1304, 0.7853982
    %vm1306 = vcmp.lt.s32.totalorder %v1090, 0
    %v1307 = vand.u32 %v1090, 2139095040
    %v1308 = vshrl.u32 %v1307, 23
    %v1309 = vsub.s32 %v1308, 127
    %v1310 = vand.u32 2147483647, %v1090
    %v1311 = vand.u32 %v1310, 8388607
    %v1312 = vor.u32 %v1311, 8388608
    %v1313 = vsub.s32 0, %v1312
    %v1314 = vadd.s32 %v1309, 1
    %vm1315 = vcmp.gt.s32.totalorder %v1314, 0
    %v1316 = vsel %vm1315, %v1314, 0
    %v1317 = vshrl.u32 %v1316, 5
    %v1318 = vand.u32 %v1316, 31
    %v1319 = vsub.s32 32, %v1318
    %v1320 = vshrl.u32 683565275, %v1319
    %v1321 = vshll.u32 683565275, %v1318
    %v1322 = vshrl.u32 2475754826, %v1319
    %v1323 = vor.u32 %v1321, %v1322
    %v1324 = vshll.u32 2475754826, %v1318
    %v1325 = vshrl.u32 2131351028, %v1319
    %v1326 = vor.u32 %v1324, %v1325
    %v1327 = vshll.u32 2131351028, %v1318
    %v1328 = vshrl.u32 2102212464, %v1319
    %v1329 = vor.u32 %v1327, %v1328
    %v1330 = vshll.u32 2102212464, %v1318
    %v1331 = vshrl.u32 920167782, %v1319
    %v1332 = vor.u32 %v1330, %v1331
    %v1333 = vshll.u32 920167782, %v1318
    %v1334 = vshrl.u32 1326507024, %v1319
    %v1335 = vor.u32 %v1333, %v1334
    %vm1336 = vcmp.lt.s32.totalorder %v1317, 1
    %vm1337 = vcmp.lt.s32.totalorder %v1317, 2
    %vm1338 = vcmp.lt.s32.totalorder %v1317, 3
    %vm1339 = vcmp.lt.s32.totalorder %v1317, 4
    %v1340 = vsel %vm1336, %v1320, %v1323
    %v1341 = vsel %vm1339, %v1329, 2102212464
    %v1342 = vsel %vm1338, %v1326, %v1341
    %v1343 = vsel %vm1337, %v1340, %v1342
    %v1344 = vsel %vm1336, %v1323, %v1326
    %v1345 = vsel %vm1339, %v1332, 920167782
    %v1346 = vsel %vm1338, %v1329, %v1345
    %v1347 = vsel %vm1337, %v1344, %v1346
    %v1348 = vsel %vm1336, %v1326, %v1329
    %v1349 = vsel %vm1339, %v1335, 1326507024
    %v1350 = vsel %vm1338, %v1332, %v1349
    %v1351 = vsel %vm1337, %v1348, %v1350
    %v1352 = vshll.u32 %v1312, 8
    %v1353 = vand.u32 %v1352, 65535
    %v1354 = vshrl.u32 %v1352, 16
    %v1355 = vand.u32 %v1351, 65535
    %v1356 = vshrl.u32 %v1351, 16
    %v1357 = vmul.u32 %v1353, %v1355
    %v1358 = vmul.u32 %v1353, %v1356
    %v1359 = vmul.u32 %v1354, %v1355
    %v1360 = vmul.u32 %v1354, %v1356
    %v1361 = vshll.u32 %v1358, 16
    %v1362 = vshrl.u32 %v1358, 16
    %v1363 = vshll.u32 %v1359, 16
    %v1364 = vshrl.u32 %v1359, 16
    %vm1365 = vc.u32 %v1357, %v1361
    %v1366 = vsel %vm1365, 1, 0
    %v1367 = vadd.s32 %v1357, %v1361
    %v1368 = vadd.s32 %v1360, %v1366
    %vm1369 = vc.u32 %v1367, %v1363
    %v1370 = vsel %vm1369, 1, 0
    %v1371 = vadd.s32 %v1367, %v1363
    %v1372 = vadd.s32 %v1368, %v1370
    %v1373 = vadd.s32 %v1372, %v1362
    %v1374 = vadd.s32 %v1373, %v1364
    %v1375 = vand.u32 %v1352, 65535
    %v1376 = vshrl.u32 %v1352, 16
    %v1377 = vand.u32 %v1347, 65535
    %v1378 = vshrl.u32 %v1347, 16
    %v1379 = vmul.u32 %v1375, %v1377
    %v1380 = vmul.u32 %v1375, %v1378
    %v1381 = vmul.u32 %v1376, %v1377
    %v1382 = vmul.u32 %v1376, %v1378
    %v1383 = vshll.u32 %v1380, 16
    %v1384 = vshrl.u32 %v1380, 16
    %v1385 = vshll.u32 %v1381, 16
    %v1386 = vshrl.u32 %v1381, 16
    %vm1387 = vc.u32 %v1379, %v1383
    %v1388 = vsel %vm1387, 1, 0
    %v1389 = vadd.s32 %v1379, %v1383
    %v1390 = vadd.s32 %v1382, %v1388
    %vm1391 = vc.u32 %v1389, %v1385
    %v1392 = vsel %vm1391, 1, 0
    %v1393 = vadd.s32 %v1389, %v1385
    %v1394 = vadd.s32 %v1390, %v1392
    %v1395 = vadd.s32 %v1394, %v1384
    %v1396 = vadd.s32 %v1395, %v1386
    %v1397 = vmul.u32 %v1352, %v1343
    %v1398 = vadd.s32 %v1374, %v1393
    %vm1399 = vc.u32 %v1374, %v1393
    %v1400 = vadd.s32 %v1396, 1
    %v1401 = vsel %vm1399, %v1400, %v1396
    %v1402 = vadd.s32 %v1397, %v1401
    %v1403 = vadd.s32 %v1402, 536870912
    %v1404 = vshrl.u32 %v1403, 30
    %v1405 = vshll.u32 %v1404, 30
    %v1406 = vsub.s32 %v1402, %v1405
    %vm1407 = vcmp.lt.s32.totalorder %v1406, 0
    %v1408 = vsub.s32 0, %v1406
    %v1409 = vsel %vm1407, %v1408, %v1406
    %v1410 = vclz %v1409
    %v1411 = vsub.s32 %v1410, 2
    %vm1412 = vcmp.gt.s32.totalorder 0, %v1411
    %v1413 = vsel %vm1412, 0, %v1411
    %v1414 = vsub.s32 32, %v1413
    %v1415 = vshll.u32 %v1406, %v1413
    %v1416 = vshrl.u32 %v1398, %v1414
    %v1417 = vor.u32 %v1415, %v1416
    %v1418 = vsub.s32 4294967266, %v1413
    %v1419 = vadd.s32 %v1418, 127
    %v1420 = vshll.u32 %v1419, 23
    %v1421 = vor.u32 4788187, %v1420
    %v1422 = vand.u32 2147483647, %v1421
    %v1424 = vcvt.s32.f32 %v1417
    %v1425 = vmul.f32 %v1424, %v1422
    %v1426 = vxor.u32 %v1425, 2147483648
    %v1427 = vsel %vm1306, %v1426, %v1425
    %v1428 = vsub.s32 4, %v1404
    %v1429 = vsel %vm1306, %v1428, %v1404
    %v1430 = vsel %vm1305, %v1090, %v1427
    %v1431 = vsel %vm1305, 0, %v1429
    %v1432 = vmul.f32 %v1430, %v1430
    %v1433 = vmul.f32 %v1432, -0.001358992
    %v1434 = vadd.f32 %v1433, 0.041655596
    %v1435 = vmul.f32 %v1432, %v1434
    %v1436 = vadd.f32 %v1435, -0.4999988
    %v1437 = vmul.f32 %v1432, %v1436
    %v1438 = vadd.f32 1.0, %v1437
    %v1439 = vmul.f32 %v1430, %v1430
    %v1440 = vmul.f32 %v1439, -0.00019511016
    %v1441 = vadd.f32 %v1440, 0.008332121
    %v1442 = vmul.f32 %v1439, %v1441
    %v1443 = vadd.f32 %v1442, -0.16666654
    %v1444 = vmul.f32 %v1439, %v1443
    %v1445 = vadd.f32 %v1444, 1.0
    %v1446 = vmul.f32 %v1445, %v1430
    %vm1447 = vweird.f32 %v1090
    %v1448 = vand.u32 %v1431, 3
    %vm1449 = vcmp.lt.s32.totalorder %v1448, 2
    %vm1450 = vcmp.eq.s32.totalorder %v1448, 0
    %v1451 = vxor.u32 %v1446, 2147483648
    %v1452 = vsel %vm1450, %v1438, %v1451
    %vm1453 = vcmp.eq.s32.totalorder %v1448, 2
    %v1454 = vxor.u32 %v1438, 2147483648
    %v1455 = vsel %vm1453, %v1454, %v1446
    %v1456 = vsel %vm1449, %v1452, %v1455
    %v1457 = vsel %vm1447, nan, %v1456
    %v1458 = vand.u32 2147483647, %v1093
    %vm1459 = vcmp.le.f32.partialorder %v1458, 0.7853982
    %vm1460 = vcmp.lt.s32.totalorder %v1093, 0
    %v1461 = vand.u32 %v1093, 2139095040
    %v1462 = vshrl.u32 %v1461, 23
    %v1463 = vsub.s32 %v1462, 127
    %v1464 = vand.u32 2147483647, %v1093
    %v1465 = vand.u32 %v1464, 8388607
    %v1466 = vor.u32 %v1465, 8388608
    %v1467 = vsub.s32 0, %v1466
    %v1468 = vadd.s32 %v1463, 1
    %vm1469 = vcmp.gt.s32.totalorder %v1468, 0
    %v1470 = vsel %vm1469, %v1468, 0
    %v1471 = vshrl.u32 %v1470, 5
    %v1472 = vand.u32 %v1470, 31
    %v1473 = vsub.s32 32, %v1472
    %v1474 = vshrl.u32 683565275, %v1473
    %v1475 = vshll.u32 683565275, %v1472
    %v1476 = vshrl.u32 2475754826, %v1473
    %v1477 = vor.u32 %v1475, %v1476
    %v1478 = vshll.u32 2475754826, %v1472
    %v1479 = vshrl.u32 2131351028, %v1473
    %v1480 = vor.u32 %v1478, %v1479
    %v1481 = vshll.u32 2131351028, %v1472
    %v1482 = vshrl.u32 2102212464, %v1473
    %v1483 = vor.u32 %v1481, %v1482
    %v1484 = vshll.u32 2102212464, %v1472
    %v1485 = vshrl.u32 920167782, %v1473
    %v1486 = vor.u32 %v1484, %v1485
    %v1487 = vshll.u32 920167782, %v1472
    %v1488 = vshrl.u32 1326507024, %v1473
    %v1489 = vor.u32 %v1487, %v1488
    %vm1490 = vcmp.lt.s32.totalorder %v1471, 1
    %vm1491 = vcmp.lt.s32.totalorder %v1471, 2
    %vm1492 = vcmp.lt.s32.totalorder %v1471, 3
    %vm1493 = vcmp.lt.s32.totalorder %v1471, 4
    %v1494 = vsel %vm1490, %v1474, %v1477
    %v1495 = vsel %vm1493, %v1483, 2102212464
    %v1496 = vsel %vm1492, %v1480, %v1495
    %v1497 = vsel %vm1491, %v1494, %v1496
    %v1498 = vsel %vm1490, %v1477, %v1480
    %v1499 = vsel %vm1493, %v1486, 920167782
    %v1500 = vsel %vm1492, %v1483, %v1499
    %v1501 = vsel %vm1491, %v1498, %v1500
    %v1502 = vsel %vm1490, %v1480, %v1483
    %v1503 = vsel %vm1493, %v1489, 1326507024
    %v1504 = vsel %vm1492, %v1486, %v1503
    %v1505 = vsel %vm1491, %v1502, %v1504
    %v1506 = vshll.u32 %v1466, 8
    %v1507 = vand.u32 %v1506, 65535
    %v1508 = vshrl.u32 %v1506, 16
    %v1509 = vand.u32 %v1505, 65535
    %v1510 = vshrl.u32 %v1505, 16
    %v1511 = vmul.u32 %v1507, %v1509
    %v1512 = vmul.u32 %v1507, %v1510
    %v1513 = vmul.u32 %v1508, %v1509
    %v1514 = vmul.u32 %v1508, %v1510
    %v1515 = vshll.u32 %v1512, 16
    %v1516 = vshrl.u32 %v1512, 16
    %v1517 = vshll.u32 %v1513, 16
    %v1518 = vshrl.u32 %v1513, 16
    %vm1519 = vc.u32 %v1511, %v1515
    %v1520 = vsel %vm1519, 1, 0
    %v1521 = vadd.s32 %v1511, %v1515
    %v1522 = vadd.s32 %v1514, %v1520
    %vm1523 = vc.u32 %v1521, %v1517
    %v1524 = vsel %vm1523, 1, 0
    %v1525 = vadd.s32 %v1521, %v1517
    %v1526 = vadd.s32 %v1522, %v1524
    %v1527 = vadd.s32 %v1526, %v1516
    %v1528 = vadd.s32 %v1527, %v1518
    %v1529 = vand.u32 %v1506, 65535
    %v1530 = vshrl.u32 %v1506, 16
    %v1531 = vand.u32 %v1501, 65535
    %v1532 = vshrl.u32 %v1501, 16
    %v1533 = vmul.u32 %v1529, %v1531
    %v1534 = vmul.u32 %v1529, %v1532
    %v1535 = vmul.u32 %v1530, %v1531
    %v1536 = vmul.u32 %v1530, %v1532
    %v1537 = vshll.u32 %v1534, 16
    %v1538 = vshrl.u32 %v1534, 16
    %v1539 = vshll.u32 %v1535, 16
    %v1540 = vshrl.u32 %v1535, 16
    %vm1541 = vc.u32 %v1533, %v1537
    %v1542 = vsel %vm1541, 1, 0
    %v1543 = vadd.s32 %v1533, %v1537
    %v1544 = vadd.s32 %v1536, %v1542
    %vm1545 = vc.u32 %v1543, %v1539
    %v1546 = vsel %vm1545, 1, 0
    %v1547 = vadd.s32 %v1543, %v1539
    %v1548 = vadd.s32 %v1544, %v1546
    %v1549 = vadd.s32 %v1548, %v1538
    %v1550 = vadd.s32 %v1549, %v1540
    %v1551 = vmul.u32 %v1506, %v1497
    %v1552 = vadd.s32 %v1528, %v1547
    %vm1553 = vc.u32 %v1528, %v1547
    %v1554 = vadd.s32 %v1550, 1
    %v1555 = vsel %vm1553, %v1554, %v1550
    %v1556 = vadd.s32 %v1551, %v1555
    %v1557 = vadd.s32 %v1556, 536870912
    %v1558 = vshrl.u32 %v1557, 30
    %v1559 = vshll.u32 %v1558, 30
    %v1560 = vsub.s32 %v1556, %v1559
    %vm1561 = vcmp.lt.s32.totalorder %v1560, 0
    %v1562 = vsub.s32 0, %v1560
    %v1563 = vsel %vm1561, %v1562, %v1560
    %v1564 = vclz %v1563
    %v1565 = vsub.s32 %v1564, 2
    %vm1566 = vcmp.gt.s32.totalorder 0, %v1565
    %v1567 = vsel %vm1566, 0, %v1565
    %v1568 = vsub.s32 32, %v1567
    %v1569 = vshll.u32 %v1560, %v1567
    %v1570 = vshrl.u32 %v1552, %v1568
    %v1571 = vor.u32 %v1569, %v1570
    %v1572 = vsub.s32 4294967266, %v1567
    %v1573 = vadd.s32 %v1572, 127
    %v1574 = vshll.u32 %v1573, 23
    %v1575 = vor.u32 4788187, %v1574
    %v1576 = vand.u32 2147483647, %v1575
    %v1578 = vcvt.s32.f32 %v1571
    %v1579 = vmul.f32 %v1578, %v1576
    %v1580 = vxor.u32 %v1579, 2147483648
    %v1581 = vsel %vm1460, %v1580, %v1579
    %v1582 = vsub.s32 4, %v1558
    %v1583 = vsel %vm1460, %v1582, %v1558
    %v1584 = vsel %vm1459, %v1093, %v1581
    %v1585 = vsel %vm1459, 0, %v1583
    %v1586 = vmul.f32 %v1584, %v1584
    %v1587 = vmul.f32 %v1586, -0.001358992
    %v1588 = vadd.f32 %v1587, 0.041655596
    %v1589 = vmul.f32 %v1586, %v1588
    %v1590 = vadd.f32 %v1589, -0.4999988
    %v1591 = vmul.f32 %v1586, %v1590
    %v1592 = vadd.f32 1.0, %v1591
    %v1593 = vmul.f32 %v1584, %v1584
    %v1594 = vmul.f32 %v1593, -0.00019511016
    %v1595 = vadd.f32 %v1594, 0.008332121
    %v1596 = vmul.f32 %v1593, %v1595
    %v1597 = vadd.f32 %v1596, -0.16666654
    %v1598 = vmul.f32 %v1593, %v1597
    %v1599 = vadd.f32 %v1598, 1.0
    %v1600 = vmul.f32 %v1599, %v1584
    %vm1601 = vweird.f32 %v1093
    %v1602 = vand.u32 %v1585, 3
    %vm1603 = vcmp.lt.s32.totalorder %v1602, 2
    %vm1604 = vcmp.eq.s32.totalorder %v1602, 0
    %v1605 = vxor.u32 %v1600, 2147483648
    %v1606 = vsel %vm1604, %v1592, %v1605
    %vm1607 = vcmp.eq.s32.totalorder %v1602, 2
    %v1608 = vxor.u32 %v1592, 2147483648
    %v1609 = vsel %vm1607, %v1608, %v1600
    %v1610 = vsel %vm1603, %v1606, %v1609
    %v1611 = vsel %vm1601, nan, %v1610
    %v1612 = vand.u32 2147483647, %v1096
    %vm1613 = vcmp.le.f32.partialorder %v1612, 0.7853982
    %vm1614 = vcmp.lt.s32.totalorder %v1096, 0
    %v1615 = vand.u32 %v1096, 2139095040
    %v1616 = vshrl.u32 %v1615, 23
    %v1617 = vsub.s32 %v1616, 127
    %v1618 = vand.u32 2147483647, %v1096
    %v1619 = vand.u32 %v1618, 8388607
    %v1620 = vor.u32 %v1619, 8388608
    %v1621 = vsub.s32 0, %v1620
    %v1622 = vadd.s32 %v1617, 1
    %vm1623 = vcmp.gt.s32.totalorder %v1622, 0
    %v1624 = vsel %vm1623, %v1622, 0
    %v1625 = vshrl.u32 %v1624, 5
    %v1626 = vand.u32 %v1624, 31
    %v1627 = vsub.s32 32, %v1626
    %v1628 = vshrl.u32 683565275, %v1627
    %v1629 = vshll.u32 683565275, %v1626
    %v1630 = vshrl.u32 2475754826, %v1627
    %v1631 = vor.u32 %v1629, %v1630
    %v1632 = vshll.u32 2475754826, %v1626
    %v1633 = vshrl.u32 2131351028, %v1627
    %v1634 = vor.u32 %v1632, %v1633
    %v1635 = vshll.u32 2131351028, %v1626
    %v1636 = vshrl.u32 2102212464, %v1627
    %v1637 = vor.u32 %v1635, %v1636
    %v1638 = vshll.u32 2102212464, %v1626
    %v1639 = vshrl.u32 920167782, %v1627
    %v1640 = vor.u32 %v1638, %v1639
    %v1641 = vshll.u32 920167782, %v1626
    %v1642 = vshrl.u32 1326507024, %v1627
    %v1643 = vor.u32 %v1641, %v1642
    %vm1644 = vcmp.lt.s32.totalorder %v1625, 1
    %vm1645 = vcmp.lt.s32.totalorder %v1625, 2
    %vm1646 = vcmp.lt.s32.totalorder %v1625, 3
    %vm1647 = vcmp.lt.s32.totalorder %v1625, 4
    %v1648 = vsel %vm1644, %v1628, %v1631
    %v1649 = vsel %vm1647, %v1637, 2102212464
    %v1650 = vsel %vm1646, %v1634, %v1649
    %v1651 = vsel %vm1645, %v1648, %v1650
    %v1652 = vsel %vm1644, %v1631, %v1634
    %v1653 = vsel %vm1647, %v1640, 920167782
    %v1654 = vsel %vm1646, %v1637, %v1653
    %v1655 = vsel %vm1645, %v1652, %v1654
    %v1656 = vsel %vm1644, %v1634, %v1637
    %v1657 = vsel %vm1647, %v1643, 1326507024
    %v1658 = vsel %vm1646, %v1640, %v1657
    %v1659 = vsel %vm1645, %v1656, %v1658
    %v1660 = vshll.u32 %v1620, 8
    %v1661 = vand.u32 %v1660, 65535
    %v1662 = vshrl.u32 %v1660, 16
    %v1663 = vand.u32 %v1659, 65535
    %v1664 = vshrl.u32 %v1659, 16
    %v1665 = vmul.u32 %v1661, %v1663
    %v1666 = vmul.u32 %v1661, %v1664
    %v1667 = vmul.u32 %v1662, %v1663
    %v1668 = vmul.u32 %v1662, %v1664
    %v1669 = vshll.u32 %v1666, 16
    %v1670 = vshrl.u32 %v1666, 16
    %v1671 = vshll.u32 %v1667, 16
    %v1672 = vshrl.u32 %v1667, 16
    %vm1673 = vc.u32 %v1665, %v1669
    %v1674 = vsel %vm1673, 1, 0
    %v1675 = vadd.s32 %v1665, %v1669
    %v1676 = vadd.s32 %v1668, %v1674
    %vm1677 = vc.u32 %v1675, %v1671
    %v1678 = vsel %vm1677, 1, 0
    %v1679 = vadd.s32 %v1675, %v1671
    %v1680 = vadd.s32 %v1676, %v1678
    %v1681 = vadd.s32 %v1680, %v1670
    %v1682 = vadd.s32 %v1681, %v1672
    %v1683 = vand.u32 %v1660, 65535
    %v1684 = vshrl.u32 %v1660, 16
    %v1685 = vand.u32 %v1655, 65535
    %v1686 = vshrl.u32 %v1655, 16
    %v1687 = vmul.u32 %v1683, %v1685
    %v1688 = vmul.u32 %v1683, %v1686
    %v1689 = vmul.u32 %v1684, %v1685
    %v1690 = vmul.u32 %v1684, %v1686
    %v1691 = vshll.u32 %v1688, 16
    %v1692 = vshrl.u32 %v1688, 16
    %v1693 = vshll.u32 %v1689, 16
    %v1694 = vshrl.u32 %v1689, 16
    %vm1695 = vc.u32 %v1687, %v1691
    %v1696 = vsel %vm1695, 1, 0
    %v1697 = vadd.s32 %v1687, %v1691
    %v1698 = vadd.s32 %v1690, %v1696
    %vm1699 = vc.u32 %v1697, %v1693
    %v1700 = vsel %vm1699, 1, 0
    %v1701 = vadd.s32 %v1697, %v1693
    %v1702 = vadd.s32 %v1698, %v1700
    %v1703 = vadd.s32 %v1702, %v1692
    %v1704 = vadd.s32 %v1703, %v1694
    %v1705 = vmul.u32 %v1660, %v1651
    %v1706 = vadd.s32 %v1682, %v1701
    %vm1707 = vc.u32 %v1682, %v1701
    %v1708 = vadd.s32 %v1704, 1
    %v1709 = vsel %vm1707, %v1708, %v1704
    %v1710 = vadd.s32 %v1705, %v1709
    %v1711 = vadd.s32 %v1710, 536870912
    %v1712 = vshrl.u32 %v1711, 30
    %v1713 = vshll.u32 %v1712, 30
    %v1714 = vsub.s32 %v1710, %v1713
    %vm1715 = vcmp.lt.s32.totalorder %v1714, 0
    %v1716 = vsub.s32 0, %v1714
    %v1717 = vsel %vm1715, %v1716, %v1714
    %v1718 = vclz %v1717
    %v1719 = vsub.s32 %v1718, 2
    %vm1720 = vcmp.gt.s32.totalorder 0, %v1719
    %v1721 = vsel %vm1720, 0, %v1719
    %v1722 = vsub.s32 32, %v1721
    %v1723 = vshll.u32 %v1714, %v1721
    %v1724 = vshrl.u32 %v1706, %v1722
    %v1725 = vor.u32 %v1723, %v1724
    %v1726 = vsub.s32 4294967266, %v1721
    %v1727 = vadd.s32 %v1726, 127
    %v1728 = vshll.u32 %v1727, 23
    %v1729 = vor.u32 4788187, %v1728
    %v1730 = vand.u32 2147483647, %v1729
    %v1732 = vcvt.s32.f32 %v1725
    %v1733 = vmul.f32 %v1732, %v1730
    %v1734 = vxor.u32 %v1733, 2147483648
    %v1735 = vsel %vm1614, %v1734, %v1733
    %v1736 = vsub.s32 4, %v1712
    %v1737 = vsel %vm1614, %v1736, %v1712
    %v1738 = vsel %vm1613, %v1096, %v1735
    %v1739 = vsel %vm1613, 0, %v1737
    %v1740 = vmul.f32 %v1738, %v1738
    %v1741 = vmul.f32 %v1740, -0.001358992
    %v1742 = vadd.f32 %v1741, 0.041655596
    %v1743 = vmul.f32 %v1740, %v1742
    %v1744 = vadd.f32 %v1743, -0.4999988
    %v1745 = vmul.f32 %v1740, %v1744
    %v1746 = vadd.f32 1.0, %v1745
    %v1747 = vmul.f32 %v1738, %v1738
    %v1748 = vmul.f32 %v1747, -0.00019511016
    %v1749 = vadd.f32 %v1748, 0.008332121
    %v1750 = vmul.f32 %v1747, %v1749
    %v1751 = vadd.f32 %v1750, -0.16666654
    %v1752 = vmul.f32 %v1747, %v1751
    %v1753 = vadd.f32 %v1752, 1.0
    %v1754 = vmul.f32 %v1753, %v1738
    %vm1755 = vweird.f32 %v1096
    %v1756 = vand.u32 %v1739, 3
    %vm1757 = vcmp.lt.s32.totalorder %v1756, 2
    %vm1758 = vcmp.eq.s32.totalorder %v1756, 0
    %v1759 = vxor.u32 %v1754, 2147483648
    %v1760 = vsel %vm1758, %v1746, %v1759
    %vm1761 = vcmp.eq.s32.totalorder %v1756, 2
    %v1762 = vxor.u32 %v1746, 2147483648
    %v1763 = vsel %vm1761, %v1762, %v1754
    %v1764 = vsel %vm1757, %v1760, %v1763
    %v1765 = vsel %vm1755, nan, %v1764
    %v1766 = vand.u32 2147483647, %v1099
    %vm1767 = vcmp.le.f32.partialorder %v1766, 0.7853982
    %vm1768 = vcmp.lt.s32.totalorder %v1099, 0
    %v1769 = vand.u32 %v1099, 2139095040
    %v1770 = vshrl.u32 %v1769, 23
    %v1771 = vsub.s32 %v1770, 127
    %v1772 = vand.u32 2147483647, %v1099
    %v1773 = vand.u32 %v1772, 8388607
    %v1774 = vor.u32 %v1773, 8388608
    %v1775 = vsub.s32 0, %v1774
    %v1776 = vadd.s32 %v1771, 1
    %vm1777 = vcmp.gt.s32.totalorder %v1776, 0
    %v1778 = vsel %vm1777, %v1776, 0
    %v1779 = vshrl.u32 %v1778, 5
    %v1780 = vand.u32 %v1778, 31
    %v1781 = vsub.s32 32, %v1780
    %v1782 = vshrl.u32 683565275, %v1781
    %v1783 = vshll.u32 683565275, %v1780
    %v1784 = vshrl.u32 2475754826, %v1781
    %v1785 = vor.u32 %v1783, %v1784
    %v1786 = vshll.u32 2475754826, %v1780
    %v1787 = vshrl.u32 2131351028, %v1781
    %v1788 = vor.u32 %v1786, %v1787
    %v1789 = vshll.u32 2131351028, %v1780
    %v1790 = vshrl.u32 2102212464, %v1781
    %v1791 = vor.u32 %v1789, %v1790
    %v1792 = vshll.u32 2102212464, %v1780
    %v1793 = vshrl.u32 920167782, %v1781
    %v1794 = vor.u32 %v1792, %v1793
    %v1795 = vshll.u32 920167782, %v1780
    %v1796 = vshrl.u32 1326507024, %v1781
    %v1797 = vor.u32 %v1795, %v1796
    %vm1798 = vcmp.lt.s32.totalorder %v1779, 1
    %vm1799 = vcmp.lt.s32.totalorder %v1779, 2
    %vm1800 = vcmp.lt.s32.totalorder %v1779, 3
    %vm1801 = vcmp.lt.s32.totalorder %v1779, 4
    %v1802 = vsel %vm1798, %v1782, %v1785
    %v1803 = vsel %vm1801, %v1791, 2102212464
    %v1804 = vsel %vm1800, %v1788, %v1803
    %v1805 = vsel %vm1799, %v1802, %v1804
    %v1806 = vsel %vm1798, %v1785, %v1788
    %v1807 = vsel %vm1801, %v1794, 920167782
    %v1808 = vsel %vm1800, %v1791, %v1807
    %v1809 = vsel %vm1799, %v1806, %v1808
    %v1810 = vsel %vm1798, %v1788, %v1791
    %v1811 = vsel %vm1801, %v1797, 1326507024
    %v1812 = vsel %vm1800, %v1794, %v1811
    %v1813 = vsel %vm1799, %v1810, %v1812
    %v1814 = vshll.u32 %v1774, 8
    %v1815 = vand.u32 %v1814, 65535
    %v1816 = vshrl.u32 %v1814, 16
    %v1817 = vand.u32 %v1813, 65535
    %v1818 = vshrl.u32 %v1813, 16
    %v1819 = vmul.u32 %v1815, %v1817
    %v1820 = vmul.u32 %v1815, %v1818
    %v1821 = vmul.u32 %v1816, %v1817
    %v1822 = vmul.u32 %v1816, %v1818
    %v1823 = vshll.u32 %v1820, 16
    %v1824 = vshrl.u32 %v1820, 16
    %v1825 = vshll.u32 %v1821, 16
    %v1826 = vshrl.u32 %v1821, 16
    %vm1827 = vc.u32 %v1819, %v1823
    %v1828 = vsel %vm1827, 1, 0
    %v1829 = vadd.s32 %v1819, %v1823
    %v1830 = vadd.s32 %v1822, %v1828
    %vm1831 = vc.u32 %v1829, %v1825
    %v1832 = vsel %vm1831, 1, 0
    %v1833 = vadd.s32 %v1829, %v1825
    %v1834 = vadd.s32 %v1830, %v1832
    %v1835 = vadd.s32 %v1834, %v1824
    %v1836 = vadd.s32 %v1835, %v1826
    %v1837 = vand.u32 %v1814, 65535
    %v1838 = vshrl.u32 %v1814, 16
    %v1839 = vand.u32 %v1809, 65535
    %v1840 = vshrl.u32 %v1809, 16
    %v1841 = vmul.u32 %v1837, %v1839
    %v1842 = vmul.u32 %v1837, %v1840
    %v1843 = vmul.u32 %v1838, %v1839
    %v1844 = vmul.u32 %v1838, %v1840
    %v1845 = vshll.u32 %v1842, 16
    %v1846 = vshrl.u32 %v1842, 16
    %v1847 = vshll.u32 %v1843, 16
    %v1848 = vshrl.u32 %v1843, 16
    %vm1849 = vc.u32 %v1841, %v1845
    %v1850 = vsel %vm1849, 1, 0
    %v1851 = vadd.s32 %v1841, %v1845
    %v1852 = vadd.s32 %v1844, %v1850
    %vm1853 = vc.u32 %v1851, %v1847
    %v1854 = vsel %vm1853, 1, 0
    %v1855 = vadd.s32 %v1851, %v1847
    %v1856 = vadd.s32 %v1852, %v1854
    %v1857 = vadd.s32 %v1856, %v1846
    %v1858 = vadd.s32 %v1857, %v1848
    %v1859 = vmul.u32 %v1814, %v1805
    %v1860 = vadd.s32 %v1836, %v1855
    %vm1861 = vc.u32 %v1836, %v1855
    %v1862 = vadd.s32 %v1858, 1
    %v1863 = vsel %vm1861, %v1862, %v1858
    %v1864 = vadd.s32 %v1859, %v1863
    %v1865 = vadd.s32 %v1864, 536870912
    %v1866 = vshrl.u32 %v1865, 30
    %v1867 = vshll.u32 %v1866, 30
    %v1868 = vsub.s32 %v1864, %v1867
    %vm1869 = vcmp.lt.s32.totalorder %v1868, 0
    %v1870 = vsub.s32 0, %v1868
    %v1871 = vsel %vm1869, %v1870, %v1868
    %v1872 = vclz %v1871
    %v1873 = vsub.s32 %v1872, 2
    %vm1874 = vcmp.gt.s32.totalorder 0, %v1873
    %v1875 = vsel %vm1874, 0, %v1873
    %v1876 = vsub.s32 32, %v1875
    %v1877 = vshll.u32 %v1868, %v1875
    %v1878 = vshrl.u32 %v1860, %v1876
    %v1879 = vor.u32 %v1877, %v1878
    %v1880 = vsub.s32 4294967266, %v1875
    %v1881 = vadd.s32 %v1880, 127
    %v1882 = vshll.u32 %v1881, 23
    %v1883 = vor.u32 4788187, %v1882
    %v1884 = vand.u32 2147483647, %v1883
    %v1886 = vcvt.s32.f32 %v1879
    %v1887 = vmul.f32 %v1886, %v1884
    %v1888 = vxor.u32 %v1887, 2147483648
    %v1889 = vsel %vm1768, %v1888, %v1887
    %v1890 = vsub.s32 4, %v1866
    %v1891 = vsel %vm1768, %v1890, %v1866
    %v1892 = vsel %vm1767, %v1099, %v1889
    %v1893 = vsel %vm1767, 0, %v1891
    %v1894 = vmul.f32 %v1892, %v1892
    %v1895 = vmul.f32 %v1894, -0.001358992
    %v1896 = vadd.f32 %v1895, 0.041655596
    %v1897 = vmul.f32 %v1894, %v1896
    %v1898 = vadd.f32 %v1897, -0.4999988
    %v1899 = vmul.f32 %v1894, %v1898
    %v1900 = vadd.f32 1.0, %v1899
    %v1901 = vmul.f32 %v1892, %v1892
    %v1902 = vmul.f32 %v1901, -0.00019511016
    %v1903 = vadd.f32 %v1902, 0.008332121
    %v1904 = vmul.f32 %v1901, %v1903
    %v1905 = vadd.f32 %v1904, -0.16666654
    %v1906 = vmul.f32 %v1901, %v1905
    %v1907 = vadd.f32 %v1906, 1.0
    %v1908 = vmul.f32 %v1907, %v1892
    %vm1909 = vweird.f32 %v1099
    %v1910 = vand.u32 %v1893, 3
    %vm1911 = vcmp.lt.s32.totalorder %v1910, 2
    %vm1912 = vcmp.eq.s32.totalorder %v1910, 0
    %v1913 = vxor.u32 %v1908, 2147483648
    %v1914 = vsel %vm1912, %v1900, %v1913
    %vm1915 = vcmp.eq.s32.totalorder %v1910, 2
    %v1916 = vxor.u32 %v1900, 2147483648
    %v1917 = vsel %vm1915, %v1916, %v1908
    %v1918 = vsel %vm1911, %v1914, %v1917
    %v1919 = vsel %vm1909, nan, %v1918
    %v1920 = vand.u32 2147483647, %v1102
    %vm1921 = vcmp.le.f32.partialorder %v1920, 0.7853982
    %vm1922 = vcmp.lt.s32.totalorder %v1102, 0
    %v1923 = vand.u32 %v1102, 2139095040
    %v1924 = vshrl.u32 %v1923, 23
    %v1925 = vsub.s32 %v1924, 127
    %v1926 = vand.u32 2147483647, %v1102
    %v1927 = vand.u32 %v1926, 8388607
    %v1928 = vor.u32 %v1927, 8388608
    %v1929 = vsub.s32 0, %v1928
    %v1930 = vadd.s32 %v1925, 1
    %vm1931 = vcmp.gt.s32.totalorder %v1930, 0
    %v1932 = vsel %vm1931, %v1930, 0
    %v1933 = vshrl.u32 %v1932, 5
    %v1934 = vand.u32 %v1932, 31
    %v1935 = vsub.s32 32, %v1934
    %v1936 = vshrl.u32 683565275, %v1935
    %v1937 = vshll.u32 683565275, %v1934
    %v1938 = vshrl.u32 2475754826, %v1935
    %v1939 = vor.u32 %v1937, %v1938
    %v1940 = vshll.u32 2475754826, %v1934
    %v1941 = vshrl.u32 2131351028, %v1935
    %v1942 = vor.u32 %v1940, %v1941
    %v1943 = vshll.u32 2131351028, %v1934
    %v1944 = vshrl.u32 2102212464, %v1935
    %v1945 = vor.u32 %v1943, %v1944
    %v1946 = vshll.u32 2102212464, %v1934
    %v1947 = vshrl.u32 920167782, %v1935
    %v1948 = vor.u32 %v1946, %v1947
    %v1949 = vshll.u32 920167782, %v1934
    %v1950 = vshrl.u32 1326507024, %v1935
    %v1951 = vor.u32 %v1949, %v1950
    %vm1952 = vcmp.lt.s32.totalorder %v1933, 1
    %vm1953 = vcmp.lt.s32.totalorder %v1933, 2
    %vm1954 = vcmp.lt.s32.totalorder %v1933, 3
    %vm1955 = vcmp.lt.s32.totalorder %v1933, 4
    %v1956 = vsel %vm1952, %v1936, %v1939
    %v1957 = vsel %vm1955, %v1945, 2102212464
    %v1958 = vsel %vm1954, %v1942, %v1957
    %v1959 = vsel %vm1953, %v1956, %v1958
    %v1960 = vsel %vm1952, %v1939, %v1942
    %v1961 = vsel %vm1955, %v1948, 920167782
    %v1962 = vsel %vm1954, %v1945, %v1961
    %v1963 = vsel %vm1953, %v1960, %v1962
    %v1964 = vsel %vm1952, %v1942, %v1945
    %v1965 = vsel %vm1955, %v1951, 1326507024
    %v1966 = vsel %vm1954, %v1948, %v1965
    %v1967 = vsel %vm1953, %v1964, %v1966
    %v1968 = vshll.u32 %v1928, 8
    %v1969 = vand.u32 %v1968, 65535
    %v1970 = vshrl.u32 %v1968, 16
    %v1971 = vand.u32 %v1967, 65535
    %v1972 = vshrl.u32 %v1967, 16
    %v1973 = vmul.u32 %v1969, %v1971
    %v1974 = vmul.u32 %v1969, %v1972
    %v1975 = vmul.u32 %v1970, %v1971
    %v1976 = vmul.u32 %v1970, %v1972
    %v1977 = vshll.u32 %v1974, 16
    %v1978 = vshrl.u32 %v1974, 16
    %v1979 = vshll.u32 %v1975, 16
    %v1980 = vshrl.u32 %v1975, 16
    %vm1981 = vc.u32 %v1973, %v1977
    %v1982 = vsel %vm1981, 1, 0
    %v1983 = vadd.s32 %v1973, %v1977
    %v1984 = vadd.s32 %v1976, %v1982
    %vm1985 = vc.u32 %v1983, %v1979
    %v1986 = vsel %vm1985, 1, 0
    %v1987 = vadd.s32 %v1983, %v1979
    %v1988 = vadd.s32 %v1984, %v1986
    %v1989 = vadd.s32 %v1988, %v1978
    %v1990 = vadd.s32 %v1989, %v1980
    %v1991 = vand.u32 %v1968, 65535
    %v1992 = vshrl.u32 %v1968, 16
    %v1993 = vand.u32 %v1963, 65535
    %v1994 = vshrl.u32 %v1963, 16
    %v1995 = vmul.u32 %v1991, %v1993
    %v1996 = vmul.u32 %v1991, %v1994
    %v1997 = vmul.u32 %v1992, %v1993
    %v1998 = vmul.u32 %v1992, %v1994
    %v1999 = vshll.u32 %v1996, 16
    %v2000 = vshrl.u32 %v1996, 16
    %v2001 = vshll.u32 %v1997, 16
    %v2002 = vshrl.u32 %v1997, 16
    %vm2003 = vc.u32 %v1995, %v1999
    %v2004 = vsel %vm2003, 1, 0
    %v2005 = vadd.s32 %v1995, %v1999
    %v2006 = vadd.s32 %v1998, %v2004
    %vm2007 = vc.u32 %v2005, %v2001
    %v2008 = vsel %vm2007, 1, 0
    %v2009 = vadd.s32 %v2005, %v2001
    %v2010 = vadd.s32 %v2006, %v2008
    %v2011 = vadd.s32 %v2010, %v2000
    %v2012 = vadd.s32 %v2011, %v2002
    %v2013 = vmul.u32 %v1968, %v1959
    %v2014 = vadd.s32 %v1990, %v2009
    %vm2015 = vc.u32 %v1990, %v2009
    %v2016 = vadd.s32 %v2012, 1
    %v2017 = vsel %vm2015, %v2016, %v2012
    %v2018 = vadd.s32 %v2013, %v2017
    %v2019 = vadd.s32 %v2018, 536870912
    %v2020 = vshrl.u32 %v2019, 30
    %v2021 = vshll.u32 %v2020, 30
    %v2022 = vsub.s32 %v2018, %v2021
    %vm2023 = vcmp.lt.s32.totalorder %v2022, 0
    %v2024 = vsub.s32 0, %v2022
    %v2025 = vsel %vm2023, %v2024, %v2022
    %v2026 = vclz %v2025
    %v2027 = vsub.s32 %v2026, 2
    %vm2028 = vcmp.gt.s32.totalorder 0, %v2027
    %v2029 = vsel %vm2028, 0, %v2027
    %v2030 = vsub.s32 32, %v2029
    %v2031 = vshll.u32 %v2022, %v2029
    %v2032 = vshrl.u32 %v2014, %v2030
    %v2033 = vor.u32 %v2031, %v2032
    %v2034 = vsub.s32 4294967266, %v2029
    %v2035 = vadd.s32 %v2034, 127
    %v2036 = vshll.u32 %v2035, 23
    %v2037 = vor.u32 4788187, %v2036
    %v2038 = vand.u32 2147483647, %v2037
    %v2040 = vcvt.s32.f32 %v2033
    %v2041 = vmul.f32 %v2040, %v2038
    %v2042 = vxor.u32 %v2041, 2147483648
    %v2043 = vsel %vm1922, %v2042, %v2041
    %v2044 = vsub.s32 4, %v2020
    %v2045 = vsel %vm1922, %v2044, %v2020
    %v2046 = vsel %vm1921, %v1102, %v2043
    %v2047 = vsel %vm1921, 0, %v2045
    %v2048 = vmul.f32 %v2046, %v2046
    %v2049 = vmul.f32 %v2048, -0.001358992
    %v2050 = vadd.f32 %v2049, 0.041655596
    %v2051 = vmul.f32 %v2048, %v2050
    %v2052 = vadd.f32 %v2051, -0.4999988
    %v2053 = vmul.f32 %v2048, %v2052
    %v2054 = vadd.f32 1.0, %v2053
    %v2055 = vmul.f32 %v2046, %v2046
    %v2056 = vmul.f32 %v2055, -0.00019511016
    %v2057 = vadd.f32 %v2056, 0.008332121
    %v2058 = vmul.f32 %v2055, %v2057
    %v2059 = vadd.f32 %v2058, -0.16666654
    %v2060 = vmul.f32 %v2055, %v2059
    %v2061 = vadd.f32 %v2060, 1.0
    %v2062 = vmul.f32 %v2061, %v2046
    %vm2063 = vweird.f32 %v1102
    %v2064 = vand.u32 %v2047, 3
    %vm2065 = vcmp.lt.s32.totalorder %v2064, 2
    %vm2066 = vcmp.eq.s32.totalorder %v2064, 0
    %v2067 = vxor.u32 %v2062, 2147483648
    %v2068 = vsel %vm2066, %v2054, %v2067
    %vm2069 = vcmp.eq.s32.totalorder %v2064, 2
    %v2070 = vxor.u32 %v2054, 2147483648
    %v2071 = vsel %vm2069, %v2070, %v2062
    %v2072 = vsel %vm2065, %v2068, %v2071
    %v2073 = vsel %vm2063, nan, %v2072
    %v2074 = vand.u32 2147483647, %v1105
    %vm2075 = vcmp.le.f32.partialorder %v2074, 0.7853982
    %vm2076 = vcmp.lt.s32.totalorder %v1105, 0
    %v2077 = vand.u32 %v1105, 2139095040
    %v2078 = vshrl.u32 %v2077, 23
    %v2079 = vsub.s32 %v2078, 127
    %v2080 = vand.u32 2147483647, %v1105
    %v2081 = vand.u32 %v2080, 8388607
    %v2082 = vor.u32 %v2081, 8388608
    %v2083 = vsub.s32 0, %v2082
    %v2084 = vadd.s32 %v2079, 1
    %vm2085 = vcmp.gt.s32.totalorder %v2084, 0
    %v2086 = vsel %vm2085, %v2084, 0
    %v2087 = vshrl.u32 %v2086, 5
    %v2088 = vand.u32 %v2086, 31
    %v2089 = vsub.s32 32, %v2088
    %v2090 = vshrl.u32 683565275, %v2089
    %v2091 = vshll.u32 683565275, %v2088
    %v2092 = vshrl.u32 2475754826, %v2089
    %v2093 = vor.u32 %v2091, %v2092
    %v2094 = vshll.u32 2475754826, %v2088
    %v2095 = vshrl.u32 2131351028, %v2089
    %v2096 = vor.u32 %v2094, %v2095
    %v2097 = vshll.u32 2131351028, %v2088
    %v2098 = vshrl.u32 2102212464, %v2089
    %v2099 = vor.u32 %v2097, %v2098
    %v2100 = vshll.u32 2102212464, %v2088
    %v2101 = vshrl.u32 920167782, %v2089
    %v2102 = vor.u32 %v2100, %v2101
    %v2103 = vshll.u32 920167782, %v2088
    %v2104 = vshrl.u32 1326507024, %v2089
    %v2105 = vor.u32 %v2103, %v2104
    %vm2106 = vcmp.lt.s32.totalorder %v2087, 1
    %vm2107 = vcmp.lt.s32.totalorder %v2087, 2
    %vm2108 = vcmp.lt.s32.totalorder %v2087, 3
    %vm2109 = vcmp.lt.s32.totalorder %v2087, 4
    %v2110 = vsel %vm2106, %v2090, %v2093
    %v2111 = vsel %vm2109, %v2099, 2102212464
    %v2112 = vsel %vm2108, %v2096, %v2111
    %v2113 = vsel %vm2107, %v2110, %v2112
    %v2114 = vsel %vm2106, %v2093, %v2096
    %v2115 = vsel %vm2109, %v2102, 920167782
    %v2116 = vsel %vm2108, %v2099, %v2115
    %v2117 = vsel %vm2107, %v2114, %v2116
    %v2118 = vsel %vm2106, %v2096, %v2099
    %v2119 = vsel %vm2109, %v2105, 1326507024
    %v2120 = vsel %vm2108, %v2102, %v2119
    %v2121 = vsel %vm2107, %v2118, %v2120
    %v2122 = vshll.u32 %v2082, 8
    %v2123 = vand.u32 %v2122, 65535
    %v2124 = vshrl.u32 %v2122, 16
    %v2125 = vand.u32 %v2121, 65535
    %v2126 = vshrl.u32 %v2121, 16
    %v2127 = vmul.u32 %v2123, %v2125
    %v2128 = vmul.u32 %v2123, %v2126
    %v2129 = vmul.u32 %v2124, %v2125
    %v2130 = vmul.u32 %v2124, %v2126
    %v2131 = vshll.u32 %v2128, 16
    %v2132 = vshrl.u32 %v2128, 16
    %v2133 = vshll.u32 %v2129, 16
    %v2134 = vshrl.u32 %v2129, 16
    %vm2135 = vc.u32 %v2127, %v2131
    %v2136 = vsel %vm2135, 1, 0
    %v2137 = vadd.s32 %v2127, %v2131
    %v2138 = vadd.s32 %v2130, %v2136
    %vm2139 = vc.u32 %v2137, %v2133
    %v2140 = vsel %vm2139, 1, 0
    %v2141 = vadd.s32 %v2137, %v2133
    %v2142 = vadd.s32 %v2138, %v2140
    %v2143 = vadd.s32 %v2142, %v2132
    %v2144 = vadd.s32 %v2143, %v2134
    %v2145 = vand.u32 %v2122, 65535
    %v2146 = vshrl.u32 %v2122, 16
    %v2147 = vand.u32 %v2117, 65535
    %v2148 = vshrl.u32 %v2117, 16
    %v2149 = vmul.u32 %v2145, %v2147
    %v2150 = vmul.u32 %v2145, %v2148
    %v2151 = vmul.u32 %v2146, %v2147
    %v2152 = vmul.u32 %v2146, %v2148
    %v2153 = vshll.u32 %v2150, 16
    %v2154 = vshrl.u32 %v2150, 16
    %v2155 = vshll.u32 %v2151, 16
    %v2156 = vshrl.u32 %v2151, 16
    %vm2157 = vc.u32 %v2149, %v2153
    %v2158 = vsel %vm2157, 1, 0
    %v2159 = vadd.s32 %v2149, %v2153
    %v2160 = vadd.s32 %v2152, %v2158
    %vm2161 = vc.u32 %v2159, %v2155
    %v2162 = vsel %vm2161, 1, 0
    %v2163 = vadd.s32 %v2159, %v2155
    %v2164 = vadd.s32 %v2160, %v2162
    %v2165 = vadd.s32 %v2164, %v2154
    %v2166 = vadd.s32 %v2165, %v2156
    %v2167 = vmul.u32 %v2122, %v2113
    %v2168 = vadd.s32 %v2144, %v2163
    %vm2169 = vc.u32 %v2144, %v2163
    %v2170 = vadd.s32 %v2166, 1
    %v2171 = vsel %vm2169, %v2170, %v2166
    %v2172 = vadd.s32 %v2167, %v2171
    %v2173 = vadd.s32 %v2172, 536870912
    %v2174 = vshrl.u32 %v2173, 30
    %v2175 = vshll.u32 %v2174, 30
    %v2176 = vsub.s32 %v2172, %v2175
    %vm2177 = vcmp.lt.s32.totalorder %v2176, 0
    %v2178 = vsub.s32 0, %v2176
    %v2179 = vsel %vm2177, %v2178, %v2176
    %v2180 = vclz %v2179
    %v2181 = vsub.s32 %v2180, 2
    %vm2182 = vcmp.gt.s32.totalorder 0, %v2181
    %v2183 = vsel %vm2182, 0, %v2181
    %v2184 = vsub.s32 32, %v2183
    %v2185 = vshll.u32 %v2176, %v2183
    %v2186 = vshrl.u32 %v2168, %v2184
    %v2187 = vor.u32 %v2185, %v2186
    %v2188 = vsub.s32 4294967266, %v2183
    %v2189 = vadd.s32 %v2188, 127
    %v2190 = vshll.u32 %v2189, 23
    %v2191 = vor.u32 4788187, %v2190
    %v2192 = vand.u32 2147483647, %v2191
    %v2194 = vcvt.s32.f32 %v2187
    %v2195 = vmul.f32 %v2194, %v2192
    %v2196 = vxor.u32 %v2195, 2147483648
    %v2197 = vsel %vm2076, %v2196, %v2195
    %v2198 = vsub.s32 4, %v2174
    %v2199 = vsel %vm2076, %v2198, %v2174
    %v2200 = vsel %vm2075, %v1105, %v2197
    %v2201 = vsel %vm2075, 0, %v2199
    %v2202 = vmul.f32 %v2200, %v2200
    %v2203 = vmul.f32 %v2202, -0.001358992
    %v2204 = vadd.f32 %v2203, 0.041655596
    %v2205 = vmul.f32 %v2202, %v2204
    %v2206 = vadd.f32 %v2205, -0.4999988
    %v2207 = vmul.f32 %v2202, %v2206
    %v2208 = vadd.f32 1.0, %v2207
    %v2209 = vmul.f32 %v2200, %v2200
    %v2210 = vmul.f32 %v2209, -0.00019511016
    %v2211 = vadd.f32 %v2210, 0.008332121
    %v2212 = vmul.f32 %v2209, %v2211
    %v2213 = vadd.f32 %v2212, -0.16666654
    %v2214 = vmul.f32 %v2209, %v2213
    %v2215 = vadd.f32 %v2214, 1.0
    %v2216 = vmul.f32 %v2215, %v2200
    %vm2217 = vweird.f32 %v1105
    %v2218 = vand.u32 %v2201, 3
    %vm2219 = vcmp.lt.s32.totalorder %v2218, 2
    %vm2220 = vcmp.eq.s32.totalorder %v2218, 0
    %v2221 = vxor.u32 %v2216, 2147483648
    %v2222 = vsel %vm2220, %v2208, %v2221
    %vm2223 = vcmp.eq.s32.totalorder %v2218, 2
    %v2224 = vxor.u32 %v2208, 2147483648
    %v2225 = vsel %vm2223, %v2224, %v2216
    %v2226 = vsel %vm2219, %v2222, %v2225
    %v2227 = vsel %vm2217, nan, %v2226
    %v2228 = vand.u32 2147483647, %v1108
    %vm2229 = vcmp.le.f32.partialorder %v2228, 0.7853982
    %vm2230 = vcmp.lt.s32.totalorder %v1108, 0
    %v2231 = vand.u32 %v1108, 2139095040
    %v2232 = vshrl.u32 %v2231, 23
    %v2233 = vsub.s32 %v2232, 127
    %v2234 = vand.u32 2147483647, %v1108
    %v2235 = vand.u32 %v2234, 8388607
    %v2236 = vor.u32 %v2235, 8388608
    %v2237 = vsub.s32 0, %v2236
    %v2238 = vadd.s32 %v2233, 1
    %vm2239 = vcmp.gt.s32.totalorder %v2238, 0
    %v2240 = vsel %vm2239, %v2238, 0
    %v2241 = vshrl.u32 %v2240, 5
    %v2242 = vand.u32 %v2240, 31
    %v2243 = vsub.s32 32, %v2242
    %v2244 = vshrl.u32 683565275, %v2243
    %v2245 = vshll.u32 683565275, %v2242
    %v2246 = vshrl.u32 2475754826, %v2243
    %v2247 = vor.u32 %v2245, %v2246
    %v2248 = vshll.u32 2475754826, %v2242
    %v2249 = vshrl.u32 2131351028, %v2243
    %v2250 = vor.u32 %v2248, %v2249
    %v2251 = vshll.u32 2131351028, %v2242
    %v2252 = vshrl.u32 2102212464, %v2243
    %v2253 = vor.u32 %v2251, %v2252
    %v2254 = vshll.u32 2102212464, %v2242
    %v2255 = vshrl.u32 920167782, %v2243
    %v2256 = vor.u32 %v2254, %v2255
    %v2257 = vshll.u32 920167782, %v2242
    %v2258 = vshrl.u32 1326507024, %v2243
    %v2259 = vor.u32 %v2257, %v2258
    %vm2260 = vcmp.lt.s32.totalorder %v2241, 1
    %vm2261 = vcmp.lt.s32.totalorder %v2241, 2
    %vm2262 = vcmp.lt.s32.totalorder %v2241, 3
    %vm2263 = vcmp.lt.s32.totalorder %v2241, 4
    %v2264 = vsel %vm2260, %v2244, %v2247
    %v2265 = vsel %vm2263, %v2253, 2102212464
    %v2266 = vsel %vm2262, %v2250, %v2265
    %v2267 = vsel %vm2261, %v2264, %v2266
    %v2268 = vsel %vm2260, %v2247, %v2250
    %v2269 = vsel %vm2263, %v2256, 920167782
    %v2270 = vsel %vm2262, %v2253, %v2269
    %v2271 = vsel %vm2261, %v2268, %v2270
    %v2272 = vsel %vm2260, %v2250, %v2253
    %v2273 = vsel %vm2263, %v2259, 1326507024
    %v2274 = vsel %vm2262, %v2256, %v2273
    %v2275 = vsel %vm2261, %v2272, %v2274
    %v2276 = vshll.u32 %v2236, 8
    %v2277 = vand.u32 %v2276, 65535
    %v2278 = vshrl.u32 %v2276, 16
    %v2279 = vand.u32 %v2275, 65535
    %v2280 = vshrl.u32 %v2275, 16
    %v2281 = vmul.u32 %v2277, %v2279
    %v2282 = vmul.u32 %v2277, %v2280
    %v2283 = vmul.u32 %v2278, %v2279
    %v2284 = vmul.u32 %v2278, %v2280
    %v2285 = vshll.u32 %v2282, 16
    %v2286 = vshrl.u32 %v2282, 16
    %v2287 = vshll.u32 %v2283, 16
    %v2288 = vshrl.u32 %v2283, 16
    %vm2289 = vc.u32 %v2281, %v2285
    %v2290 = vsel %vm2289, 1, 0
    %v2291 = vadd.s32 %v2281, %v2285
    %v2292 = vadd.s32 %v2284, %v2290
    %vm2293 = vc.u32 %v2291, %v2287
    %v2294 = vsel %vm2293, 1, 0
    %v2295 = vadd.s32 %v2291, %v2287
    %v2296 = vadd.s32 %v2292, %v2294
    %v2297 = vadd.s32 %v2296, %v2286
    %v2298 = vadd.s32 %v2297, %v2288
    %v2299 = vand.u32 %v2276, 65535
    %v2300 = vshrl.u32 %v2276, 16
    %v2301 = vand.u32 %v2271, 65535
    %v2302 = vshrl.u32 %v2271, 16
    %v2303 = vmul.u32 %v2299, %v2301
    %v2304 = vmul.u32 %v2299, %v2302
    %v2305 = vmul.u32 %v2300, %v2301
    %v2306 = vmul.u32 %v2300, %v2302
    %v2307 = vshll.u32 %v2304, 16
    %v2308 = vshrl.u32 %v2304, 16
    %v2309 = vshll.u32 %v2305, 16
    %v2310 = vshrl.u32 %v2305, 16
    %vm2311 = vc.u32 %v2303, %v2307
    %v2312 = vsel %vm2311, 1, 0
    %v2313 = vadd.s32 %v2303, %v2307
    %v2314 = vadd.s32 %v2306, %v2312
    %vm2315 = vc.u32 %v2313, %v2309
    %v2316 = vsel %vm2315, 1, 0
    %v2317 = vadd.s32 %v2313, %v2309
    %v2318 = vadd.s32 %v2314, %v2316
    %v2319 = vadd.s32 %v2318, %v2308
    %v2320 = vadd.s32 %v2319, %v2310
    %v2321 = vmul.u32 %v2276, %v2267
    %v2322 = vadd.s32 %v2298, %v2317
    %vm2323 = vc.u32 %v2298, %v2317
    %v2324 = vadd.s32 %v2320, 1
    %v2325 = vsel %vm2323, %v2324, %v2320
    %v2326 = vadd.s32 %v2321, %v2325
    %v2327 = vadd.s32 %v2326, 536870912
    %v2328 = vshrl.u32 %v2327, 30
    %v2329 = vshll.u32 %v2328, 30
    %v2330 = vsub.s32 %v2326, %v2329
    %vm2331 = vcmp.lt.s32.totalorder %v2330, 0
    %v2332 = vsub.s32 0, %v2330
    %v2333 = vsel %vm2331, %v2332, %v2330
    %v2334 = vclz %v2333
    %v2335 = vsub.s32 %v2334, 2
    %vm2336 = vcmp.gt.s32.totalorder 0, %v2335
    %v2337 = vsel %vm2336, 0, %v2335
    %v2338 = vsub.s32 32, %v2337
    %v2339 = vshll.u32 %v2330, %v2337
    %v2340 = vshrl.u32 %v2322, %v2338
    %v2341 = vor.u32 %v2339, %v2340
    %v2342 = vsub.s32 4294967266, %v2337
    %v2343 = vadd.s32 %v2342, 127
    %v2344 = vshll.u32 %v2343, 23
    %v2345 = vor.u32 4788187, %v2344
    %v2346 = vand.u32 2147483647, %v2345
    %v2348 = vcvt.s32.f32 %v2341
    %v2349 = vmul.f32 %v2348, %v2346
    %v2350 = vxor.u32 %v2349, 2147483648
    %v2351 = vsel %vm2230, %v2350, %v2349
    %v2352 = vsub.s32 4, %v2328
    %v2353 = vsel %vm2230, %v2352, %v2328
    %v2354 = vsel %vm2229, %v1108, %v2351
    %v2355 = vsel %vm2229, 0, %v2353
    %v2356 = vmul.f32 %v2354, %v2354
    %v2357 = vmul.f32 %v2356, -0.001358992
    %v2358 = vadd.f32 %v2357, 0.041655596
    %v2359 = vmul.f32 %v2356, %v2358
    %v2360 = vadd.f32 %v2359, -0.4999988
    %v2361 = vmul.f32 %v2356, %v2360
    %v2362 = vadd.f32 1.0, %v2361
    %v2363 = vmul.f32 %v2354, %v2354
    %v2364 = vmul.f32 %v2363, -0.00019511016
    %v2365 = vadd.f32 %v2364, 0.008332121
    %v2366 = vmul.f32 %v2363, %v2365
    %v2367 = vadd.f32 %v2366, -0.16666654
    %v2368 = vmul.f32 %v2363, %v2367
    %v2369 = vadd.f32 %v2368, 1.0
    %v2370 = vmul.f32 %v2369, %v2354
    %vm2371 = vweird.f32 %v1108
    %v2372 = vand.u32 %v2355, 3
    %vm2373 = vcmp.lt.s32.totalorder %v2372, 2
    %vm2374 = vcmp.eq.s32.totalorder %v2372, 0
    %v2375 = vxor.u32 %v2370, 2147483648
    %v2376 = vsel %vm2374, %v2362, %v2375
    %vm2377 = vcmp.eq.s32.totalorder %v2372, 2
    %v2378 = vxor.u32 %v2362, 2147483648
    %v2379 = vsel %vm2377, %v2378, %v2370
    %v2380 = vsel %vm2373, %v2376, %v2379
    %v2381 = vsel %vm2371, nan, %v2380
    %v2382 = vand.u32 2147483647, %v1111
    %vm2383 = vcmp.le.f32.partialorder %v2382, 0.7853982
    %vm2384 = vcmp.lt.s32.totalorder %v1111, 0
    %v2385 = vand.u32 %v1111, 2139095040
    %v2386 = vshrl.u32 %v2385, 23
    %v2387 = vsub.s32 %v2386, 127
    %v2388 = vand.u32 2147483647, %v1111
    %v2389 = vand.u32 %v2388, 8388607
    %v2390 = vor.u32 %v2389, 8388608
    %v2391 = vsub.s32 0, %v2390
    %v2392 = vadd.s32 %v2387, 1
    %vm2393 = vcmp.gt.s32.totalorder %v2392, 0
    %v2394 = vsel %vm2393, %v2392, 0
    %v2395 = vshrl.u32 %v2394, 5
    %v2396 = vand.u32 %v2394, 31
    %v2397 = vsub.s32 32, %v2396
    %v2398 = vshrl.u32 683565275, %v2397
    %v2399 = vshll.u32 683565275, %v2396
    %v2400 = vshrl.u32 2475754826, %v2397
    %v2401 = vor.u32 %v2399, %v2400
    %v2402 = vshll.u32 2475754826, %v2396
    %v2403 = vshrl.u32 2131351028, %v2397
    %v2404 = vor.u32 %v2402, %v2403
    %v2405 = vshll.u32 2131351028, %v2396
    %v2406 = vshrl.u32 2102212464, %v2397
    %v2407 = vor.u32 %v2405, %v2406
    %v2408 = vshll.u32 2102212464, %v2396
    %v2409 = vshrl.u32 920167782, %v2397
    %v2410 = vor.u32 %v2408, %v2409
    %v2411 = vshll.u32 920167782, %v2396
    %v2412 = vshrl.u32 1326507024, %v2397
    %v2413 = vor.u32 %v2411, %v2412
    %vm2414 = vcmp.lt.s32.totalorder %v2395, 1
    %vm2415 = vcmp.lt.s32.totalorder %v2395, 2
    %vm2416 = vcmp.lt.s32.totalorder %v2395, 3
    %vm2417 = vcmp.lt.s32.totalorder %v2395, 4
    %v2418 = vsel %vm2414, %v2398, %v2401
    %v2419 = vsel %vm2417, %v2407, 2102212464
    %v2420 = vsel %vm2416, %v2404, %v2419
    %v2421 = vsel %vm2415, %v2418, %v2420
    %v2422 = vsel %vm2414, %v2401, %v2404
    %v2423 = vsel %vm2417, %v2410, 920167782
    %v2424 = vsel %vm2416, %v2407, %v2423
    %v2425 = vsel %vm2415, %v2422, %v2424
    %v2426 = vsel %vm2414, %v2404, %v2407
    %v2427 = vsel %vm2417, %v2413, 1326507024
    %v2428 = vsel %vm2416, %v2410, %v2427
    %v2429 = vsel %vm2415, %v2426, %v2428
    %v2430 = vshll.u32 %v2390, 8
    %v2431 = vand.u32 %v2430, 65535
    %v2432 = vshrl.u32 %v2430, 16
    %v2433 = vand.u32 %v2429, 65535
    %v2434 = vshrl.u32 %v2429, 16
    %v2435 = vmul.u32 %v2431, %v2433
    %v2436 = vmul.u32 %v2431, %v2434
    %v2437 = vmul.u32 %v2432, %v2433
    %v2438 = vmul.u32 %v2432, %v2434
    %v2439 = vshll.u32 %v2436, 16
    %v2440 = vshrl.u32 %v2436, 16
    %v2441 = vshll.u32 %v2437, 16
    %v2442 = vshrl.u32 %v2437, 16
    %vm2443 = vc.u32 %v2435, %v2439
    %v2444 = vsel %vm2443, 1, 0
    %v2445 = vadd.s32 %v2435, %v2439
    %v2446 = vadd.s32 %v2438, %v2444
    %vm2447 = vc.u32 %v2445, %v2441
    %v2448 = vsel %vm2447, 1, 0
    %v2449 = vadd.s32 %v2445, %v2441
    %v2450 = vadd.s32 %v2446, %v2448
    %v2451 = vadd.s32 %v2450, %v2440
    %v2452 = vadd.s32 %v2451, %v2442
    %v2453 = vand.u32 %v2430, 65535
    %v2454 = vshrl.u32 %v2430, 16
    %v2455 = vand.u32 %v2425, 65535
    %v2456 = vshrl.u32 %v2425, 16
    %v2457 = vmul.u32 %v2453, %v2455
    %v2458 = vmul.u32 %v2453, %v2456
    %v2459 = vmul.u32 %v2454, %v2455
    %v2460 = vmul.u32 %v2454, %v2456
    %v2461 = vshll.u32 %v2458, 16
    %v2462 = vshrl.u32 %v2458, 16
    %v2463 = vshll.u32 %v2459, 16
    %v2464 = vshrl.u32 %v2459, 16
    %vm2465 = vc.u32 %v2457, %v2461
    %v2466 = vsel %vm2465, 1, 0
    %v2467 = vadd.s32 %v2457, %v2461
    %v2468 = vadd.s32 %v2460, %v2466
    %vm2469 = vc.u32 %v2467, %v2463
    %v2470 = vsel %vm2469, 1, 0
    %v2471 = vadd.s32 %v2467, %v2463
    %v2472 = vadd.s32 %v2468, %v2470
    %v2473 = vadd.s32 %v2472, %v2462
    %v2474 = vadd.s32 %v2473, %v2464
    %v2475 = vmul.u32 %v2430, %v2421
    %v2476 = vadd.s32 %v2452, %v2471
    %vm2477 = vc.u32 %v2452, %v2471
    %v2478 = vadd.s32 %v2474, 1
    %v2479 = vsel %vm2477, %v2478, %v2474
    %v2480 = vadd.s32 %v2475, %v2479
    %v2481 = vadd.s32 %v2480, 536870912
    %v2482 = vshrl.u32 %v2481, 30
    %v2483 = vshll.u32 %v2482, 30
    %v2484 = vsub.s32 %v2480, %v2483
    %vm2485 = vcmp.lt.s32.totalorder %v2484, 0
    %v2486 = vsub.s32 0, %v2484
    %v2487 = vsel %vm2485, %v2486, %v2484
    %v2488 = vclz %v2487
    %v2489 = vsub.s32 %v2488, 2
    %vm2490 = vcmp.gt.s32.totalorder 0, %v2489
    %v2491 = vsel %vm2490, 0, %v2489
    %v2492 = vsub.s32 32, %v2491
    %v2493 = vshll.u32 %v2484, %v2491
    %v2494 = vshrl.u32 %v2476, %v2492
    %v2495 = vor.u32 %v2493, %v2494
    %v2496 = vsub.s32 4294967266, %v2491
    %v2497 = vadd.s32 %v2496, 127
    %v2498 = vshll.u32 %v2497, 23
    %v2499 = vor.u32 4788187, %v2498
    %v2500 = vand.u32 2147483647, %v2499
    %v2502 = vcvt.s32.f32 %v2495
    %v2503 = vmul.f32 %v2502, %v2500
    %v2504 = vxor.u32 %v2503, 2147483648
    %v2505 = vsel %vm2384, %v2504, %v2503
    %v2506 = vsub.s32 4, %v2482
    %v2507 = vsel %vm2384, %v2506, %v2482
    %v2508 = vsel %vm2383, %v1111, %v2505
    %v2509 = vsel %vm2383, 0, %v2507
    %v2510 = vmul.f32 %v2508, %v2508
    %v2511 = vmul.f32 %v2510, -0.001358992
    %v2512 = vadd.f32 %v2511, 0.041655596
    %v2513 = vmul.f32 %v2510, %v2512
    %v2514 = vadd.f32 %v2513, -0.4999988
    %v2515 = vmul.f32 %v2510, %v2514
    %v2516 = vadd.f32 1.0, %v2515
    %v2517 = vmul.f32 %v2508, %v2508
    %v2518 = vmul.f32 %v2517, -0.00019511016
    %v2519 = vadd.f32 %v2518, 0.008332121
    %v2520 = vmul.f32 %v2517, %v2519
    %v2521 = vadd.f32 %v2520, -0.16666654
    %v2522 = vmul.f32 %v2517, %v2521
    %v2523 = vadd.f32 %v2522, 1.0
    %v2524 = vmul.f32 %v2523, %v2508
    %vm2525 = vweird.f32 %v1111
    %v2526 = vand.u32 %v2509, 3
    %vm2527 = vcmp.lt.s32.totalorder %v2526, 2
    %vm2528 = vcmp.eq.s32.totalorder %v2526, 0
    %v2529 = vxor.u32 %v2524, 2147483648
    %v2530 = vsel %vm2528, %v2516, %v2529
    %vm2531 = vcmp.eq.s32.totalorder %v2526, 2
    %v2532 = vxor.u32 %v2516, 2147483648
    %v2533 = vsel %vm2531, %v2532, %v2524
    %v2534 = vsel %vm2527, %v2530, %v2533
    %v2535 = vsel %vm2525, nan, %v2534
    %v2536 = vand.u32 2147483647, %v1114
    %vm2537 = vcmp.le.f32.partialorder %v2536, 0.7853982
    %vm2538 = vcmp.lt.s32.totalorder %v1114, 0
    %v2539 = vand.u32 %v1114, 2139095040
    %v2540 = vshrl.u32 %v2539, 23
    %v2541 = vsub.s32 %v2540, 127
    %v2542 = vand.u32 2147483647, %v1114
    %v2543 = vand.u32 %v2542, 8388607
    %v2544 = vor.u32 %v2543, 8388608
    %v2545 = vsub.s32 0, %v2544
    %v2546 = vadd.s32 %v2541, 1
    %vm2547 = vcmp.gt.s32.totalorder %v2546, 0
    %v2548 = vsel %vm2547, %v2546, 0
    %v2549 = vshrl.u32 %v2548, 5
    %v2550 = vand.u32 %v2548, 31
    %v2551 = vsub.s32 32, %v2550
    %v2552 = vshrl.u32 683565275, %v2551
    %v2553 = vshll.u32 683565275, %v2550
    %v2554 = vshrl.u32 2475754826, %v2551
    %v2555 = vor.u32 %v2553, %v2554
    %v2556 = vshll.u32 2475754826, %v2550
    %v2557 = vshrl.u32 2131351028, %v2551
    %v2558 = vor.u32 %v2556, %v2557
    %v2559 = vshll.u32 2131351028, %v2550
    %v2560 = vshrl.u32 2102212464, %v2551
    %v2561 = vor.u32 %v2559, %v2560
    %v2562 = vshll.u32 2102212464, %v2550
    %v2563 = vshrl.u32 920167782, %v2551
    %v2564 = vor.u32 %v2562, %v2563
    %v2565 = vshll.u32 920167782, %v2550
    %v2566 = vshrl.u32 1326507024, %v2551
    %v2567 = vor.u32 %v2565, %v2566
    %vm2568 = vcmp.lt.s32.totalorder %v2549, 1
    %vm2569 = vcmp.lt.s32.totalorder %v2549, 2
    %vm2570 = vcmp.lt.s32.totalorder %v2549, 3
    %vm2571 = vcmp.lt.s32.totalorder %v2549, 4
    %v2572 = vsel %vm2568, %v2552, %v2555
    %v2573 = vsel %vm2571, %v2561, 2102212464
    %v2574 = vsel %vm2570, %v2558, %v2573
    %v2575 = vsel %vm2569, %v2572, %v2574
    %v2576 = vsel %vm2568, %v2555, %v2558
    %v2577 = vsel %vm2571, %v2564, 920167782
    %v2578 = vsel %vm2570, %v2561, %v2577
    %v2579 = vsel %vm2569, %v2576, %v2578
    %v2580 = vsel %vm2568, %v2558, %v2561
    %v2581 = vsel %vm2571, %v2567, 1326507024
    %v2582 = vsel %vm2570, %v2564, %v2581
    %v2583 = vsel %vm2569, %v2580, %v2582
    %v2584 = vshll.u32 %v2544, 8
    %v2585 = vand.u32 %v2584, 65535
    %v2586 = vshrl.u32 %v2584, 16
    %v2587 = vand.u32 %v2583, 65535
    %v2588 = vshrl.u32 %v2583, 16
    %v2589 = vmul.u32 %v2585, %v2587
    %v2590 = vmul.u32 %v2585, %v2588
    %v2591 = vmul.u32 %v2586, %v2587
    %v2592 = vmul.u32 %v2586, %v2588
    %v2593 = vshll.u32 %v2590, 16
    %v2594 = vshrl.u32 %v2590, 16
    %v2595 = vshll.u32 %v2591, 16
    %v2596 = vshrl.u32 %v2591, 16
    %vm2597 = vc.u32 %v2589, %v2593
    %v2598 = vsel %vm2597, 1, 0
    %v2599 = vadd.s32 %v2589, %v2593
    %v2600 = vadd.s32 %v2592, %v2598
    %vm2601 = vc.u32 %v2599, %v2595
    %v2602 = vsel %vm2601, 1, 0
    %v2603 = vadd.s32 %v2599, %v2595
    %v2604 = vadd.s32 %v2600, %v2602
    %v2605 = vadd.s32 %v2604, %v2594
    %v2606 = vadd.s32 %v2605, %v2596
    %v2607 = vand.u32 %v2584, 65535
    %v2608 = vshrl.u32 %v2584, 16
    %v2609 = vand.u32 %v2579, 65535
    %v2610 = vshrl.u32 %v2579, 16
    %v2611 = vmul.u32 %v2607, %v2609
    %v2612 = vmul.u32 %v2607, %v2610
    %v2613 = vmul.u32 %v2608, %v2609
    %v2614 = vmul.u32 %v2608, %v2610
    %v2615 = vshll.u32 %v2612, 16
    %v2616 = vshrl.u32 %v2612, 16
    %v2617 = vshll.u32 %v2613, 16
    %v2618 = vshrl.u32 %v2613, 16
    %vm2619 = vc.u32 %v2611, %v2615
    %v2620 = vsel %vm2619, 1, 0
    %v2621 = vadd.s32 %v2611, %v2615
    %v2622 = vadd.s32 %v2614, %v2620
    %vm2623 = vc.u32 %v2621, %v2617
    %v2624 = vsel %vm2623, 1, 0
    %v2625 = vadd.s32 %v2621, %v2617
    %v2626 = vadd.s32 %v2622, %v2624
    %v2627 = vadd.s32 %v2626, %v2616
    %v2628 = vadd.s32 %v2627, %v2618
    %v2629 = vmul.u32 %v2584, %v2575
    %v2630 = vadd.s32 %v2606, %v2625
    %vm2631 = vc.u32 %v2606, %v2625
    %v2632 = vadd.s32 %v2628, 1
    %v2633 = vsel %vm2631, %v2632, %v2628
    %v2634 = vadd.s32 %v2629, %v2633
    %v2635 = vadd.s32 %v2634, 536870912
    %v2636 = vshrl.u32 %v2635, 30
    %v2637 = vshll.u32 %v2636, 30
    %v2638 = vsub.s32 %v2634, %v2637
    %vm2639 = vcmp.lt.s32.totalorder %v2638, 0
    %v2640 = vsub.s32 0, %v2638
    %v2641 = vsel %vm2639, %v2640, %v2638
    %v2642 = vclz %v2641
    %v2643 = vsub.s32 %v2642, 2
    %vm2644 = vcmp.gt.s32.totalorder 0, %v2643
    %v2645 = vsel %vm2644, 0, %v2643
    %v2646 = vsub.s32 32, %v2645
    %v2647 = vshll.u32 %v2638, %v2645
    %v2648 = vshrl.u32 %v2630, %v2646
    %v2649 = vor.u32 %v2647, %v2648
    %v2650 = vsub.s32 4294967266, %v2645
    %v2651 = vadd.s32 %v2650, 127
    %v2652 = vshll.u32 %v2651, 23
    %v2653 = vor.u32 4788187, %v2652
    %v2654 = vand.u32 2147483647, %v2653
    %v2656 = vcvt.s32.f32 %v2649
    %v2657 = vmul.f32 %v2656, %v2654
    %v2658 = vxor.u32 %v2657, 2147483648
    %v2659 = vsel %vm2538, %v2658, %v2657
    %v2660 = vsub.s32 4, %v2636
    %v2661 = vsel %vm2538, %v2660, %v2636
    %v2662 = vsel %vm2537, %v1114, %v2659
    %v2663 = vsel %vm2537, 0, %v2661
    %v2664 = vmul.f32 %v2662, %v2662
    %v2665 = vmul.f32 %v2664, -0.001358992
    %v2666 = vadd.f32 %v2665, 0.041655596
    %v2667 = vmul.f32 %v2664, %v2666
    %v2668 = vadd.f32 %v2667, -0.4999988
    %v2669 = vmul.f32 %v2664, %v2668
    %v2670 = vadd.f32 1.0, %v2669
    %v2671 = vmul.f32 %v2662, %v2662
    %v2672 = vmul.f32 %v2671, -0.00019511016
    %v2673 = vadd.f32 %v2672, 0.008332121
    %v2674 = vmul.f32 %v2671, %v2673
    %v2675 = vadd.f32 %v2674, -0.16666654
    %v2676 = vmul.f32 %v2671, %v2675
    %v2677 = vadd.f32 %v2676, 1.0
    %v2678 = vmul.f32 %v2677, %v2662
    %vm2679 = vweird.f32 %v1114
    %v2680 = vand.u32 %v2663, 3
    %vm2681 = vcmp.lt.s32.totalorder %v2680, 2
    %vm2682 = vcmp.eq.s32.totalorder %v2680, 0
    %v2683 = vxor.u32 %v2678, 2147483648
    %v2684 = vsel %vm2682, %v2670, %v2683
    %vm2685 = vcmp.eq.s32.totalorder %v2680, 2
    %v2686 = vxor.u32 %v2670, 2147483648
    %v2687 = vsel %vm2685, %v2686, %v2678
    %v2688 = vsel %vm2681, %v2684, %v2687
    %v2689 = vsel %vm2679, nan, %v2688
    %v2690 = vand.u32 2147483647, %v1117
    %vm2691 = vcmp.le.f32.partialorder %v2690, 0.7853982
    %vm2692 = vcmp.lt.s32.totalorder %v1117, 0
    %v2693 = vand.u32 %v1117, 2139095040
    %v2694 = vshrl.u32 %v2693, 23
    %v2695 = vsub.s32 %v2694, 127
    %v2696 = vand.u32 2147483647, %v1117
    %v2697 = vand.u32 %v2696, 8388607
    %v2698 = vor.u32 %v2697, 8388608
    %v2699 = vsub.s32 0, %v2698
    %v2700 = vadd.s32 %v2695, 1
    %vm2701 = vcmp.gt.s32.totalorder %v2700, 0
    %v2702 = vsel %vm2701, %v2700, 0
    %v2703 = vshrl.u32 %v2702, 5
    %v2704 = vand.u32 %v2702, 31
    %v2705 = vsub.s32 32, %v2704
    %v2706 = vshrl.u32 683565275, %v2705
    %v2707 = vshll.u32 683565275, %v2704
    %v2708 = vshrl.u32 2475754826, %v2705
    %v2709 = vor.u32 %v2707, %v2708
    %v2710 = vshll.u32 2475754826, %v2704
    %v2711 = vshrl.u32 2131351028, %v2705
    %v2712 = vor.u32 %v2710, %v2711
    %v2713 = vshll.u32 2131351028, %v2704
    %v2714 = vshrl.u32 2102212464, %v2705
    %v2715 = vor.u32 %v2713, %v2714
    %v2716 = vshll.u32 2102212464, %v2704
    %v2717 = vshrl.u32 920167782, %v2705
    %v2718 = vor.u32 %v2716, %v2717
    %v2719 = vshll.u32 920167782, %v2704
    %v2720 = vshrl.u32 1326507024, %v2705
    %v2721 = vor.u32 %v2719, %v2720
    %vm2722 = vcmp.lt.s32.totalorder %v2703, 1
    %vm2723 = vcmp.lt.s32.totalorder %v2703, 2
    %vm2724 = vcmp.lt.s32.totalorder %v2703, 3
    %vm2725 = vcmp.lt.s32.totalorder %v2703, 4
    %v2726 = vsel %vm2722, %v2706, %v2709
    %v2727 = vsel %vm2725, %v2715, 2102212464
    %v2728 = vsel %vm2724, %v2712, %v2727
    %v2729 = vsel %vm2723, %v2726, %v2728
    %v2730 = vsel %vm2722, %v2709, %v2712
    %v2731 = vsel %vm2725, %v2718, 920167782
    %v2732 = vsel %vm2724, %v2715, %v2731
    %v2733 = vsel %vm2723, %v2730, %v2732
    %v2734 = vsel %vm2722, %v2712, %v2715
    %v2735 = vsel %vm2725, %v2721, 1326507024
    %v2736 = vsel %vm2724, %v2718, %v2735
    %v2737 = vsel %vm2723, %v2734, %v2736
    %v2738 = vshll.u32 %v2698, 8
    %v2739 = vand.u32 %v2738, 65535
    %v2740 = vshrl.u32 %v2738, 16
    %v2741 = vand.u32 %v2737, 65535
    %v2742 = vshrl.u32 %v2737, 16
    %v2743 = vmul.u32 %v2739, %v2741
    %v2744 = vmul.u32 %v2739, %v2742
    %v2745 = vmul.u32 %v2740, %v2741
    %v2746 = vmul.u32 %v2740, %v2742
    %v2747 = vshll.u32 %v2744, 16
    %v2748 = vshrl.u32 %v2744, 16
    %v2749 = vshll.u32 %v2745, 16
    %v2750 = vshrl.u32 %v2745, 16
    %vm2751 = vc.u32 %v2743, %v2747
    %v2752 = vsel %vm2751, 1, 0
    %v2753 = vadd.s32 %v2743, %v2747
    %v2754 = vadd.s32 %v2746, %v2752
    %vm2755 = vc.u32 %v2753, %v2749
    %v2756 = vsel %vm2755, 1, 0
    %v2757 = vadd.s32 %v2753, %v2749
    %v2758 = vadd.s32 %v2754, %v2756
    %v2759 = vadd.s32 %v2758, %v2748
    %v2760 = vadd.s32 %v2759, %v2750
    %v2761 = vand.u32 %v2738, 65535
    %v2762 = vshrl.u32 %v2738, 16
    %v2763 = vand.u32 %v2733, 65535
    %v2764 = vshrl.u32 %v2733, 16
    %v2765 = vmul.u32 %v2761, %v2763
    %v2766 = vmul.u32 %v2761, %v2764
    %v2767 = vmul.u32 %v2762, %v2763
    %v2768 = vmul.u32 %v2762, %v2764
    %v2769 = vshll.u32 %v2766, 16
    %v2770 = vshrl.u32 %v2766, 16
    %v2771 = vshll.u32 %v2767, 16
    %v2772 = vshrl.u32 %v2767, 16
    %vm2773 = vc.u32 %v2765, %v2769
    %v2774 = vsel %vm2773, 1, 0
    %v2775 = vadd.s32 %v2765, %v2769
    %v2776 = vadd.s32 %v2768, %v2774
    %vm2777 = vc.u32 %v2775, %v2771
    %v2778 = vsel %vm2777, 1, 0
    %v2779 = vadd.s32 %v2775, %v2771
    %v2780 = vadd.s32 %v2776, %v2778
    %v2781 = vadd.s32 %v2780, %v2770
    %v2782 = vadd.s32 %v2781, %v2772
    %v2783 = vmul.u32 %v2738, %v2729
    %v2784 = vadd.s32 %v2760, %v2779
    %vm2785 = vc.u32 %v2760, %v2779
    %v2786 = vadd.s32 %v2782, 1
    %v2787 = vsel %vm2785, %v2786, %v2782
    %v2788 = vadd.s32 %v2783, %v2787
    %v2789 = vadd.s32 %v2788, 536870912
    %v2790 = vshrl.u32 %v2789, 30
    %v2791 = vshll.u32 %v2790, 30
    %v2792 = vsub.s32 %v2788, %v2791
    %vm2793 = vcmp.lt.s32.totalorder %v2792, 0
    %v2794 = vsub.s32 0, %v2792
    %v2795 = vsel %vm2793, %v2794, %v2792
    %v2796 = vclz %v2795
    %v2797 = vsub.s32 %v2796, 2
    %vm2798 = vcmp.gt.s32.totalorder 0, %v2797
    %v2799 = vsel %vm2798, 0, %v2797
    %v2800 = vsub.s32 32, %v2799
    %v2801 = vshll.u32 %v2792, %v2799
    %v2802 = vshrl.u32 %v2784, %v2800
    %v2803 = vor.u32 %v2801, %v2802
    %v2804 = vsub.s32 4294967266, %v2799
    %v2805 = vadd.s32 %v2804, 127
    %v2806 = vshll.u32 %v2805, 23
    %v2807 = vor.u32 4788187, %v2806
    %v2808 = vand.u32 2147483647, %v2807
    %v2810 = vcvt.s32.f32 %v2803
    %v2811 = vmul.f32 %v2810, %v2808
    %v2812 = vxor.u32 %v2811, 2147483648
    %v2813 = vsel %vm2692, %v2812, %v2811
    %v2814 = vsub.s32 4, %v2790
    %v2815 = vsel %vm2692, %v2814, %v2790
    %v2816 = vsel %vm2691, %v1117, %v2813
    %v2817 = vsel %vm2691, 0, %v2815
    %v2818 = vmul.f32 %v2816, %v2816
    %v2819 = vmul.f32 %v2818, -0.001358992
    %v2820 = vadd.f32 %v2819, 0.041655596
    %v2821 = vmul.f32 %v2818, %v2820
    %v2822 = vadd.f32 %v2821, -0.4999988
    %v2823 = vmul.f32 %v2818, %v2822
    %v2824 = vadd.f32 1.0, %v2823
    %v2825 = vmul.f32 %v2816, %v2816
    %v2826 = vmul.f32 %v2825, -0.00019511016
    %v2827 = vadd.f32 %v2826, 0.008332121
    %v2828 = vmul.f32 %v2825, %v2827
    %v2829 = vadd.f32 %v2828, -0.16666654
    %v2830 = vmul.f32 %v2825, %v2829
    %v2831 = vadd.f32 %v2830, 1.0
    %v2832 = vmul.f32 %v2831, %v2816
    %vm2833 = vweird.f32 %v1117
    %v2834 = vand.u32 %v2817, 3
    %vm2835 = vcmp.lt.s32.totalorder %v2834, 2
    %vm2836 = vcmp.eq.s32.totalorder %v2834, 0
    %v2837 = vxor.u32 %v2832, 2147483648
    %v2838 = vsel %vm2836, %v2824, %v2837
    %vm2839 = vcmp.eq.s32.totalorder %v2834, 2
    %v2840 = vxor.u32 %v2824, 2147483648
    %v2841 = vsel %vm2839, %v2840, %v2832
    %v2842 = vsel %vm2835, %v2838, %v2841
    %v2843 = vsel %vm2833, nan, %v2842
    %v2844 = vand.u32 2147483647, %v1120
    %vm2845 = vcmp.le.f32.partialorder %v2844, 0.7853982
    %vm2846 = vcmp.lt.s32.totalorder %v1120, 0
    %v2847 = vand.u32 %v1120, 2139095040
    %v2848 = vshrl.u32 %v2847, 23
    %v2849 = vsub.s32 %v2848, 127
    %v2850 = vand.u32 2147483647, %v1120
    %v2851 = vand.u32 %v2850, 8388607
    %v2852 = vor.u32 %v2851, 8388608
    %v2853 = vsub.s32 0, %v2852
    %v2854 = vadd.s32 %v2849, 1
    %vm2855 = vcmp.gt.s32.totalorder %v2854, 0
    %v2856 = vsel %vm2855, %v2854, 0
    %v2857 = vshrl.u32 %v2856, 5
    %v2858 = vand.u32 %v2856, 31
    %v2859 = vsub.s32 32, %v2858
    %v2860 = vshrl.u32 683565275, %v2859
    %v2861 = vshll.u32 683565275, %v2858
    %v2862 = vshrl.u32 2475754826, %v2859
    %v2863 = vor.u32 %v2861, %v2862
    %v2864 = vshll.u32 2475754826, %v2858
    %v2865 = vshrl.u32 2131351028, %v2859
    %v2866 = vor.u32 %v2864, %v2865
    %v2867 = vshll.u32 2131351028, %v2858
    %v2868 = vshrl.u32 2102212464, %v2859
    %v2869 = vor.u32 %v2867, %v2868
    %v2870 = vshll.u32 2102212464, %v2858
    %v2871 = vshrl.u32 920167782, %v2859
    %v2872 = vor.u32 %v2870, %v2871
    %v2873 = vshll.u32 920167782, %v2858
    %v2874 = vshrl.u32 1326507024, %v2859
    %v2875 = vor.u32 %v2873, %v2874
    %vm2876 = vcmp.lt.s32.totalorder %v2857, 1
    %vm2877 = vcmp.lt.s32.totalorder %v2857, 2
    %vm2878 = vcmp.lt.s32.totalorder %v2857, 3
    %vm2879 = vcmp.lt.s32.totalorder %v2857, 4
    %v2880 = vsel %vm2876, %v2860, %v2863
    %v2881 = vsel %vm2879, %v2869, 2102212464
    %v2882 = vsel %vm2878, %v2866, %v2881
    %v2883 = vsel %vm2877, %v2880, %v2882
    %v2884 = vsel %vm2876, %v2863, %v2866
    %v2885 = vsel %vm2879, %v2872, 920167782
    %v2886 = vsel %vm2878, %v2869, %v2885
    %v2887 = vsel %vm2877, %v2884, %v2886
    %v2888 = vsel %vm2876, %v2866, %v2869
    %v2889 = vsel %vm2879, %v2875, 1326507024
    %v2890 = vsel %vm2878, %v2872, %v2889
    %v2891 = vsel %vm2877, %v2888, %v2890
    %v2892 = vshll.u32 %v2852, 8
    %v2893 = vand.u32 %v2892, 65535
    %v2894 = vshrl.u32 %v2892, 16
    %v2895 = vand.u32 %v2891, 65535
    %v2896 = vshrl.u32 %v2891, 16
    %v2897 = vmul.u32 %v2893, %v2895
    %v2898 = vmul.u32 %v2893, %v2896
    %v2899 = vmul.u32 %v2894, %v2895
    %v2900 = vmul.u32 %v2894, %v2896
    %v2901 = vshll.u32 %v2898, 16
    %v2902 = vshrl.u32 %v2898, 16
    %v2903 = vshll.u32 %v2899, 16
    %v2904 = vshrl.u32 %v2899, 16
    %vm2905 = vc.u32 %v2897, %v2901
    %v2906 = vsel %vm2905, 1, 0
    %v2907 = vadd.s32 %v2897, %v2901
    %v2908 = vadd.s32 %v2900, %v2906
    %vm2909 = vc.u32 %v2907, %v2903
    %v2910 = vsel %vm2909, 1, 0
    %v2911 = vadd.s32 %v2907, %v2903
    %v2912 = vadd.s32 %v2908, %v2910
    %v2913 = vadd.s32 %v2912, %v2902
    %v2914 = vadd.s32 %v2913, %v2904
    %v2915 = vand.u32 %v2892, 65535
    %v2916 = vshrl.u32 %v2892, 16
    %v2917 = vand.u32 %v2887, 65535
    %v2918 = vshrl.u32 %v2887, 16
    %v2919 = vmul.u32 %v2915, %v2917
    %v2920 = vmul.u32 %v2915, %v2918
    %v2921 = vmul.u32 %v2916, %v2917
    %v2922 = vmul.u32 %v2916, %v2918
    %v2923 = vshll.u32 %v2920, 16
    %v2924 = vshrl.u32 %v2920, 16
    %v2925 = vshll.u32 %v2921, 16
    %v2926 = vshrl.u32 %v2921, 16
    %vm2927 = vc.u32 %v2919, %v2923
    %v2928 = vsel %vm2927, 1, 0
    %v2929 = vadd.s32 %v2919, %v2923
    %v2930 = vadd.s32 %v2922, %v2928
    %vm2931 = vc.u32 %v2929, %v2925
    %v2932 = vsel %vm2931, 1, 0
    %v2933 = vadd.s32 %v2929, %v2925
    %v2934 = vadd.s32 %v2930, %v2932
    %v2935 = vadd.s32 %v2934, %v2924
    %v2936 = vadd.s32 %v2935, %v2926
    %v2937 = vmul.u32 %v2892, %v2883
    %v2938 = vadd.s32 %v2914, %v2933
    %vm2939 = vc.u32 %v2914, %v2933
    %v2940 = vadd.s32 %v2936, 1
    %v2941 = vsel %vm2939, %v2940, %v2936
    %v2942 = vadd.s32 %v2937, %v2941
    %v2943 = vadd.s32 %v2942, 536870912
    %v2944 = vshrl.u32 %v2943, 30
    %v2945 = vshll.u32 %v2944, 30
    %v2946 = vsub.s32 %v2942, %v2945
    %vm2947 = vcmp.lt.s32.totalorder %v2946, 0
    %v2948 = vsub.s32 0, %v2946
    %v2949 = vsel %vm2947, %v2948, %v2946
    %v2950 = vclz %v2949
    %v2951 = vsub.s32 %v2950, 2
    %vm2952 = vcmp.gt.s32.totalorder 0, %v2951
    %v2953 = vsel %vm2952, 0, %v2951
    %v2954 = vsub.s32 32, %v2953
    %v2955 = vshll.u32 %v2946, %v2953
    %v2956 = vshrl.u32 %v2938, %v2954
    %v2957 = vor.u32 %v2955, %v2956
    %v2958 = vsub.s32 4294967266, %v2953
    %v2959 = vadd.s32 %v2958, 127
    %v2960 = vshll.u32 %v2959, 23
    %v2961 = vor.u32 4788187, %v2960
    %v2962 = vand.u32 2147483647, %v2961
    %v2964 = vcvt.s32.f32 %v2957
    %v2965 = vmul.f32 %v2964, %v2962
    %v2966 = vxor.u32 %v2965, 2147483648
    %v2967 = vsel %vm2846, %v2966, %v2965
    %v2968 = vsub.s32 4, %v2944
    %v2969 = vsel %vm2846, %v2968, %v2944
    %v2970 = vsel %vm2845, %v1120, %v2967
    %v2971 = vsel %vm2845, 0, %v2969
    %v2972 = vmul.f32 %v2970, %v2970
    %v2973 = vmul.f32 %v2972, -0.001358992
    %v2974 = vadd.f32 %v2973, 0.041655596
    %v2975 = vmul.f32 %v2972, %v2974
    %v2976 = vadd.f32 %v2975, -0.4999988
    %v2977 = vmul.f32 %v2972, %v2976
    %v2978 = vadd.f32 1.0, %v2977
    %v2979 = vmul.f32 %v2970, %v2970
    %v2980 = vmul.f32 %v2979, -0.00019511016
    %v2981 = vadd.f32 %v2980, 0.008332121
    %v2982 = vmul.f32 %v2979, %v2981
    %v2983 = vadd.f32 %v2982, -0.16666654
    %v2984 = vmul.f32 %v2979, %v2983
    %v2985 = vadd.f32 %v2984, 1.0
    %v2986 = vmul.f32 %v2985, %v2970
    %vm2987 = vweird.f32 %v1120
    %v2988 = vand.u32 %v2971, 3
    %vm2989 = vcmp.lt.s32.totalorder %v2988, 2
    %vm2990 = vcmp.eq.s32.totalorder %v2988, 0
    %v2991 = vxor.u32 %v2986, 2147483648
    %v2992 = vsel %vm2990, %v2978, %v2991
    %vm2993 = vcmp.eq.s32.totalorder %v2988, 2
    %v2994 = vxor.u32 %v2978, 2147483648
    %v2995 = vsel %vm2993, %v2994, %v2986
    %v2996 = vsel %vm2989, %v2992, %v2995
    %v2997 = vsel %vm2987, nan, %v2996
    %v2998 = vand.u32 2147483647, %v1123
    %vm2999 = vcmp.le.f32.partialorder %v2998, 0.7853982
    %vm3000 = vcmp.lt.s32.totalorder %v1123, 0
    %v3001 = vand.u32 %v1123, 2139095040
    %v3002 = vshrl.u32 %v3001, 23
    %v3003 = vsub.s32 %v3002, 127
    %v3004 = vand.u32 2147483647, %v1123
    %v3005 = vand.u32 %v3004, 8388607
    %v3006 = vor.u32 %v3005, 8388608
    %v3007 = vsub.s32 0, %v3006
    %v3008 = vadd.s32 %v3003, 1
    %vm3009 = vcmp.gt.s32.totalorder %v3008, 0
    %v3010 = vsel %vm3009, %v3008, 0
    %v3011 = vshrl.u32 %v3010, 5
    %v3012 = vand.u32 %v3010, 31
    %v3013 = vsub.s32 32, %v3012
    %v3014 = vshrl.u32 683565275, %v3013
    %v3015 = vshll.u32 683565275, %v3012
    %v3016 = vshrl.u32 2475754826, %v3013
    %v3017 = vor.u32 %v3015, %v3016
    %v3018 = vshll.u32 2475754826, %v3012
    %v3019 = vshrl.u32 2131351028, %v3013
    %v3020 = vor.u32 %v3018, %v3019
    %v3021 = vshll.u32 2131351028, %v3012
    %v3022 = vshrl.u32 2102212464, %v3013
    %v3023 = vor.u32 %v3021, %v3022
    %v3024 = vshll.u32 2102212464, %v3012
    %v3025 = vshrl.u32 920167782, %v3013
    %v3026 = vor.u32 %v3024, %v3025
    %v3027 = vshll.u32 920167782, %v3012
    %v3028 = vshrl.u32 1326507024, %v3013
    %v3029 = vor.u32 %v3027, %v3028
    %vm3030 = vcmp.lt.s32.totalorder %v3011, 1
    %vm3031 = vcmp.lt.s32.totalorder %v3011, 2
    %vm3032 = vcmp.lt.s32.totalorder %v3011, 3
    %vm3033 = vcmp.lt.s32.totalorder %v3011, 4
    %v3034 = vsel %vm3030, %v3014, %v3017
    %v3035 = vsel %vm3033, %v3023, 2102212464
    %v3036 = vsel %vm3032, %v3020, %v3035
    %v3037 = vsel %vm3031, %v3034, %v3036
    %v3038 = vsel %vm3030, %v3017, %v3020
    %v3039 = vsel %vm3033, %v3026, 920167782
    %v3040 = vsel %vm3032, %v3023, %v3039
    %v3041 = vsel %vm3031, %v3038, %v3040
    %v3042 = vsel %vm3030, %v3020, %v3023
    %v3043 = vsel %vm3033, %v3029, 1326507024
    %v3044 = vsel %vm3032, %v3026, %v3043
    %v3045 = vsel %vm3031, %v3042, %v3044
    %v3046 = vshll.u32 %v3006, 8
    %v3047 = vand.u32 %v3046, 65535
    %v3048 = vshrl.u32 %v3046, 16
    %v3049 = vand.u32 %v3045, 65535
    %v3050 = vshrl.u32 %v3045, 16
    %v3051 = vmul.u32 %v3047, %v3049
    %v3052 = vmul.u32 %v3047, %v3050
    %v3053 = vmul.u32 %v3048, %v3049
    %v3054 = vmul.u32 %v3048, %v3050
    %v3055 = vshll.u32 %v3052, 16
    %v3056 = vshrl.u32 %v3052, 16
    %v3057 = vshll.u32 %v3053, 16
    %v3058 = vshrl.u32 %v3053, 16
    %vm3059 = vc.u32 %v3051, %v3055
    %v3060 = vsel %vm3059, 1, 0
    %v3061 = vadd.s32 %v3051, %v3055
    %v3062 = vadd.s32 %v3054, %v3060
    %vm3063 = vc.u32 %v3061, %v3057
    %v3064 = vsel %vm3063, 1, 0
    %v3065 = vadd.s32 %v3061, %v3057
    %v3066 = vadd.s32 %v3062, %v3064
    %v3067 = vadd.s32 %v3066, %v3056
    %v3068 = vadd.s32 %v3067, %v3058
    %v3069 = vand.u32 %v3046, 65535
    %v3070 = vshrl.u32 %v3046, 16
    %v3071 = vand.u32 %v3041, 65535
    %v3072 = vshrl.u32 %v3041, 16
    %v3073 = vmul.u32 %v3069, %v3071
    %v3074 = vmul.u32 %v3069, %v3072
    %v3075 = vmul.u32 %v3070, %v3071
    %v3076 = vmul.u32 %v3070, %v3072
    %v3077 = vshll.u32 %v3074, 16
    %v3078 = vshrl.u32 %v3074, 16
    %v3079 = vshll.u32 %v3075, 16
    %v3080 = vshrl.u32 %v3075, 16
    %vm3081 = vc.u32 %v3073, %v3077
    %v3082 = vsel %vm3081, 1, 0
    %v3083 = vadd.s32 %v3073, %v3077
    %v3084 = vadd.s32 %v3076, %v3082
    %vm3085 = vc.u32 %v3083, %v3079
    %v3086 = vsel %vm3085, 1, 0
    %v3087 = vadd.s32 %v3083, %v3079
    %v3088 = vadd.s32 %v3084, %v3086
    %v3089 = vadd.s32 %v3088, %v3078
    %v3090 = vadd.s32 %v3089, %v3080
    %v3091 = vmul.u32 %v3046, %v3037
    %v3092 = vadd.s32 %v3068, %v3087
    %vm3093 = vc.u32 %v3068, %v3087
    %v3094 = vadd.s32 %v3090, 1
    %v3095 = vsel %vm3093, %v3094, %v3090
    %v3096 = vadd.s32 %v3091, %v3095
    %v3097 = vadd.s32 %v3096, 536870912
    %v3098 = vshrl.u32 %v3097, 30
    %v3099 = vshll.u32 %v3098, 30
    %v3100 = vsub.s32 %v3096, %v3099
    %vm3101 = vcmp.lt.s32.totalorder %v3100, 0
    %v3102 = vsub.s32 0, %v3100
    %v3103 = vsel %vm3101, %v3102, %v3100
    %v3104 = vclz %v3103
    %v3105 = vsub.s32 %v3104, 2
    %vm3106 = vcmp.gt.s32.totalorder 0, %v3105
    %v3107 = vsel %vm3106, 0, %v3105
    %v3108 = vsub.s32 32, %v3107
    %v3109 = vshll.u32 %v3100, %v3107
    %v3110 = vshrl.u32 %v3092, %v3108
    %v3111 = vor.u32 %v3109, %v3110
    %v3112 = vsub.s32 4294967266, %v3107
    %v3113 = vadd.s32 %v3112, 127
    %v3114 = vshll.u32 %v3113, 23
    %v3115 = vor.u32 4788187, %v3114
    %v3116 = vand.u32 2147483647, %v3115
    %v3118 = vcvt.s32.f32 %v3111
    %v3119 = vmul.f32 %v3118, %v3116
    %v3120 = vxor.u32 %v3119, 2147483648
    %v3121 = vsel %vm3000, %v3120, %v3119
    %v3122 = vsub.s32 4, %v3098
    %v3123 = vsel %vm3000, %v3122, %v3098
    %v3124 = vsel %vm2999, %v1123, %v3121
    %v3125 = vsel %vm2999, 0, %v3123
    %v3126 = vmul.f32 %v3124, %v3124
    %v3127 = vmul.f32 %v3126, -0.001358992
    %v3128 = vadd.f32 %v3127, 0.041655596
    %v3129 = vmul.f32 %v3126, %v3128
    %v3130 = vadd.f32 %v3129, -0.4999988
    %v3131 = vmul.f32 %v3126, %v3130
    %v3132 = vadd.f32 1.0, %v3131
    %v3133 = vmul.f32 %v3124, %v3124
    %v3134 = vmul.f32 %v3133, -0.00019511016
    %v3135 = vadd.f32 %v3134, 0.008332121
    %v3136 = vmul.f32 %v3133, %v3135
    %v3137 = vadd.f32 %v3136, -0.16666654
    %v3138 = vmul.f32 %v3133, %v3137
    %v3139 = vadd.f32 %v3138, 1.0
    %v3140 = vmul.f32 %v3139, %v3124
    %vm3141 = vweird.f32 %v1123
    %v3142 = vand.u32 %v3125, 3
    %vm3143 = vcmp.lt.s32.totalorder %v3142, 2
    %vm3144 = vcmp.eq.s32.totalorder %v3142, 0
    %v3145 = vxor.u32 %v3140, 2147483648
    %v3146 = vsel %vm3144, %v3132, %v3145
    %vm3147 = vcmp.eq.s32.totalorder %v3142, 2
    %v3148 = vxor.u32 %v3132, 2147483648
    %v3149 = vsel %vm3147, %v3148, %v3140
    %v3150 = vsel %vm3143, %v3146, %v3149
    %v3151 = vsel %vm3141, nan, %v3150
    %v3152 = vand.u32 2147483647, %v1126
    %vm3153 = vcmp.le.f32.partialorder %v3152, 0.7853982
    %vm3154 = vcmp.lt.s32.totalorder %v1126, 0
    %v3155 = vand.u32 %v1126, 2139095040
    %v3156 = vshrl.u32 %v3155, 23
    %v3157 = vsub.s32 %v3156, 127
    %v3158 = vand.u32 2147483647, %v1126
    %v3159 = vand.u32 %v3158, 8388607
    %v3160 = vor.u32 %v3159, 8388608
    %v3161 = vsub.s32 0, %v3160
    %v3162 = vadd.s32 %v3157, 1
    %vm3163 = vcmp.gt.s32.totalorder %v3162, 0
    %v3164 = vsel %vm3163, %v3162, 0
    %v3165 = vshrl.u32 %v3164, 5
    %v3166 = vand.u32 %v3164, 31
    %v3167 = vsub.s32 32, %v3166
    %v3168 = vshrl.u32 683565275, %v3167
    %v3169 = vshll.u32 683565275, %v3166
    %v3170 = vshrl.u32 2475754826, %v3167
    %v3171 = vor.u32 %v3169, %v3170
    %v3172 = vshll.u32 2475754826, %v3166
    %v3173 = vshrl.u32 2131351028, %v3167
    %v3174 = vor.u32 %v3172, %v3173
    %v3175 = vshll.u32 2131351028, %v3166
    %v3176 = vshrl.u32 2102212464, %v3167
    %v3177 = vor.u32 %v3175, %v3176
    %v3178 = vshll.u32 2102212464, %v3166
    %v3179 = vshrl.u32 920167782, %v3167
    %v3180 = vor.u32 %v3178, %v3179
    %v3181 = vshll.u32 920167782, %v3166
    %v3182 = vshrl.u32 1326507024, %v3167
    %v3183 = vor.u32 %v3181, %v3182
    %vm3184 = vcmp.lt.s32.totalorder %v3165, 1
    %vm3185 = vcmp.lt.s32.totalorder %v3165, 2
    %vm3186 = vcmp.lt.s32.totalorder %v3165, 3
    %vm3187 = vcmp.lt.s32.totalorder %v3165, 4
    %v3188 = vsel %vm3184, %v3168, %v3171
    %v3189 = vsel %vm3187, %v3177, 2102212464
    %v3190 = vsel %vm3186, %v3174, %v3189
    %v3191 = vsel %vm3185, %v3188, %v3190
    %v3192 = vsel %vm3184, %v3171, %v3174
    %v3193 = vsel %vm3187, %v3180, 920167782
    %v3194 = vsel %vm3186, %v3177, %v3193
    %v3195 = vsel %vm3185, %v3192, %v3194
    %v3196 = vsel %vm3184, %v3174, %v3177
    %v3197 = vsel %vm3187, %v3183, 1326507024
    %v3198 = vsel %vm3186, %v3180, %v3197
    %v3199 = vsel %vm3185, %v3196, %v3198
    %v3200 = vshll.u32 %v3160, 8
    %v3201 = vand.u32 %v3200, 65535
    %v3202 = vshrl.u32 %v3200, 16
    %v3203 = vand.u32 %v3199, 65535
    %v3204 = vshrl.u32 %v3199, 16
    %v3205 = vmul.u32 %v3201, %v3203
    %v3206 = vmul.u32 %v3201, %v3204
    %v3207 = vmul.u32 %v3202, %v3203
    %v3208 = vmul.u32 %v3202, %v3204
    %v3209 = vshll.u32 %v3206, 16
    %v3210 = vshrl.u32 %v3206, 16
    %v3211 = vshll.u32 %v3207, 16
    %v3212 = vshrl.u32 %v3207, 16
    %vm3213 = vc.u32 %v3205, %v3209
    %v3214 = vsel %vm3213, 1, 0
    %v3215 = vadd.s32 %v3205, %v3209
    %v3216 = vadd.s32 %v3208, %v3214
    %vm3217 = vc.u32 %v3215, %v3211
    %v3218 = vsel %vm3217, 1, 0
    %v3219 = vadd.s32 %v3215, %v3211
    %v3220 = vadd.s32 %v3216, %v3218
    %v3221 = vadd.s32 %v3220, %v3210
    %v3222 = vadd.s32 %v3221, %v3212
    %v3223 = vand.u32 %v3200, 65535
    %v3224 = vshrl.u32 %v3200, 16
    %v3225 = vand.u32 %v3195, 65535
    %v3226 = vshrl.u32 %v3195, 16
    %v3227 = vmul.u32 %v3223, %v3225
    %v3228 = vmul.u32 %v3223, %v3226
    %v3229 = vmul.u32 %v3224, %v3225
    %v3230 = vmul.u32 %v3224, %v3226
    %v3231 = vshll.u32 %v3228, 16
    %v3232 = vshrl.u32 %v3228, 16
    %v3233 = vshll.u32 %v3229, 16
    %v3234 = vshrl.u32 %v3229, 16
    %vm3235 = vc.u32 %v3227, %v3231
    %v3236 = vsel %vm3235, 1, 0
    %v3237 = vadd.s32 %v3227, %v3231
    %v3238 = vadd.s32 %v3230, %v3236
    %vm3239 = vc.u32 %v3237, %v3233
    %v3240 = vsel %vm3239, 1, 0
    %v3241 = vadd.s32 %v3237, %v3233
    %v3242 = vadd.s32 %v3238, %v3240
    %v3243 = vadd.s32 %v3242, %v3232
    %v3244 = vadd.s32 %v3243, %v3234
    %v3245 = vmul.u32 %v3200, %v3191
    %v3246 = vadd.s32 %v3222, %v3241
    %vm3247 = vc.u32 %v3222, %v3241
    %v3248 = vadd.s32 %v3244, 1
    %v3249 = vsel %vm3247, %v3248, %v3244
    %v3250 = vadd.s32 %v3245, %v3249
    %v3251 = vadd.s32 %v3250, 536870912
    %v3252 = vshrl.u32 %v3251, 30
    %v3253 = vshll.u32 %v3252, 30
    %v3254 = vsub.s32 %v3250, %v3253
    %vm3255 = vcmp.lt.s32.totalorder %v3254, 0
    %v3256 = vsub.s32 0, %v3254
    %v3257 = vsel %vm3255, %v3256, %v3254
    %v3258 = vclz %v3257
    %v3259 = vsub.s32 %v3258, 2
    %vm3260 = vcmp.gt.s32.totalorder 0, %v3259
    %v3261 = vsel %vm3260, 0, %v3259
    %v3262 = vsub.s32 32, %v3261
    %v3263 = vshll.u32 %v3254, %v3261
    %v3264 = vshrl.u32 %v3246, %v3262
    %v3265 = vor.u32 %v3263, %v3264
    %v3266 = vsub.s32 4294967266, %v3261
    %v3267 = vadd.s32 %v3266, 127
    %v3268 = vshll.u32 %v3267, 23
    %v3269 = vor.u32 4788187, %v3268
    %v3270 = vand.u32 2147483647, %v3269
    %v3272 = vcvt.s32.f32 %v3265
    %v3273 = vmul.f32 %v3272, %v3270
    %v3274 = vxor.u32 %v3273, 2147483648
    %v3275 = vsel %vm3154, %v3274, %v3273
    %v3276 = vsub.s32 4, %v3252
    %v3277 = vsel %vm3154, %v3276, %v3252
    %v3278 = vsel %vm3153, %v1126, %v3275
    %v3279 = vsel %vm3153, 0, %v3277
    %v3280 = vmul.f32 %v3278, %v3278
    %v3281 = vmul.f32 %v3280, -0.001358992
    %v3282 = vadd.f32 %v3281, 0.041655596
    %v3283 = vmul.f32 %v3280, %v3282
    %v3284 = vadd.f32 %v3283, -0.4999988
    %v3285 = vmul.f32 %v3280, %v3284
    %v3286 = vadd.f32 1.0, %v3285
    %v3287 = vmul.f32 %v3278, %v3278
    %v3288 = vmul.f32 %v3287, -0.00019511016
    %v3289 = vadd.f32 %v3288, 0.008332121
    %v3290 = vmul.f32 %v3287, %v3289
    %v3291 = vadd.f32 %v3290, -0.16666654
    %v3292 = vmul.f32 %v3287, %v3291
    %v3293 = vadd.f32 %v3292, 1.0
    %v3294 = vmul.f32 %v3293, %v3278
    %vm3295 = vweird.f32 %v1126
    %v3296 = vand.u32 %v3279, 3
    %vm3297 = vcmp.lt.s32.totalorder %v3296, 2
    %vm3298 = vcmp.eq.s32.totalorder %v3296, 0
    %v3299 = vxor.u32 %v3294, 2147483648
    %v3300 = vsel %vm3298, %v3286, %v3299
    %vm3301 = vcmp.eq.s32.totalorder %v3296, 2
    %v3302 = vxor.u32 %v3286, 2147483648
    %v3303 = vsel %vm3301, %v3302, %v3294
    %v3304 = vsel %vm3297, %v3300, %v3303
    %v3305 = vsel %vm3295, nan, %v3304
    %v3306 = vand.u32 2147483647, %v1129
    %vm3307 = vcmp.le.f32.partialorder %v3306, 0.7853982
    %vm3308 = vcmp.lt.s32.totalorder %v1129, 0
    %v3309 = vand.u32 %v1129, 2139095040
    %v3310 = vshrl.u32 %v3309, 23
    %v3311 = vsub.s32 %v3310, 127
    %v3312 = vand.u32 2147483647, %v1129
    %v3313 = vand.u32 %v3312, 8388607
    %v3314 = vor.u32 %v3313, 8388608
    %v3315 = vsub.s32 0, %v3314
    %v3316 = vadd.s32 %v3311, 1
    %vm3317 = vcmp.gt.s32.totalorder %v3316, 0
    %v3318 = vsel %vm3317, %v3316, 0
    %v3319 = vshrl.u32 %v3318, 5
    %v3320 = vand.u32 %v3318, 31
    %v3321 = vsub.s32 32, %v3320
    %v3322 = vshrl.u32 683565275, %v3321
    %v3323 = vshll.u32 683565275, %v3320
    %v3324 = vshrl.u32 2475754826, %v3321
    %v3325 = vor.u32 %v3323, %v3324
    %v3326 = vshll.u32 2475754826, %v3320
    %v3327 = vshrl.u32 2131351028, %v3321
    %v3328 = vor.u32 %v3326, %v3327
    %v3329 = vshll.u32 2131351028, %v3320
    %v3330 = vshrl.u32 2102212464, %v3321
    %v3331 = vor.u32 %v3329, %v3330
    %v3332 = vshll.u32 2102212464, %v3320
    %v3333 = vshrl.u32 920167782, %v3321
    %v3334 = vor.u32 %v3332, %v3333
    %v3335 = vshll.u32 920167782, %v3320
    %v3336 = vshrl.u32 1326507024, %v3321
    %v3337 = vor.u32 %v3335, %v3336
    %vm3338 = vcmp.lt.s32.totalorder %v3319, 1
    %vm3339 = vcmp.lt.s32.totalorder %v3319, 2
    %vm3340 = vcmp.lt.s32.totalorder %v3319, 3
    %vm3341 = vcmp.lt.s32.totalorder %v3319, 4
    %v3342 = vsel %vm3338, %v3322, %v3325
    %v3343 = vsel %vm3341, %v3331, 2102212464
    %v3344 = vsel %vm3340, %v3328, %v3343
    %v3345 = vsel %vm3339, %v3342, %v3344
    %v3346 = vsel %vm3338, %v3325, %v3328
    %v3347 = vsel %vm3341, %v3334, 920167782
    %v3348 = vsel %vm3340, %v3331, %v3347
    %v3349 = vsel %vm3339, %v3346, %v3348
    %v3350 = vsel %vm3338, %v3328, %v3331
    %v3351 = vsel %vm3341, %v3337, 1326507024
    %v3352 = vsel %vm3340, %v3334, %v3351
    %v3353 = vsel %vm3339, %v3350, %v3352
    %v3354 = vshll.u32 %v3314, 8
    %v3355 = vand.u32 %v3354, 65535
    %v3356 = vshrl.u32 %v3354, 16
    %v3357 = vand.u32 %v3353, 65535
    %v3358 = vshrl.u32 %v3353, 16
    %v3359 = vmul.u32 %v3355, %v3357
    %v3360 = vmul.u32 %v3355, %v3358
    %v3361 = vmul.u32 %v3356, %v3357
    %v3362 = vmul.u32 %v3356, %v3358
    %v3363 = vshll.u32 %v3360, 16
    %v3364 = vshrl.u32 %v3360, 16
    %v3365 = vshll.u32 %v3361, 16
    %v3366 = vshrl.u32 %v3361, 16
    %vm3367 = vc.u32 %v3359, %v3363
    %v3368 = vsel %vm3367, 1, 0
    %v3369 = vadd.s32 %v3359, %v3363
    %v3370 = vadd.s32 %v3362, %v3368
    %vm3371 = vc.u32 %v3369, %v3365
    %v3372 = vsel %vm3371, 1, 0
    %v3373 = vadd.s32 %v3369, %v3365
    %v3374 = vadd.s32 %v3370, %v3372
    %v3375 = vadd.s32 %v3374, %v3364
    %v3376 = vadd.s32 %v3375, %v3366
    %v3377 = vand.u32 %v3354, 65535
    %v3378 = vshrl.u32 %v3354, 16
    %v3379 = vand.u32 %v3349, 65535
    %v3380 = vshrl.u32 %v3349, 16
    %v3381 = vmul.u32 %v3377, %v3379
    %v3382 = vmul.u32 %v3377, %v3380
    %v3383 = vmul.u32 %v3378, %v3379
    %v3384 = vmul.u32 %v3378, %v3380
    %v3385 = vshll.u32 %v3382, 16
    %v3386 = vshrl.u32 %v3382, 16
    %v3387 = vshll.u32 %v3383, 16
    %v3388 = vshrl.u32 %v3383, 16
    %vm3389 = vc.u32 %v3381, %v3385
    %v3390 = vsel %vm3389, 1, 0
    %v3391 = vadd.s32 %v3381, %v3385
    %v3392 = vadd.s32 %v3384, %v3390
    %vm3393 = vc.u32 %v3391, %v3387
    %v3394 = vsel %vm3393, 1, 0
    %v3395 = vadd.s32 %v3391, %v3387
    %v3396 = vadd.s32 %v3392, %v3394
    %v3397 = vadd.s32 %v3396, %v3386
    %v3398 = vadd.s32 %v3397, %v3388
    %v3399 = vmul.u32 %v3354, %v3345
    %v3400 = vadd.s32 %v3376, %v3395
    %vm3401 = vc.u32 %v3376, %v3395
    %v3402 = vadd.s32 %v3398, 1
    %v3403 = vsel %vm3401, %v3402, %v3398
    %v3404 = vadd.s32 %v3399, %v3403
    %v3405 = vadd.s32 %v3404, 536870912
    %v3406 = vshrl.u32 %v3405, 30
    %v3407 = vshll.u32 %v3406, 30
    %v3408 = vsub.s32 %v3404, %v3407
    %vm3409 = vcmp.lt.s32.totalorder %v3408, 0
    %v3410 = vsub.s32 0, %v3408
    %v3411 = vsel %vm3409, %v3410, %v3408
    %v3412 = vclz %v3411
    %v3413 = vsub.s32 %v3412, 2
    %vm3414 = vcmp.gt.s32.totalorder 0, %v3413
    %v3415 = vsel %vm3414, 0, %v3413
    %v3416 = vsub.s32 32, %v3415
    %v3417 = vshll.u32 %v3408, %v3415
    %v3418 = vshrl.u32 %v3400, %v3416
    %v3419 = vor.u32 %v3417, %v3418
    %v3420 = vsub.s32 4294967266, %v3415
    %v3421 = vadd.s32 %v3420, 127
    %v3422 = vshll.u32 %v3421, 23
    %v3423 = vor.u32 4788187, %v3422
    %v3424 = vand.u32 2147483647, %v3423
    %v3426 = vcvt.s32.f32 %v3419
    %v3427 = vmul.f32 %v3426, %v3424
    %v3428 = vxor.u32 %v3427, 2147483648
    %v3429 = vsel %vm3308, %v3428, %v3427
    %v3430 = vsub.s32 4, %v3406
    %v3431 = vsel %vm3308, %v3430, %v3406
    %v3432 = vsel %vm3307, %v1129, %v3429
    %v3433 = vsel %vm3307, 0, %v3431
    %v3434 = vmul.f32 %v3432, %v3432
    %v3435 = vmul.f32 %v3434, -0.001358992
    %v3436 = vadd.f32 %v3435, 0.041655596
    %v3437 = vmul.f32 %v3434, %v3436
    %v3438 = vadd.f32 %v3437, -0.4999988
    %v3439 = vmul.f32 %v3434, %v3438
    %v3440 = vadd.f32 1.0, %v3439
    %v3441 = vmul.f32 %v3432, %v3432
    %v3442 = vmul.f32 %v3441, -0.00019511016
    %v3443 = vadd.f32 %v3442, 0.008332121
    %v3444 = vmul.f32 %v3441, %v3443
    %v3445 = vadd.f32 %v3444, -0.16666654
    %v3446 = vmul.f32 %v3441, %v3445
    %v3447 = vadd.f32 %v3446, 1.0
    %v3448 = vmul.f32 %v3447, %v3432
    %vm3449 = vweird.f32 %v1129
    %v3450 = vand.u32 %v3433, 3
    %vm3451 = vcmp.lt.s32.totalorder %v3450, 2
    %vm3452 = vcmp.eq.s32.totalorder %v3450, 0
    %v3453 = vxor.u32 %v3448, 2147483648
    %v3454 = vsel %vm3452, %v3440, %v3453
    %vm3455 = vcmp.eq.s32.totalorder %v3450, 2
    %v3456 = vxor.u32 %v3440, 2147483648
    %v3457 = vsel %vm3455, %v3456, %v3448
    %v3458 = vsel %vm3451, %v3454, %v3457
    %v3459 = vsel %vm3449, nan, %v3458
    %v3460 = vand.u32 2147483647, %v1132
    %vm3461 = vcmp.le.f32.partialorder %v3460, 0.7853982
    %vm3462 = vcmp.lt.s32.totalorder %v1132, 0
    %v3463 = vand.u32 %v1132, 2139095040
    %v3464 = vshrl.u32 %v3463, 23
    %v3465 = vsub.s32 %v3464, 127
    %v3466 = vand.u32 2147483647, %v1132
    %v3467 = vand.u32 %v3466, 8388607
    %v3468 = vor.u32 %v3467, 8388608
    %v3469 = vsub.s32 0, %v3468
    %v3470 = vadd.s32 %v3465, 1
    %vm3471 = vcmp.gt.s32.totalorder %v3470, 0
    %v3472 = vsel %vm3471, %v3470, 0
    %v3473 = vshrl.u32 %v3472, 5
    %v3474 = vand.u32 %v3472, 31
    %v3475 = vsub.s32 32, %v3474
    %v3476 = vshrl.u32 683565275, %v3475
    %v3477 = vshll.u32 683565275, %v3474
    %v3478 = vshrl.u32 2475754826, %v3475
    %v3479 = vor.u32 %v3477, %v3478
    %v3480 = vshll.u32 2475754826, %v3474
    %v3481 = vshrl.u32 2131351028, %v3475
    %v3482 = vor.u32 %v3480, %v3481
    %v3483 = vshll.u32 2131351028, %v3474
    %v3484 = vshrl.u32 2102212464, %v3475
    %v3485 = vor.u32 %v3483, %v3484
    %v3486 = vshll.u32 2102212464, %v3474
    %v3487 = vshrl.u32 920167782, %v3475
    %v3488 = vor.u32 %v3486, %v3487
    %v3489 = vshll.u32 920167782, %v3474
    %v3490 = vshrl.u32 1326507024, %v3475
    %v3491 = vor.u32 %v3489, %v3490
    %vm3492 = vcmp.lt.s32.totalorder %v3473, 1
    %vm3493 = vcmp.lt.s32.totalorder %v3473, 2
    %vm3494 = vcmp.lt.s32.totalorder %v3473, 3
    %vm3495 = vcmp.lt.s32.totalorder %v3473, 4
    %v3496 = vsel %vm3492, %v3476, %v3479
    %v3497 = vsel %vm3495, %v3485, 2102212464
    %v3498 = vsel %vm3494, %v3482, %v3497
    %v3499 = vsel %vm3493, %v3496, %v3498
    %v3500 = vsel %vm3492, %v3479, %v3482
    %v3501 = vsel %vm3495, %v3488, 920167782
    %v3502 = vsel %vm3494, %v3485, %v3501
    %v3503 = vsel %vm3493, %v3500, %v3502
    %v3504 = vsel %vm3492, %v3482, %v3485
    %v3505 = vsel %vm3495, %v3491, 1326507024
    %v3506 = vsel %vm3494, %v3488, %v3505
    %v3507 = vsel %vm3493, %v3504, %v3506
    %v3508 = vshll.u32 %v3468, 8
    %v3509 = vand.u32 %v3508, 65535
    %v3510 = vshrl.u32 %v3508, 16
    %v3511 = vand.u32 %v3507, 65535
    %v3512 = vshrl.u32 %v3507, 16
    %v3513 = vmul.u32 %v3509, %v3511
    %v3514 = vmul.u32 %v3509, %v3512
    %v3515 = vmul.u32 %v3510, %v3511
    %v3516 = vmul.u32 %v3510, %v3512
    %v3517 = vshll.u32 %v3514, 16
    %v3518 = vshrl.u32 %v3514, 16
    %v3519 = vshll.u32 %v3515, 16
    %v3520 = vshrl.u32 %v3515, 16
    %vm3521 = vc.u32 %v3513, %v3517
    %v3522 = vsel %vm3521, 1, 0
    %v3523 = vadd.s32 %v3513, %v3517
    %v3524 = vadd.s32 %v3516, %v3522
    %vm3525 = vc.u32 %v3523, %v3519
    %v3526 = vsel %vm3525, 1, 0
    %v3527 = vadd.s32 %v3523, %v3519
    %v3528 = vadd.s32 %v3524, %v3526
    %v3529 = vadd.s32 %v3528, %v3518
    %v3530 = vadd.s32 %v3529, %v3520
    %v3531 = vand.u32 %v3508, 65535
    %v3532 = vshrl.u32 %v3508, 16
    %v3533 = vand.u32 %v3503, 65535
    %v3534 = vshrl.u32 %v3503, 16
    %v3535 = vmul.u32 %v3531, %v3533
    %v3536 = vmul.u32 %v3531, %v3534
    %v3537 = vmul.u32 %v3532, %v3533
    %v3538 = vmul.u32 %v3532, %v3534
    %v3539 = vshll.u32 %v3536, 16
    %v3540 = vshrl.u32 %v3536, 16
    %v3541 = vshll.u32 %v3537, 16
    %v3542 = vshrl.u32 %v3537, 16
    %vm3543 = vc.u32 %v3535, %v3539
    %v3544 = vsel %vm3543, 1, 0
    %v3545 = vadd.s32 %v3535, %v3539
    %v3546 = vadd.s32 %v3538, %v3544
    %vm3547 = vc.u32 %v3545, %v3541
    %v3548 = vsel %vm3547, 1, 0
    %v3549 = vadd.s32 %v3545, %v3541
    %v3550 = vadd.s32 %v3546, %v3548
    %v3551 = vadd.s32 %v3550, %v3540
    %v3552 = vadd.s32 %v3551, %v3542
    %v3553 = vmul.u32 %v3508, %v3499
    %v3554 = vadd.s32 %v3530, %v3549
    %vm3555 = vc.u32 %v3530, %v3549
    %v3556 = vadd.s32 %v3552, 1
    %v3557 = vsel %vm3555, %v3556, %v3552
    %v3558 = vadd.s32 %v3553, %v3557
    %v3559 = vadd.s32 %v3558, 536870912
    %v3560 = vshrl.u32 %v3559, 30
    %v3561 = vshll.u32 %v3560, 30
    %v3562 = vsub.s32 %v3558, %v3561
    %vm3563 = vcmp.lt.s32.totalorder %v3562, 0
    %v3564 = vsub.s32 0, %v3562
    %v3565 = vsel %vm3563, %v3564, %v3562
    %v3566 = vclz %v3565
    %v3567 = vsub.s32 %v3566, 2
    %vm3568 = vcmp.gt.s32.totalorder 0, %v3567
    %v3569 = vsel %vm3568, 0, %v3567
    %v3570 = vsub.s32 32, %v3569
    %v3571 = vshll.u32 %v3562, %v3569
    %v3572 = vshrl.u32 %v3554, %v3570
    %v3573 = vor.u32 %v3571, %v3572
    %v3574 = vsub.s32 4294967266, %v3569
    %v3575 = vadd.s32 %v3574, 127
    %v3576 = vshll.u32 %v3575, 23
    %v3577 = vor.u32 4788187, %v3576
    %v3578 = vand.u32 2147483647, %v3577
    %v3580 = vcvt.s32.f32 %v3573
    %v3581 = vmul.f32 %v3580, %v3578
    %v3582 = vxor.u32 %v3581, 2147483648
    %v3583 = vsel %vm3462, %v3582, %v3581
    %v3584 = vsub.s32 4, %v3560
    %v3585 = vsel %vm3462, %v3584, %v3560
    %v3586 = vsel %vm3461, %v1132, %v3583
    %v3587 = vsel %vm3461, 0, %v3585
    %v3588 = vmul.f32 %v3586, %v3586
    %v3589 = vmul.f32 %v3588, -0.001358992
    %v3590 = vadd.f32 %v3589, 0.041655596
    %v3591 = vmul.f32 %v3588, %v3590
    %v3592 = vadd.f32 %v3591, -0.4999988
    %v3593 = vmul.f32 %v3588, %v3592
    %v3594 = vadd.f32 1.0, %v3593
    %v3595 = vmul.f32 %v3586, %v3586
    %v3596 = vmul.f32 %v3595, -0.00019511016
    %v3597 = vadd.f32 %v3596, 0.008332121
    %v3598 = vmul.f32 %v3595, %v3597
    %v3599 = vadd.f32 %v3598, -0.16666654
    %v3600 = vmul.f32 %v3595, %v3599
    %v3601 = vadd.f32 %v3600, 1.0
    %v3602 = vmul.f32 %v3601, %v3586
    %vm3603 = vweird.f32 %v1132
    %v3604 = vand.u32 %v3587, 3
    %vm3605 = vcmp.lt.s32.totalorder %v3604, 2
    %vm3606 = vcmp.eq.s32.totalorder %v3604, 0
    %v3607 = vxor.u32 %v3602, 2147483648
    %v3608 = vsel %vm3606, %v3594, %v3607
    %vm3609 = vcmp.eq.s32.totalorder %v3604, 2
    %v3610 = vxor.u32 %v3594, 2147483648
    %v3611 = vsel %vm3609, %v3610, %v3602
    %v3612 = vsel %vm3605, %v3608, %v3611
    %v3613 = vsel %vm3603, nan, %v3612
    %v3614 = vmul.f32 %v1134, %v1303
    %v3615 = vmul.f32 %v1135, %v1457
    %v3616 = vmul.f32 %v1136, %v1611
    %v3617 = vmul.f32 %v1137, %v1765
    %v3618 = vmul.f32 %v1138, %v1919
    %v3619 = vmul.f32 %v1139, %v2073
    %v3620 = vmul.f32 %v1140, %v2227
    %v3621 = vmul.f32 %v1141, %v2381
    %v3622 = vmul.f32 %v1142, %v2535
    %v3623 = vmul.f32 %v1143, %v2689
    %v3624 = vmul.f32 %v1144, %v2843
    %v3625 = vmul.f32 %v1145, %v2997
    %v3626 = vmul.f32 %v1146, %v3151
    %v3627 = vmul.f32 %v1147, %v3305
    %v3628 = vmul.f32 %v1148, %v3459
    %v3629 = vmul.f32 %v1149, %v3613
    %v3630 = vand.u32 2147483647, %v1087
    %vm3631 = vcmp.le.f32.partialorder %v3630, 0.7853982
    %vm3632 = vcmp.lt.s32.totalorder %v1087, 0
    %v3633 = vand.u32 %v1087, 2139095040
    %v3634 = vshrl.u32 %v3633, 23
    %v3635 = vsub.s32 %v3634, 127
    %v3636 = vand.u32 2147483647, %v1087
    %v3637 = vand.u32 %v3636, 8388607
    %v3638 = vor.u32 %v3637, 8388608
    %v3639 = vsub.s32 0, %v3638
    %v3640 = vadd.s32 %v3635, 1
    %vm3641 = vcmp.gt.s32.totalorder %v3640, 0
    %v3642 = vsel %vm3641, %v3640, 0
    %v3643 = vshrl.u32 %v3642, 5
    %v3644 = vand.u32 %v3642, 31
    %v3645 = vsub.s32 32, %v3644
    %v3646 = vshrl.u32 683565275, %v3645
    %v3647 = vshll.u32 683565275, %v3644
    %v3648 = vshrl.u32 2475754826, %v3645
    %v3649 = vor.u32 %v3647, %v3648
    %v3650 = vshll.u32 2475754826, %v3644
    %v3651 = vshrl.u32 2131351028, %v3645
    %v3652 = vor.u32 %v3650, %v3651
    %v3653 = vshll.u32 2131351028, %v3644
    %v3654 = vshrl.u32 2102212464, %v3645
    %v3655 = vor.u32 %v3653, %v3654
    %v3656 = vshll.u32 2102212464, %v3644
    %v3657 = vshrl.u32 920167782, %v3645
    %v3658 = vor.u32 %v3656, %v3657
    %v3659 = vshll.u32 920167782, %v3644
    %v3660 = vshrl.u32 1326507024, %v3645
    %v3661 = vor.u32 %v3659, %v3660
    %vm3662 = vcmp.lt.s32.totalorder %v3643, 1
    %vm3663 = vcmp.lt.s32.totalorder %v3643, 2
    %vm3664 = vcmp.lt.s32.totalorder %v3643, 3
    %vm3665 = vcmp.lt.s32.totalorder %v3643, 4
    %v3666 = vsel %vm3662, %v3646, %v3649
    %v3667 = vsel %vm3665, %v3655, 2102212464
    %v3668 = vsel %vm3664, %v3652, %v3667
    %v3669 = vsel %vm3663, %v3666, %v3668
    %v3670 = vsel %vm3662, %v3649, %v3652
    %v3671 = vsel %vm3665, %v3658, 920167782
    %v3672 = vsel %vm3664, %v3655, %v3671
    %v3673 = vsel %vm3663, %v3670, %v3672
    %v3674 = vsel %vm3662, %v3652, %v3655
    %v3675 = vsel %vm3665, %v3661, 1326507024
    %v3676 = vsel %vm3664, %v3658, %v3675
    %v3677 = vsel %vm3663, %v3674, %v3676
    %v3678 = vshll.u32 %v3638, 8
    %v3679 = vand.u32 %v3678, 65535
    %v3680 = vshrl.u32 %v3678, 16
    %v3681 = vand.u32 %v3677, 65535
    %v3682 = vshrl.u32 %v3677, 16
    %v3683 = vmul.u32 %v3679, %v3681
    %v3684 = vmul.u32 %v3679, %v3682
    %v3685 = vmul.u32 %v3680, %v3681
    %v3686 = vmul.u32 %v3680, %v3682
    %v3687 = vshll.u32 %v3684, 16
    %v3688 = vshrl.u32 %v3684, 16
    %v3689 = vshll.u32 %v3685, 16
    %v3690 = vshrl.u32 %v3685, 16
    %vm3691 = vc.u32 %v3683, %v3687
    %v3692 = vsel %vm3691, 1, 0
    %v3693 = vadd.s32 %v3683, %v3687
    %v3694 = vadd.s32 %v3686, %v3692
    %vm3695 = vc.u32 %v3693, %v3689
    %v3696 = vsel %vm3695, 1, 0
    %v3697 = vadd.s32 %v3693, %v3689
    %v3698 = vadd.s32 %v3694, %v3696
    %v3699 = vadd.s32 %v3698, %v3688
    %v3700 = vadd.s32 %v3699, %v3690
    %v3701 = vand.u32 %v3678, 65535
    %v3702 = vshrl.u32 %v3678, 16
    %v3703 = vand.u32 %v3673, 65535
    %v3704 = vshrl.u32 %v3673, 16
    %v3705 = vmul.u32 %v3701, %v3703
    %v3706 = vmul.u32 %v3701, %v3704
    %v3707 = vmul.u32 %v3702, %v3703
    %v3708 = vmul.u32 %v3702, %v3704
    %v3709 = vshll.u32 %v3706, 16
    %v3710 = vshrl.u32 %v3706, 16
    %v3711 = vshll.u32 %v3707, 16
    %v3712 = vshrl.u32 %v3707, 16
    %vm3713 = vc.u32 %v3705, %v3709
    %v3714 = vsel %vm3713, 1, 0
    %v3715 = vadd.s32 %v3705, %v3709
    %v3716 = vadd.s32 %v3708, %v3714
    %vm3717 = vc.u32 %v3715, %v3711
    %v3718 = vsel %vm3717, 1, 0
    %v3719 = vadd.s32 %v3715, %v3711
    %v3720 = vadd.s32 %v3716, %v3718
    %v3721 = vadd.s32 %v3720, %v3710
    %v3722 = vadd.s32 %v3721, %v3712
    %v3723 = vmul.u32 %v3678, %v3669
    %v3724 = vadd.s32 %v3700, %v3719
    %vm3725 = vc.u32 %v3700, %v3719
    %v3726 = vadd.s32 %v3722, 1
    %v3727 = vsel %vm3725, %v3726, %v3722
    %v3728 = vadd.s32 %v3723, %v3727
    %v3729 = vadd.s32 %v3728, 536870912
    %v3730 = vshrl.u32 %v3729, 30
    %v3731 = vshll.u32 %v3730, 30
    %v3732 = vsub.s32 %v3728, %v3731
    %vm3733 = vcmp.lt.s32.totalorder %v3732, 0
    %v3734 = vsub.s32 0, %v3732
    %v3735 = vsel %vm3733, %v3734, %v3732
    %v3736 = vclz %v3735
    %v3737 = vsub.s32 %v3736, 2
    %vm3738 = vcmp.gt.s32.totalorder 0, %v3737
    %v3739 = vsel %vm3738, 0, %v3737
    %v3740 = vsub.s32 32, %v3739
    %v3741 = vshll.u32 %v3732, %v3739
    %v3742 = vshrl.u32 %v3724, %v3740
    %v3743 = vor.u32 %v3741, %v3742
    %v3744 = vsub.s32 4294967266, %v3739
    %v3745 = vadd.s32 %v3744, 127
    %v3746 = vshll.u32 %v3745, 23
    %v3747 = vor.u32 4788187, %v3746
    %v3748 = vand.u32 2147483647, %v3747
    %v3750 = vcvt.s32.f32 %v3743
    %v3751 = vmul.f32 %v3750, %v3748
    %v3752 = vxor.u32 %v3751, 2147483648
    %v3753 = vsel %vm3632, %v3752, %v3751
    %v3754 = vsub.s32 4, %v3730
    %v3755 = vsel %vm3632, %v3754, %v3730
    %v3756 = vsel %vm3631, %v1087, %v3753
    %v3757 = vsel %vm3631, 0, %v3755
    %v3758 = vmul.f32 %v3756, %v3756
    %v3759 = vmul.f32 %v3758, -0.001358992
    %v3760 = vadd.f32 %v3759, 0.041655596
    %v3761 = vmul.f32 %v3758, %v3760
    %v3762 = vadd.f32 %v3761, -0.4999988
    %v3763 = vmul.f32 %v3758, %v3762
    %v3764 = vadd.f32 1.0, %v3763
    %v3765 = vmul.f32 %v3756, %v3756
    %v3766 = vmul.f32 %v3765, -0.00019511016
    %v3767 = vadd.f32 %v3766, 0.008332121
    %v3768 = vmul.f32 %v3765, %v3767
    %v3769 = vadd.f32 %v3768, -0.16666654
    %v3770 = vmul.f32 %v3765, %v3769
    %v3771 = vadd.f32 %v3770, 1.0
    %v3772 = vmul.f32 %v3771, %v3756
    %vm3773 = vweird.f32 %v1087
    %v3774 = vadd.s32 %v3757, 3
    %v3775 = vand.u32 %v3774, 3
    %vm3776 = vcmp.lt.s32.totalorder %v3775, 2
    %vm3777 = vcmp.eq.s32.totalorder %v3775, 0
    %v3778 = vxor.u32 %v3772, 2147483648
    %v3779 = vsel %vm3777, %v3764, %v3778
    %vm3780 = vcmp.eq.s32.totalorder %v3775, 2
    %v3781 = vxor.u32 %v3764, 2147483648
    %v3782 = vsel %vm3780, %v3781, %v3772
    %v3783 = vsel %vm3776, %v3779, %v3782
    %v3784 = vsel %vm3773, nan, %v3783
    %v3785 = vand.u32 2147483647, %v1090
    %vm3786 = vcmp.le.f32.partialorder %v3785, 0.7853982
    %vm3787 = vcmp.lt.s32.totalorder %v1090, 0
    %v3788 = vand.u32 %v1090, 2139095040
    %v3789 = vshrl.u32 %v3788, 23
    %v3790 = vsub.s32 %v3789, 127
    %v3791 = vand.u32 2147483647, %v1090
    %v3792 = vand.u32 %v3791, 8388607
    %v3793 = vor.u32 %v3792, 8388608
    %v3794 = vsub.s32 0, %v3793
    %v3795 = vadd.s32 %v3790, 1
    %vm3796 = vcmp.gt.s32.totalorder %v3795, 0
    %v3797 = vsel %vm3796, %v3795, 0
    %v3798 = vshrl.u32 %v3797, 5
    %v3799 = vand.u32 %v3797, 31
    %v3800 = vsub.s32 32, %v3799
    %v3801 = vshrl.u32 683565275, %v3800
    %v3802 = vshll.u32 683565275, %v3799
    %v3803 = vshrl.u32 2475754826, %v3800
    %v3804 = vor.u32 %v3802, %v3803
    %v3805 = vshll.u32 2475754826, %v3799
    %v3806 = vshrl.u32 2131351028, %v3800
    %v3807 = vor.u32 %v3805, %v3806
    %v3808 = vshll.u32 2131351028, %v3799
    %v3809 = vshrl.u32 2102212464, %v3800
    %v3810 = vor.u32 %v3808, %v3809
    %v3811 = vshll.u32 2102212464, %v3799
    %v3812 = vshrl.u32 920167782, %v3800
    %v3813 = vor.u32 %v3811, %v3812
    %v3814 = vshll.u32 920167782, %v3799
    %v3815 = vshrl.u32 1326507024, %v3800
    %v3816 = vor.u32 %v3814, %v3815
    %vm3817 = vcmp.lt.s32.totalorder %v3798, 1
    %vm3818 = vcmp.lt.s32.totalorder %v3798, 2
    %vm3819 = vcmp.lt.s32.totalorder %v3798, 3
    %vm3820 = vcmp.lt.s32.totalorder %v3798, 4
    %v3821 = vsel %vm3817, %v3801, %v3804
    %v3822 = vsel %vm3820, %v3810, 2102212464
    %v3823 = vsel %vm3819, %v3807, %v3822
    %v3824 = vsel %vm3818, %v3821, %v3823
    %v3825 = vsel %vm3817, %v3804, %v3807
    %v3826 = vsel %vm3820, %v3813, 920167782
    %v3827 = vsel %vm3819, %v3810, %v3826
    %v3828 = vsel %vm3818, %v3825, %v3827
    %v3829 = vsel %vm3817, %v3807, %v3810
    %v3830 = vsel %vm3820, %v3816, 1326507024
    %v3831 = vsel %vm3819, %v3813, %v3830
    %v3832 = vsel %vm3818, %v3829, %v3831
    %v3833 = vshll.u32 %v3793, 8
    %v3834 = vand.u32 %v3833, 65535
    %v3835 = vshrl.u32 %v3833, 16
    %v3836 = vand.u32 %v3832, 65535
    %v3837 = vshrl.u32 %v3832, 16
    %v3838 = vmul.u32 %v3834, %v3836
    %v3839 = vmul.u32 %v3834, %v3837
    %v3840 = vmul.u32 %v3835, %v3836
    %v3841 = vmul.u32 %v3835, %v3837
    %v3842 = vshll.u32 %v3839, 16
    %v3843 = vshrl.u32 %v3839, 16
    %v3844 = vshll.u32 %v3840, 16
    %v3845 = vshrl.u32 %v3840, 16
    %vm3846 = vc.u32 %v3838, %v3842
    %v3847 = vsel %vm3846, 1, 0
    %v3848 = vadd.s32 %v3838, %v3842
    %v3849 = vadd.s32 %v3841, %v3847
    %vm3850 = vc.u32 %v3848, %v3844
    %v3851 = vsel %vm3850, 1, 0
    %v3852 = vadd.s32 %v3848, %v3844
    %v3853 = vadd.s32 %v3849, %v3851
    %v3854 = vadd.s32 %v3853, %v3843
    %v3855 = vadd.s32 %v3854, %v3845
    %v3856 = vand.u32 %v3833, 65535
    %v3857 = vshrl.u32 %v3833, 16
    %v3858 = vand.u32 %v3828, 65535
    %v3859 = vshrl.u32 %v3828, 16
    %v3860 = vmul.u32 %v3856, %v3858
    %v3861 = vmul.u32 %v3856, %v3859
    %v3862 = vmul.u32 %v3857, %v3858
    %v3863 = vmul.u32 %v3857, %v3859
    %v3864 = vshll.u32 %v3861, 16
    %v3865 = vshrl.u32 %v3861, 16
    %v3866 = vshll.u32 %v3862, 16
    %v3867 = vshrl.u32 %v3862, 16
    %vm3868 = vc.u32 %v3860, %v3864
    %v3869 = vsel %vm3868, 1, 0
    %v3870 = vadd.s32 %v3860, %v3864
    %v3871 = vadd.s32 %v3863, %v3869
    %vm3872 = vc.u32 %v3870, %v3866
    %v3873 = vsel %vm3872, 1, 0
    %v3874 = vadd.s32 %v3870, %v3866
    %v3875 = vadd.s32 %v3871, %v3873
    %v3876 = vadd.s32 %v3875, %v3865
    %v3877 = vadd.s32 %v3876, %v3867
    %v3878 = vmul.u32 %v3833, %v3824
    %v3879 = vadd.s32 %v3855, %v3874
    %vm3880 = vc.u32 %v3855, %v3874
    %v3881 = vadd.s32 %v3877, 1
    %v3882 = vsel %vm3880, %v3881, %v3877
    %v3883 = vadd.s32 %v3878, %v3882
    %v3884 = vadd.s32 %v3883, 536870912
    %v3885 = vshrl.u32 %v3884, 30
    %v3886 = vshll.u32 %v3885, 30
    %v3887 = vsub.s32 %v3883, %v3886
    %vm3888 = vcmp.lt.s32.totalorder %v3887, 0
    %v3889 = vsub.s32 0, %v3887
    %v3890 = vsel %vm3888, %v3889, %v3887
    %v3891 = vclz %v3890
    %v3892 = vsub.s32 %v3891, 2
    %vm3893 = vcmp.gt.s32.totalorder 0, %v3892
    %v3894 = vsel %vm3893, 0, %v3892
    %v3895 = vsub.s32 32, %v3894
    %v3896 = vshll.u32 %v3887, %v3894
    %v3897 = vshrl.u32 %v3879, %v3895
    %v3898 = vor.u32 %v3896, %v3897
    %v3899 = vsub.s32 4294967266, %v3894
    %v3900 = vadd.s32 %v3899, 127
    %v3901 = vshll.u32 %v3900, 23
    %v3902 = vor.u32 4788187, %v3901
    %v3903 = vand.u32 2147483647, %v3902
    %v3905 = vcvt.s32.f32 %v3898
    %v3906 = vmul.f32 %v3905, %v3903
    %v3907 = vxor.u32 %v3906, 2147483648
    %v3908 = vsel %vm3787, %v3907, %v3906
    %v3909 = vsub.s32 4, %v3885
    %v3910 = vsel %vm3787, %v3909, %v3885
    %v3911 = vsel %vm3786, %v1090, %v3908
    %v3912 = vsel %vm3786, 0, %v3910
    %v3913 = vmul.f32 %v3911, %v3911
    %v3914 = vmul.f32 %v3913, -0.001358992
    %v3915 = vadd.f32 %v3914, 0.041655596
    %v3916 = vmul.f32 %v3913, %v3915
    %v3917 = vadd.f32 %v3916, -0.4999988
    %v3918 = vmul.f32 %v3913, %v3917
    %v3919 = vadd.f32 1.0, %v3918
    %v3920 = vmul.f32 %v3911, %v3911
    %v3921 = vmul.f32 %v3920, -0.00019511016
    %v3922 = vadd.f32 %v3921, 0.008332121
    %v3923 = vmul.f32 %v3920, %v3922
    %v3924 = vadd.f32 %v3923, -0.16666654
    %v3925 = vmul.f32 %v3920, %v3924
    %v3926 = vadd.f32 %v3925, 1.0
    %v3927 = vmul.f32 %v3926, %v3911
    %vm3928 = vweird.f32 %v1090
    %v3929 = vadd.s32 %v3912, 3
    %v3930 = vand.u32 %v3929, 3
    %vm3931 = vcmp.lt.s32.totalorder %v3930, 2
    %vm3932 = vcmp.eq.s32.totalorder %v3930, 0
    %v3933 = vxor.u32 %v3927, 2147483648
    %v3934 = vsel %vm3932, %v3919, %v3933
    %vm3935 = vcmp.eq.s32.totalorder %v3930, 2
    %v3936 = vxor.u32 %v3919, 2147483648
    %v3937 = vsel %vm3935, %v3936, %v3927
    %v3938 = vsel %vm3931, %v3934, %v3937
    %v3939 = vsel %vm3928, nan, %v3938
    %v3940 = vand.u32 2147483647, %v1093
    %vm3941 = vcmp.le.f32.partialorder %v3940, 0.7853982
    %vm3942 = vcmp.lt.s32.totalorder %v1093, 0
    %v3943 = vand.u32 %v1093, 2139095040
    %v3944 = vshrl.u32 %v3943, 23
    %v3945 = vsub.s32 %v3944, 127
    %v3946 = vand.u32 2147483647, %v1093
    %v3947 = vand.u32 %v3946, 8388607
    %v3948 = vor.u32 %v3947, 8388608
    %v3949 = vsub.s32 0, %v3948
    %v3950 = vadd.s32 %v3945, 1
    %vm3951 = vcmp.gt.s32.totalorder %v3950, 0
    %v3952 = vsel %vm3951, %v3950, 0
    %v3953 = vshrl.u32 %v3952, 5
    %v3954 = vand.u32 %v3952, 31
    %v3955 = vsub.s32 32, %v3954
    %v3956 = vshrl.u32 683565275, %v3955
    %v3957 = vshll.u32 683565275, %v3954
    %v3958 = vshrl.u32 2475754826, %v3955
    %v3959 = vor.u32 %v3957, %v3958
    %v3960 = vshll.u32 2475754826, %v3954
    %v3961 = vshrl.u32 2131351028, %v3955
    %v3962 = vor.u32 %v3960, %v3961
    %v3963 = vshll.u32 2131351028, %v3954
    %v3964 = vshrl.u32 2102212464, %v3955
    %v3965 = vor.u32 %v3963, %v3964
    %v3966 = vshll.u32 2102212464, %v3954
    %v3967 = vshrl.u32 920167782, %v3955
    %v3968 = vor.u32 %v3966, %v3967
    %v3969 = vshll.u32 920167782, %v3954
    %v3970 = vshrl.u32 1326507024, %v3955
    %v3971 = vor.u32 %v3969, %v3970
    %vm3972 = vcmp.lt.s32.totalorder %v3953, 1
    %vm3973 = vcmp.lt.s32.totalorder %v3953, 2
    %vm3974 = vcmp.lt.s32.totalorder %v3953, 3
    %vm3975 = vcmp.lt.s32.totalorder %v3953, 4
    %v3976 = vsel %vm3972, %v3956, %v3959
    %v3977 = vsel %vm3975, %v3965, 2102212464
    %v3978 = vsel %vm3974, %v3962, %v3977
    %v3979 = vsel %vm3973, %v3976, %v3978
    %v3980 = vsel %vm3972, %v3959, %v3962
    %v3981 = vsel %vm3975, %v3968, 920167782
    %v3982 = vsel %vm3974, %v3965, %v3981
    %v3983 = vsel %vm3973, %v3980, %v3982
    %v3984 = vsel %vm3972, %v3962, %v3965
    %v3985 = vsel %vm3975, %v3971, 1326507024
    %v3986 = vsel %vm3974, %v3968, %v3985
    %v3987 = vsel %vm3973, %v3984, %v3986
    %v3988 = vshll.u32 %v3948, 8
    %v3989 = vand.u32 %v3988, 65535
    %v3990 = vshrl.u32 %v3988, 16
    %v3991 = vand.u32 %v3987, 65535
    %v3992 = vshrl.u32 %v3987, 16
    %v3993 = vmul.u32 %v3989, %v3991
    %v3994 = vmul.u32 %v3989, %v3992
    %v3995 = vmul.u32 %v3990, %v3991
    %v3996 = vmul.u32 %v3990, %v3992
    %v3997 = vshll.u32 %v3994, 16
    %v3998 = vshrl.u32 %v3994, 16
    %v3999 = vshll.u32 %v3995, 16
    %v4000 = vshrl.u32 %v3995, 16
    %vm4001 = vc.u32 %v3993, %v3997
    %v4002 = vsel %vm4001, 1, 0
    %v4003 = vadd.s32 %v3993, %v3997
    %v4004 = vadd.s32 %v3996, %v4002
    %vm4005 = vc.u32 %v4003, %v3999
    %v4006 = vsel %vm4005, 1, 0
    %v4007 = vadd.s32 %v4003, %v3999
    %v4008 = vadd.s32 %v4004, %v4006
    %v4009 = vadd.s32 %v4008, %v3998
    %v4010 = vadd.s32 %v4009, %v4000
    %v4011 = vand.u32 %v3988, 65535
    %v4012 = vshrl.u32 %v3988, 16
    %v4013 = vand.u32 %v3983, 65535
    %v4014 = vshrl.u32 %v3983, 16
    %v4015 = vmul.u32 %v4011, %v4013
    %v4016 = vmul.u32 %v4011, %v4014
    %v4017 = vmul.u32 %v4012, %v4013
    %v4018 = vmul.u32 %v4012, %v4014
    %v4019 = vshll.u32 %v4016, 16
    %v4020 = vshrl.u32 %v4016, 16
    %v4021 = vshll.u32 %v4017, 16
    %v4022 = vshrl.u32 %v4017, 16
    %vm4023 = vc.u32 %v4015, %v4019
    %v4024 = vsel %vm4023, 1, 0
    %v4025 = vadd.s32 %v4015, %v4019
    %v4026 = vadd.s32 %v4018, %v4024
    %vm4027 = vc.u32 %v4025, %v4021
    %v4028 = vsel %vm4027, 1, 0
    %v4029 = vadd.s32 %v4025, %v4021
    %v4030 = vadd.s32 %v4026, %v4028
    %v4031 = vadd.s32 %v4030, %v4020
    %v4032 = vadd.s32 %v4031, %v4022
    %v4033 = vmul.u32 %v3988, %v3979
    %v4034 = vadd.s32 %v4010, %v4029
    %vm4035 = vc.u32 %v4010, %v4029
    %v4036 = vadd.s32 %v4032, 1
    %v4037 = vsel %vm4035, %v4036, %v4032
    %v4038 = vadd.s32 %v4033, %v4037
    %v4039 = vadd.s32 %v4038, 536870912
    %v4040 = vshrl.u32 %v4039, 30
    %v4041 = vshll.u32 %v4040, 30
    %v4042 = vsub.s32 %v4038, %v4041
    %vm4043 = vcmp.lt.s32.totalorder %v4042, 0
    %v4044 = vsub.s32 0, %v4042
    %v4045 = vsel %vm4043, %v4044, %v4042
    %v4046 = vclz %v4045
    %v4047 = vsub.s32 %v4046, 2
    %vm4048 = vcmp.gt.s32.totalorder 0, %v4047
    %v4049 = vsel %vm4048, 0, %v4047
    %v4050 = vsub.s32 32, %v4049
    %v4051 = vshll.u32 %v4042, %v4049
    %v4052 = vshrl.u32 %v4034, %v4050
    %v4053 = vor.u32 %v4051, %v4052
    %v4054 = vsub.s32 4294967266, %v4049
    %v4055 = vadd.s32 %v4054, 127
    %v4056 = vshll.u32 %v4055, 23
    %v4057 = vor.u32 4788187, %v4056
    %v4058 = vand.u32 2147483647, %v4057
    %v4060 = vcvt.s32.f32 %v4053
    %v4061 = vmul.f32 %v4060, %v4058
    %v4062 = vxor.u32 %v4061, 2147483648
    %v4063 = vsel %vm3942, %v4062, %v4061
    %v4064 = vsub.s32 4, %v4040
    %v4065 = vsel %vm3942, %v4064, %v4040
    %v4066 = vsel %vm3941, %v1093, %v4063
    %v4067 = vsel %vm3941, 0, %v4065
    %v4068 = vmul.f32 %v4066, %v4066
    %v4069 = vmul.f32 %v4068, -0.001358992
    %v4070 = vadd.f32 %v4069, 0.041655596
    %v4071 = vmul.f32 %v4068, %v4070
    %v4072 = vadd.f32 %v4071, -0.4999988
    %v4073 = vmul.f32 %v4068, %v4072
    %v4074 = vadd.f32 1.0, %v4073
    %v4075 = vmul.f32 %v4066, %v4066
    %v4076 = vmul.f32 %v4075, -0.00019511016
    %v4077 = vadd.f32 %v4076, 0.008332121
    %v4078 = vmul.f32 %v4075, %v4077
    %v4079 = vadd.f32 %v4078, -0.16666654
    %v4080 = vmul.f32 %v4075, %v4079
    %v4081 = vadd.f32 %v4080, 1.0
    %v4082 = vmul.f32 %v4081, %v4066
    %vm4083 = vweird.f32 %v1093
    %v4084 = vadd.s32 %v4067, 3
    %v4085 = vand.u32 %v4084, 3
    %vm4086 = vcmp.lt.s32.totalorder %v4085, 2
    %vm4087 = vcmp.eq.s32.totalorder %v4085, 0
    %v4088 = vxor.u32 %v4082, 2147483648
    %v4089 = vsel %vm4087, %v4074, %v4088
    %vm4090 = vcmp.eq.s32.totalorder %v4085, 2
    %v4091 = vxor.u32 %v4074, 2147483648
    %v4092 = vsel %vm4090, %v4091, %v4082
    %v4093 = vsel %vm4086, %v4089, %v4092
    %v4094 = vsel %vm4083, nan, %v4093
    %v4095 = vand.u32 2147483647, %v1096
    %vm4096 = vcmp.le.f32.partialorder %v4095, 0.7853982
    %vm4097 = vcmp.lt.s32.totalorder %v1096, 0
    %v4098 = vand.u32 %v1096, 2139095040
    %v4099 = vshrl.u32 %v4098, 23
    %v4100 = vsub.s32 %v4099, 127
    %v4101 = vand.u32 2147483647, %v1096
    %v4102 = vand.u32 %v4101, 8388607
    %v4103 = vor.u32 %v4102, 8388608
    %v4104 = vsub.s32 0, %v4103
    %v4105 = vadd.s32 %v4100, 1
    %vm4106 = vcmp.gt.s32.totalorder %v4105, 0
    %v4107 = vsel %vm4106, %v4105, 0
    %v4108 = vshrl.u32 %v4107, 5
    %v4109 = vand.u32 %v4107, 31
    %v4110 = vsub.s32 32, %v4109
    %v4111 = vshrl.u32 683565275, %v4110
    %v4112 = vshll.u32 683565275, %v4109
    %v4113 = vshrl.u32 2475754826, %v4110
    %v4114 = vor.u32 %v4112, %v4113
    %v4115 = vshll.u32 2475754826, %v4109
    %v4116 = vshrl.u32 2131351028, %v4110
    %v4117 = vor.u32 %v4115, %v4116
    %v4118 = vshll.u32 2131351028, %v4109
    %v4119 = vshrl.u32 2102212464, %v4110
    %v4120 = vor.u32 %v4118, %v4119
    %v4121 = vshll.u32 2102212464, %v4109
    %v4122 = vshrl.u32 920167782, %v4110
    %v4123 = vor.u32 %v4121, %v4122
    %v4124 = vshll.u32 920167782, %v4109
    %v4125 = vshrl.u32 1326507024, %v4110
    %v4126 = vor.u32 %v4124, %v4125
    %vm4127 = vcmp.lt.s32.totalorder %v4108, 1
    %vm4128 = vcmp.lt.s32.totalorder %v4108, 2
    %vm4129 = vcmp.lt.s32.totalorder %v4108, 3
    %vm4130 = vcmp.lt.s32.totalorder %v4108, 4
    %v4131 = vsel %vm4127, %v4111, %v4114
    %v4132 = vsel %vm4130, %v4120, 2102212464
    %v4133 = vsel %vm4129, %v4117, %v4132
    %v4134 = vsel %vm4128, %v4131, %v4133
    %v4135 = vsel %vm4127, %v4114, %v4117
    %v4136 = vsel %vm4130, %v4123, 920167782
    %v4137 = vsel %vm4129, %v4120, %v4136
    %v4138 = vsel %vm4128, %v4135, %v4137
    %v4139 = vsel %vm4127, %v4117, %v4120
    %v4140 = vsel %vm4130, %v4126, 1326507024
    %v4141 = vsel %vm4129, %v4123, %v4140
    %v4142 = vsel %vm4128, %v4139, %v4141
    %v4143 = vshll.u32 %v4103, 8
    %v4144 = vand.u32 %v4143, 65535
    %v4145 = vshrl.u32 %v4143, 16
    %v4146 = vand.u32 %v4142, 65535
    %v4147 = vshrl.u32 %v4142, 16
    %v4148 = vmul.u32 %v4144, %v4146
    %v4149 = vmul.u32 %v4144, %v4147
    %v4150 = vmul.u32 %v4145, %v4146
    %v4151 = vmul.u32 %v4145, %v4147
    %v4152 = vshll.u32 %v4149, 16
    %v4153 = vshrl.u32 %v4149, 16
    %v4154 = vshll.u32 %v4150, 16
    %v4155 = vshrl.u32 %v4150, 16
    %vm4156 = vc.u32 %v4148, %v4152
    %v4157 = vsel %vm4156, 1, 0
    %v4158 = vadd.s32 %v4148, %v4152
    %v4159 = vadd.s32 %v4151, %v4157
    %vm4160 = vc.u32 %v4158, %v4154
    %v4161 = vsel %vm4160, 1, 0
    %v4162 = vadd.s32 %v4158, %v4154
    %v4163 = vadd.s32 %v4159, %v4161
    %v4164 = vadd.s32 %v4163, %v4153
    %v4165 = vadd.s32 %v4164, %v4155
    %v4166 = vand.u32 %v4143, 65535
    %v4167 = vshrl.u32 %v4143, 16
    %v4168 = vand.u32 %v4138, 65535
    %v4169 = vshrl.u32 %v4138, 16
    %v4170 = vmul.u32 %v4166, %v4168
    %v4171 = vmul.u32 %v4166, %v4169
    %v4172 = vmul.u32 %v4167, %v4168
    %v4173 = vmul.u32 %v4167, %v4169
    %v4174 = vshll.u32 %v4171, 16
    %v4175 = vshrl.u32 %v4171, 16
    %v4176 = vshll.u32 %v4172, 16
    %v4177 = vshrl.u32 %v4172, 16
    %vm4178 = vc.u32 %v4170, %v4174
    %v4179 = vsel %vm4178, 1, 0
    %v4180 = vadd.s32 %v4170, %v4174
    %v4181 = vadd.s32 %v4173, %v4179
    %vm4182 = vc.u32 %v4180, %v4176
    %v4183 = vsel %vm4182, 1, 0
    %v4184 = vadd.s32 %v4180, %v4176
    %v4185 = vadd.s32 %v4181, %v4183
    %v4186 = vadd.s32 %v4185, %v4175
    %v4187 = vadd.s32 %v4186, %v4177
    %v4188 = vmul.u32 %v4143, %v4134
    %v4189 = vadd.s32 %v4165, %v4184
    %vm4190 = vc.u32 %v4165, %v4184
    %v4191 = vadd.s32 %v4187, 1
    %v4192 = vsel %vm4190, %v4191, %v4187
    %v4193 = vadd.s32 %v4188, %v4192
    %v4194 = vadd.s32 %v4193, 536870912
    %v4195 = vshrl.u32 %v4194, 30
    %v4196 = vshll.u32 %v4195, 30
    %v4197 = vsub.s32 %v4193, %v4196
    %vm4198 = vcmp.lt.s32.totalorder %v4197, 0
    %v4199 = vsub.s32 0, %v4197
    %v4200 = vsel %vm4198, %v4199, %v4197
    %v4201 = vclz %v4200
    %v4202 = vsub.s32 %v4201, 2
    %vm4203 = vcmp.gt.s32.totalorder 0, %v4202
    %v4204 = vsel %vm4203, 0, %v4202
    %v4205 = vsub.s32 32, %v4204
    %v4206 = vshll.u32 %v4197, %v4204
    %v4207 = vshrl.u32 %v4189, %v4205
    %v4208 = vor.u32 %v4206, %v4207
    %v4209 = vsub.s32 4294967266, %v4204
    %v4210 = vadd.s32 %v4209, 127
    %v4211 = vshll.u32 %v4210, 23
    %v4212 = vor.u32 4788187, %v4211
    %v4213 = vand.u32 2147483647, %v4212
    %v4215 = vcvt.s32.f32 %v4208
    %v4216 = vmul.f32 %v4215, %v4213
    %v4217 = vxor.u32 %v4216, 2147483648
    %v4218 = vsel %vm4097, %v4217, %v4216
    %v4219 = vsub.s32 4, %v4195
    %v4220 = vsel %vm4097, %v4219, %v4195
    %v4221 = vsel %vm4096, %v1096, %v4218
    %v4222 = vsel %vm4096, 0, %v4220
    %v4223 = vmul.f32 %v4221, %v4221
    %v4224 = vmul.f32 %v4223, -0.001358992
    %v4225 = vadd.f32 %v4224, 0.041655596
    %v4226 = vmul.f32 %v4223, %v4225
    %v4227 = vadd.f32 %v4226, -0.4999988
    %v4228 = vmul.f32 %v4223, %v4227
    %v4229 = vadd.f32 1.0, %v4228
    %v4230 = vmul.f32 %v4221, %v4221
    %v4231 = vmul.f32 %v4230, -0.00019511016
    %v4232 = vadd.f32 %v4231, 0.008332121
    %v4233 = vmul.f32 %v4230, %v4232
    %v4234 = vadd.f32 %v4233, -0.16666654
    %v4235 = vmul.f32 %v4230, %v4234
    %v4236 = vadd.f32 %v4235, 1.0
    %v4237 = vmul.f32 %v4236, %v4221
    %vm4238 = vweird.f32 %v1096
    %v4239 = vadd.s32 %v4222, 3
    %v4240 = vand.u32 %v4239, 3
    %vm4241 = vcmp.lt.s32.totalorder %v4240, 2
    %vm4242 = vcmp.eq.s32.totalorder %v4240, 0
    %v4243 = vxor.u32 %v4237, 2147483648
    %v4244 = vsel %vm4242, %v4229, %v4243
    %vm4245 = vcmp.eq.s32.totalorder %v4240, 2
    %v4246 = vxor.u32 %v4229, 2147483648
    %v4247 = vsel %vm4245, %v4246, %v4237
    %v4248 = vsel %vm4241, %v4244, %v4247
    %v4249 = vsel %vm4238, nan, %v4248
    %v4250 = vand.u32 2147483647, %v1099
    %vm4251 = vcmp.le.f32.partialorder %v4250, 0.7853982
    %vm4252 = vcmp.lt.s32.totalorder %v1099, 0
    %v4253 = vand.u32 %v1099, 2139095040
    %v4254 = vshrl.u32 %v4253, 23
    %v4255 = vsub.s32 %v4254, 127
    %v4256 = vand.u32 2147483647, %v1099
    %v4257 = vand.u32 %v4256, 8388607
    %v4258 = vor.u32 %v4257, 8388608
    %v4259 = vsub.s32 0, %v4258
    %v4260 = vadd.s32 %v4255, 1
    %vm4261 = vcmp.gt.s32.totalorder %v4260, 0
    %v4262 = vsel %vm4261, %v4260, 0
    %v4263 = vshrl.u32 %v4262, 5
    %v4264 = vand.u32 %v4262, 31
    %v4265 = vsub.s32 32, %v4264
    %v4266 = vshrl.u32 683565275, %v4265
    %v4267 = vshll.u32 683565275, %v4264
    %v4268 = vshrl.u32 2475754826, %v4265
    %v4269 = vor.u32 %v4267, %v4268
    %v4270 = vshll.u32 2475754826, %v4264
    %v4271 = vshrl.u32 2131351028, %v4265
    %v4272 = vor.u32 %v4270, %v4271
    %v4273 = vshll.u32 2131351028, %v4264
    %v4274 = vshrl.u32 2102212464, %v4265
    %v4275 = vor.u32 %v4273, %v4274
    %v4276 = vshll.u32 2102212464, %v4264
    %v4277 = vshrl.u32 920167782, %v4265
    %v4278 = vor.u32 %v4276, %v4277
    %v4279 = vshll.u32 920167782, %v4264
    %v4280 = vshrl.u32 1326507024, %v4265
    %v4281 = vor.u32 %v4279, %v4280
    %vm4282 = vcmp.lt.s32.totalorder %v4263, 1
    %vm4283 = vcmp.lt.s32.totalorder %v4263, 2
    %vm4284 = vcmp.lt.s32.totalorder %v4263, 3
    %vm4285 = vcmp.lt.s32.totalorder %v4263, 4
    %v4286 = vsel %vm4282, %v4266, %v4269
    %v4287 = vsel %vm4285, %v4275, 2102212464
    %v4288 = vsel %vm4284, %v4272, %v4287
    %v4289 = vsel %vm4283, %v4286, %v4288
    %v4290 = vsel %vm4282, %v4269, %v4272
    %v4291 = vsel %vm4285, %v4278, 920167782
    %v4292 = vsel %vm4284, %v4275, %v4291
    %v4293 = vsel %vm4283, %v4290, %v4292
    %v4294 = vsel %vm4282, %v4272, %v4275
    %v4295 = vsel %vm4285, %v4281, 1326507024
    %v4296 = vsel %vm4284, %v4278, %v4295
    %v4297 = vsel %vm4283, %v4294, %v4296
    %v4298 = vshll.u32 %v4258, 8
    %v4299 = vand.u32 %v4298, 65535
    %v4300 = vshrl.u32 %v4298, 16
    %v4301 = vand.u32 %v4297, 65535
    %v4302 = vshrl.u32 %v4297, 16
    %v4303 = vmul.u32 %v4299, %v4301
    %v4304 = vmul.u32 %v4299, %v4302
    %v4305 = vmul.u32 %v4300, %v4301
    %v4306 = vmul.u32 %v4300, %v4302
    %v4307 = vshll.u32 %v4304, 16
    %v4308 = vshrl.u32 %v4304, 16
    %v4309 = vshll.u32 %v4305, 16
    %v4310 = vshrl.u32 %v4305, 16
    %vm4311 = vc.u32 %v4303, %v4307
    %v4312 = vsel %vm4311, 1, 0
    %v4313 = vadd.s32 %v4303, %v4307
    %v4314 = vadd.s32 %v4306, %v4312
    %vm4315 = vc.u32 %v4313, %v4309
    %v4316 = vsel %vm4315, 1, 0
    %v4317 = vadd.s32 %v4313, %v4309
    %v4318 = vadd.s32 %v4314, %v4316
    %v4319 = vadd.s32 %v4318, %v4308
    %v4320 = vadd.s32 %v4319, %v4310
    %v4321 = vand.u32 %v4298, 65535
    %v4322 = vshrl.u32 %v4298, 16
    %v4323 = vand.u32 %v4293, 65535
    %v4324 = vshrl.u32 %v4293, 16
    %v4325 = vmul.u32 %v4321, %v4323
    %v4326 = vmul.u32 %v4321, %v4324
    %v4327 = vmul.u32 %v4322, %v4323
    %v4328 = vmul.u32 %v4322, %v4324
    %v4329 = vshll.u32 %v4326, 16
    %v4330 = vshrl.u32 %v4326, 16
    %v4331 = vshll.u32 %v4327, 16
    %v4332 = vshrl.u32 %v4327, 16
    %vm4333 = vc.u32 %v4325, %v4329
    %v4334 = vsel %vm4333, 1, 0
    %v4335 = vadd.s32 %v4325, %v4329
    %v4336 = vadd.s32 %v4328, %v4334
    %vm4337 = vc.u32 %v4335, %v4331
    %v4338 = vsel %vm4337, 1, 0
    %v4339 = vadd.s32 %v4335, %v4331
    %v4340 = vadd.s32 %v4336, %v4338
    %v4341 = vadd.s32 %v4340, %v4330
    %v4342 = vadd.s32 %v4341, %v4332
    %v4343 = vmul.u32 %v4298, %v4289
    %v4344 = vadd.s32 %v4320, %v4339
    %vm4345 = vc.u32 %v4320, %v4339
    %v4346 = vadd.s32 %v4342, 1
    %v4347 = vsel %vm4345, %v4346, %v4342
    %v4348 = vadd.s32 %v4343, %v4347
    %v4349 = vadd.s32 %v4348, 536870912
    %v4350 = vshrl.u32 %v4349, 30
    %v4351 = vshll.u32 %v4350, 30
    %v4352 = vsub.s32 %v4348, %v4351
    %vm4353 = vcmp.lt.s32.totalorder %v4352, 0
    %v4354 = vsub.s32 0, %v4352
    %v4355 = vsel %vm4353, %v4354, %v4352
    %v4356 = vclz %v4355
    %v4357 = vsub.s32 %v4356, 2
    %vm4358 = vcmp.gt.s32.totalorder 0, %v4357
    %v4359 = vsel %vm4358, 0, %v4357
    %v4360 = vsub.s32 32, %v4359
    %v4361 = vshll.u32 %v4352, %v4359
    %v4362 = vshrl.u32 %v4344, %v4360
    %v4363 = vor.u32 %v4361, %v4362
    %v4364 = vsub.s32 4294967266, %v4359
    %v4365 = vadd.s32 %v4364, 127
    %v4366 = vshll.u32 %v4365, 23
    %v4367 = vor.u32 4788187, %v4366
    %v4368 = vand.u32 2147483647, %v4367
    %v4370 = vcvt.s32.f32 %v4363
    %v4371 = vmul.f32 %v4370, %v4368
    %v4372 = vxor.u32 %v4371, 2147483648
    %v4373 = vsel %vm4252, %v4372, %v4371
    %v4374 = vsub.s32 4, %v4350
    %v4375 = vsel %vm4252, %v4374, %v4350
    %v4376 = vsel %vm4251, %v1099, %v4373
    %v4377 = vsel %vm4251, 0, %v4375
    %v4378 = vmul.f32 %v4376, %v4376
    %v4379 = vmul.f32 %v4378, -0.001358992
    %v4380 = vadd.f32 %v4379, 0.041655596
    %v4381 = vmul.f32 %v4378, %v4380
    %v4382 = vadd.f32 %v4381, -0.4999988
    %v4383 = vmul.f32 %v4378, %v4382
    %v4384 = vadd.f32 1.0, %v4383
    %v4385 = vmul.f32 %v4376, %v4376
    %v4386 = vmul.f32 %v4385, -0.00019511016
    %v4387 = vadd.f32 %v4386, 0.008332121
    %v4388 = vmul.f32 %v4385, %v4387
    %v4389 = vadd.f32 %v4388, -0.16666654
    %v4390 = vmul.f32 %v4385, %v4389
    %v4391 = vadd.f32 %v4390, 1.0
    %v4392 = vmul.f32 %v4391, %v4376
    %vm4393 = vweird.f32 %v1099
    %v4394 = vadd.s32 %v4377, 3
    %v4395 = vand.u32 %v4394, 3
    %vm4396 = vcmp.lt.s32.totalorder %v4395, 2
    %vm4397 = vcmp.eq.s32.totalorder %v4395, 0
    %v4398 = vxor.u32 %v4392, 2147483648
    %v4399 = vsel %vm4397, %v4384, %v4398
    %vm4400 = vcmp.eq.s32.totalorder %v4395, 2
    %v4401 = vxor.u32 %v4384, 2147483648
    %v4402 = vsel %vm4400, %v4401, %v4392
    %v4403 = vsel %vm4396, %v4399, %v4402
    %v4404 = vsel %vm4393, nan, %v4403
    %v4405 = vand.u32 2147483647, %v1102
    %vm4406 = vcmp.le.f32.partialorder %v4405, 0.7853982
    %vm4407 = vcmp.lt.s32.totalorder %v1102, 0
    %v4408 = vand.u32 %v1102, 2139095040
    %v4409 = vshrl.u32 %v4408, 23
    %v4410 = vsub.s32 %v4409, 127
    %v4411 = vand.u32 2147483647, %v1102
    %v4412 = vand.u32 %v4411, 8388607
    %v4413 = vor.u32 %v4412, 8388608
    %v4414 = vsub.s32 0, %v4413
    %v4415 = vadd.s32 %v4410, 1
    %vm4416 = vcmp.gt.s32.totalorder %v4415, 0
    %v4417 = vsel %vm4416, %v4415, 0
    %v4418 = vshrl.u32 %v4417, 5
    %v4419 = vand.u32 %v4417, 31
    %v4420 = vsub.s32 32, %v4419
    %v4421 = vshrl.u32 683565275, %v4420
    %v4422 = vshll.u32 683565275, %v4419
    %v4423 = vshrl.u32 2475754826, %v4420
    %v4424 = vor.u32 %v4422, %v4423
    %v4425 = vshll.u32 2475754826, %v4419
    %v4426 = vshrl.u32 2131351028, %v4420
    %v4427 = vor.u32 %v4425, %v4426
    %v4428 = vshll.u32 2131351028, %v4419
    %v4429 = vshrl.u32 2102212464, %v4420
    %v4430 = vor.u32 %v4428, %v4429
    %v4431 = vshll.u32 2102212464, %v4419
    %v4432 = vshrl.u32 920167782, %v4420
    %v4433 = vor.u32 %v4431, %v4432
    %v4434 = vshll.u32 920167782, %v4419
    %v4435 = vshrl.u32 1326507024, %v4420
    %v4436 = vor.u32 %v4434, %v4435
    %vm4437 = vcmp.lt.s32.totalorder %v4418, 1
    %vm4438 = vcmp.lt.s32.totalorder %v4418, 2
    %vm4439 = vcmp.lt.s32.totalorder %v4418, 3
    %vm4440 = vcmp.lt.s32.totalorder %v4418, 4
    %v4441 = vsel %vm4437, %v4421, %v4424
    %v4442 = vsel %vm4440, %v4430, 2102212464
    %v4443 = vsel %vm4439, %v4427, %v4442
    %v4444 = vsel %vm4438, %v4441, %v4443
    %v4445 = vsel %vm4437, %v4424, %v4427
    %v4446 = vsel %vm4440, %v4433, 920167782
    %v4447 = vsel %vm4439, %v4430, %v4446
    %v4448 = vsel %vm4438, %v4445, %v4447
    %v4449 = vsel %vm4437, %v4427, %v4430
    %v4450 = vsel %vm4440, %v4436, 1326507024
    %v4451 = vsel %vm4439, %v4433, %v4450
    %v4452 = vsel %vm4438, %v4449, %v4451
    %v4453 = vshll.u32 %v4413, 8
    %v4454 = vand.u32 %v4453, 65535
    %v4455 = vshrl.u32 %v4453, 16
    %v4456 = vand.u32 %v4452, 65535
    %v4457 = vshrl.u32 %v4452, 16
    %v4458 = vmul.u32 %v4454, %v4456
    %v4459 = vmul.u32 %v4454, %v4457
    %v4460 = vmul.u32 %v4455, %v4456
    %v4461 = vmul.u32 %v4455, %v4457
    %v4462 = vshll.u32 %v4459, 16
    %v4463 = vshrl.u32 %v4459, 16
    %v4464 = vshll.u32 %v4460, 16
    %v4465 = vshrl.u32 %v4460, 16
    %vm4466 = vc.u32 %v4458, %v4462
    %v4467 = vsel %vm4466, 1, 0
    %v4468 = vadd.s32 %v4458, %v4462
    %v4469 = vadd.s32 %v4461, %v4467
    %vm4470 = vc.u32 %v4468, %v4464
    %v4471 = vsel %vm4470, 1, 0
    %v4472 = vadd.s32 %v4468, %v4464
    %v4473 = vadd.s32 %v4469, %v4471
    %v4474 = vadd.s32 %v4473, %v4463
    %v4475 = vadd.s32 %v4474, %v4465
    %v4476 = vand.u32 %v4453, 65535
    %v4477 = vshrl.u32 %v4453, 16
    %v4478 = vand.u32 %v4448, 65535
    %v4479 = vshrl.u32 %v4448, 16
    %v4480 = vmul.u32 %v4476, %v4478
    %v4481 = vmul.u32 %v4476, %v4479
    %v4482 = vmul.u32 %v4477, %v4478
    %v4483 = vmul.u32 %v4477, %v4479
    %v4484 = vshll.u32 %v4481, 16
    %v4485 = vshrl.u32 %v4481, 16
    %v4486 = vshll.u32 %v4482, 16
    %v4487 = vshrl.u32 %v4482, 16
    %vm4488 = vc.u32 %v4480, %v4484
    %v4489 = vsel %vm4488, 1, 0
    %v4490 = vadd.s32 %v4480, %v4484
    %v4491 = vadd.s32 %v4483, %v4489
    %vm4492 = vc.u32 %v4490, %v4486
    %v4493 = vsel %vm4492, 1, 0
    %v4494 = vadd.s32 %v4490, %v4486
    %v4495 = vadd.s32 %v4491, %v4493
    %v4496 = vadd.s32 %v4495, %v4485
    %v4497 = vadd.s32 %v4496, %v4487
    %v4498 = vmul.u32 %v4453, %v4444
    %v4499 = vadd.s32 %v4475, %v4494
    %vm4500 = vc.u32 %v4475, %v4494
    %v4501 = vadd.s32 %v4497, 1
    %v4502 = vsel %vm4500, %v4501, %v4497
    %v4503 = vadd.s32 %v4498, %v4502
    %v4504 = vadd.s32 %v4503, 536870912
    %v4505 = vshrl.u32 %v4504, 30
    %v4506 = vshll.u32 %v4505, 30
    %v4507 = vsub.s32 %v4503, %v4506
    %vm4508 = vcmp.lt.s32.totalorder %v4507, 0
    %v4509 = vsub.s32 0, %v4507
    %v4510 = vsel %vm4508, %v4509, %v4507
    %v4511 = vclz %v4510
    %v4512 = vsub.s32 %v4511, 2
    %vm4513 = vcmp.gt.s32.totalorder 0, %v4512
    %v4514 = vsel %vm4513, 0, %v4512
    %v4515 = vsub.s32 32, %v4514
    %v4516 = vshll.u32 %v4507, %v4514
    %v4517 = vshrl.u32 %v4499, %v4515
    %v4518 = vor.u32 %v4516, %v4517
    %v4519 = vsub.s32 4294967266, %v4514
    %v4520 = vadd.s32 %v4519, 127
    %v4521 = vshll.u32 %v4520, 23
    %v4522 = vor.u32 4788187, %v4521
    %v4523 = vand.u32 2147483647, %v4522
    %v4525 = vcvt.s32.f32 %v4518
    %v4526 = vmul.f32 %v4525, %v4523
    %v4527 = vxor.u32 %v4526, 2147483648
    %v4528 = vsel %vm4407, %v4527, %v4526
    %v4529 = vsub.s32 4, %v4505
    %v4530 = vsel %vm4407, %v4529, %v4505
    %v4531 = vsel %vm4406, %v1102, %v4528
    %v4532 = vsel %vm4406, 0, %v4530
    %v4533 = vmul.f32 %v4531, %v4531
    %v4534 = vmul.f32 %v4533, -0.001358992
    %v4535 = vadd.f32 %v4534, 0.041655596
    %v4536 = vmul.f32 %v4533, %v4535
    %v4537 = vadd.f32 %v4536, -0.4999988
    %v4538 = vmul.f32 %v4533, %v4537
    %v4539 = vadd.f32 1.0, %v4538
    %v4540 = vmul.f32 %v4531, %v4531
    %v4541 = vmul.f32 %v4540, -0.00019511016
    %v4542 = vadd.f32 %v4541, 0.008332121
    %v4543 = vmul.f32 %v4540, %v4542
    %v4544 = vadd.f32 %v4543, -0.16666654
    %v4545 = vmul.f32 %v4540, %v4544
    %v4546 = vadd.f32 %v4545, 1.0
    %v4547 = vmul.f32 %v4546, %v4531
    %vm4548 = vweird.f32 %v1102
    %v4549 = vadd.s32 %v4532, 3
    %v4550 = vand.u32 %v4549, 3
    %vm4551 = vcmp.lt.s32.totalorder %v4550, 2
    %vm4552 = vcmp.eq.s32.totalorder %v4550, 0
    %v4553 = vxor.u32 %v4547, 2147483648
    %v4554 = vsel %vm4552, %v4539, %v4553
    %vm4555 = vcmp.eq.s32.totalorder %v4550, 2
    %v4556 = vxor.u32 %v4539, 2147483648
    %v4557 = vsel %vm4555, %v4556, %v4547
    %v4558 = vsel %vm4551, %v4554, %v4557
    %v4559 = vsel %vm4548, nan, %v4558
    %v4560 = vand.u32 2147483647, %v1105
    %vm4561 = vcmp.le.f32.partialorder %v4560, 0.7853982
    %vm4562 = vcmp.lt.s32.totalorder %v1105, 0
    %v4563 = vand.u32 %v1105, 2139095040
    %v4564 = vshrl.u32 %v4563, 23
    %v4565 = vsub.s32 %v4564, 127
    %v4566 = vand.u32 2147483647, %v1105
    %v4567 = vand.u32 %v4566, 8388607
    %v4568 = vor.u32 %v4567, 8388608
    %v4569 = vsub.s32 0, %v4568
    %v4570 = vadd.s32 %v4565, 1
    %vm4571 = vcmp.gt.s32.totalorder %v4570, 0
    %v4572 = vsel %vm4571, %v4570, 0
    %v4573 = vshrl.u32 %v4572, 5
    %v4574 = vand.u32 %v4572, 31
    %v4575 = vsub.s32 32, %v4574
    %v4576 = vshrl.u32 683565275, %v4575
    %v4577 = vshll.u32 683565275, %v4574
    %v4578 = vshrl.u32 2475754826, %v4575
    %v4579 = vor.u32 %v4577, %v4578
    %v4580 = vshll.u32 2475754826, %v4574
    %v4581 = vshrl.u32 2131351028, %v4575
    %v4582 = vor.u32 %v4580, %v4581
    %v4583 = vshll.u32 2131351028, %v4574
    %v4584 = vshrl.u32 2102212464, %v4575
    %v4585 = vor.u32 %v4583, %v4584
    %v4586 = vshll.u32 2102212464, %v4574
    %v4587 = vshrl.u32 920167782, %v4575
    %v4588 = vor.u32 %v4586, %v4587
    %v4589 = vshll.u32 920167782, %v4574
    %v4590 = vshrl.u32 1326507024, %v4575
    %v4591 = vor.u32 %v4589, %v4590
    %vm4592 = vcmp.lt.s32.totalorder %v4573, 1
    %vm4593 = vcmp.lt.s32.totalorder %v4573, 2
    %vm4594 = vcmp.lt.s32.totalorder %v4573, 3
    %vm4595 = vcmp.lt.s32.totalorder %v4573, 4
    %v4596 = vsel %vm4592, %v4576, %v4579
    %v4597 = vsel %vm4595, %v4585, 2102212464
    %v4598 = vsel %vm4594, %v4582, %v4597
    %v4599 = vsel %vm4593, %v4596, %v4598
    %v4600 = vsel %vm4592, %v4579, %v4582
    %v4601 = vsel %vm4595, %v4588, 920167782
    %v4602 = vsel %vm4594, %v4585, %v4601
    %v4603 = vsel %vm4593, %v4600, %v4602
    %v4604 = vsel %vm4592, %v4582, %v4585
    %v4605 = vsel %vm4595, %v4591, 1326507024
    %v4606 = vsel %vm4594, %v4588, %v4605
    %v4607 = vsel %vm4593, %v4604, %v4606
    %v4608 = vshll.u32 %v4568, 8
    %v4609 = vand.u32 %v4608, 65535
    %v4610 = vshrl.u32 %v4608, 16
    %v4611 = vand.u32 %v4607, 65535
    %v4612 = vshrl.u32 %v4607, 16
    %v4613 = vmul.u32 %v4609, %v4611
    %v4614 = vmul.u32 %v4609, %v4612
    %v4615 = vmul.u32 %v4610, %v4611
    %v4616 = vmul.u32 %v4610, %v4612
    %v4617 = vshll.u32 %v4614, 16
    %v4618 = vshrl.u32 %v4614, 16
    %v4619 = vshll.u32 %v4615, 16
    %v4620 = vshrl.u32 %v4615, 16
    %vm4621 = vc.u32 %v4613, %v4617
    %v4622 = vsel %vm4621, 1, 0
    %v4623 = vadd.s32 %v4613, %v4617
    %v4624 = vadd.s32 %v4616, %v4622
    %vm4625 = vc.u32 %v4623, %v4619
    %v4626 = vsel %vm4625, 1, 0
    %v4627 = vadd.s32 %v4623, %v4619
    %v4628 = vadd.s32 %v4624, %v4626
    %v4629 = vadd.s32 %v4628, %v4618
    %v4630 = vadd.s32 %v4629, %v4620
    %v4631 = vand.u32 %v4608, 65535
    %v4632 = vshrl.u32 %v4608, 16
    %v4633 = vand.u32 %v4603, 65535
    %v4634 = vshrl.u32 %v4603, 16
    %v4635 = vmul.u32 %v4631, %v4633
    %v4636 = vmul.u32 %v4631, %v4634
    %v4637 = vmul.u32 %v4632, %v4633
    %v4638 = vmul.u32 %v4632, %v4634
    %v4639 = vshll.u32 %v4636, 16
    %v4640 = vshrl.u32 %v4636, 16
    %v4641 = vshll.u32 %v4637, 16
    %v4642 = vshrl.u32 %v4637, 16
    %vm4643 = vc.u32 %v4635, %v4639
    %v4644 = vsel %vm4643, 1, 0
    %v4645 = vadd.s32 %v4635, %v4639
    %v4646 = vadd.s32 %v4638, %v4644
    %vm4647 = vc.u32 %v4645, %v4641
    %v4648 = vsel %vm4647, 1, 0
    %v4649 = vadd.s32 %v4645, %v4641
    %v4650 = vadd.s32 %v4646, %v4648
    %v4651 = vadd.s32 %v4650, %v4640
    %v4652 = vadd.s32 %v4651, %v4642
    %v4653 = vmul.u32 %v4608, %v4599
    %v4654 = vadd.s32 %v4630, %v4649
    %vm4655 = vc.u32 %v4630, %v4649
    %v4656 = vadd.s32 %v4652, 1
    %v4657 = vsel %vm4655, %v4656, %v4652
    %v4658 = vadd.s32 %v4653, %v4657
    %v4659 = vadd.s32 %v4658, 536870912
    %v4660 = vshrl.u32 %v4659, 30
    %v4661 = vshll.u32 %v4660, 30
    %v4662 = vsub.s32 %v4658, %v4661
    %vm4663 = vcmp.lt.s32.totalorder %v4662, 0
    %v4664 = vsub.s32 0, %v4662
    %v4665 = vsel %vm4663, %v4664, %v4662
    %v4666 = vclz %v4665
    %v4667 = vsub.s32 %v4666, 2
    %vm4668 = vcmp.gt.s32.totalorder 0, %v4667
    %v4669 = vsel %vm4668, 0, %v4667
    %v4670 = vsub.s32 32, %v4669
    %v4671 = vshll.u32 %v4662, %v4669
    %v4672 = vshrl.u32 %v4654, %v4670
    %v4673 = vor.u32 %v4671, %v4672
    %v4674 = vsub.s32 4294967266, %v4669
    %v4675 = vadd.s32 %v4674, 127
    %v4676 = vshll.u32 %v4675, 23
    %v4677 = vor.u32 4788187, %v4676
    %v4678 = vand.u32 2147483647, %v4677
    %v4680 = vcvt.s32.f32 %v4673
    %v4681 = vmul.f32 %v4680, %v4678
    %v4682 = vxor.u32 %v4681, 2147483648
    %v4683 = vsel %vm4562, %v4682, %v4681
    %v4684 = vsub.s32 4, %v4660
    %v4685 = vsel %vm4562, %v4684, %v4660
    %v4686 = vsel %vm4561, %v1105, %v4683
    %v4687 = vsel %vm4561, 0, %v4685
    %v4688 = vmul.f32 %v4686, %v4686
    %v4689 = vmul.f32 %v4688, -0.001358992
    %v4690 = vadd.f32 %v4689, 0.041655596
    %v4691 = vmul.f32 %v4688, %v4690
    %v4692 = vadd.f32 %v4691, -0.4999988
    %v4693 = vmul.f32 %v4688, %v4692
    %v4694 = vadd.f32 1.0, %v4693
    %v4695 = vmul.f32 %v4686, %v4686
    %v4696 = vmul.f32 %v4695, -0.00019511016
    %v4697 = vadd.f32 %v4696, 0.008332121
    %v4698 = vmul.f32 %v4695, %v4697
    %v4699 = vadd.f32 %v4698, -0.16666654
    %v4700 = vmul.f32 %v4695, %v4699
    %v4701 = vadd.f32 %v4700, 1.0
    %v4702 = vmul.f32 %v4701, %v4686
    %vm4703 = vweird.f32 %v1105
    %v4704 = vadd.s32 %v4687, 3
    %v4705 = vand.u32 %v4704, 3
    %vm4706 = vcmp.lt.s32.totalorder %v4705, 2
    %vm4707 = vcmp.eq.s32.totalorder %v4705, 0
    %v4708 = vxor.u32 %v4702, 2147483648
    %v4709 = vsel %vm4707, %v4694, %v4708
    %vm4710 = vcmp.eq.s32.totalorder %v4705, 2
    %v4711 = vxor.u32 %v4694, 2147483648
    %v4712 = vsel %vm4710, %v4711, %v4702
    %v4713 = vsel %vm4706, %v4709, %v4712
    %v4714 = vsel %vm4703, nan, %v4713
    %v4715 = vand.u32 2147483647, %v1108
    %vm4716 = vcmp.le.f32.partialorder %v4715, 0.7853982
    %vm4717 = vcmp.lt.s32.totalorder %v1108, 0
    %v4718 = vand.u32 %v1108, 2139095040
    %v4719 = vshrl.u32 %v4718, 23
    %v4720 = vsub.s32 %v4719, 127
    %v4721 = vand.u32 2147483647, %v1108
    %v4722 = vand.u32 %v4721, 8388607
    %v4723 = vor.u32 %v4722, 8388608
    %v4724 = vsub.s32 0, %v4723
    %v4725 = vadd.s32 %v4720, 1
    %vm4726 = vcmp.gt.s32.totalorder %v4725, 0
    %v4727 = vsel %vm4726, %v4725, 0
    %v4728 = vshrl.u32 %v4727, 5
    %v4729 = vand.u32 %v4727, 31
    %v4730 = vsub.s32 32, %v4729
    %v4731 = vshrl.u32 683565275, %v4730
    %v4732 = vshll.u32 683565275, %v4729
    %v4733 = vshrl.u32 2475754826, %v4730
    %v4734 = vor.u32 %v4732, %v4733
    %v4735 = vshll.u32 2475754826, %v4729
    %v4736 = vshrl.u32 2131351028, %v4730
    %v4737 = vor.u32 %v4735, %v4736
    %v4738 = vshll.u32 2131351028, %v4729
    %v4739 = vshrl.u32 2102212464, %v4730
    %v4740 = vor.u32 %v4738, %v4739
    %v4741 = vshll.u32 2102212464, %v4729
    %v4742 = vshrl.u32 920167782, %v4730
    %v4743 = vor.u32 %v4741, %v4742
    %v4744 = vshll.u32 920167782, %v4729
    %v4745 = vshrl.u32 1326507024, %v4730
    %v4746 = vor.u32 %v4744, %v4745
    %vm4747 = vcmp.lt.s32.totalorder %v4728, 1
    %vm4748 = vcmp.lt.s32.totalorder %v4728, 2
    %vm4749 = vcmp.lt.s32.totalorder %v4728, 3
    %vm4750 = vcmp.lt.s32.totalorder %v4728, 4
    %v4751 = vsel %vm4747, %v4731, %v4734
    %v4752 = vsel %vm4750, %v4740, 2102212464
    %v4753 = vsel %vm4749, %v4737, %v4752
    %v4754 = vsel %vm4748, %v4751, %v4753
    %v4755 = vsel %vm4747, %v4734, %v4737
    %v4756 = vsel %vm4750, %v4743, 920167782
    %v4757 = vsel %vm4749, %v4740, %v4756
    %v4758 = vsel %vm4748, %v4755, %v4757
    %v4759 = vsel %vm4747, %v4737, %v4740
    %v4760 = vsel %vm4750, %v4746, 1326507024
    %v4761 = vsel %vm4749, %v4743, %v4760
    %v4762 = vsel %vm4748, %v4759, %v4761
    %v4763 = vshll.u32 %v4723, 8
    %v4764 = vand.u32 %v4763, 65535
    %v4765 = vshrl.u32 %v4763, 16
    %v4766 = vand.u32 %v4762, 65535
    %v4767 = vshrl.u32 %v4762, 16
    %v4768 = vmul.u32 %v4764, %v4766
    %v4769 = vmul.u32 %v4764, %v4767
    %v4770 = vmul.u32 %v4765, %v4766
    %v4771 = vmul.u32 %v4765, %v4767
    %v4772 = vshll.u32 %v4769, 16
    %v4773 = vshrl.u32 %v4769, 16
    %v4774 = vshll.u32 %v4770, 16
    %v4775 = vshrl.u32 %v4770, 16
    %vm4776 = vc.u32 %v4768, %v4772
    %v4777 = vsel %vm4776, 1, 0
    %v4778 = vadd.s32 %v4768, %v4772
    %v4779 = vadd.s32 %v4771, %v4777
    %vm4780 = vc.u32 %v4778, %v4774
    %v4781 = vsel %vm4780, 1, 0
    %v4782 = vadd.s32 %v4778, %v4774
    %v4783 = vadd.s32 %v4779, %v4781
    %v4784 = vadd.s32 %v4783, %v4773
    %v4785 = vadd.s32 %v4784, %v4775
    %v4786 = vand.u32 %v4763, 65535
    %v4787 = vshrl.u32 %v4763, 16
    %v4788 = vand.u32 %v4758, 65535
    %v4789 = vshrl.u32 %v4758, 16
    %v4790 = vmul.u32 %v4786, %v4788
    %v4791 = vmul.u32 %v4786, %v4789
    %v4792 = vmul.u32 %v4787, %v4788
    %v4793 = vmul.u32 %v4787, %v4789
    %v4794 = vshll.u32 %v4791, 16
    %v4795 = vshrl.u32 %v4791, 16
    %v4796 = vshll.u32 %v4792, 16
    %v4797 = vshrl.u32 %v4792, 16
    %vm4798 = vc.u32 %v4790, %v4794
    %v4799 = vsel %vm4798, 1, 0
    %v4800 = vadd.s32 %v4790, %v4794
    %v4801 = vadd.s32 %v4793, %v4799
    %vm4802 = vc.u32 %v4800, %v4796
    %v4803 = vsel %vm4802, 1, 0
    %v4804 = vadd.s32 %v4800, %v4796
    %v4805 = vadd.s32 %v4801, %v4803
    %v4806 = vadd.s32 %v4805, %v4795
    %v4807 = vadd.s32 %v4806, %v4797
    %v4808 = vmul.u32 %v4763, %v4754
    %v4809 = vadd.s32 %v4785, %v4804
    %vm4810 = vc.u32 %v4785, %v4804
    %v4811 = vadd.s32 %v4807, 1
    %v4812 = vsel %vm4810, %v4811, %v4807
    %v4813 = vadd.s32 %v4808, %v4812
    %v4814 = vadd.s32 %v4813, 536870912
    %v4815 = vshrl.u32 %v4814, 30
    %v4816 = vshll.u32 %v4815, 30
    %v4817 = vsub.s32 %v4813, %v4816
    %vm4818 = vcmp.lt.s32.totalorder %v4817, 0
    %v4819 = vsub.s32 0, %v4817
    %v4820 = vsel %vm4818, %v4819, %v4817
    %v4821 = vclz %v4820
    %v4822 = vsub.s32 %v4821, 2
    %vm4823 = vcmp.gt.s32.totalorder 0, %v4822
    %v4824 = vsel %vm4823, 0, %v4822
    %v4825 = vsub.s32 32, %v4824
    %v4826 = vshll.u32 %v4817, %v4824
    %v4827 = vshrl.u32 %v4809, %v4825
    %v4828 = vor.u32 %v4826, %v4827
    %v4829 = vsub.s32 4294967266, %v4824
    %v4830 = vadd.s32 %v4829, 127
    %v4831 = vshll.u32 %v4830, 23
    %v4832 = vor.u32 4788187, %v4831
    %v4833 = vand.u32 2147483647, %v4832
    %v4835 = vcvt.s32.f32 %v4828
    %v4836 = vmul.f32 %v4835, %v4833
    %v4837 = vxor.u32 %v4836, 2147483648
    %v4838 = vsel %vm4717, %v4837, %v4836
    %v4839 = vsub.s32 4, %v4815
    %v4840 = vsel %vm4717, %v4839, %v4815
    %v4841 = vsel %vm4716, %v1108, %v4838
    %v4842 = vsel %vm4716, 0, %v4840
    %v4843 = vmul.f32 %v4841, %v4841
    %v4844 = vmul.f32 %v4843, -0.001358992
    %v4845 = vadd.f32 %v4844, 0.041655596
    %v4846 = vmul.f32 %v4843, %v4845
    %v4847 = vadd.f32 %v4846, -0.4999988
    %v4848 = vmul.f32 %v4843, %v4847
    %v4849 = vadd.f32 1.0, %v4848
    %v4850 = vmul.f32 %v4841, %v4841
    %v4851 = vmul.f32 %v4850, -0.00019511016
    %v4852 = vadd.f32 %v4851, 0.008332121
    %v4853 = vmul.f32 %v4850, %v4852
    %v4854 = vadd.f32 %v4853, -0.16666654
    %v4855 = vmul.f32 %v4850, %v4854
    %v4856 = vadd.f32 %v4855, 1.0
    %v4857 = vmul.f32 %v4856, %v4841
    %vm4858 = vweird.f32 %v1108
    %v4859 = vadd.s32 %v4842, 3
    %v4860 = vand.u32 %v4859, 3
    %vm4861 = vcmp.lt.s32.totalorder %v4860, 2
    %vm4862 = vcmp.eq.s32.totalorder %v4860, 0
    %v4863 = vxor.u32 %v4857, 2147483648
    %v4864 = vsel %vm4862, %v4849, %v4863
    %vm4865 = vcmp.eq.s32.totalorder %v4860, 2
    %v4866 = vxor.u32 %v4849, 2147483648
    %v4867 = vsel %vm4865, %v4866, %v4857
    %v4868 = vsel %vm4861, %v4864, %v4867
    %v4869 = vsel %vm4858, nan, %v4868
    %v4870 = vand.u32 2147483647, %v1111
    %vm4871 = vcmp.le.f32.partialorder %v4870, 0.7853982
    %vm4872 = vcmp.lt.s32.totalorder %v1111, 0
    %v4873 = vand.u32 %v1111, 2139095040
    %v4874 = vshrl.u32 %v4873, 23
    %v4875 = vsub.s32 %v4874, 127
    %v4876 = vand.u32 2147483647, %v1111
    %v4877 = vand.u32 %v4876, 8388607
    %v4878 = vor.u32 %v4877, 8388608
    %v4879 = vsub.s32 0, %v4878
    %v4880 = vadd.s32 %v4875, 1
    %vm4881 = vcmp.gt.s32.totalorder %v4880, 0
    %v4882 = vsel %vm4881, %v4880, 0
    %v4883 = vshrl.u32 %v4882, 5
    %v4884 = vand.u32 %v4882, 31
    %v4885 = vsub.s32 32, %v4884
    %v4886 = vshrl.u32 683565275, %v4885
    %v4887 = vshll.u32 683565275, %v4884
    %v4888 = vshrl.u32 2475754826, %v4885
    %v4889 = vor.u32 %v4887, %v4888
    %v4890 = vshll.u32 2475754826, %v4884
    %v4891 = vshrl.u32 2131351028, %v4885
    %v4892 = vor.u32 %v4890, %v4891
    %v4893 = vshll.u32 2131351028, %v4884
    %v4894 = vshrl.u32 2102212464, %v4885
    %v4895 = vor.u32 %v4893, %v4894
    %v4896 = vshll.u32 2102212464, %v4884
    %v4897 = vshrl.u32 920167782, %v4885
    %v4898 = vor.u32 %v4896, %v4897
    %v4899 = vshll.u32 920167782, %v4884
    %v4900 = vshrl.u32 1326507024, %v4885
    %v4901 = vor.u32 %v4899, %v4900
    %vm4902 = vcmp.lt.s32.totalorder %v4883, 1
    %vm4903 = vcmp.lt.s32.totalorder %v4883, 2
    %vm4904 = vcmp.lt.s32.totalorder %v4883, 3
    %vm4905 = vcmp.lt.s32.totalorder %v4883, 4
    %v4906 = vsel %vm4902, %v4886, %v4889
    %v4907 = vsel %vm4905, %v4895, 2102212464
    %v4908 = vsel %vm4904, %v4892, %v4907
    %v4909 = vsel %vm4903, %v4906, %v4908
    %v4910 = vsel %vm4902, %v4889, %v4892
    %v4911 = vsel %vm4905, %v4898, 920167782
    %v4912 = vsel %vm4904, %v4895, %v4911
    %v4913 = vsel %vm4903, %v4910, %v4912
    %v4914 = vsel %vm4902, %v4892, %v4895
    %v4915 = vsel %vm4905, %v4901, 1326507024
    %v4916 = vsel %vm4904, %v4898, %v4915
    %v4917 = vsel %vm4903, %v4914, %v4916
    %v4918 = vshll.u32 %v4878, 8
    %v4919 = vand.u32 %v4918, 65535
    %v4920 = vshrl.u32 %v4918, 16
    %v4921 = vand.u32 %v4917, 65535
    %v4922 = vshrl.u32 %v4917, 16
    %v4923 = vmul.u32 %v4919, %v4921
    %v4924 = vmul.u32 %v4919, %v4922
    %v4925 = vmul.u32 %v4920, %v4921
    %v4926 = vmul.u32 %v4920, %v4922
    %v4927 = vshll.u32 %v4924, 16
    %v4928 = vshrl.u32 %v4924, 16
    %v4929 = vshll.u32 %v4925, 16
    %v4930 = vshrl.u32 %v4925, 16
    %vm4931 = vc.u32 %v4923, %v4927
    %v4932 = vsel %vm4931, 1, 0
    %v4933 = vadd.s32 %v4923, %v4927
    %v4934 = vadd.s32 %v4926, %v4932
    %vm4935 = vc.u32 %v4933, %v4929
    %v4936 = vsel %vm4935, 1, 0
    %v4937 = vadd.s32 %v4933, %v4929
    %v4938 = vadd.s32 %v4934, %v4936
    %v4939 = vadd.s32 %v4938, %v4928
    %v4940 = vadd.s32 %v4939, %v4930
    %v4941 = vand.u32 %v4918, 65535
    %v4942 = vshrl.u32 %v4918, 16
    %v4943 = vand.u32 %v4913, 65535
    %v4944 = vshrl.u32 %v4913, 16
    %v4945 = vmul.u32 %v4941, %v4943
    %v4946 = vmul.u32 %v4941, %v4944
    %v4947 = vmul.u32 %v4942, %v4943
    %v4948 = vmul.u32 %v4942, %v4944
    %v4949 = vshll.u32 %v4946, 16
    %v4950 = vshrl.u32 %v4946, 16
    %v4951 = vshll.u32 %v4947, 16
    %v4952 = vshrl.u32 %v4947, 16
    %vm4953 = vc.u32 %v4945, %v4949
    %v4954 = vsel %vm4953, 1, 0
    %v4955 = vadd.s32 %v4945, %v4949
    %v4956 = vadd.s32 %v4948, %v4954
    %vm4957 = vc.u32 %v4955, %v4951
    %v4958 = vsel %vm4957, 1, 0
    %v4959 = vadd.s32 %v4955, %v4951
    %v4960 = vadd.s32 %v4956, %v4958
    %v4961 = vadd.s32 %v4960, %v4950
    %v4962 = vadd.s32 %v4961, %v4952
    %v4963 = vmul.u32 %v4918, %v4909
    %v4964 = vadd.s32 %v4940, %v4959
    %vm4965 = vc.u32 %v4940, %v4959
    %v4966 = vadd.s32 %v4962, 1
    %v4967 = vsel %vm4965, %v4966, %v4962
    %v4968 = vadd.s32 %v4963, %v4967
    %v4969 = vadd.s32 %v4968, 536870912
    %v4970 = vshrl.u32 %v4969, 30
    %v4971 = vshll.u32 %v4970, 30
    %v4972 = vsub.s32 %v4968, %v4971
    %vm4973 = vcmp.lt.s32.totalorder %v4972, 0
    %v4974 = vsub.s32 0, %v4972
    %v4975 = vsel %vm4973, %v4974, %v4972
    %v4976 = vclz %v4975
    %v4977 = vsub.s32 %v4976, 2
    %vm4978 = vcmp.gt.s32.totalorder 0, %v4977
    %v4979 = vsel %vm4978, 0, %v4977
    %v4980 = vsub.s32 32, %v4979
    %v4981 = vshll.u32 %v4972, %v4979
    %v4982 = vshrl.u32 %v4964, %v4980
    %v4983 = vor.u32 %v4981, %v4982
    %v4984 = vsub.s32 4294967266, %v4979
    %v4985 = vadd.s32 %v4984, 127
    %v4986 = vshll.u32 %v4985, 23
    %v4987 = vor.u32 4788187, %v4986
    %v4988 = vand.u32 2147483647, %v4987
    %v4990 = vcvt.s32.f32 %v4983
    %v4991 = vmul.f32 %v4990, %v4988
    %v4992 = vxor.u32 %v4991, 2147483648
    %v4993 = vsel %vm4872, %v4992, %v4991
    %v4994 = vsub.s32 4, %v4970
    %v4995 = vsel %vm4872, %v4994, %v4970
    %v4996 = vsel %vm4871, %v1111, %v4993
    %v4997 = vsel %vm4871, 0, %v4995
    %v4998 = vmul.f32 %v4996, %v4996
    %v4999 = vmul.f32 %v4998, -0.001358992
    %v5000 = vadd.f32 %v4999, 0.041655596
    %v5001 = vmul.f32 %v4998, %v5000
    %v5002 = vadd.f32 %v5001, -0.4999988
    %v5003 = vmul.f32 %v4998, %v5002
    %v5004 = vadd.f32 1.0, %v5003
    %v5005 = vmul.f32 %v4996, %v4996
    %v5006 = vmul.f32 %v5005, -0.00019511016
    %v5007 = vadd.f32 %v5006, 0.008332121
    %v5008 = vmul.f32 %v5005, %v5007
    %v5009 = vadd.f32 %v5008, -0.16666654
    %v5010 = vmul.f32 %v5005, %v5009
    %v5011 = vadd.f32 %v5010, 1.0
    %v5012 = vmul.f32 %v5011, %v4996
    %vm5013 = vweird.f32 %v1111
    %v5014 = vadd.s32 %v4997, 3
    %v5015 = vand.u32 %v5014, 3
    %vm5016 = vcmp.lt.s32.totalorder %v5015, 2
    %vm5017 = vcmp.eq.s32.totalorder %v5015, 0
    %v5018 = vxor.u32 %v5012, 2147483648
    %v5019 = vsel %vm5017, %v5004, %v5018
    %vm5020 = vcmp.eq.s32.totalorder %v5015, 2
    %v5021 = vxor.u32 %v5004, 2147483648
    %v5022 = vsel %vm5020, %v5021, %v5012
    %v5023 = vsel %vm5016, %v5019, %v5022
    %v5024 = vsel %vm5013, nan, %v5023
    %v5025 = vand.u32 2147483647, %v1114
    %vm5026 = vcmp.le.f32.partialorder %v5025, 0.7853982
    %vm5027 = vcmp.lt.s32.totalorder %v1114, 0
    %v5028 = vand.u32 %v1114, 2139095040
    %v5029 = vshrl.u32 %v5028, 23
    %v5030 = vsub.s32 %v5029, 127
    %v5031 = vand.u32 2147483647, %v1114
    %v5032 = vand.u32 %v5031, 8388607
    %v5033 = vor.u32 %v5032, 8388608
    %v5034 = vsub.s32 0, %v5033
    %v5035 = vadd.s32 %v5030, 1
    %vm5036 = vcmp.gt.s32.totalorder %v5035, 0
    %v5037 = vsel %vm5036, %v5035, 0
    %v5038 = vshrl.u32 %v5037, 5
    %v5039 = vand.u32 %v5037, 31
    %v5040 = vsub.s32 32, %v5039
    %v5041 = vshrl.u32 683565275, %v5040
    %v5042 = vshll.u32 683565275, %v5039
    %v5043 = vshrl.u32 2475754826, %v5040
    %v5044 = vor.u32 %v5042, %v5043
    %v5045 = vshll.u32 2475754826, %v5039
    %v5046 = vshrl.u32 2131351028, %v5040
    %v5047 = vor.u32 %v5045, %v5046
    %v5048 = vshll.u32 2131351028, %v5039
    %v5049 = vshrl.u32 2102212464, %v5040
    %v5050 = vor.u32 %v5048, %v5049
    %v5051 = vshll.u32 2102212464, %v5039
    %v5052 = vshrl.u32 920167782, %v5040
    %v5053 = vor.u32 %v5051, %v5052
    %v5054 = vshll.u32 920167782, %v5039
    %v5055 = vshrl.u32 1326507024, %v5040
    %v5056 = vor.u32 %v5054, %v5055
    %vm5057 = vcmp.lt.s32.totalorder %v5038, 1
    %vm5058 = vcmp.lt.s32.totalorder %v5038, 2
    %vm5059 = vcmp.lt.s32.totalorder %v5038, 3
    %vm5060 = vcmp.lt.s32.totalorder %v5038, 4
    %v5061 = vsel %vm5057, %v5041, %v5044
    %v5062 = vsel %vm5060, %v5050, 2102212464
    %v5063 = vsel %vm5059, %v5047, %v5062
    %v5064 = vsel %vm5058, %v5061, %v5063
    %v5065 = vsel %vm5057, %v5044, %v5047
    %v5066 = vsel %vm5060, %v5053, 920167782
    %v5067 = vsel %vm5059, %v5050, %v5066
    %v5068 = vsel %vm5058, %v5065, %v5067
    %v5069 = vsel %vm5057, %v5047, %v5050
    %v5070 = vsel %vm5060, %v5056, 1326507024
    %v5071 = vsel %vm5059, %v5053, %v5070
    %v5072 = vsel %vm5058, %v5069, %v5071
    %v5073 = vshll.u32 %v5033, 8
    %v5074 = vand.u32 %v5073, 65535
    %v5075 = vshrl.u32 %v5073, 16
    %v5076 = vand.u32 %v5072, 65535
    %v5077 = vshrl.u32 %v5072, 16
    %v5078 = vmul.u32 %v5074, %v5076
    %v5079 = vmul.u32 %v5074, %v5077
    %v5080 = vmul.u32 %v5075, %v5076
    %v5081 = vmul.u32 %v5075, %v5077
    %v5082 = vshll.u32 %v5079, 16
    %v5083 = vshrl.u32 %v5079, 16
    %v5084 = vshll.u32 %v5080, 16
    %v5085 = vshrl.u32 %v5080, 16
    %vm5086 = vc.u32 %v5078, %v5082
    %v5087 = vsel %vm5086, 1, 0
    %v5088 = vadd.s32 %v5078, %v5082
    %v5089 = vadd.s32 %v5081, %v5087
    %vm5090 = vc.u32 %v5088, %v5084
    %v5091 = vsel %vm5090, 1, 0
    %v5092 = vadd.s32 %v5088, %v5084
    %v5093 = vadd.s32 %v5089, %v5091
    %v5094 = vadd.s32 %v5093, %v5083
    %v5095 = vadd.s32 %v5094, %v5085
    %v5096 = vand.u32 %v5073, 65535
    %v5097 = vshrl.u32 %v5073, 16
    %v5098 = vand.u32 %v5068, 65535
    %v5099 = vshrl.u32 %v5068, 16
    %v5100 = vmul.u32 %v5096, %v5098
    %v5101 = vmul.u32 %v5096, %v5099
    %v5102 = vmul.u32 %v5097, %v5098
    %v5103 = vmul.u32 %v5097, %v5099
    %v5104 = vshll.u32 %v5101, 16
    %v5105 = vshrl.u32 %v5101, 16
    %v5106 = vshll.u32 %v5102, 16
    %v5107 = vshrl.u32 %v5102, 16
    %vm5108 = vc.u32 %v5100, %v5104
    %v5109 = vsel %vm5108, 1, 0
    %v5110 = vadd.s32 %v5100, %v5104
    %v5111 = vadd.s32 %v5103, %v5109
    %vm5112 = vc.u32 %v5110, %v5106
    %v5113 = vsel %vm5112, 1, 0
    %v5114 = vadd.s32 %v5110, %v5106
    %v5115 = vadd.s32 %v5111, %v5113
    %v5116 = vadd.s32 %v5115, %v5105
    %v5117 = vadd.s32 %v5116, %v5107
    %v5118 = vmul.u32 %v5073, %v5064
    %v5119 = vadd.s32 %v5095, %v5114
    %vm5120 = vc.u32 %v5095, %v5114
    %v5121 = vadd.s32 %v5117, 1
    %v5122 = vsel %vm5120, %v5121, %v5117
    %v5123 = vadd.s32 %v5118, %v5122
    %v5124 = vadd.s32 %v5123, 536870912
    %v5125 = vshrl.u32 %v5124, 30
    %v5126 = vshll.u32 %v5125, 30
    %v5127 = vsub.s32 %v5123, %v5126
    %vm5128 = vcmp.lt.s32.totalorder %v5127, 0
    %v5129 = vsub.s32 0, %v5127
    %v5130 = vsel %vm5128, %v5129, %v5127
    %v5131 = vclz %v5130
    %v5132 = vsub.s32 %v5131, 2
    %vm5133 = vcmp.gt.s32.totalorder 0, %v5132
    %v5134 = vsel %vm5133, 0, %v5132
    %v5135 = vsub.s32 32, %v5134
    %v5136 = vshll.u32 %v5127, %v5134
    %v5137 = vshrl.u32 %v5119, %v5135
    %v5138 = vor.u32 %v5136, %v5137
    %v5139 = vsub.s32 4294967266, %v5134
    %v5140 = vadd.s32 %v5139, 127
    %v5141 = vshll.u32 %v5140, 23
    %v5142 = vor.u32 4788187, %v5141
    %v5143 = vand.u32 2147483647, %v5142
    %v5145 = vcvt.s32.f32 %v5138
    %v5146 = vmul.f32 %v5145, %v5143
    %v5147 = vxor.u32 %v5146, 2147483648
    %v5148 = vsel %vm5027, %v5147, %v5146
    %v5149 = vsub.s32 4, %v5125
    %v5150 = vsel %vm5027, %v5149, %v5125
    %v5151 = vsel %vm5026, %v1114, %v5148
    %v5152 = vsel %vm5026, 0, %v5150
    %v5153 = vmul.f32 %v5151, %v5151
    %v5154 = vmul.f32 %v5153, -0.001358992
    %v5155 = vadd.f32 %v5154, 0.041655596
    %v5156 = vmul.f32 %v5153, %v5155
    %v5157 = vadd.f32 %v5156, -0.4999988
    %v5158 = vmul.f32 %v5153, %v5157
    %v5159 = vadd.f32 1.0, %v5158
    %v5160 = vmul.f32 %v5151, %v5151
    %v5161 = vmul.f32 %v5160, -0.00019511016
    %v5162 = vadd.f32 %v5161, 0.008332121
    %v5163 = vmul.f32 %v5160, %v5162
    %v5164 = vadd.f32 %v5163, -0.16666654
    %v5165 = vmul.f32 %v5160, %v5164
    %v5166 = vadd.f32 %v5165, 1.0
    %v5167 = vmul.f32 %v5166, %v5151
    %vm5168 = vweird.f32 %v1114
    %v5169 = vadd.s32 %v5152, 3
    %v5170 = vand.u32 %v5169, 3
    %vm5171 = vcmp.lt.s32.totalorder %v5170, 2
    %vm5172 = vcmp.eq.s32.totalorder %v5170, 0
    %v5173 = vxor.u32 %v5167, 2147483648
    %v5174 = vsel %vm5172, %v5159, %v5173
    %vm5175 = vcmp.eq.s32.totalorder %v5170, 2
    %v5176 = vxor.u32 %v5159, 2147483648
    %v5177 = vsel %vm5175, %v5176, %v5167
    %v5178 = vsel %vm5171, %v5174, %v5177
    %v5179 = vsel %vm5168, nan, %v5178
    %v5180 = vand.u32 2147483647, %v1117
    %vm5181 = vcmp.le.f32.partialorder %v5180, 0.7853982
    %vm5182 = vcmp.lt.s32.totalorder %v1117, 0
    %v5183 = vand.u32 %v1117, 2139095040
    %v5184 = vshrl.u32 %v5183, 23
    %v5185 = vsub.s32 %v5184, 127
    %v5186 = vand.u32 2147483647, %v1117
    %v5187 = vand.u32 %v5186, 8388607
    %v5188 = vor.u32 %v5187, 8388608
    %v5189 = vsub.s32 0, %v5188
    %v5190 = vadd.s32 %v5185, 1
    %vm5191 = vcmp.gt.s32.totalorder %v5190, 0
    %v5192 = vsel %vm5191, %v5190, 0
    %v5193 = vshrl.u32 %v5192, 5
    %v5194 = vand.u32 %v5192, 31
    %v5195 = vsub.s32 32, %v5194
    %v5196 = vshrl.u32 683565275, %v5195
    %v5197 = vshll.u32 683565275, %v5194
    %v5198 = vshrl.u32 2475754826, %v5195
    %v5199 = vor.u32 %v5197, %v5198
    %v5200 = vshll.u32 2475754826, %v5194
    %v5201 = vshrl.u32 2131351028, %v5195
    %v5202 = vor.u32 %v5200, %v5201
    %v5203 = vshll.u32 2131351028, %v5194
    %v5204 = vshrl.u32 2102212464, %v5195
    %v5205 = vor.u32 %v5203, %v5204
    %v5206 = vshll.u32 2102212464, %v5194
    %v5207 = vshrl.u32 920167782, %v5195
    %v5208 = vor.u32 %v5206, %v5207
    %v5209 = vshll.u32 920167782, %v5194
    %v5210 = vshrl.u32 1326507024, %v5195
    %v5211 = vor.u32 %v5209, %v5210
    %vm5212 = vcmp.lt.s32.totalorder %v5193, 1
    %vm5213 = vcmp.lt.s32.totalorder %v5193, 2
    %vm5214 = vcmp.lt.s32.totalorder %v5193, 3
    %vm5215 = vcmp.lt.s32.totalorder %v5193, 4
    %v5216 = vsel %vm5212, %v5196, %v5199
    %v5217 = vsel %vm5215, %v5205, 2102212464
    %v5218 = vsel %vm5214, %v5202, %v5217
    %v5219 = vsel %vm5213, %v5216, %v5218
    %v5220 = vsel %vm5212, %v5199, %v5202
    %v5221 = vsel %vm5215, %v5208, 920167782
    %v5222 = vsel %vm5214, %v5205, %v5221
    %v5223 = vsel %vm5213, %v5220, %v5222
    %v5224 = vsel %vm5212, %v5202, %v5205
    %v5225 = vsel %vm5215, %v5211, 1326507024
    %v5226 = vsel %vm5214, %v5208, %v5225
    %v5227 = vsel %vm5213, %v5224, %v5226
    %v5228 = vshll.u32 %v5188, 8
    %v5229 = vand.u32 %v5228, 65535
    %v5230 = vshrl.u32 %v5228, 16
    %v5231 = vand.u32 %v5227, 65535
    %v5232 = vshrl.u32 %v5227, 16
    %v5233 = vmul.u32 %v5229, %v5231
    %v5234 = vmul.u32 %v5229, %v5232
    %v5235 = vmul.u32 %v5230, %v5231
    %v5236 = vmul.u32 %v5230, %v5232
    %v5237 = vshll.u32 %v5234, 16
    %v5238 = vshrl.u32 %v5234, 16
    %v5239 = vshll.u32 %v5235, 16
    %v5240 = vshrl.u32 %v5235, 16
    %vm5241 = vc.u32 %v5233, %v5237
    %v5242 = vsel %vm5241, 1, 0
    %v5243 = vadd.s32 %v5233, %v5237
    %v5244 = vadd.s32 %v5236, %v5242
    %vm5245 = vc.u32 %v5243, %v5239
    %v5246 = vsel %vm5245, 1, 0
    %v5247 = vadd.s32 %v5243, %v5239
    %v5248 = vadd.s32 %v5244, %v5246
    %v5249 = vadd.s32 %v5248, %v5238
    %v5250 = vadd.s32 %v5249, %v5240
    %v5251 = vand.u32 %v5228, 65535
    %v5252 = vshrl.u32 %v5228, 16
    %v5253 = vand.u32 %v5223, 65535
    %v5254 = vshrl.u32 %v5223, 16
    %v5255 = vmul.u32 %v5251, %v5253
    %v5256 = vmul.u32 %v5251, %v5254
    %v5257 = vmul.u32 %v5252, %v5253
    %v5258 = vmul.u32 %v5252, %v5254
    %v5259 = vshll.u32 %v5256, 16
    %v5260 = vshrl.u32 %v5256, 16
    %v5261 = vshll.u32 %v5257, 16
    %v5262 = vshrl.u32 %v5257, 16
    %vm5263 = vc.u32 %v5255, %v5259
    %v5264 = vsel %vm5263, 1, 0
    %v5265 = vadd.s32 %v5255, %v5259
    %v5266 = vadd.s32 %v5258, %v5264
    %vm5267 = vc.u32 %v5265, %v5261
    %v5268 = vsel %vm5267, 1, 0
    %v5269 = vadd.s32 %v5265, %v5261
    %v5270 = vadd.s32 %v5266, %v5268
    %v5271 = vadd.s32 %v5270, %v5260
    %v5272 = vadd.s32 %v5271, %v5262
    %v5273 = vmul.u32 %v5228, %v5219
    %v5274 = vadd.s32 %v5250, %v5269
    %vm5275 = vc.u32 %v5250, %v5269
    %v5276 = vadd.s32 %v5272, 1
    %v5277 = vsel %vm5275, %v5276, %v5272
    %v5278 = vadd.s32 %v5273, %v5277
    %v5279 = vadd.s32 %v5278, 536870912
    %v5280 = vshrl.u32 %v5279, 30
    %v5281 = vshll.u32 %v5280, 30
    %v5282 = vsub.s32 %v5278, %v5281
    %vm5283 = vcmp.lt.s32.totalorder %v5282, 0
    %v5284 = vsub.s32 0, %v5282
    %v5285 = vsel %vm5283, %v5284, %v5282
    %v5286 = vclz %v5285
    %v5287 = vsub.s32 %v5286, 2
    %vm5288 = vcmp.gt.s32.totalorder 0, %v5287
    %v5289 = vsel %vm5288, 0, %v5287
    %v5290 = vsub.s32 32, %v5289
    %v5291 = vshll.u32 %v5282, %v5289
    %v5292 = vshrl.u32 %v5274, %v5290
    %v5293 = vor.u32 %v5291, %v5292
    %v5294 = vsub.s32 4294967266, %v5289
    %v5295 = vadd.s32 %v5294, 127
    %v5296 = vshll.u32 %v5295, 23
    %v5297 = vor.u32 4788187, %v5296
    %v5298 = vand.u32 2147483647, %v5297
    %v5300 = vcvt.s32.f32 %v5293
    %v5301 = vmul.f32 %v5300, %v5298
    %v5302 = vxor.u32 %v5301, 2147483648
    %v5303 = vsel %vm5182, %v5302, %v5301
    %v5304 = vsub.s32 4, %v5280
    %v5305 = vsel %vm5182, %v5304, %v5280
    %v5306 = vsel %vm5181, %v1117, %v5303
    %v5307 = vsel %vm5181, 0, %v5305
    %v5308 = vmul.f32 %v5306, %v5306
    %v5309 = vmul.f32 %v5308, -0.001358992
    %v5310 = vadd.f32 %v5309, 0.041655596
    %v5311 = vmul.f32 %v5308, %v5310
    %v5312 = vadd.f32 %v5311, -0.4999988
    %v5313 = vmul.f32 %v5308, %v5312
    %v5314 = vadd.f32 1.0, %v5313
    %v5315 = vmul.f32 %v5306, %v5306
    %v5316 = vmul.f32 %v5315, -0.00019511016
    %v5317 = vadd.f32 %v5316, 0.008332121
    %v5318 = vmul.f32 %v5315, %v5317
    %v5319 = vadd.f32 %v5318, -0.16666654
    %v5320 = vmul.f32 %v5315, %v5319
    %v5321 = vadd.f32 %v5320, 1.0
    %v5322 = vmul.f32 %v5321, %v5306
    %vm5323 = vweird.f32 %v1117
    %v5324 = vadd.s32 %v5307, 3
    %v5325 = vand.u32 %v5324, 3
    %vm5326 = vcmp.lt.s32.totalorder %v5325, 2
    %vm5327 = vcmp.eq.s32.totalorder %v5325, 0
    %v5328 = vxor.u32 %v5322, 2147483648
    %v5329 = vsel %vm5327, %v5314, %v5328
    %vm5330 = vcmp.eq.s32.totalorder %v5325, 2
    %v5331 = vxor.u32 %v5314, 2147483648
    %v5332 = vsel %vm5330, %v5331, %v5322
    %v5333 = vsel %vm5326, %v5329, %v5332
    %v5334 = vsel %vm5323, nan, %v5333
    %v5335 = vand.u32 2147483647, %v1120
    %vm5336 = vcmp.le.f32.partialorder %v5335, 0.7853982
    %vm5337 = vcmp.lt.s32.totalorder %v1120, 0
    %v5338 = vand.u32 %v1120, 2139095040
    %v5339 = vshrl.u32 %v5338, 23
    %v5340 = vsub.s32 %v5339, 127
    %v5341 = vand.u32 2147483647, %v1120
    %v5342 = vand.u32 %v5341, 8388607
    %v5343 = vor.u32 %v5342, 8388608
    %v5344 = vsub.s32 0, %v5343
    %v5345 = vadd.s32 %v5340, 1
    %vm5346 = vcmp.gt.s32.totalorder %v5345, 0
    %v5347 = vsel %vm5346, %v5345, 0
    %v5348 = vshrl.u32 %v5347, 5
    %v5349 = vand.u32 %v5347, 31
    %v5350 = vsub.s32 32, %v5349
    %v5351 = vshrl.u32 683565275, %v5350
    %v5352 = vshll.u32 683565275, %v5349
    %v5353 = vshrl.u32 2475754826, %v5350
    %v5354 = vor.u32 %v5352, %v5353
    %v5355 = vshll.u32 2475754826, %v5349
    %v5356 = vshrl.u32 2131351028, %v5350
    %v5357 = vor.u32 %v5355, %v5356
    %v5358 = vshll.u32 2131351028, %v5349
    %v5359 = vshrl.u32 2102212464, %v5350
    %v5360 = vor.u32 %v5358, %v5359
    %v5361 = vshll.u32 2102212464, %v5349
    %v5362 = vshrl.u32 920167782, %v5350
    %v5363 = vor.u32 %v5361, %v5362
    %v5364 = vshll.u32 920167782, %v5349
    %v5365 = vshrl.u32 1326507024, %v5350
    %v5366 = vor.u32 %v5364, %v5365
    %vm5367 = vcmp.lt.s32.totalorder %v5348, 1
    %vm5368 = vcmp.lt.s32.totalorder %v5348, 2
    %vm5369 = vcmp.lt.s32.totalorder %v5348, 3
    %vm5370 = vcmp.lt.s32.totalorder %v5348, 4
    %v5371 = vsel %vm5367, %v5351, %v5354
    %v5372 = vsel %vm5370, %v5360, 2102212464
    %v5373 = vsel %vm5369, %v5357, %v5372
    %v5374 = vsel %vm5368, %v5371, %v5373
    %v5375 = vsel %vm5367, %v5354, %v5357
    %v5376 = vsel %vm5370, %v5363, 920167782
    %v5377 = vsel %vm5369, %v5360, %v5376
    %v5378 = vsel %vm5368, %v5375, %v5377
    %v5379 = vsel %vm5367, %v5357, %v5360
    %v5380 = vsel %vm5370, %v5366, 1326507024
    %v5381 = vsel %vm5369, %v5363, %v5380
    %v5382 = vsel %vm5368, %v5379, %v5381
    %v5383 = vshll.u32 %v5343, 8
    %v5384 = vand.u32 %v5383, 65535
    %v5385 = vshrl.u32 %v5383, 16
    %v5386 = vand.u32 %v5382, 65535
    %v5387 = vshrl.u32 %v5382, 16
    %v5388 = vmul.u32 %v5384, %v5386
    %v5389 = vmul.u32 %v5384, %v5387
    %v5390 = vmul.u32 %v5385, %v5386
    %v5391 = vmul.u32 %v5385, %v5387
    %v5392 = vshll.u32 %v5389, 16
    %v5393 = vshrl.u32 %v5389, 16
    %v5394 = vshll.u32 %v5390, 16
    %v5395 = vshrl.u32 %v5390, 16
    %vm5396 = vc.u32 %v5388, %v5392
    %v5397 = vsel %vm5396, 1, 0
    %v5398 = vadd.s32 %v5388, %v5392
    %v5399 = vadd.s32 %v5391, %v5397
    %vm5400 = vc.u32 %v5398, %v5394
    %v5401 = vsel %vm5400, 1, 0
    %v5402 = vadd.s32 %v5398, %v5394
    %v5403 = vadd.s32 %v5399, %v5401
    %v5404 = vadd.s32 %v5403, %v5393
    %v5405 = vadd.s32 %v5404, %v5395
    %v5406 = vand.u32 %v5383, 65535
    %v5407 = vshrl.u32 %v5383, 16
    %v5408 = vand.u32 %v5378, 65535
    %v5409 = vshrl.u32 %v5378, 16
    %v5410 = vmul.u32 %v5406, %v5408
    %v5411 = vmul.u32 %v5406, %v5409
    %v5412 = vmul.u32 %v5407, %v5408
    %v5413 = vmul.u32 %v5407, %v5409
    %v5414 = vshll.u32 %v5411, 16
    %v5415 = vshrl.u32 %v5411, 16
    %v5416 = vshll.u32 %v5412, 16
    %v5417 = vshrl.u32 %v5412, 16
    %vm5418 = vc.u32 %v5410, %v5414
    %v5419 = vsel %vm5418, 1, 0
    %v5420 = vadd.s32 %v5410, %v5414
    %v5421 = vadd.s32 %v5413, %v5419
    %vm5422 = vc.u32 %v5420, %v5416
    %v5423 = vsel %vm5422, 1, 0
    %v5424 = vadd.s32 %v5420, %v5416
    %v5425 = vadd.s32 %v5421, %v5423
    %v5426 = vadd.s32 %v5425, %v5415
    %v5427 = vadd.s32 %v5426, %v5417
    %v5428 = vmul.u32 %v5383, %v5374
    %v5429 = vadd.s32 %v5405, %v5424
    %vm5430 = vc.u32 %v5405, %v5424
    %v5431 = vadd.s32 %v5427, 1
    %v5432 = vsel %vm5430, %v5431, %v5427
    %v5433 = vadd.s32 %v5428, %v5432
    %v5434 = vadd.s32 %v5433, 536870912
    %v5435 = vshrl.u32 %v5434, 30
    %v5436 = vshll.u32 %v5435, 30
    %v5437 = vsub.s32 %v5433, %v5436
    %vm5438 = vcmp.lt.s32.totalorder %v5437, 0
    %v5439 = vsub.s32 0, %v5437
    %v5440 = vsel %vm5438, %v5439, %v5437
    %v5441 = vclz %v5440
    %v5442 = vsub.s32 %v5441, 2
    %vm5443 = vcmp.gt.s32.totalorder 0, %v5442
    %v5444 = vsel %vm5443, 0, %v5442
    %v5445 = vsub.s32 32, %v5444
    %v5446 = vshll.u32 %v5437, %v5444
    %v5447 = vshrl.u32 %v5429, %v5445
    %v5448 = vor.u32 %v5446, %v5447
    %v5449 = vsub.s32 4294967266, %v5444
    %v5450 = vadd.s32 %v5449, 127
    %v5451 = vshll.u32 %v5450, 23
    %v5452 = vor.u32 4788187, %v5451
    %v5453 = vand.u32 2147483647, %v5452
    %v5455 = vcvt.s32.f32 %v5448
    %v5456 = vmul.f32 %v5455, %v5453
    %v5457 = vxor.u32 %v5456, 2147483648
    %v5458 = vsel %vm5337, %v5457, %v5456
    %v5459 = vsub.s32 4, %v5435
    %v5460 = vsel %vm5337, %v5459, %v5435
    %v5461 = vsel %vm5336, %v1120, %v5458
    %v5462 = vsel %vm5336, 0, %v5460
    %v5463 = vmul.f32 %v5461, %v5461
    %v5464 = vmul.f32 %v5463, -0.001358992
    %v5465 = vadd.f32 %v5464, 0.041655596
    %v5466 = vmul.f32 %v5463, %v5465
    %v5467 = vadd.f32 %v5466, -0.4999988
    %v5468 = vmul.f32 %v5463, %v5467
    %v5469 = vadd.f32 1.0, %v5468
    %v5470 = vmul.f32 %v5461, %v5461
    %v5471 = vmul.f32 %v5470, -0.00019511016
    %v5472 = vadd.f32 %v5471, 0.008332121
    %v5473 = vmul.f32 %v5470, %v5472
    %v5474 = vadd.f32 %v5473, -0.16666654
    %v5475 = vmul.f32 %v5470, %v5474
    %v5476 = vadd.f32 %v5475, 1.0
    %v5477 = vmul.f32 %v5476, %v5461
    %vm5478 = vweird.f32 %v1120
    %v5479 = vadd.s32 %v5462, 3
    %v5480 = vand.u32 %v5479, 3
    %vm5481 = vcmp.lt.s32.totalorder %v5480, 2
    %vm5482 = vcmp.eq.s32.totalorder %v5480, 0
    %v5483 = vxor.u32 %v5477, 2147483648
    %v5484 = vsel %vm5482, %v5469, %v5483
    %vm5485 = vcmp.eq.s32.totalorder %v5480, 2
    %v5486 = vxor.u32 %v5469, 2147483648
    %v5487 = vsel %vm5485, %v5486, %v5477
    %v5488 = vsel %vm5481, %v5484, %v5487
    %v5489 = vsel %vm5478, nan, %v5488
    %v5490 = vand.u32 2147483647, %v1123
    %vm5491 = vcmp.le.f32.partialorder %v5490, 0.7853982
    %vm5492 = vcmp.lt.s32.totalorder %v1123, 0
    %v5493 = vand.u32 %v1123, 2139095040
    %v5494 = vshrl.u32 %v5493, 23
    %v5495 = vsub.s32 %v5494, 127
    %v5496 = vand.u32 2147483647, %v1123
    %v5497 = vand.u32 %v5496, 8388607
    %v5498 = vor.u32 %v5497, 8388608
    %v5499 = vsub.s32 0, %v5498
    %v5500 = vadd.s32 %v5495, 1
    %vm5501 = vcmp.gt.s32.totalorder %v5500, 0
    %v5502 = vsel %vm5501, %v5500, 0
    %v5503 = vshrl.u32 %v5502, 5
    %v5504 = vand.u32 %v5502, 31
    %v5505 = vsub.s32 32, %v5504
    %v5506 = vshrl.u32 683565275, %v5505
    %v5507 = vshll.u32 683565275, %v5504
    %v5508 = vshrl.u32 2475754826, %v5505
    %v5509 = vor.u32 %v5507, %v5508
    %v5510 = vshll.u32 2475754826, %v5504
    %v5511 = vshrl.u32 2131351028, %v5505
    %v5512 = vor.u32 %v5510, %v5511
    %v5513 = vshll.u32 2131351028, %v5504
    %v5514 = vshrl.u32 2102212464, %v5505
    %v5515 = vor.u32 %v5513, %v5514
    %v5516 = vshll.u32 2102212464, %v5504
    %v5517 = vshrl.u32 920167782, %v5505
    %v5518 = vor.u32 %v5516, %v5517
    %v5519 = vshll.u32 920167782, %v5504
    %v5520 = vshrl.u32 1326507024, %v5505
    %v5521 = vor.u32 %v5519, %v5520
    %vm5522 = vcmp.lt.s32.totalorder %v5503, 1
    %vm5523 = vcmp.lt.s32.totalorder %v5503, 2
    %vm5524 = vcmp.lt.s32.totalorder %v5503, 3
    %vm5525 = vcmp.lt.s32.totalorder %v5503, 4
    %v5526 = vsel %vm5522, %v5506, %v5509
    %v5527 = vsel %vm5525, %v5515, 2102212464
    %v5528 = vsel %vm5524, %v5512, %v5527
    %v5529 = vsel %vm5523, %v5526, %v5528
    %v5530 = vsel %vm5522, %v5509, %v5512
    %v5531 = vsel %vm5525, %v5518, 920167782
    %v5532 = vsel %vm5524, %v5515, %v5531
    %v5533 = vsel %vm5523, %v5530, %v5532
    %v5534 = vsel %vm5522, %v5512, %v5515
    %v5535 = vsel %vm5525, %v5521, 1326507024
    %v5536 = vsel %vm5524, %v5518, %v5535
    %v5537 = vsel %vm5523, %v5534, %v5536
    %v5538 = vshll.u32 %v5498, 8
    %v5539 = vand.u32 %v5538, 65535
    %v5540 = vshrl.u32 %v5538, 16
    %v5541 = vand.u32 %v5537, 65535
    %v5542 = vshrl.u32 %v5537, 16
    %v5543 = vmul.u32 %v5539, %v5541
    %v5544 = vmul.u32 %v5539, %v5542
    %v5545 = vmul.u32 %v5540, %v5541
    %v5546 = vmul.u32 %v5540, %v5542
    %v5547 = vshll.u32 %v5544, 16
    %v5548 = vshrl.u32 %v5544, 16
    %v5549 = vshll.u32 %v5545, 16
    %v5550 = vshrl.u32 %v5545, 16
    %vm5551 = vc.u32 %v5543, %v5547
    %v5552 = vsel %vm5551, 1, 0
    %v5553 = vadd.s32 %v5543, %v5547
    %v5554 = vadd.s32 %v5546, %v5552
    %vm5555 = vc.u32 %v5553, %v5549
    %v5556 = vsel %vm5555, 1, 0
    %v5557 = vadd.s32 %v5553, %v5549
    %v5558 = vadd.s32 %v5554, %v5556
    %v5559 = vadd.s32 %v5558, %v5548
    %v5560 = vadd.s32 %v5559, %v5550
    %v5561 = vand.u32 %v5538, 65535
    %v5562 = vshrl.u32 %v5538, 16
    %v5563 = vand.u32 %v5533, 65535
    %v5564 = vshrl.u32 %v5533, 16
    %v5565 = vmul.u32 %v5561, %v5563
    %v5566 = vmul.u32 %v5561, %v5564
    %v5567 = vmul.u32 %v5562, %v5563
    %v5568 = vmul.u32 %v5562, %v5564
    %v5569 = vshll.u32 %v5566, 16
    %v5570 = vshrl.u32 %v5566, 16
    %v5571 = vshll.u32 %v5567, 16
    %v5572 = vshrl.u32 %v5567, 16
    %vm5573 = vc.u32 %v5565, %v5569
    %v5574 = vsel %vm5573, 1, 0
    %v5575 = vadd.s32 %v5565, %v5569
    %v5576 = vadd.s32 %v5568, %v5574
    %vm5577 = vc.u32 %v5575, %v5571
    %v5578 = vsel %vm5577, 1, 0
    %v5579 = vadd.s32 %v5575, %v5571
    %v5580 = vadd.s32 %v5576, %v5578
    %v5581 = vadd.s32 %v5580, %v5570
    %v5582 = vadd.s32 %v5581, %v5572
    %v5583 = vmul.u32 %v5538, %v5529
    %v5584 = vadd.s32 %v5560, %v5579
    %vm5585 = vc.u32 %v5560, %v5579
    %v5586 = vadd.s32 %v5582, 1
    %v5587 = vsel %vm5585, %v5586, %v5582
    %v5588 = vadd.s32 %v5583, %v5587
    %v5589 = vadd.s32 %v5588, 536870912
    %v5590 = vshrl.u32 %v5589, 30
    %v5591 = vshll.u32 %v5590, 30
    %v5592 = vsub.s32 %v5588, %v5591
    %vm5593 = vcmp.lt.s32.totalorder %v5592, 0
    %v5594 = vsub.s32 0, %v5592
    %v5595 = vsel %vm5593, %v5594, %v5592
    %v5596 = vclz %v5595
    %v5597 = vsub.s32 %v5596, 2
    %vm5598 = vcmp.gt.s32.totalorder 0, %v5597
    %v5599 = vsel %vm5598, 0, %v5597
    %v5600 = vsub.s32 32, %v5599
    %v5601 = vshll.u32 %v5592, %v5599
    %v5602 = vshrl.u32 %v5584, %v5600
    %v5603 = vor.u32 %v5601, %v5602
    %v5604 = vsub.s32 4294967266, %v5599
    %v5605 = vadd.s32 %v5604, 127
    %v5606 = vshll.u32 %v5605, 23
    %v5607 = vor.u32 4788187, %v5606
    %v5608 = vand.u32 2147483647, %v5607
    %v5610 = vcvt.s32.f32 %v5603
    %v5611 = vmul.f32 %v5610, %v5608
    %v5612 = vxor.u32 %v5611, 2147483648
    %v5613 = vsel %vm5492, %v5612, %v5611
    %v5614 = vsub.s32 4, %v5590
    %v5615 = vsel %vm5492, %v5614, %v5590
    %v5616 = vsel %vm5491, %v1123, %v5613
    %v5617 = vsel %vm5491, 0, %v5615
    %v5618 = vmul.f32 %v5616, %v5616
    %v5619 = vmul.f32 %v5618, -0.001358992
    %v5620 = vadd.f32 %v5619, 0.041655596
    %v5621 = vmul.f32 %v5618, %v5620
    %v5622 = vadd.f32 %v5621, -0.4999988
    %v5623 = vmul.f32 %v5618, %v5622
    %v5624 = vadd.f32 1.0, %v5623
    %v5625 = vmul.f32 %v5616, %v5616
    %v5626 = vmul.f32 %v5625, -0.00019511016
    %v5627 = vadd.f32 %v5626, 0.008332121
    %v5628 = vmul.f32 %v5625, %v5627
    %v5629 = vadd.f32 %v5628, -0.16666654
    %v5630 = vmul.f32 %v5625, %v5629
    %v5631 = vadd.f32 %v5630, 1.0
    %v5632 = vmul.f32 %v5631, %v5616
    %vm5633 = vweird.f32 %v1123
    %v5634 = vadd.s32 %v5617, 3
    %v5635 = vand.u32 %v5634, 3
    %vm5636 = vcmp.lt.s32.totalorder %v5635, 2
    %vm5637 = vcmp.eq.s32.totalorder %v5635, 0
    %v5638 = vxor.u32 %v5632, 2147483648
    %v5639 = vsel %vm5637, %v5624, %v5638
    %vm5640 = vcmp.eq.s32.totalorder %v5635, 2
    %v5641 = vxor.u32 %v5624, 2147483648
    %v5642 = vsel %vm5640, %v5641, %v5632
    %v5643 = vsel %vm5636, %v5639, %v5642
    %v5644 = vsel %vm5633, nan, %v5643
    %v5645 = vand.u32 2147483647, %v1126
    %vm5646 = vcmp.le.f32.partialorder %v5645, 0.7853982
    %vm5647 = vcmp.lt.s32.totalorder %v1126, 0
    %v5648 = vand.u32 %v1126, 2139095040
    %v5649 = vshrl.u32 %v5648, 23
    %v5650 = vsub.s32 %v5649, 127
    %v5651 = vand.u32 2147483647, %v1126
    %v5652 = vand.u32 %v5651, 8388607
    %v5653 = vor.u32 %v5652, 8388608
    %v5654 = vsub.s32 0, %v5653
    %v5655 = vadd.s32 %v5650, 1
    %vm5656 = vcmp.gt.s32.totalorder %v5655, 0
    %v5657 = vsel %vm5656, %v5655, 0
    %v5658 = vshrl.u32 %v5657, 5
    %v5659 = vand.u32 %v5657, 31
    %v5660 = vsub.s32 32, %v5659
    %v5661 = vshrl.u32 683565275, %v5660
    %v5662 = vshll.u32 683565275, %v5659
    %v5663 = vshrl.u32 2475754826, %v5660
    %v5664 = vor.u32 %v5662, %v5663
    %v5665 = vshll.u32 2475754826, %v5659
    %v5666 = vshrl.u32 2131351028, %v5660
    %v5667 = vor.u32 %v5665, %v5666
    %v5668 = vshll.u32 2131351028, %v5659
    %v5669 = vshrl.u32 2102212464, %v5660
    %v5670 = vor.u32 %v5668, %v5669
    %v5671 = vshll.u32 2102212464, %v5659
    %v5672 = vshrl.u32 920167782, %v5660
    %v5673 = vor.u32 %v5671, %v5672
    %v5674 = vshll.u32 920167782, %v5659
    %v5675 = vshrl.u32 1326507024, %v5660
    %v5676 = vor.u32 %v5674, %v5675
    %vm5677 = vcmp.lt.s32.totalorder %v5658, 1
    %vm5678 = vcmp.lt.s32.totalorder %v5658, 2
    %vm5679 = vcmp.lt.s32.totalorder %v5658, 3
    %vm5680 = vcmp.lt.s32.totalorder %v5658, 4
    %v5681 = vsel %vm5677, %v5661, %v5664
    %v5682 = vsel %vm5680, %v5670, 2102212464
    %v5683 = vsel %vm5679, %v5667, %v5682
    %v5684 = vsel %vm5678, %v5681, %v5683
    %v5685 = vsel %vm5677, %v5664, %v5667
    %v5686 = vsel %vm5680, %v5673, 920167782
    %v5687 = vsel %vm5679, %v5670, %v5686
    %v5688 = vsel %vm5678, %v5685, %v5687
    %v5689 = vsel %vm5677, %v5667, %v5670
    %v5690 = vsel %vm5680, %v5676, 1326507024
    %v5691 = vsel %vm5679, %v5673, %v5690
    %v5692 = vsel %vm5678, %v5689, %v5691
    %v5693 = vshll.u32 %v5653, 8
    %v5694 = vand.u32 %v5693, 65535
    %v5695 = vshrl.u32 %v5693, 16
    %v5696 = vand.u32 %v5692, 65535
    %v5697 = vshrl.u32 %v5692, 16
    %v5698 = vmul.u32 %v5694, %v5696
    %v5699 = vmul.u32 %v5694, %v5697
    %v5700 = vmul.u32 %v5695, %v5696
    %v5701 = vmul.u32 %v5695, %v5697
    %v5702 = vshll.u32 %v5699, 16
    %v5703 = vshrl.u32 %v5699, 16
    %v5704 = vshll.u32 %v5700, 16
    %v5705 = vshrl.u32 %v5700, 16
    %vm5706 = vc.u32 %v5698, %v5702
    %v5707 = vsel %vm5706, 1, 0
    %v5708 = vadd.s32 %v5698, %v5702
    %v5709 = vadd.s32 %v5701, %v5707
    %vm5710 = vc.u32 %v5708, %v5704
    %v5711 = vsel %vm5710, 1, 0
    %v5712 = vadd.s32 %v5708, %v5704
    %v5713 = vadd.s32 %v5709, %v5711
    %v5714 = vadd.s32 %v5713, %v5703
    %v5715 = vadd.s32 %v5714, %v5705
    %v5716 = vand.u32 %v5693, 65535
    %v5717 = vshrl.u32 %v5693, 16
    %v5718 = vand.u32 %v5688, 65535
    %v5719 = vshrl.u32 %v5688, 16
    %v5720 = vmul.u32 %v5716, %v5718
    %v5721 = vmul.u32 %v5716, %v5719
    %v5722 = vmul.u32 %v5717, %v5718
    %v5723 = vmul.u32 %v5717, %v5719
    %v5724 = vshll.u32 %v5721, 16
    %v5725 = vshrl.u32 %v5721, 16
    %v5726 = vshll.u32 %v5722, 16
    %v5727 = vshrl.u32 %v5722, 16
    %vm5728 = vc.u32 %v5720, %v5724
    %v5729 = vsel %vm5728, 1, 0
    %v5730 = vadd.s32 %v5720, %v5724
    %v5731 = vadd.s32 %v5723, %v5729
    %vm5732 = vc.u32 %v5730, %v5726
    %v5733 = vsel %vm5732, 1, 0
    %v5734 = vadd.s32 %v5730, %v5726
    %v5735 = vadd.s32 %v5731, %v5733
    %v5736 = vadd.s32 %v5735, %v5725
    %v5737 = vadd.s32 %v5736, %v5727
    %v5738 = vmul.u32 %v5693, %v5684
    %v5739 = vadd.s32 %v5715, %v5734
    %vm5740 = vc.u32 %v5715, %v5734
    %v5741 = vadd.s32 %v5737, 1
    %v5742 = vsel %vm5740, %v5741, %v5737
    %v5743 = vadd.s32 %v5738, %v5742
    %v5744 = vadd.s32 %v5743, 536870912
    %v5745 = vshrl.u32 %v5744, 30
    %v5746 = vshll.u32 %v5745, 30
    %v5747 = vsub.s32 %v5743, %v5746
    %vm5748 = vcmp.lt.s32.totalorder %v5747, 0
    %v5749 = vsub.s32 0, %v5747
    %v5750 = vsel %vm5748, %v5749, %v5747
    %v5751 = vclz %v5750
    %v5752 = vsub.s32 %v5751, 2
    %vm5753 = vcmp.gt.s32.totalorder 0, %v5752
    %v5754 = vsel %vm5753, 0, %v5752
    %v5755 = vsub.s32 32, %v5754
    %v5756 = vshll.u32 %v5747, %v5754
    %v5757 = vshrl.u32 %v5739, %v5755
    %v5758 = vor.u32 %v5756, %v5757
    %v5759 = vsub.s32 4294967266, %v5754
    %v5760 = vadd.s32 %v5759, 127
    %v5761 = vshll.u32 %v5760, 23
    %v5762 = vor.u32 4788187, %v5761
    %v5763 = vand.u32 2147483647, %v5762
    %v5765 = vcvt.s32.f32 %v5758
    %v5766 = vmul.f32 %v5765, %v5763
    %v5767 = vxor.u32 %v5766, 2147483648
    %v5768 = vsel %vm5647, %v5767, %v5766
    %v5769 = vsub.s32 4, %v5745
    %v5770 = vsel %vm5647, %v5769, %v5745
    %v5771 = vsel %vm5646, %v1126, %v5768
    %v5772 = vsel %vm5646, 0, %v5770
    %v5773 = vmul.f32 %v5771, %v5771
    %v5774 = vmul.f32 %v5773, -0.001358992
    %v5775 = vadd.f32 %v5774, 0.041655596
    %v5776 = vmul.f32 %v5773, %v5775
    %v5777 = vadd.f32 %v5776, -0.4999988
    %v5778 = vmul.f32 %v5773, %v5777
    %v5779 = vadd.f32 1.0, %v5778
    %v5780 = vmul.f32 %v5771, %v5771
    %v5781 = vmul.f32 %v5780, -0.00019511016
    %v5782 = vadd.f32 %v5781, 0.008332121
    %v5783 = vmul.f32 %v5780, %v5782
    %v5784 = vadd.f32 %v5783, -0.16666654
    %v5785 = vmul.f32 %v5780, %v5784
    %v5786 = vadd.f32 %v5785, 1.0
    %v5787 = vmul.f32 %v5786, %v5771
    %vm5788 = vweird.f32 %v1126
    %v5789 = vadd.s32 %v5772, 3
    %v5790 = vand.u32 %v5789, 3
    %vm5791 = vcmp.lt.s32.totalorder %v5790, 2
    %vm5792 = vcmp.eq.s32.totalorder %v5790, 0
    %v5793 = vxor.u32 %v5787, 2147483648
    %v5794 = vsel %vm5792, %v5779, %v5793
    %vm5795 = vcmp.eq.s32.totalorder %v5790, 2
    %v5796 = vxor.u32 %v5779, 2147483648
    %v5797 = vsel %vm5795, %v5796, %v5787
    %v5798 = vsel %vm5791, %v5794, %v5797
    %v5799 = vsel %vm5788, nan, %v5798
    %v5800 = vand.u32 2147483647, %v1129
    %vm5801 = vcmp.le.f32.partialorder %v5800, 0.7853982
    %vm5802 = vcmp.lt.s32.totalorder %v1129, 0
    %v5803 = vand.u32 %v1129, 2139095040
    %v5804 = vshrl.u32 %v5803, 23
    %v5805 = vsub.s32 %v5804, 127
    %v5806 = vand.u32 2147483647, %v1129
    %v5807 = vand.u32 %v5806, 8388607
    %v5808 = vor.u32 %v5807, 8388608
    %v5809 = vsub.s32 0, %v5808
    %v5810 = vadd.s32 %v5805, 1
    %vm5811 = vcmp.gt.s32.totalorder %v5810, 0
    %v5812 = vsel %vm5811, %v5810, 0
    %v5813 = vshrl.u32 %v5812, 5
    %v5814 = vand.u32 %v5812, 31
    %v5815 = vsub.s32 32, %v5814
    %v5816 = vshrl.u32 683565275, %v5815
    %v5817 = vshll.u32 683565275, %v5814
    %v5818 = vshrl.u32 2475754826, %v5815
    %v5819 = vor.u32 %v5817, %v5818
    %v5820 = vshll.u32 2475754826, %v5814
    %v5821 = vshrl.u32 2131351028, %v5815
    %v5822 = vor.u32 %v5820, %v5821
    %v5823 = vshll.u32 2131351028, %v5814
    %v5824 = vshrl.u32 2102212464, %v5815
    %v5825 = vor.u32 %v5823, %v5824
    %v5826 = vshll.u32 2102212464, %v5814
    %v5827 = vshrl.u32 920167782, %v5815
    %v5828 = vor.u32 %v5826, %v5827
    %v5829 = vshll.u32 920167782, %v5814
    %v5830 = vshrl.u32 1326507024, %v5815
    %v5831 = vor.u32 %v5829, %v5830
    %vm5832 = vcmp.lt.s32.totalorder %v5813, 1
    %vm5833 = vcmp.lt.s32.totalorder %v5813, 2
    %vm5834 = vcmp.lt.s32.totalorder %v5813, 3
    %vm5835 = vcmp.lt.s32.totalorder %v5813, 4
    %v5836 = vsel %vm5832, %v5816, %v5819
    %v5837 = vsel %vm5835, %v5825, 2102212464
    %v5838 = vsel %vm5834, %v5822, %v5837
    %v5839 = vsel %vm5833, %v5836, %v5838
    %v5840 = vsel %vm5832, %v5819, %v5822
    %v5841 = vsel %vm5835, %v5828, 920167782
    %v5842 = vsel %vm5834, %v5825, %v5841
    %v5843 = vsel %vm5833, %v5840, %v5842
    %v5844 = vsel %vm5832, %v5822, %v5825
    %v5845 = vsel %vm5835, %v5831, 1326507024
    %v5846 = vsel %vm5834, %v5828, %v5845
    %v5847 = vsel %vm5833, %v5844, %v5846
    %v5848 = vshll.u32 %v5808, 8
    %v5849 = vand.u32 %v5848, 65535
    %v5850 = vshrl.u32 %v5848, 16
    %v5851 = vand.u32 %v5847, 65535
    %v5852 = vshrl.u32 %v5847, 16
    %v5853 = vmul.u32 %v5849, %v5851
    %v5854 = vmul.u32 %v5849, %v5852
    %v5855 = vmul.u32 %v5850, %v5851
    %v5856 = vmul.u32 %v5850, %v5852
    %v5857 = vshll.u32 %v5854, 16
    %v5858 = vshrl.u32 %v5854, 16
    %v5859 = vshll.u32 %v5855, 16
    %v5860 = vshrl.u32 %v5855, 16
    %vm5861 = vc.u32 %v5853, %v5857
    %v5862 = vsel %vm5861, 1, 0
    %v5863 = vadd.s32 %v5853, %v5857
    %v5864 = vadd.s32 %v5856, %v5862
    %vm5865 = vc.u32 %v5863, %v5859
    %v5866 = vsel %vm5865, 1, 0
    %v5867 = vadd.s32 %v5863, %v5859
    %v5868 = vadd.s32 %v5864, %v5866
    %v5869 = vadd.s32 %v5868, %v5858
    %v5870 = vadd.s32 %v5869, %v5860
    %v5871 = vand.u32 %v5848, 65535
    %v5872 = vshrl.u32 %v5848, 16
    %v5873 = vand.u32 %v5843, 65535
    %v5874 = vshrl.u32 %v5843, 16
    %v5875 = vmul.u32 %v5871, %v5873
    %v5876 = vmul.u32 %v5871, %v5874
    %v5877 = vmul.u32 %v5872, %v5873
    %v5878 = vmul.u32 %v5872, %v5874
    %v5879 = vshll.u32 %v5876, 16
    %v5880 = vshrl.u32 %v5876, 16
    %v5881 = vshll.u32 %v5877, 16
    %v5882 = vshrl.u32 %v5877, 16
    %vm5883 = vc.u32 %v5875, %v5879
    %v5884 = vsel %vm5883, 1, 0
    %v5885 = vadd.s32 %v5875, %v5879
    %v5886 = vadd.s32 %v5878, %v5884
    %vm5887 = vc.u32 %v5885, %v5881
    %v5888 = vsel %vm5887, 1, 0
    %v5889 = vadd.s32 %v5885, %v5881
    %v5890 = vadd.s32 %v5886, %v5888
    %v5891 = vadd.s32 %v5890, %v5880
    %v5892 = vadd.s32 %v5891, %v5882
    %v5893 = vmul.u32 %v5848, %v5839
    %v5894 = vadd.s32 %v5870, %v5889
    %vm5895 = vc.u32 %v5870, %v5889
    %v5896 = vadd.s32 %v5892, 1
    %v5897 = vsel %vm5895, %v5896, %v5892
    %v5898 = vadd.s32 %v5893, %v5897
    %v5899 = vadd.s32 %v5898, 536870912
    %v5900 = vshrl.u32 %v5899, 30
    %v5901 = vshll.u32 %v5900, 30
    %v5902 = vsub.s32 %v5898, %v5901
    %vm5903 = vcmp.lt.s32.totalorder %v5902, 0
    %v5904 = vsub.s32 0, %v5902
    %v5905 = vsel %vm5903, %v5904, %v5902
    %v5906 = vclz %v5905
    %v5907 = vsub.s32 %v5906, 2
    %vm5908 = vcmp.gt.s32.totalorder 0, %v5907
    %v5909 = vsel %vm5908, 0, %v5907
    %v5910 = vsub.s32 32, %v5909
    %v5911 = vshll.u32 %v5902, %v5909
    %v5912 = vshrl.u32 %v5894, %v5910
    %v5913 = vor.u32 %v5911, %v5912
    %v5914 = vsub.s32 4294967266, %v5909
    %v5915 = vadd.s32 %v5914, 127
    %v5916 = vshll.u32 %v5915, 23
    %v5917 = vor.u32 4788187, %v5916
    %v5918 = vand.u32 2147483647, %v5917
    %v5920 = vcvt.s32.f32 %v5913
    %v5921 = vmul.f32 %v5920, %v5918
    %v5922 = vxor.u32 %v5921, 2147483648
    %v5923 = vsel %vm5802, %v5922, %v5921
    %v5924 = vsub.s32 4, %v5900
    %v5925 = vsel %vm5802, %v5924, %v5900
    %v5926 = vsel %vm5801, %v1129, %v5923
    %v5927 = vsel %vm5801, 0, %v5925
    %v5928 = vmul.f32 %v5926, %v5926
    %v5929 = vmul.f32 %v5928, -0.001358992
    %v5930 = vadd.f32 %v5929, 0.041655596
    %v5931 = vmul.f32 %v5928, %v5930
    %v5932 = vadd.f32 %v5931, -0.4999988
    %v5933 = vmul.f32 %v5928, %v5932
    %v5934 = vadd.f32 1.0, %v5933
    %v5935 = vmul.f32 %v5926, %v5926
    %v5936 = vmul.f32 %v5935, -0.00019511016
    %v5937 = vadd.f32 %v5936, 0.008332121
    %v5938 = vmul.f32 %v5935, %v5937
    %v5939 = vadd.f32 %v5938, -0.16666654
    %v5940 = vmul.f32 %v5935, %v5939
    %v5941 = vadd.f32 %v5940, 1.0
    %v5942 = vmul.f32 %v5941, %v5926
    %vm5943 = vweird.f32 %v1129
    %v5944 = vadd.s32 %v5927, 3
    %v5945 = vand.u32 %v5944, 3
    %vm5946 = vcmp.lt.s32.totalorder %v5945, 2
    %vm5947 = vcmp.eq.s32.totalorder %v5945, 0
    %v5948 = vxor.u32 %v5942, 2147483648
    %v5949 = vsel %vm5947, %v5934, %v5948
    %vm5950 = vcmp.eq.s32.totalorder %v5945, 2
    %v5951 = vxor.u32 %v5934, 2147483648
    %v5952 = vsel %vm5950, %v5951, %v5942
    %v5953 = vsel %vm5946, %v5949, %v5952
    %v5954 = vsel %vm5943, nan, %v5953
    %v5955 = vand.u32 2147483647, %v1132
    %vm5956 = vcmp.le.f32.partialorder %v5955, 0.7853982
    %vm5957 = vcmp.lt.s32.totalorder %v1132, 0
    %v5958 = vand.u32 %v1132, 2139095040
    %v5959 = vshrl.u32 %v5958, 23
    %v5960 = vsub.s32 %v5959, 127
    %v5961 = vand.u32 2147483647, %v1132
    %v5962 = vand.u32 %v5961, 8388607
    %v5963 = vor.u32 %v5962, 8388608
    %v5964 = vsub.s32 0, %v5963
    %v5965 = vadd.s32 %v5960, 1
    %vm5966 = vcmp.gt.s32.totalorder %v5965, 0
    %v5967 = vsel %vm5966, %v5965, 0
    %v5968 = vshrl.u32 %v5967, 5
    %v5969 = vand.u32 %v5967, 31
    %v5970 = vsub.s32 32, %v5969
    %v5971 = vshrl.u32 683565275, %v5970
    %v5972 = vshll.u32 683565275, %v5969
    %v5973 = vshrl.u32 2475754826, %v5970
    %v5974 = vor.u32 %v5972, %v5973
    %v5975 = vshll.u32 2475754826, %v5969
    %v5976 = vshrl.u32 2131351028, %v5970
    %v5977 = vor.u32 %v5975, %v5976
    %v5978 = vshll.u32 2131351028, %v5969
    %v5979 = vshrl.u32 2102212464, %v5970
    %v5980 = vor.u32 %v5978, %v5979
    %v5981 = vshll.u32 2102212464, %v5969
    %v5982 = vshrl.u32 920167782, %v5970
    %v5983 = vor.u32 %v5981, %v5982
    %v5984 = vshll.u32 920167782, %v5969
    %v5985 = vshrl.u32 1326507024, %v5970
    %v5986 = vor.u32 %v5984, %v5985
    %vm5987 = vcmp.lt.s32.totalorder %v5968, 1
    %vm5988 = vcmp.lt.s32.totalorder %v5968, 2
    %vm5989 = vcmp.lt.s32.totalorder %v5968, 3
    %vm5990 = vcmp.lt.s32.totalorder %v5968, 4
    %v5991 = vsel %vm5987, %v5971, %v5974
    %v5992 = vsel %vm5990, %v5980, 2102212464
    %v5993 = vsel %vm5989, %v5977, %v5992
    %v5994 = vsel %vm5988, %v5991, %v5993
    %v5995 = vsel %vm5987, %v5974, %v5977
    %v5996 = vsel %vm5990, %v5983, 920167782
    %v5997 = vsel %vm5989, %v5980, %v5996
    %v5998 = vsel %vm5988, %v5995, %v5997
    %v5999 = vsel %vm5987, %v5977, %v5980
    %v6000 = vsel %vm5990, %v5986, 1326507024
    %v6001 = vsel %vm5989, %v5983, %v6000
    %v6002 = vsel %vm5988, %v5999, %v6001
    %v6003 = vshll.u32 %v5963, 8
    %v6004 = vand.u32 %v6003, 65535
    %v6005 = vshrl.u32 %v6003, 16
    %v6006 = vand.u32 %v6002, 65535
    %v6007 = vshrl.u32 %v6002, 16
    %v6008 = vmul.u32 %v6004, %v6006
    %v6009 = vmul.u32 %v6004, %v6007
    %v6010 = vmul.u32 %v6005, %v6006
    %v6011 = vmul.u32 %v6005, %v6007
    %v6012 = vshll.u32 %v6009, 16
    %v6013 = vshrl.u32 %v6009, 16
    %v6014 = vshll.u32 %v6010, 16
    %v6015 = vshrl.u32 %v6010, 16
    %vm6016 = vc.u32 %v6008, %v6012
    %v6017 = vsel %vm6016, 1, 0
    %v6018 = vadd.s32 %v6008, %v6012
    %v6019 = vadd.s32 %v6011, %v6017
    %vm6020 = vc.u32 %v6018, %v6014
    %v6021 = vsel %vm6020, 1, 0
    %v6022 = vadd.s32 %v6018, %v6014
    %v6023 = vadd.s32 %v6019, %v6021
    %v6024 = vadd.s32 %v6023, %v6013
    %v6025 = vadd.s32 %v6024, %v6015
    %v6026 = vand.u32 %v6003, 65535
    %v6027 = vshrl.u32 %v6003, 16
    %v6028 = vand.u32 %v5998, 65535
    %v6029 = vshrl.u32 %v5998, 16
    %v6030 = vmul.u32 %v6026, %v6028
    %v6031 = vmul.u32 %v6026, %v6029
    %v6032 = vmul.u32 %v6027, %v6028
    %v6033 = vmul.u32 %v6027, %v6029
    %v6034 = vshll.u32 %v6031, 16
    %v6035 = vshrl.u32 %v6031, 16
    %v6036 = vshll.u32 %v6032, 16
    %v6037 = vshrl.u32 %v6032, 16
    %vm6038 = vc.u32 %v6030, %v6034
    %v6039 = vsel %vm6038, 1, 0
    %v6040 = vadd.s32 %v6030, %v6034
    %v6041 = vadd.s32 %v6033, %v6039
    %vm6042 = vc.u32 %v6040, %v6036
    %v6043 = vsel %vm6042, 1, 0
    %v6044 = vadd.s32 %v6040, %v6036
    %v6045 = vadd.s32 %v6041, %v6043
    %v6046 = vadd.s32 %v6045, %v6035
    %v6047 = vadd.s32 %v6046, %v6037
    %v6048 = vmul.u32 %v6003, %v5994
    %v6049 = vadd.s32 %v6025, %v6044
    %vm6050 = vc.u32 %v6025, %v6044
    %v6051 = vadd.s32 %v6047, 1
    %v6052 = vsel %vm6050, %v6051, %v6047
    %v6053 = vadd.s32 %v6048, %v6052
    %v6054 = vadd.s32 %v6053, 536870912
    %v6055 = vshrl.u32 %v6054, 30
    %v6056 = vshll.u32 %v6055, 30
    %v6057 = vsub.s32 %v6053, %v6056
    %vm6058 = vcmp.lt.s32.totalorder %v6057, 0
    %v6059 = vsub.s32 0, %v6057
    %v6060 = vsel %vm6058, %v6059, %v6057
    %v6061 = vclz %v6060
    %v6062 = vsub.s32 %v6061, 2
    %vm6063 = vcmp.gt.s32.totalorder 0, %v6062
    %v6064 = vsel %vm6063, 0, %v6062
    %v6065 = vsub.s32 32, %v6064
    %v6066 = vshll.u32 %v6057, %v6064
    %v6067 = vshrl.u32 %v6049, %v6065
    %v6068 = vor.u32 %v6066, %v6067
    %v6069 = vsub.s32 4294967266, %v6064
    %v6070 = vadd.s32 %v6069, 127
    %v6071 = vshll.u32 %v6070, 23
    %v6072 = vor.u32 4788187, %v6071
    %v6073 = vand.u32 2147483647, %v6072
    %v6075 = vcvt.s32.f32 %v6068
    %v6076 = vmul.f32 %v6075, %v6073
    %v6077 = vxor.u32 %v6076, 2147483648
    %v6078 = vsel %vm5957, %v6077, %v6076
    %v6079 = vsub.s32 4, %v6055
    %v6080 = vsel %vm5957, %v6079, %v6055
    %v6081 = vsel %vm5956, %v1132, %v6078
    %v6082 = vsel %vm5956, 0, %v6080
    %v6083 = vmul.f32 %v6081, %v6081
    %v6084 = vmul.f32 %v6083, -0.001358992
    %v6085 = vadd.f32 %v6084, 0.041655596
    %v6086 = vmul.f32 %v6083, %v6085
    %v6087 = vadd.f32 %v6086, -0.4999988
    %v6088 = vmul.f32 %v6083, %v6087
    %v6089 = vadd.f32 1.0, %v6088
    %v6090 = vmul.f32 %v6081, %v6081
    %v6091 = vmul.f32 %v6090, -0.00019511016
    %v6092 = vadd.f32 %v6091, 0.008332121
    %v6093 = vmul.f32 %v6090, %v6092
    %v6094 = vadd.f32 %v6093, -0.16666654
    %v6095 = vmul.f32 %v6090, %v6094
    %v6096 = vadd.f32 %v6095, 1.0
    %v6097 = vmul.f32 %v6096, %v6081
    %vm6098 = vweird.f32 %v1132
    %v6099 = vadd.s32 %v6082, 3
    %v6100 = vand.u32 %v6099, 3
    %vm6101 = vcmp.lt.s32.totalorder %v6100, 2
    %vm6102 = vcmp.eq.s32.totalorder %v6100, 0
    %v6103 = vxor.u32 %v6097, 2147483648
    %v6104 = vsel %vm6102, %v6089, %v6103
    %vm6105 = vcmp.eq.s32.totalorder %v6100, 2
    %v6106 = vxor.u32 %v6089, 2147483648
    %v6107 = vsel %vm6105, %v6106, %v6097
    %v6108 = vsel %vm6101, %v6104, %v6107
    %v6109 = vsel %vm6098, nan, %v6108
    %6126 = vrot.lane.b32.xlu0 %v3784, 64
    %v6127 = vpop.permute.xlu0 %6126
    %6128 = vrot.lane.b32.xlu0 %v3939, 64
    %v6129 = vpop.permute.xlu0 %6128
    %6130 = vrot.lane.b32.xlu0 %v4094, 64
    %v6131 = vpop.permute.xlu0 %6130
    %6132 = vrot.lane.b32.xlu0 %v4249, 64
    %v6133 = vpop.permute.xlu0 %6132
    %6134 = vrot.lane.b32.xlu0 %v4404, 64
    %v6135 = vpop.permute.xlu0 %6134
    %6136 = vrot.lane.b32.xlu0 %v4559, 64
    %v6137 = vpop.permute.xlu0 %6136
    %6138 = vrot.lane.b32.xlu0 %v4714, 64
    %v6139 = vpop.permute.xlu0 %6138
    %6140 = vrot.lane.b32.xlu0 %v4869, 64
    %v6141 = vpop.permute.xlu0 %6140
    %6142 = vrot.lane.b32.xlu0 %v5024, 64
    %v6143 = vpop.permute.xlu0 %6142
    %6144 = vrot.lane.b32.xlu0 %v5179, 64
    %v6145 = vpop.permute.xlu0 %6144
    %6146 = vrot.lane.b32.xlu0 %v5334, 64
    %v6147 = vpop.permute.xlu0 %6146
    %6148 = vrot.lane.b32.xlu0 %v5489, 64
    %v6149 = vpop.permute.xlu0 %6148
    %6150 = vrot.lane.b32.xlu0 %v5644, 64
    %v6151 = vpop.permute.xlu0 %6150
    %6152 = vrot.lane.b32.xlu0 %v5799, 64
    %v6153 = vpop.permute.xlu0 %6152
    %6154 = vrot.lane.b32.xlu0 %v5954, 64
    %v6155 = vpop.permute.xlu0 %6154
    %6156 = vrot.lane.b32.xlu0 %v6109, 64
    %v6157 = vpop.permute.xlu0 %6156
    %v6174 = vmul.f32 %v1134, %v6127
    %v6175 = vmul.f32 %v1135, %v6129
    %v6176 = vmul.f32 %v1136, %v6131
    %v6177 = vmul.f32 %v1137, %v6133
    %v6178 = vmul.f32 %v1138, %v6135
    %v6179 = vmul.f32 %v1139, %v6137
    %v6180 = vmul.f32 %v1140, %v6139
    %v6181 = vmul.f32 %v1141, %v6141
    %v6182 = vmul.f32 %v1142, %v6143
    %v6183 = vmul.f32 %v1143, %v6145
    %v6184 = vmul.f32 %v1144, %v6147
    %v6185 = vmul.f32 %v1145, %v6149
    %v6186 = vmul.f32 %v1146, %v6151
    %v6187 = vmul.f32 %v1147, %v6153
    %v6188 = vmul.f32 %v1148, %v6155
    %v6189 = vmul.f32 %v1149, %v6157
    %6206 = vrot.lane.b32.xlu0 %v6174, 64
    %v6207 = vpop.permute.xlu0 %6206
    %6208 = vrot.lane.b32.xlu0 %v6175, 64
    %v6209 = vpop.permute.xlu0 %6208
    %6210 = vrot.lane.b32.xlu0 %v6176, 64
    %v6211 = vpop.permute.xlu0 %6210
    %6212 = vrot.lane.b32.xlu0 %v6177, 64
    %v6213 = vpop.permute.xlu0 %6212
    %6214 = vrot.lane.b32.xlu0 %v6178, 64
    %v6215 = vpop.permute.xlu0 %6214
    %6216 = vrot.lane.b32.xlu0 %v6179, 64
    %v6217 = vpop.permute.xlu0 %6216
    %6218 = vrot.lane.b32.xlu0 %v6180, 64
    %v6219 = vpop.permute.xlu0 %6218
    %6220 = vrot.lane.b32.xlu0 %v6181, 64
    %v6221 = vpop.permute.xlu0 %6220
    %6222 = vrot.lane.b32.xlu0 %v6182, 64
    %v6223 = vpop.permute.xlu0 %6222
    %6224 = vrot.lane.b32.xlu0 %v6183, 64
    %v6225 = vpop.permute.xlu0 %6224
    %6226 = vrot.lane.b32.xlu0 %v6184, 64
    %v6227 = vpop.permute.xlu0 %6226
    %6228 = vrot.lane.b32.xlu0 %v6185, 64
    %v6229 = vpop.permute.xlu0 %6228
    %6230 = vrot.lane.b32.xlu0 %v6186, 64
    %v6231 = vpop.permute.xlu0 %6230
    %6232 = vrot.lane.b32.xlu0 %v6187, 64
    %v6233 = vpop.permute.xlu0 %6232
    %6234 = vrot.lane.b32.xlu0 %v6188, 64
    %v6235 = vpop.permute.xlu0 %6234
    %6236 = vrot.lane.b32.xlu0 %v6189, 64
    %v6237 = vpop.permute.xlu0 %6236
    %v6254 = vadd.f32 %v3614, %v6207
    %v6255 = vadd.f32 %v3615, %v6209
    %v6256 = vadd.f32 %v3616, %v6211
    %v6257 = vadd.f32 %v3617, %v6213
    %v6258 = vadd.f32 %v3618, %v6215
    %v6259 = vadd.f32 %v3619, %v6217
    %v6260 = vadd.f32 %v3620, %v6219
    %v6261 = vadd.f32 %v3621, %v6221
    %v6262 = vadd.f32 %v3622, %v6223
    %v6263 = vadd.f32 %v3623, %v6225
    %v6264 = vadd.f32 %v3624, %v6227
    %v6265 = vadd.f32 %v3625, %v6229
    %v6266 = vadd.f32 %v3626, %v6231
    %v6267 = vadd.f32 %v3627, %v6233
    %v6268 = vadd.f32 %v3628, %v6235
    %v6269 = vadd.f32 %v3629, %v6237
    %vm6270 = vcmask 523264
    %v6271 = vsel %vm6270, %v6254, 0.0
    %6272 = vadd.xlane.f32.xlu0 %v6271
    %v6273 = vpop.xlane.xlu0 %6272
    %v6274 = vsel %vm6270, %v6255, 0.0
    %6275 = vadd.xlane.f32.xlu0 %v6274
    %v6276 = vpop.xlane.xlu0 %6275
    %v6277 = vsel %vm6270, %v6256, 0.0
    %6278 = vadd.xlane.f32.xlu0 %v6277
    %v6279 = vpop.xlane.xlu0 %6278
    %v6280 = vsel %vm6270, %v6257, 0.0
    %6281 = vadd.xlane.f32.xlu0 %v6280
    %v6282 = vpop.xlane.xlu0 %6281
    %v6283 = vsel %vm6270, %v6258, 0.0
    %6284 = vadd.xlane.f32.xlu0 %v6283
    %v6285 = vpop.xlane.xlu0 %6284
    %v6286 = vsel %vm6270, %v6259, 0.0
    %6287 = vadd.xlane.f32.xlu0 %v6286
    %v6288 = vpop.xlane.xlu0 %6287
    %v6289 = vsel %vm6270, %v6260, 0.0
    %6290 = vadd.xlane.f32.xlu0 %v6289
    %v6291 = vpop.xlane.xlu0 %6290
    %v6292 = vsel %vm6270, %v6261, 0.0
    %6293 = vadd.xlane.f32.xlu0 %v6292
    %v6294 = vpop.xlane.xlu0 %6293
    %v6295 = vsel %vm6270, %v6262, 0.0
    %6296 = vadd.xlane.f32.xlu0 %v6295
    %v6297 = vpop.xlane.xlu0 %6296
    %v6298 = vsel %vm6270, %v6263, 0.0
    %6299 = vadd.xlane.f32.xlu0 %v6298
    %v6300 = vpop.xlane.xlu0 %6299
    %v6301 = vsel %vm6270, %v6264, 0.0
    %6302 = vadd.xlane.f32.xlu0 %v6301
    %v6303 = vpop.xlane.xlu0 %6302
    %v6304 = vsel %vm6270, %v6265, 0.0
    %6305 = vadd.xlane.f32.xlu0 %v6304
    %v6306 = vpop.xlane.xlu0 %6305
    %v6307 = vsel %vm6270, %v6266, 0.0
    %6308 = vadd.xlane.f32.xlu0 %v6307
    %v6309 = vpop.xlane.xlu0 %6308
    %v6310 = vsel %vm6270, %v6267, 0.0
    %6311 = vadd.xlane.f32.xlu0 %v6310
    %v6312 = vpop.xlane.xlu0 %6311
    %v6313 = vsel %vm6270, %v6268, 0.0
    %6314 = vadd.xlane.f32.xlu0 %v6313
    %v6315 = vpop.xlane.xlu0 %6314
    %v6316 = vsel %vm6270, %v6269, 0.0
    %6317 = vadd.xlane.f32.xlu0 %v6316
    %v6318 = vpop.xlane.xlu0 %6317
    %v6319 = vld [vmem:[%s3] sm:$0xff]
    %v6320 = vld [vmem:[%s3 + $0x8] sm:$0xff]
    %v6321 = vld [vmem:[%s3 + $0x10] sm:$0xff]
    %v6322 = vld [vmem:[%s3 + $0x18] sm:$0xff]
    %v6323 = vld [vmem:[%s3 + $0x20] sm:$0xff]
    %v6324 = vld [vmem:[%s3 + $0x28] sm:$0xff]
    %v6325 = vld [vmem:[%s3 + $0x30] sm:$0xff]
    %v6326 = vld [vmem:[%s3 + $0x38] sm:$0xff]
    %v6327 = vld [vmem:[%s3 + $0x40] sm:$0xff]
    %v6328 = vld [vmem:[%s3 + $0x48] sm:$0xff]
    %v6329 = vld [vmem:[%s3 + $0x50] sm:$0xff]
    %v6330 = vld [vmem:[%s3 + $0x58] sm:$0xff]
    %v6331 = vld [vmem:[%s3 + $0x60] sm:$0xff]
    %v6332 = vld [vmem:[%s3 + $0x68] sm:$0xff]
    %v6333 = vld [vmem:[%s3 + $0x70] sm:$0xff]
    %v6334 = vld [vmem:[%s3 + $0x78] sm:$0xff]
    %v6335 = vmul.f32 %v6319, 0.015625
    %v6336 = vmul.f32 %v6320, 0.015625
    %v6337 = vmul.f32 %v6321, 0.015625
    %v6338 = vmul.f32 %v6322, 0.015625
    %v6339 = vmul.f32 %v6323, 0.015625
    %v6340 = vmul.f32 %v6324, 0.015625
    %v6341 = vmul.f32 %v6325, 0.015625
    %v6342 = vmul.f32 %v6326, 0.015625
    %v6343 = vmul.f32 %v6327, 0.015625
    %v6344 = vmul.f32 %v6328, 0.015625
    %v6345 = vmul.f32 %v6329, 0.015625
    %v6346 = vmul.f32 %v6330, 0.015625
    %v6347 = vmul.f32 %v6331, 0.015625
    %v6348 = vmul.f32 %v6332, 0.015625
    %v6349 = vmul.f32 %v6333, 0.015625
    %v6350 = vmul.f32 %v6334, 0.015625
    %v6351 = vmul.f32 %v6273, %v6273
    %v6352 = vmul.f32 %v6276, %v6276
    %v6353 = vmul.f32 %v6279, %v6279
    %v6354 = vmul.f32 %v6282, %v6282
    %v6355 = vmul.f32 %v6285, %v6285
    %v6356 = vmul.f32 %v6288, %v6288
    %v6357 = vmul.f32 %v6291, %v6291
    %v6358 = vmul.f32 %v6294, %v6294
    %v6359 = vmul.f32 %v6297, %v6297
    %v6360 = vmul.f32 %v6300, %v6300
    %v6361 = vmul.f32 %v6303, %v6303
    %v6362 = vmul.f32 %v6306, %v6306
    %v6363 = vmul.f32 %v6309, %v6309
    %v6364 = vmul.f32 %v6312, %v6312
    %v6365 = vmul.f32 %v6315, %v6315
    %v6366 = vmul.f32 %v6318, %v6318
    %v6367 = vmul.f32 %v6335, %v6351
    %v6368 = vmul.f32 %v6336, %v6352
    %v6369 = vmul.f32 %v6337, %v6353
    %v6370 = vmul.f32 %v6338, %v6354
    %v6371 = vmul.f32 %v6339, %v6355
    %v6372 = vmul.f32 %v6340, %v6356
    %v6373 = vmul.f32 %v6341, %v6357
    %v6374 = vmul.f32 %v6342, %v6358
    %v6375 = vmul.f32 %v6343, %v6359
    %v6376 = vmul.f32 %v6344, %v6360
    %v6377 = vmul.f32 %v6345, %v6361
    %v6378 = vmul.f32 %v6346, %v6362
    %v6379 = vmul.f32 %v6347, %v6363
    %v6380 = vmul.f32 %v6348, %v6364
    %v6381 = vmul.f32 %v6349, %v6365
    %v6382 = vmul.f32 %v6350, %v6366
    %v6383 = vadd.f32 %v6367, 1.0
    %v6384 = vlog2.pop %v6383
    %v6385 = vmul.f32 %v6384, 0.6931472
    %v6386 = vmul.f32 -0.5, %v6367
    %v6387 = vadd.f32 %v6386, 1.0
    %v6388 = vmul.f32 %v6387, %v6367
    %v6389 = vand.u32 2147483647, %v6367
    %vm6390 = vcmp.lt.f32.partialorder %v6389, 0.0004427343
    %v6391 = vsel %vm6390, %v6388, %v6385
    %v6392 = vadd.f32 %v6368, 1.0
    %v6393 = vlog2.pop %v6392
    %v6394 = vmul.f32 %v6393, 0.6931472
    %v6395 = vmul.f32 -0.5, %v6368
    %v6396 = vadd.f32 %v6395, 1.0
    %v6397 = vmul.f32 %v6396, %v6368
    %v6398 = vand.u32 2147483647, %v6368
    %vm6399 = vcmp.lt.f32.partialorder %v6398, 0.0004427343
    %v6400 = vsel %vm6399, %v6397, %v6394
    %v6401 = vadd.f32 %v6369, 1.0
    %v6402 = vlog2.pop %v6401
    %v6403 = vmul.f32 %v6402, 0.6931472
    %v6404 = vmul.f32 -0.5, %v6369
    %v6405 = vadd.f32 %v6404, 1.0
    %v6406 = vmul.f32 %v6405, %v6369
    %v6407 = vand.u32 2147483647, %v6369
    %vm6408 = vcmp.lt.f32.partialorder %v6407, 0.0004427343
    %v6409 = vsel %vm6408, %v6406, %v6403
    %v6410 = vadd.f32 %v6370, 1.0
    %v6411 = vlog2.pop %v6410
    %v6412 = vmul.f32 %v6411, 0.6931472
    %v6413 = vmul.f32 -0.5, %v6370
    %v6414 = vadd.f32 %v6413, 1.0
    %v6415 = vmul.f32 %v6414, %v6370
    %v6416 = vand.u32 2147483647, %v6370
    %vm6417 = vcmp.lt.f32.partialorder %v6416, 0.0004427343
    %v6418 = vsel %vm6417, %v6415, %v6412
    %v6419 = vadd.f32 %v6371, 1.0
    %v6420 = vlog2.pop %v6419
    %v6421 = vmul.f32 %v6420, 0.6931472
    %v6422 = vmul.f32 -0.5, %v6371
    %v6423 = vadd.f32 %v6422, 1.0
    %v6424 = vmul.f32 %v6423, %v6371
    %v6425 = vand.u32 2147483647, %v6371
    %vm6426 = vcmp.lt.f32.partialorder %v6425, 0.0004427343
    %v6427 = vsel %vm6426, %v6424, %v6421
    %v6428 = vadd.f32 %v6372, 1.0
    %v6429 = vlog2.pop %v6428
    %v6430 = vmul.f32 %v6429, 0.6931472
    %v6431 = vmul.f32 -0.5, %v6372
    %v6432 = vadd.f32 %v6431, 1.0
    %v6433 = vmul.f32 %v6432, %v6372
    %v6434 = vand.u32 2147483647, %v6372
    %vm6435 = vcmp.lt.f32.partialorder %v6434, 0.0004427343
    %v6436 = vsel %vm6435, %v6433, %v6430
    %v6437 = vadd.f32 %v6373, 1.0
    %v6438 = vlog2.pop %v6437
    %v6439 = vmul.f32 %v6438, 0.6931472
    %v6440 = vmul.f32 -0.5, %v6373
    %v6441 = vadd.f32 %v6440, 1.0
    %v6442 = vmul.f32 %v6441, %v6373
    %v6443 = vand.u32 2147483647, %v6373
    %vm6444 = vcmp.lt.f32.partialorder %v6443, 0.0004427343
    %v6445 = vsel %vm6444, %v6442, %v6439
    %v6446 = vadd.f32 %v6374, 1.0
    %v6447 = vlog2.pop %v6446
    %v6448 = vmul.f32 %v6447, 0.6931472
    %v6449 = vmul.f32 -0.5, %v6374
    %v6450 = vadd.f32 %v6449, 1.0
    %v6451 = vmul.f32 %v6450, %v6374
    %v6452 = vand.u32 2147483647, %v6374
    %vm6453 = vcmp.lt.f32.partialorder %v6452, 0.0004427343
    %v6454 = vsel %vm6453, %v6451, %v6448
    %v6455 = vadd.f32 %v6375, 1.0
    %v6456 = vlog2.pop %v6455
    %v6457 = vmul.f32 %v6456, 0.6931472
    %v6458 = vmul.f32 -0.5, %v6375
    %v6459 = vadd.f32 %v6458, 1.0
    %v6460 = vmul.f32 %v6459, %v6375
    %v6461 = vand.u32 2147483647, %v6375
    %vm6462 = vcmp.lt.f32.partialorder %v6461, 0.0004427343
    %v6463 = vsel %vm6462, %v6460, %v6457
    %v6464 = vadd.f32 %v6376, 1.0
    %v6465 = vlog2.pop %v6464
    %v6466 = vmul.f32 %v6465, 0.6931472
    %v6467 = vmul.f32 -0.5, %v6376
    %v6468 = vadd.f32 %v6467, 1.0
    %v6469 = vmul.f32 %v6468, %v6376
    %v6470 = vand.u32 2147483647, %v6376
    %vm6471 = vcmp.lt.f32.partialorder %v6470, 0.0004427343
    %v6472 = vsel %vm6471, %v6469, %v6466
    %v6473 = vadd.f32 %v6377, 1.0
    %v6474 = vlog2.pop %v6473
    %v6475 = vmul.f32 %v6474, 0.6931472
    %v6476 = vmul.f32 -0.5, %v6377
    %v6477 = vadd.f32 %v6476, 1.0
    %v6478 = vmul.f32 %v6477, %v6377
    %v6479 = vand.u32 2147483647, %v6377
    %vm6480 = vcmp.lt.f32.partialorder %v6479, 0.0004427343
    %v6481 = vsel %vm6480, %v6478, %v6475
    %v6482 = vadd.f32 %v6378, 1.0
    %v6483 = vlog2.pop %v6482
    %v6484 = vmul.f32 %v6483, 0.6931472
    %v6485 = vmul.f32 -0.5, %v6378
    %v6486 = vadd.f32 %v6485, 1.0
    %v6487 = vmul.f32 %v6486, %v6378
    %v6488 = vand.u32 2147483647, %v6378
    %vm6489 = vcmp.lt.f32.partialorder %v6488, 0.0004427343
    %v6490 = vsel %vm6489, %v6487, %v6484
    %v6491 = vadd.f32 %v6379, 1.0
    %v6492 = vlog2.pop %v6491
    %v6493 = vmul.f32 %v6492, 0.6931472
    %v6494 = vmul.f32 -0.5, %v6379
    %v6495 = vadd.f32 %v6494, 1.0
    %v6496 = vmul.f32 %v6495, %v6379
    %v6497 = vand.u32 2147483647, %v6379
    %vm6498 = vcmp.lt.f32.partialorder %v6497, 0.0004427343
    %v6499 = vsel %vm6498, %v6496, %v6493
    %v6500 = vadd.f32 %v6380, 1.0
    %v6501 = vlog2.pop %v6500
    %v6502 = vmul.f32 %v6501, 0.6931472
    %v6503 = vmul.f32 -0.5, %v6380
    %v6504 = vadd.f32 %v6503, 1.0
    %v6505 = vmul.f32 %v6504, %v6380
    %v6506 = vand.u32 2147483647, %v6380
    %vm6507 = vcmp.lt.f32.partialorder %v6506, 0.0004427343
    %v6508 = vsel %vm6507, %v6505, %v6502
    %v6509 = vadd.f32 %v6381, 1.0
    %v6510 = vlog2.pop %v6509
    %v6511 = vmul.f32 %v6510, 0.6931472
    %v6512 = vmul.f32 -0.5, %v6381
    %v6513 = vadd.f32 %v6512, 1.0
    %v6514 = vmul.f32 %v6513, %v6381
    %v6515 = vand.u32 2147483647, %v6381
    %vm6516 = vcmp.lt.f32.partialorder %v6515, 0.0004427343
    %v6517 = vsel %vm6516, %v6514, %v6511
    %v6518 = vadd.f32 %v6382, 1.0
    %v6519 = vlog2.pop %v6518
    %v6520 = vmul.f32 %v6519, 0.6931472
    %v6521 = vmul.f32 -0.5, %v6382
    %v6522 = vadd.f32 %v6521, 1.0
    %v6523 = vmul.f32 %v6522, %v6382
    %v6524 = vand.u32 2147483647, %v6382
    %vm6525 = vcmp.lt.f32.partialorder %v6524, 0.0004427343
    %v6526 = vsel %vm6525, %v6523, %v6520
    %v6527 = vmul.f32 %v6391, 1.442695
    %v6528 = vmul.f32 %v6400, 1.442695
    %v6529 = vmul.f32 %v6409, 1.442695
    %v6530 = vmul.f32 %v6418, 1.442695
    %v6531 = vmul.f32 %v6427, 1.442695
    %v6532 = vmul.f32 %v6436, 1.442695
    %v6533 = vmul.f32 %v6445, 1.442695
    %v6534 = vmul.f32 %v6454, 1.442695
    %v6535 = vmul.f32 %v6463, 1.442695
    %v6536 = vmul.f32 %v6472, 1.442695
    %v6537 = vmul.f32 %v6481, 1.442695
    %v6538 = vmul.f32 %v6490, 1.442695
    %v6539 = vmul.f32 %v6499, 1.442695
    %v6540 = vmul.f32 %v6508, 1.442695
    %v6541 = vmul.f32 %v6517, 1.442695
    %v6542 = vmul.f32 %v6526, 1.442695
    %v6543 = vsub.f32 0.0, %v6527
    %v6544 = vsub.f32 0.0, %v6528
    %v6545 = vsub.f32 0.0, %v6529
    %v6546 = vsub.f32 0.0, %v6530
    %v6547 = vsub.f32 0.0, %v6531
    %v6548 = vsub.f32 0.0, %v6532
    %v6549 = vsub.f32 0.0, %v6533
    %v6550 = vsub.f32 0.0, %v6534
    %v6551 = vsub.f32 0.0, %v6535
    %v6552 = vsub.f32 0.0, %v6536
    %v6553 = vsub.f32 0.0, %v6537
    %v6554 = vsub.f32 0.0, %v6538
    %v6555 = vsub.f32 0.0, %v6539
    %v6556 = vsub.f32 0.0, %v6540
    %v6557 = vsub.f32 0.0, %v6541
    %v6558 = vsub.f32 0.0, %v6542
    %vm6559 = vcmask 7168
    %6560 = vst.msk [vmem:[%s8] sm:$0xff] %vm6559, %v6543
    %6561 = vst.msk [vmem:[%s8 + $0x8] sm:$0xff] %vm6559, %v6544
    %6562 = vst.msk [vmem:[%s8 + $0x10] sm:$0xff] %vm6559, %v6545
    %6563 = vst.msk [vmem:[%s8 + $0x18] sm:$0xff] %vm6559, %v6546
    %6564 = vst.msk [vmem:[%s8 + $0x20] sm:$0xff] %vm6559, %v6547
    %6565 = vst.msk [vmem:[%s8 + $0x28] sm:$0xff] %vm6559, %v6548
    %6566 = vst.msk [vmem:[%s8 + $0x30] sm:$0xff] %vm6559, %v6549
    %6567 = vst.msk [vmem:[%s8 + $0x38] sm:$0xff] %vm6559, %v6550
    %6568 = vst.msk [vmem:[%s8 + $0x40] sm:$0xff] %vm6559, %v6551
    %6569 = vst.msk [vmem:[%s8 + $0x48] sm:$0xff] %vm6559, %v6552
    %6570 = vst.msk [vmem:[%s8 + $0x50] sm:$0xff] %vm6559, %v6553
    %6571 = vst.msk [vmem:[%s8 + $0x58] sm:$0xff] %vm6559, %v6554
    %6572 = vst.msk [vmem:[%s8 + $0x60] sm:$0xff] %vm6559, %v6555
    %6573 = vst.msk [vmem:[%s8 + $0x68] sm:$0xff] %vm6559, %v6556
    %6574 = vst.msk [vmem:[%s8 + $0x70] sm:$0xff] %vm6559, %v6557
    %6575 = vst.msk [vmem:[%s8 + $0x78] sm:$0xff] %vm6559, %v6558
    // Predicated region
    $region54: #{tpu_custom_call.1} parent=1 // pred_check
      _
    $region55: #{tpu_custom_call.1} parent=1 // pred_check_branch
      %6577 = sbr.rel (0) target = $region57
    $region56: #{tpu_custom_call.1} parent=1 // pred_region
      _
    $region57: #{tpu_custom_call.1} parent=1 // pred_fallthru
      _
    // Predicated region
    $region58: #{tpu_custom_call.1} parent=1 // pred_check
      _
    $region59: #{tpu_custom_call.1} parent=1 // pred_check_branch
      %6579 = sbr.rel (0) target = $region61
    $region60: #{tpu_custom_call.1} parent=1 // pred_region
      _
    $region61: #{tpu_custom_call.1} parent=1 // pred_fallthru
      _
    %6580 = vsyncpa [#allocation3], 1
    %6581 = vsyncpa [#allocation7], 1
    %6582 = vsyncpa [#allocation10], 1
    %6583 = vsyncpa [#allocation4], 1

</llo_original>
